<compile_context>
chip_gen: v6e
topology: v6e:2x2x1
jax: 0.10.0
libtpu: 0.0.40
codegen_flags: <defaults>
</compile_context>

<pallas_src>
import math

import jax
import jax.numpy as jnp
from jax import lax
from jax.experimental import pallas as pl
from jax.experimental.pallas import tpu as pltpu

# ----------------------------- config (small) -------------------------------
RES = 16          # image_resolution
PATCH = 4         # patch_size
WIDTH = 32        # width
LAYERS = 2        # transformer layers
HEADS = 4         # attention heads
OUT_DIM = 16      # output_dim
BATCH = 2

N_PATCH = (RES // PATCH) ** 2          # 16
SEQ = N_PATCH + 1                       # 17 (cls token)
SEQ_PAD = 24                            # per-batch block padded to 8-sublane multiple
D_PATCH = 3 * PATCH * PATCH             # 48
HEAD_DIM = WIDTH // HEADS               # 8
HIDDEN = 4 * WIDTH                      # 128
EPS = 1e-5

# Batch elements fused per program (whole batch -> grid of 1; see TODO above).
BATCH_CHUNK = BATCH
NUM_PROGRAMS = BATCH // BATCH_CHUNK
TOK = BATCH_CHUNK * SEQ_PAD             # padded tokens per program (48)

# Per-batch block row layout inside the token slab:
#   rows [0, N_PATCH)         : patch tokens (+ pos[1:])
#   row  N_PATCH (=16)        : CLS token    (+ pos[0])   <- 8-aligned row
#   rows [N_PATCH+1, SEQ_PAD) : zero padding (own block id in the attn mask)
CLS_ROW = N_PATCH

# ---- packed f32 small-parameter row layout (WIDTH lanes per row) ----
ROW_POS_PATCH = 0                          # N_PATCH rows: pos[1:]
ROW_CLS = ROW_POS_PATCH + N_PATCH          # cls + pos[0]
ROW_LN_PRE_G = ROW_CLS + 1
ROW_LN_PRE_B = ROW_LN_PRE_G + 1
ROW_LN_POST_G = ROW_LN_PRE_B + 1
ROW_LN_POST_B = ROW_LN_POST_G + 1
ROW_LN1_G = ROW_LN_POST_B + 1              # + layer
ROW_LN1_B = ROW_LN1_G + LAYERS
ROW_LN2_G = ROW_LN1_B + LAYERS
ROW_LN2_B = ROW_LN2_G + LAYERS
ROW_B_AO = ROW_LN2_B + LAYERS              # b_ao + b_v @ w_ao (v-bias folded)
ROW_B_FC2 = ROW_B_AO + LAYERS
N_SMALL = ROW_B_FC2 + LAYERS               # 33

# ---- packed bf16 misc-weight row layout (WIDTH lanes per row) ----
ROW_W_PATCH = 0                            # D_PATCH rows (patch-embed matmul)
ROW_PROJ = ROW_W_PATCH + D_PATCH           # WIDTH rows (first OUT_DIM lanes used)
N_MISC = ROW_PROJ + WIDTH                  # 80

# Per-head weight slots in w_heads (each block is (WIDTH+1, HEAD_DIM) bf16):
#   slot 0: Wq * scale, last row = bq * scale
#   slot 1: Wk                     (k bias dropped: softmax shift-invariance)
#   slot 2: Wv                     (v bias folded into b_ao)
#   slot 3: W_out[h].T             (pv @ W_out[h] via dot_general on dim 1)
N_SLOT = 4


# ------------------------------- kernel -------------------------------------
def _layernorm(v, g, b):
    # LayerNorm in f32 (mirrors the fp16-safe LayerNorm subclass).
    mu = jnp.mean(v, axis=-1, keepdims=True)
    var = jnp.mean((v - mu) ** 2, axis=-1, keepdims=True)
    return (v - mu) * lax.rsqrt(var + EPS) * g + b


def vit_kernel(
    patches_ref,   # (BATCH_CHUNK*N_PATCH, D_PATCH)        bf16
    w_heads_ref,   # (LAYERS*HEADS*4, WIDTH+1, HEAD_DIM)   bf16
    w_mlp_ref,     # (LAYERS*2, WIDTH+1, HIDDEN)           bf16
    misc_ref,      # (N_MISC, WIDTH)                       bf16
    small_ref,     # (N_SMALL, WIDTH)                      f32
    mask_ref,      # (TOK, TOK)                            f32
    out_ref,       # (BATCH_CHUNK, OUT_DIM)                f32
    x_scr,         # VMEM (TOK, WIDTH)                     f32
):
    # ---- patch embedding for the whole chunk (one bf16 matmul) ----
    w_patch = misc_ref[ROW_W_PATCH:ROW_W_PATCH + D_PATCH, :]
    x_patch = jnp.dot(patches_ref[...], w_patch,
                      preferred_element_type=jnp.float32)           # [BC*N, W] f32

    pos_patch = small_ref[ROW_POS_PATCH:ROW_POS_PATCH + N_PATCH, :]
    cls_row = small_ref[ROW_CLS:ROW_CLS + 1, :]

    # ---- assemble the padded token slab with 8-aligned row stores ----
    x_scr[...] = jnp.zeros((TOK, WIDTH), jnp.float32)                # pad rows = 0
    for b in range(BATCH_CHUNK):
        base = b * SEQ_PAD
        x_scr[base:base + N_PATCH, :] = (
            x_patch[b * N_PATCH:(b + 1) * N_PATCH, :] + pos_patch)
        x_scr[base + CLS_ROW:base + CLS_ROW + 1, :] = cls_row

    # ---- ln_pre on the full token slab ----
    x = _layernorm(x_scr[...],
                   small_ref[ROW_LN_PRE_G:ROW_LN_PRE_G + 1, :],
                   small_ref[ROW_LN_PRE_B:ROW_LN_PRE_B + 1, :])

    mask = mask_ref[...]                                             # [TOK, TOK] f32

    # ---- transformer (pre-LN residual attention blocks, CLIP style) ----
    for l in range(LAYERS):
        # ---------------- multi-head self attention ----------------
        h = _layernorm(x,
                       small_ref[ROW_LN1_G + l:ROW_LN1_G + l + 1, :],
                       small_ref[ROW_LN1_B + l:ROW_LN1_B + l + 1, :])
        h_b = h.astype(jnp.bfloat16)

        attn = None
        for hh in range(HEADS):
            base = (l * HEADS + hh) * N_SLOT
            wq = w_heads_ref[base + 0]                               # (W+1, HD)
            wk = w_heads_ref[base + 1]
            wv = w_heads_ref[base + 2]
            wo = w_heads_ref[base + 3]

            q = jnp.dot(h_b, wq[:WIDTH],
                        preferred_element_type=jnp.float32) + wq[WIDTH:WIDTH + 1]
            k = jnp.dot(h_b, wk[:WIDTH], preferred_element_type=jnp.float32)
            v = jnp.dot(h_b, wv[:WIDTH], preferred_element_type=jnp.float32)

            # scores / softmax in f32
            s = lax.dot_general(q, k, (((1,), (1,)), ((), ())),
                                preferred_element_type=jnp.float32)  # [T, T]
            s = s + mask
            s = s - jnp.max(s, axis=-1, keepdims=True)
            p = jnp.exp(s)
            p = p * pl.reciprocal(jnp.sum(p, axis=-1, keepdims=True),
                                  approx=True)

            pv = jnp.dot(p.astype(jnp.bfloat16), v.astype(jnp.bfloat16),
                         preferred_element_type=jnp.float32)          # [T, HD]
            # fold the output projection into the head loop (no per-head stores)
            contrib = lax.dot_general(pv.astype(jnp.bfloat16), wo[:WIDTH],
                                      (((1,), (1,)), ((), ())),
                                      preferred_element_type=jnp.float32)
            attn = contrib if attn is None else attn + contrib

        attn = attn + small_ref[ROW_B_AO + l:ROW_B_AO + l + 1, :]
        x = x + attn

        # --------------------------- MLP ----------------------------
        h = _layernorm(x,
                       small_ref[ROW_LN2_G + l:ROW_LN2_G + l + 1, :],
                       small_ref[ROW_LN2_B + l:ROW_LN2_B + l + 1, :])
        w1 = w_mlp_ref[2 * l + 0]                                    # (W+1, 4W)
        w2t = w_mlp_ref[2 * l + 1]                                   # rows 0..W-1 = fc2.T
        h1 = jnp.dot(h.astype(jnp.bfloat16), w1[:WIDTH],
                     preferred_element_type=jnp.float32) + w1[WIDTH:WIDTH + 1]
        h1 = h1 * jax.nn.sigmoid(1.702 * h1)                         # QuickGELU (f32)
        h2 = lax.dot_general(h1.astype(jnp.bfloat16), w2t[:WIDTH],
                             (((1,), (1,)), ((), ())),
                             preferred_element_type=jnp.float32)     # [T, W]
        h2 = h2 + small_ref[ROW_B_FC2 + l:ROW_B_FC2 + l + 1, :]
        x = x + h2

    # ---- ln_post + projection on the full slab; store only CLS rows ----
    y = _layernorm(x,
                   small_ref[ROW_LN_POST_G:ROW_LN_POST_G + 1, :],
                   small_ref[ROW_LN_POST_B:ROW_LN_POST_B + 1, :])
    proj = misc_ref[ROW_PROJ:ROW_PROJ + WIDTH, 0:OUT_DIM]            # (W, OUT) bf16
    o = jnp.dot(y.astype(jnp.bfloat16), proj,
                preferred_element_type=jnp.float32)                  # [T, OUT]
    for b in range(BATCH_CHUNK):
        row = b * SEQ_PAD + CLS_ROW                                  # 8-aligned
        out_ref[b:b + 1, :] = o[row:row + 1, :]


# ------------------------------- wrapper -------------------------------------
def _full_spec(shape):
    nd = len(shape)
    return pl.BlockSpec(shape, lambda g, _nd=nd: (0,) * _nd)


def pack_params(params):
    """Repack module parameters into the kernel's fused/packed layout."""
    scale = 1.0 / math.sqrt(HEAD_DIM)
    f32, bf16 = jnp.float32, jnp.bfloat16

    w_qkv, b_qkv = params["w_qkv"], params["b_qkv"]          # (L,W,3W), (L,3W)
    w_ao, b_ao = params["w_ao"], params["b_ao"]              # (L,W,W),  (L,W)

    # per-head attention weight blocks: (L*H*4, W+1, HD)
    blocks = []
    zero_row = jnp.zeros((1, HEAD_DIM), f32)
    for l in range(LAYERS):
        for hh in range(HEADS):
            lo, hi = hh * HEAD_DIM, (hh + 1) * HEAD_DIM
            wq = w_qkv[l][:, lo:hi] * scale
            bq = b_qkv[l][lo:hi] * scale
            wk = w_qkv[l][:, WIDTH + lo:WIDTH + hi]
            wv = w_qkv[l][:, 2 * WIDTH + lo:2 * WIDTH + hi]
            wo_t = w_ao[l][lo:hi, :].T                        # (W, HD)
            blocks += [
                jnp.concatenate([wq, bq[None, :]], axis=0),
                jnp.concatenate([wk, zero_row], axis=0),
                jnp.concatenate([wv, zero_row], axis=0),
                jnp.concatenate([wo_t, zero_row], axis=0),
            ]
    w_heads = jnp.stack(blocks, axis=0).astype(bf16)

    # MLP weight blocks: (L*2, W+1, 4W) — fc1 (+bias row), fc2 transposed
    mlp_blocks = []
    for l in range(LAYERS):
        mlp_blocks.append(jnp.concatenate(
            [params["w_fc1"][l], params["b_fc1"][l][None, :]], axis=0))
        mlp_blocks.append(jnp.concatenate(
            [params["w_fc2"][l].T, jnp.zeros((1, HIDDEN), f32)], axis=0))
    w_mlp = jnp.stack(mlp_blocks, axis=0).astype(bf16)

    # misc bf16 weights: patch embedding + output projection (lane-padded)
    proj_pad = jnp.pad(params["proj"], ((0, 0), (0, WIDTH - OUT_DIM)))
    misc = jnp.concatenate([params["w_patch"], proj_pad], axis=0).astype(bf16)
    assert misc.shape == (N_MISC, WIDTH)

    # fold the value-projection bias into the attention output bias
    b_v = b_qkv[:, 2 * WIDTH:]                                # (L, W)
    b_ao_eff = b_ao + jnp.einsum("lw,lwo->lo", b_v, w_ao)

    # f32 small parameters (pos / cls / LN / residual biases)
    small = jnp.concatenate([
        params["pos"][1:],                                    # 16 rows
        params["cls"] + params["pos"][0:1],                   # 1 row
        params["ln_pre_g"], params["ln_pre_b"],
        params["ln_post_g"], params["ln_post_b"],
        params["ln1_g"], params["ln1_b"],
        params["ln2_g"], params["ln2_b"],
        b_ao_eff, params["b_fc2"],
    ], axis=0).astype(f32)
    assert small.shape == (N_SMALL, WIDTH)

    # block-diagonal additive attention mask over the padded token slab:
    # real tokens of batch b share id b; pad rows get their own id per batch
    # (they attend only among themselves, so no NaN and no contamination).
    ids = []
    for b in range(BATCH_CHUNK):
        ids += [b] * SEQ + [BATCH_CHUNK + b] * (SEQ_PAD - SEQ)
    ids = jnp.asarray(ids, jnp.int32)
    mask = jnp.where(ids[:, None] == ids[None, :], 0.0, -1e30).astype(f32)

    return w_heads, w_mlp, misc, small, mask


def vision_transformer_forward(x_nchw, params):
    """x_nchw: [B, 3, RES, RES] float32 (PyTorch NCHW convention)."""
    B = x_nchw.shape[0]
    assert B == BATCH and B % BATCH_CHUNK == 0
    n_side = RES // PATCH
    # patch extraction: [B, 3, R, R] -> [B*N, 3*p*p] with (cin, ki, kj)
    # flattened row-major — matches conv1.weight.reshape(width, 3*p*p).
    patches = x_nchw.reshape(B, 3, n_side, PATCH, n_side, PATCH)
    patches = patches.transpose(0, 2, 4, 1, 3, 5).reshape(B * N_PATCH, D_PATCH)
    patches = patches.astype(jnp.bfloat16)

    w_heads, w_mlp, misc, small, mask = pack_params(params)

    in_arrays = [patches, w_heads, w_mlp, misc, small, mask]
    in_specs = [pl.BlockSpec((BATCH_CHUNK * N_PATCH, D_PATCH), lambda g: (g, 0))]
    in_specs += [_full_spec(a.shape) for a in in_arrays[1:]]

    out = pl.pallas_call(
        vit_kernel,
        grid=(NUM_PROGRAMS,),
        in_specs=in_specs,
        out_specs=pl.BlockSpec((BATCH_CHUNK, OUT_DIM), lambda g: (g, 0)),
        out_shape=jax.ShapeDtypeStruct((B, OUT_DIM), jnp.float32),
        scratch_shapes=[pltpu.VMEM((TOK, WIDTH), jnp.float32)],   # token slab
        compiler_params=pltpu.CompilerParams(
            dimension_semantics=("parallel",)),
    )(*in_arrays)
    return out                                                    # [B, OUT_DIM]


# --------------------------- deterministic init -------------------------------
def init_params(key):
    scale = WIDTH ** (-0.5)
    keys = jax.random.split(key, 8)
    normal = jax.random.normal

    def stack_normal(k, shape, std):
        return (std * normal(k, (LAYERS,) + shape)).astype(jnp.float32)

    return {
        # conv1 weight [width, 3, p, p] -> matmul form [3*p*p, width]
        "w_patch": (0.02 * normal(keys[0], (D_PATCH, WIDTH))).astype(jnp.float32),
        "cls": (scale * normal(keys[1], (1, WIDTH))).astype(jnp.float32),
        "pos": (scale * normal(keys[2], (SEQ, WIDTH))).astype(jnp.float32),
        "ln_pre_g": jnp.ones((1, WIDTH), jnp.float32),
        "ln_pre_b": jnp.zeros((1, WIDTH), jnp.float32),
        "ln1_g": jnp.ones((LAYERS, WIDTH), jnp.float32),
        "ln1_b": jnp.zeros((LAYERS, WIDTH), jnp.float32),
        "w_qkv": stack_normal(keys[3], (WIDTH, 3 * WIDTH), scale),
        "b_qkv": jnp.zeros((LAYERS, 3 * WIDTH), jnp.float32),
        "w_ao": stack_normal(keys[4], (WIDTH, WIDTH), scale),
        "b_ao": jnp.zeros((LAYERS, WIDTH), jnp.float32),
        "ln2_g": jnp.ones((LAYERS, WIDTH), jnp.float32),
        "ln2_b": jnp.zeros((LAYERS, WIDTH), jnp.float32),
        "w_fc1": stack_normal(keys[5], (WIDTH, 4 * WIDTH), scale),
        "b_fc1": jnp.zeros((LAYERS, 4 * WIDTH), jnp.float32),
        "w_fc2": stack_normal(keys[6], (4 * WIDTH, WIDTH), scale),
        "b_fc2": jnp.zeros((LAYERS, WIDTH), jnp.float32),
        "ln_post_g": jnp.ones((1, WIDTH), jnp.float32),
        "ln_post_b": jnp.zeros((1, WIDTH), jnp.float32),
        "proj": (scale * normal(keys[7], (WIDTH, OUT_DIM))).astype(jnp.float32),
    }


if __name__ == "__main__":
    key = jax.random.PRNGKey(0)
    k_x, k_p = jax.random.split(key)
    x = jax.random.normal(k_x, (BATCH, 3, RES, RES), dtype=jnp.float32)
    params = init_params(k_p)

    out = vision_transformer_forward(x, params)
    out = jax.block_until_ready(out)
    assert out.shape == (BATCH, OUT_DIM)
    # NOTE: bf16 matmul operands + pl.reciprocal(approx=True) give ~1e-3 rel
    # error vs. an f32 PyTorch reference; acceptable for inference.
    assert bool(jnp.all(jnp.isfinite(out)))
    print("KERNEL_OK")
</pallas_src>

<mosaic_0001>
module attributes {stable_mosaic.version = 11 : i64} {
  func.func @vit_kernel(%arg0: i32, %arg1: memref<32x48xbf16, #tpu.memory_space<vmem>>, %arg2: memref<32x33x8xbf16, #tpu.memory_space<vmem>>, %arg3: memref<4x33x128xbf16, #tpu.memory_space<vmem>>, %arg4: memref<80x32xbf16, #tpu.memory_space<vmem>>, %arg5: memref<33x32xf32, #tpu.memory_space<vmem>>, %arg6: memref<48x48xf32, #tpu.memory_space<vmem>>, %arg7: memref<2x16xf32, #tpu.memory_space<vmem>>, %arg8: memref<48x32xf32, #tpu.memory_space<vmem>>) attributes {dimension_semantics = [#tpu.dimension_semantics<parallel>], iteration_bounds = array<i64: 1>, scalar_prefetch = 0 : i64, scratch_operands = 1 : i64, tpu.core_type = #tpu.core_type<tc>, window_params = [{transform_indices = @transform_0, window_bounds = array<i64: 32, 48>}, {pipeline_mode = #tpu.pipeline_mode<synchronous>, transform_indices = @transform_1, window_bounds = array<i64: 32, 33, 8>}, {pipeline_mode = #tpu.pipeline_mode<synchronous>, transform_indices = @transform_2, window_bounds = array<i64: 4, 33, 128>}, {pipeline_mode = #tpu.pipeline_mode<synchronous>, transform_indices = @transform_3, window_bounds = array<i64: 80, 32>}, {pipeline_mode = #tpu.pipeline_mode<synchronous>, transform_indices = @transform_4, window_bounds = array<i64: 33, 32>}, {pipeline_mode = #tpu.pipeline_mode<synchronous>, transform_indices = @transform_5, window_bounds = array<i64: 48, 48>}, {transform_indices = @transform_6, window_bounds = array<i64: 2, 16>}]} {
    %c0 = arith.constant 0 : index
    %c0_0 = arith.constant 0 : index
    %0 = vector.load %arg4[%c0, %c0_0] : memref<80x32xbf16, #tpu.memory_space<vmem>>, vector<48x32xbf16>
    %c0_1 = arith.constant 0 : index
    %c0_2 = arith.constant 0 : index
    %1 = vector.load %arg1[%c0_1, %c0_2] : memref<32x48xbf16, #tpu.memory_space<vmem>>, vector<32x48xbf16>
    %cst = arith.constant dense<0.000000e+00> : vector<32x32xf32>
    %2 = tpu.matmul %1, %0, %cst {dimension_numbers = #tpu.dot_dimension_numbers<[1], [0], [0], [1], [0, 0, 1, 1], [], []>} : vector<32x48xbf16>, vector<48x32xbf16>, vector<32x32xf32> -> vector<32x32xf32>
    %c0_3 = arith.constant 0 : index
    %c0_4 = arith.constant 0 : index
    %3 = vector.load %arg5[%c0_3, %c0_4] : memref<33x32xf32, #tpu.memory_space<vmem>>, vector<16x32xf32>
    %c16 = arith.constant 16 : index
    %c0_5 = arith.constant 0 : index
    %4 = vector.load %arg5[%c16, %c0_5] : memref<33x32xf32, #tpu.memory_space<vmem>>, vector<1x32xf32>
    %cst_6 = arith.constant 0.000000e+00 : f32
    %5 = vector.broadcast %cst_6 : f32 to vector<48x32xf32>
    %c0_7 = arith.constant 0 : index
    %c0_8 = arith.constant 0 : index
    %6 = vector.load %arg8[%c0_7, %c0_8] : memref<48x32xf32, #tpu.memory_space<vmem>>, vector<48x32xf32>
    tpu.vector_store %arg8[%c0_7, %c0_8], %5 {strides = array<i32>} : memref<48x32xf32, #tpu.memory_space<vmem>>, vector<48x32xf32>,
    %7 = vector.extract_strided_slice %2 {offsets = [0, 0], sizes = [16, 32], strides = [1, 1]} : vector<32x32xf32> to vector<16x32xf32>
    %8 = arith.addf %7, %3 : vector<16x32xf32>
    %c0_9 = arith.constant 0 : index
    %c0_10 = arith.constant 0 : index
    %9 = vector.load %arg8[%c0_9, %c0_10] : memref<48x32xf32, #tpu.memory_space<vmem>>, vector<16x32xf32>
    tpu.vector_store %arg8[%c0_9, %c0_10], %8 {strides = array<i32>} : memref<48x32xf32, #tpu.memory_space<vmem>>, vector<16x32xf32>,
    %c16_11 = arith.constant 16 : index
    %c0_12 = arith.constant 0 : index
    %10 = vector.load %arg8[%c16_11, %c0_12] : memref<48x32xf32, #tpu.memory_space<vmem>>, vector<1x32xf32>
    tpu.vector_store %arg8[%c16_11, %c0_12], %4 {strides = array<i32>} : memref<48x32xf32, #tpu.memory_space<vmem>>, vector<1x32xf32>,
    %11 = vector.extract_strided_slice %2 {offsets = [16, 0], sizes = [16, 32], strides = [1, 1]} : vector<32x32xf32> to vector<16x32xf32>
    %12 = arith.addf %11, %3 : vector<16x32xf32>
    %c24 = arith.constant 24 : index
    %c0_13 = arith.constant 0 : index
    %13 = vector.load %arg8[%c24, %c0_13] : memref<48x32xf32, #tpu.memory_space<vmem>>, vector<16x32xf32>
    tpu.vector_store %arg8[%c24, %c0_13], %12 {strides = array<i32>} : memref<48x32xf32, #tpu.memory_space<vmem>>, vector<16x32xf32>,
    %c40 = arith.constant 40 : index
    %c0_14 = arith.constant 0 : index
    %14 = vector.load %arg8[%c40, %c0_14] : memref<48x32xf32, #tpu.memory_space<vmem>>, vector<1x32xf32>
    tpu.vector_store %arg8[%c40, %c0_14], %4 {strides = array<i32>} : memref<48x32xf32, #tpu.memory_space<vmem>>, vector<1x32xf32>,
    %c0_15 = arith.constant 0 : index
    %c0_16 = arith.constant 0 : index
    %15 = vector.load %arg8[%c0_15, %c0_16] : memref<48x32xf32, #tpu.memory_space<vmem>>, vector<48x32xf32>
    %c17 = arith.constant 17 : index
    %c0_17 = arith.constant 0 : index
    %16 = vector.load %arg5[%c17, %c0_17] : memref<33x32xf32, #tpu.memory_space<vmem>>, vector<1x32xf32>
    %c18 = arith.constant 18 : index
    %c0_18 = arith.constant 0 : index
    %17 = vector.load %arg5[%c18, %c0_18] : memref<33x32xf32, #tpu.memory_space<vmem>>, vector<1x32xf32>
    %cst_19 = arith.constant dense<0.000000e+00> : vector<48xf32>
    %18 = vector.multi_reduction <add>, %15, %cst_19 [1] : vector<48x32xf32> to vector<48xf32>
    %19 = vector.shape_cast %18 : vector<48xf32> to vector<48x1xf32>
    %cst_20 = arith.constant 3.200000e+01 : f32
    %20 = vector.broadcast %cst_20 : f32 to vector<48x1xf32>
    %21 = arith.divf %19, %20 : vector<48x1xf32>
    %22 = vector.broadcast %21 : vector<48x1xf32> to vector<48x32xf32>
    %23 = arith.subf %15, %22 : vector<48x32xf32>
    %24 = arith.mulf %23, %23 : vector<48x32xf32>
    %cst_21 = arith.constant dense<0.000000e+00> : vector<48xf32>
    %25 = vector.multi_reduction <add>, %24, %cst_21 [1] : vector<48x32xf32> to vector<48xf32>
    %26 = vector.shape_cast %25 : vector<48xf32> to vector<48x1xf32>
    %cst_22 = arith.constant 3.200000e+01 : f32
    %27 = vector.broadcast %cst_22 : f32 to vector<48x1xf32>
    %28 = arith.divf %26, %27 : vector<48x1xf32>
    %29 = vector.broadcast %21 : vector<48x1xf32> to vector<48x32xf32>
    %30 = arith.subf %15, %29 : vector<48x32xf32>
    %cst_23 = arith.constant 9.99999974E-6 : f32
    %31 = vector.broadcast %cst_23 : f32 to vector<48x1xf32>
    %32 = arith.addf %28, %31 : vector<48x1xf32>
    %33 = math.rsqrt %32 : vector<48x1xf32>
    %34 = vector.broadcast %33 : vector<48x1xf32> to vector<48x32xf32>
    %35 = arith.mulf %30, %34 : vector<48x32xf32>
    %36 = vector.broadcast %16 : vector<1x32xf32> to vector<48x32xf32>
    %37 = arith.mulf %35, %36 : vector<48x32xf32>
    %38 = vector.broadcast %17 : vector<1x32xf32> to vector<48x32xf32>
    %39 = arith.addf %37, %38 : vector<48x32xf32>
    %c0_24 = arith.constant 0 : index
    %c0_25 = arith.constant 0 : index
    %40 = vector.load %arg6[%c0_24, %c0_25] : memref<48x48xf32, #tpu.memory_space<vmem>>, vector<48x48xf32>
    %c21 = arith.constant 21 : index
    %c0_26 = arith.constant 0 : index
    %41 = vector.load %arg5[%c21, %c0_26] : memref<33x32xf32, #tpu.memory_space<vmem>>, vector<1x32xf32>
    %c23 = arith.constant 23 : index
    %c0_27 = arith.constant 0 : index
    %42 = vector.load %arg5[%c23, %c0_27] : memref<33x32xf32, #tpu.memory_space<vmem>>, vector<1x32xf32>
    %cst_28 = arith.constant dense<0.000000e+00> : vector<48xf32>
    %43 = vector.multi_reduction <add>, %39, %cst_28 [1] : vector<48x32xf32> to vector<48xf32>
    %44 = vector.shape_cast %43 : vector<48xf32> to vector<48x1xf32>
    %cst_29 = arith.constant 3.200000e+01 : f32
    %45 = vector.broadcast %cst_29 : f32 to vector<48x1xf32>
    %46 = arith.divf %44, %45 : vector<48x1xf32>
    %47 = vector.broadcast %46 : vector<48x1xf32> to vector<48x32xf32>
    %48 = arith.subf %39, %47 : vector<48x32xf32>
    %49 = arith.mulf %48, %48 : vector<48x32xf32>
    %cst_30 = arith.constant dense<0.000000e+00> : vector<48xf32>
    %50 = vector.multi_reduction <add>, %49, %cst_30 [1] : vector<48x32xf32> to vector<48xf32>
    %51 = vector.shape_cast %50 : vector<48xf32> to vector<48x1xf32>
    %cst_31 = arith.constant 3.200000e+01 : f32
    %52 = vector.broadcast %cst_31 : f32 to vector<48x1xf32>
    %53 = arith.divf %51, %52 : vector<48x1xf32>
    %54 = vector.broadcast %46 : vector<48x1xf32> to vector<48x32xf32>
    %55 = arith.subf %39, %54 : vector<48x32xf32>
    %cst_32 = arith.constant 9.99999974E-6 : f32
    %56 = vector.broadcast %cst_32 : f32 to vector<48x1xf32>
    %57 = arith.addf %53, %56 : vector<48x1xf32>
    %58 = math.rsqrt %57 : vector<48x1xf32>
    %59 = vector.broadcast %58 : vector<48x1xf32> to vector<48x32xf32>
    %60 = arith.mulf %55, %59 : vector<48x32xf32>
    %61 = vector.broadcast %41 : vector<1x32xf32> to vector<48x32xf32>
    %62 = arith.mulf %60, %61 : vector<48x32xf32>
    %63 = vector.broadcast %42 : vector<1x32xf32> to vector<48x32xf32>
    %64 = arith.addf %62, %63 : vector<48x32xf32>
    %65 = arith.truncf %64 : vector<48x32xf32> to vector<48x32xbf16>
    %c0_33 = arith.constant 0 : index
    %c0_34 = arith.constant 0 : index
    %c0_35 = arith.constant 0 : index
    %66 = vector.load %arg2[%c0_33, %c0_34, %c0_35] : memref<32x33x8xbf16, #tpu.memory_space<vmem>>, vector<1x33x8xbf16>
    %67 = vector.shape_cast %66 : vector<1x33x8xbf16> to vector<33x8xbf16>
    %c1 = arith.constant 1 : index
    %c0_36 = arith.constant 0 : index
    %c0_37 = arith.constant 0 : index
    %68 = vector.load %arg2[%c1, %c0_36, %c0_37] : memref<32x33x8xbf16, #tpu.memory_space<vmem>>, vector<1x33x8xbf16>
    %69 = vector.shape_cast %68 : vector<1x33x8xbf16> to vector<33x8xbf16>
    %c2 = arith.constant 2 : index
    %c0_38 = arith.constant 0 : index
    %c0_39 = arith.constant 0 : index
    %70 = vector.load %arg2[%c2, %c0_38, %c0_39] : memref<32x33x8xbf16, #tpu.memory_space<vmem>>, vector<1x33x8xbf16>
    %71 = vector.shape_cast %70 : vector<1x33x8xbf16> to vector<33x8xbf16>
    %c3 = arith.constant 3 : index
    %c0_40 = arith.constant 0 : index
    %c0_41 = arith.constant 0 : index
    %72 = vector.load %arg2[%c3, %c0_40, %c0_41] : memref<32x33x8xbf16, #tpu.memory_space<vmem>>, vector<1x33x8xbf16>
    %73 = vector.shape_cast %72 : vector<1x33x8xbf16> to vector<33x8xbf16>
    %74 = vector.extract_strided_slice %67 {offsets = [0, 0], sizes = [32, 8], strides = [1, 1]} : vector<33x8xbf16> to vector<32x8xbf16>
    %cst_42 = arith.constant dense<0.000000e+00> : vector<48x8xf32>
    %75 = tpu.matmul %65, %74, %cst_42 {dimension_numbers = #tpu.dot_dimension_numbers<[1], [0], [0], [1], [0, 0, 1, 1], [], []>} : vector<48x32xbf16>, vector<32x8xbf16>, vector<48x8xf32> -> vector<48x8xf32>
    %76 = vector.extract_strided_slice %67 {offsets = [32, 0], sizes = [1, 8], strides = [1, 1]} : vector<33x8xbf16> to vector<1x8xbf16>
    %77 = arith.extf %76 : vector<1x8xbf16> to vector<1x8xf32>
    %78 = vector.broadcast %77 : vector<1x8xf32> to vector<48x8xf32>
    %79 = arith.addf %75, %78 : vector<48x8xf32>
    %80 = vector.extract_strided_slice %69 {offsets = [0, 0], sizes = [32, 8], strides = [1, 1]} : vector<33x8xbf16> to vector<32x8xbf16>
    %cst_43 = arith.constant dense<0.000000e+00> : vector<48x8xf32>
    %81 = tpu.matmul %65, %80, %cst_43 {dimension_numbers = #tpu.dot_dimension_numbers<[1], [0], [0], [1], [0, 0, 1, 1], [], []>} : vector<48x32xbf16>, vector<32x8xbf16>, vector<48x8xf32> -> vector<48x8xf32>
    %82 = vector.extract_strided_slice %71 {offsets = [0, 0], sizes = [32, 8], strides = [1, 1]} : vector<33x8xbf16> to vector<32x8xbf16>
    %cst_44 = arith.constant dense<0.000000e+00> : vector<48x8xf32>
    %83 = tpu.matmul %65, %82, %cst_44 {dimension_numbers = #tpu.dot_dimension_numbers<[1], [0], [0], [1], [0, 0, 1, 1], [], []>} : vector<48x32xbf16>, vector<32x8xbf16>, vector<48x8xf32> -> vector<48x8xf32>
    %cst_45 = arith.constant dense<0.000000e+00> : vector<48x48xf32>
    %84 = tpu.matmul %79, %81, %cst_45 {dimension_numbers = #tpu.dot_dimension_numbers<[1], [1], [0], [0], [0, 0, 1, 0], [], []>} : vector<48x8xf32>, vector<48x8xf32>, vector<48x48xf32> -> vector<48x48xf32>
    %85 = arith.addf %84, %40 : vector<48x48xf32>
    %cst_46 = arith.constant dense<0xFF800000> : vector<48xf32>
    %86 = vector.multi_reduction <maximumf>, %85, %cst_46 [1] : vector<48x48xf32> to vector<48xf32>
    %87 = vector.shape_cast %86 : vector<48xf32> to vector<48x1xf32>
    %88 = vector.broadcast %87 : vector<48x1xf32> to vector<48x48xf32>
    %89 = arith.subf %85, %88 : vector<48x48xf32>
    %90 = math.exp %89 : vector<48x48xf32>
    %cst_47 = arith.constant dense<0.000000e+00> : vector<48xf32>
    %91 = vector.multi_reduction <add>, %90, %cst_47 [1] : vector<48x48xf32> to vector<48xf32>
    %92 = vector.shape_cast %91 : vector<48xf32> to vector<48x1xf32>
    %93 = tpu.reciprocal %92 {approx = true} : vector<48x1xf32> -> vector<48x1xf32>
    %94 = vector.broadcast %93 : vector<48x1xf32> to vector<48x48xf32>
    %95 = arith.mulf %90, %94 : vector<48x48xf32>
    %96 = arith.truncf %95 : vector<48x48xf32> to vector<48x48xbf16>
    %97 = arith.truncf %83 : vector<48x8xf32> to vector<48x8xbf16>
    %cst_48 = arith.constant dense<0.000000e+00> : vector<48x8xf32>
    %98 = tpu.matmul %96, %97, %cst_48 {dimension_numbers = #tpu.dot_dimension_numbers<[1], [0], [0], [1], [0, 0, 1, 1], [], []>} : vector<48x48xbf16>, vector<48x8xbf16>, vector<48x8xf32> -> vector<48x8xf32>
    %99 = arith.truncf %98 : vector<48x8xf32> to vector<48x8xbf16>
    %100 = vector.extract_strided_slice %73 {offsets = [0, 0], sizes = [32, 8], strides = [1, 1]} : vector<33x8xbf16> to vector<32x8xbf16>
    %cst_49 = arith.constant dense<0.000000e+00> : vector<48x32xf32>
    %101 = tpu.matmul %99, %100, %cst_49 {dimension_numbers = #tpu.dot_dimension_numbers<[1], [1], [0], [0], [0, 0, 1, 0], [], []>} : vector<48x8xbf16>, vector<32x8xbf16>, vector<48x32xf32> -> vector<48x32xf32>
    %c4 = arith.constant 4 : index
    %c0_50 = arith.constant 0 : index
    %c0_51 = arith.constant 0 : index
    %102 = vector.load %arg2[%c4, %c0_50, %c0_51] : memref<32x33x8xbf16, #tpu.memory_space<vmem>>, vector<1x33x8xbf16>
    %103 = vector.shape_cast %102 : vector<1x33x8xbf16> to vector<33x8xbf16>
    %c5 = arith.constant 5 : index
    %c0_52 = arith.constant 0 : index
    %c0_53 = arith.constant 0 : index
    %104 = vector.load %arg2[%c5, %c0_52, %c0_53] : memref<32x33x8xbf16, #tpu.memory_space<vmem>>, vector<1x33x8xbf16>
    %105 = vector.shape_cast %104 : vector<1x33x8xbf16> to vector<33x8xbf16>
    %c6 = arith.constant 6 : index
    %c0_54 = arith.constant 0 : index
    %c0_55 = arith.constant 0 : index
    %106 = vector.load %arg2[%c6, %c0_54, %c0_55] : memref<32x33x8xbf16, #tpu.memory_space<vmem>>, vector<1x33x8xbf16>
    %107 = vector.shape_cast %106 : vector<1x33x8xbf16> to vector<33x8xbf16>
    %c7 = arith.constant 7 : index
    %c0_56 = arith.constant 0 : index
    %c0_57 = arith.constant 0 : index
    %108 = vector.load %arg2[%c7, %c0_56, %c0_57] : memref<32x33x8xbf16, #tpu.memory_space<vmem>>, vector<1x33x8xbf16>
    %109 = vector.shape_cast %108 : vector<1x33x8xbf16> to vector<33x8xbf16>
    %110 = vector.extract_strided_slice %103 {offsets = [0, 0], sizes = [32, 8], strides = [1, 1]} : vector<33x8xbf16> to vector<32x8xbf16>
    %cst_58 = arith.constant dense<0.000000e+00> : vector<48x8xf32>
    %111 = tpu.matmul %65, %110, %cst_58 {dimension_numbers = #tpu.dot_dimension_numbers<[1], [0], [0], [1], [0, 0, 1, 1], [], []>} : vector<48x32xbf16>, vector<32x8xbf16>, vector<48x8xf32> -> vector<48x8xf32>
    %112 = vector.extract_strided_slice %103 {offsets = [32, 0], sizes = [1, 8], strides = [1, 1]} : vector<33x8xbf16> to vector<1x8xbf16>
    %113 = arith.extf %112 : vector<1x8xbf16> to vector<1x8xf32>
    %114 = vector.broadcast %113 : vector<1x8xf32> to vector<48x8xf32>
    %115 = arith.addf %111, %114 : vector<48x8xf32>
    %116 = vector.extract_strided_slice %105 {offsets = [0, 0], sizes = [32, 8], strides = [1, 1]} : vector<33x8xbf16> to vector<32x8xbf16>
    %cst_59 = arith.constant dense<0.000000e+00> : vector<48x8xf32>
    %117 = tpu.matmul %65, %116, %cst_59 {dimension_numbers = #tpu.dot_dimension_numbers<[1], [0], [0], [1], [0, 0, 1, 1], [], []>} : vector<48x32xbf16>, vector<32x8xbf16>, vector<48x8xf32> -> vector<48x8xf32>
    %118 = vector.extract_strided_slice %107 {offsets = [0, 0], sizes = [32, 8], strides = [1, 1]} : vector<33x8xbf16> to vector<32x8xbf16>
    %cst_60 = arith.constant dense<0.000000e+00> : vector<48x8xf32>
    %119 = tpu.matmul %65, %118, %cst_60 {dimension_numbers = #tpu.dot_dimension_numbers<[1], [0], [0], [1], [0, 0, 1, 1], [], []>} : vector<48x32xbf16>, vector<32x8xbf16>, vector<48x8xf32> -> vector<48x8xf32>
    %cst_61 = arith.constant dense<0.000000e+00> : vector<48x48xf32>
    %120 = tpu.matmul %115, %117, %cst_61 {dimension_numbers = #tpu.dot_dimension_numbers<[1], [1], [0], [0], [0, 0, 1, 0], [], []>} : vector<48x8xf32>, vector<48x8xf32>, vector<48x48xf32> -> vector<48x48xf32>
    %121 = arith.addf %120, %40 : vector<48x48xf32>
    %cst_62 = arith.constant dense<0xFF800000> : vector<48xf32>
    %122 = vector.multi_reduction <maximumf>, %121, %cst_62 [1] : vector<48x48xf32> to vector<48xf32>
    %123 = vector.shape_cast %122 : vector<48xf32> to vector<48x1xf32>
    %124 = vector.broadcast %123 : vector<48x1xf32> to vector<48x48xf32>
    %125 = arith.subf %121, %124 : vector<48x48xf32>
    %126 = math.exp %125 : vector<48x48xf32>
    %cst_63 = arith.constant dense<0.000000e+00> : vector<48xf32>
    %127 = vector.multi_reduction <add>, %126, %cst_63 [1] : vector<48x48xf32> to vector<48xf32>
    %128 = vector.shape_cast %127 : vector<48xf32> to vector<48x1xf32>
    %129 = tpu.reciprocal %128 {approx = true} : vector<48x1xf32> -> vector<48x1xf32>
    %130 = vector.broadcast %129 : vector<48x1xf32> to vector<48x48xf32>
    %131 = arith.mulf %126, %130 : vector<48x48xf32>
    %132 = arith.truncf %131 : vector<48x48xf32> to vector<48x48xbf16>
    %133 = arith.truncf %119 : vector<48x8xf32> to vector<48x8xbf16>
    %cst_64 = arith.constant dense<0.000000e+00> : vector<48x8xf32>
    %134 = tpu.matmul %132, %133, %cst_64 {dimension_numbers = #tpu.dot_dimension_numbers<[1], [0], [0], [1], [0, 0, 1, 1], [], []>} : vector<48x48xbf16>, vector<48x8xbf16>, vector<48x8xf32> -> vector<48x8xf32>
    %135 = arith.truncf %134 : vector<48x8xf32> to vector<48x8xbf16>
    %136 = vector.extract_strided_slice %109 {offsets = [0, 0], sizes = [32, 8], strides = [1, 1]} : vector<33x8xbf16> to vector<32x8xbf16>
    %cst_65 = arith.constant dense<0.000000e+00> : vector<48x32xf32>
    %137 = tpu.matmul %135, %136, %cst_65 {dimension_numbers = #tpu.dot_dimension_numbers<[1], [1], [0], [0], [0, 0, 1, 0], [], []>} : vector<48x8xbf16>, vector<32x8xbf16>, vector<48x32xf32> -> vector<48x32xf32>
    %138 = arith.addf %101, %137 : vector<48x32xf32>
    %c8 = arith.constant 8 : index
    %c0_66 = arith.constant 0 : index
    %c0_67 = arith.constant 0 : index
    %139 = vector.load %arg2[%c8, %c0_66, %c0_67] : memref<32x33x8xbf16, #tpu.memory_space<vmem>>, vector<1x33x8xbf16>
    %140 = vector.shape_cast %139 : vector<1x33x8xbf16> to vector<33x8xbf16>
    %c9 = arith.constant 9 : index
    %c0_68 = arith.constant 0 : index
    %c0_69 = arith.constant 0 : index
    %141 = vector.load %arg2[%c9, %c0_68, %c0_69] : memref<32x33x8xbf16, #tpu.memory_space<vmem>>, vector<1x33x8xbf16>
    %142 = vector.shape_cast %141 : vector<1x33x8xbf16> to vector<33x8xbf16>
    %c10 = arith.constant 10 : index
    %c0_70 = arith.constant 0 : index
    %c0_71 = arith.constant 0 : index
    %143 = vector.load %arg2[%c10, %c0_70, %c0_71] : memref<32x33x8xbf16, #tpu.memory_space<vmem>>, vector<1x33x8xbf16>
    %144 = vector.shape_cast %143 : vector<1x33x8xbf16> to vector<33x8xbf16>
    %c11 = arith.constant 11 : index
    %c0_72 = arith.constant 0 : index
    %c0_73 = arith.constant 0 : index
    %145 = vector.load %arg2[%c11, %c0_72, %c0_73] : memref<32x33x8xbf16, #tpu.memory_space<vmem>>, vector<1x33x8xbf16>
    %146 = vector.shape_cast %145 : vector<1x33x8xbf16> to vector<33x8xbf16>
    %147 = vector.extract_strided_slice %140 {offsets = [0, 0], sizes = [32, 8], strides = [1, 1]} : vector<33x8xbf16> to vector<32x8xbf16>
    %cst_74 = arith.constant dense<0.000000e+00> : vector<48x8xf32>
    %148 = tpu.matmul %65, %147, %cst_74 {dimension_numbers = #tpu.dot_dimension_numbers<[1], [0], [0], [1], [0, 0, 1, 1], [], []>} : vector<48x32xbf16>, vector<32x8xbf16>, vector<48x8xf32> -> vector<48x8xf32>
    %149 = vector.extract_strided_slice %140 {offsets = [32, 0], sizes = [1, 8], strides = [1, 1]} : vector<33x8xbf16> to vector<1x8xbf16>
    %150 = arith.extf %149 : vector<1x8xbf16> to vector<1x8xf32>
    %151 = vector.broadcast %150 : vector<1x8xf32> to vector<48x8xf32>
    %152 = arith.addf %148, %151 : vector<48x8xf32>
    %153 = vector.extract_strided_slice %142 {offsets = [0, 0], sizes = [32, 8], strides = [1, 1]} : vector<33x8xbf16> to vector<32x8xbf16>
    %cst_75 = arith.constant dense<0.000000e+00> : vector<48x8xf32>
    %154 = tpu.matmul %65, %153, %cst_75 {dimension_numbers = #tpu.dot_dimension_numbers<[1], [0], [0], [1], [0, 0, 1, 1], [], []>} : vector<48x32xbf16>, vector<32x8xbf16>, vector<48x8xf32> -> vector<48x8xf32>
    %155 = vector.extract_strided_slice %144 {offsets = [0, 0], sizes = [32, 8], strides = [1, 1]} : vector<33x8xbf16> to vector<32x8xbf16>
    %cst_76 = arith.constant dense<0.000000e+00> : vector<48x8xf32>
    %156 = tpu.matmul %65, %155, %cst_76 {dimension_numbers = #tpu.dot_dimension_numbers<[1], [0], [0], [1], [0, 0, 1, 1], [], []>} : vector<48x32xbf16>, vector<32x8xbf16>, vector<48x8xf32> -> vector<48x8xf32>
    %cst_77 = arith.constant dense<0.000000e+00> : vector<48x48xf32>
    %157 = tpu.matmul %152, %154, %cst_77 {dimension_numbers = #tpu.dot_dimension_numbers<[1], [1], [0], [0], [0, 0, 1, 0], [], []>} : vector<48x8xf32>, vector<48x8xf32>, vector<48x48xf32> -> vector<48x48xf32>
    %158 = arith.addf %157, %40 : vector<48x48xf32>
    %cst_78 = arith.constant dense<0xFF800000> : vector<48xf32>
    %159 = vector.multi_reduction <maximumf>, %158, %cst_78 [1] : vector<48x48xf32> to vector<48xf32>
    %160 = vector.shape_cast %159 : vector<48xf32> to vector<48x1xf32>
    %161 = vector.broadcast %160 : vector<48x1xf32> to vector<48x48xf32>
    %162 = arith.subf %158, %161 : vector<48x48xf32>
    %163 = math.exp %162 : vector<48x48xf32>
    %cst_79 = arith.constant dense<0.000000e+00> : vector<48xf32>
    %164 = vector.multi_reduction <add>, %163, %cst_79 [1] : vector<48x48xf32> to vector<48xf32>
    %165 = vector.shape_cast %164 : vector<48xf32> to vector<48x1xf32>
    %166 = tpu.reciprocal %165 {approx = true} : vector<48x1xf32> -> vector<48x1xf32>
    %167 = vector.broadcast %166 : vector<48x1xf32> to vector<48x48xf32>
    %168 = arith.mulf %163, %167 : vector<48x48xf32>
    %169 = arith.truncf %168 : vector<48x48xf32> to vector<48x48xbf16>
    %170 = arith.truncf %156 : vector<48x8xf32> to vector<48x8xbf16>
    %cst_80 = arith.constant dense<0.000000e+00> : vector<48x8xf32>
    %171 = tpu.matmul %169, %170, %cst_80 {dimension_numbers = #tpu.dot_dimension_numbers<[1], [0], [0], [1], [0, 0, 1, 1], [], []>} : vector<48x48xbf16>, vector<48x8xbf16>, vector<48x8xf32> -> vector<48x8xf32>
    %172 = arith.truncf %171 : vector<48x8xf32> to vector<48x8xbf16>
    %173 = vector.extract_strided_slice %146 {offsets = [0, 0], sizes = [32, 8], strides = [1, 1]} : vector<33x8xbf16> to vector<32x8xbf16>
    %cst_81 = arith.constant dense<0.000000e+00> : vector<48x32xf32>
    %174 = tpu.matmul %172, %173, %cst_81 {dimension_numbers = #tpu.dot_dimension_numbers<[1], [1], [0], [0], [0, 0, 1, 0], [], []>} : vector<48x8xbf16>, vector<32x8xbf16>, vector<48x32xf32> -> vector<48x32xf32>
    %175 = arith.addf %138, %174 : vector<48x32xf32>
    %c12 = arith.constant 12 : index
    %c0_82 = arith.constant 0 : index
    %c0_83 = arith.constant 0 : index
    %176 = vector.load %arg2[%c12, %c0_82, %c0_83] : memref<32x33x8xbf16, #tpu.memory_space<vmem>>, vector<1x33x8xbf16>
    %177 = vector.shape_cast %176 : vector<1x33x8xbf16> to vector<33x8xbf16>
    %c13 = arith.constant 13 : index
    %c0_84 = arith.constant 0 : index
    %c0_85 = arith.constant 0 : index
    %178 = vector.load %arg2[%c13, %c0_84, %c0_85] : memref<32x33x8xbf16, #tpu.memory_space<vmem>>, vector<1x33x8xbf16>
    %179 = vector.shape_cast %178 : vector<1x33x8xbf16> to vector<33x8xbf16>
    %c14 = arith.constant 14 : index
    %c0_86 = arith.constant 0 : index
    %c0_87 = arith.constant 0 : index
    %180 = vector.load %arg2[%c14, %c0_86, %c0_87] : memref<32x33x8xbf16, #tpu.memory_space<vmem>>, vector<1x33x8xbf16>
    %181 = vector.shape_cast %180 : vector<1x33x8xbf16> to vector<33x8xbf16>
    %c15 = arith.constant 15 : index
    %c0_88 = arith.constant 0 : index
    %c0_89 = arith.constant 0 : index
    %182 = vector.load %arg2[%c15, %c0_88, %c0_89] : memref<32x33x8xbf16, #tpu.memory_space<vmem>>, vector<1x33x8xbf16>
    %183 = vector.shape_cast %182 : vector<1x33x8xbf16> to vector<33x8xbf16>
    %184 = vector.extract_strided_slice %177 {offsets = [0, 0], sizes = [32, 8], strides = [1, 1]} : vector<33x8xbf16> to vector<32x8xbf16>
    %cst_90 = arith.constant dense<0.000000e+00> : vector<48x8xf32>
    %185 = tpu.matmul %65, %184, %cst_90 {dimension_numbers = #tpu.dot_dimension_numbers<[1], [0], [0], [1], [0, 0, 1, 1], [], []>} : vector<48x32xbf16>, vector<32x8xbf16>, vector<48x8xf32> -> vector<48x8xf32>
    %186 = vector.extract_strided_slice %177 {offsets = [32, 0], sizes = [1, 8], strides = [1, 1]} : vector<33x8xbf16> to vector<1x8xbf16>
    %187 = arith.extf %186 : vector<1x8xbf16> to vector<1x8xf32>
    %188 = vector.broadcast %187 : vector<1x8xf32> to vector<48x8xf32>
    %189 = arith.addf %185, %188 : vector<48x8xf32>
    %190 = vector.extract_strided_slice %179 {offsets = [0, 0], sizes = [32, 8], strides = [1, 1]} : vector<33x8xbf16> to vector<32x8xbf16>
    %cst_91 = arith.constant dense<0.000000e+00> : vector<48x8xf32>
    %191 = tpu.matmul %65, %190, %cst_91 {dimension_numbers = #tpu.dot_dimension_numbers<[1], [0], [0], [1], [0, 0, 1, 1], [], []>} : vector<48x32xbf16>, vector<32x8xbf16>, vector<48x8xf32> -> vector<48x8xf32>
    %192 = vector.extract_strided_slice %181 {offsets = [0, 0], sizes = [32, 8], strides = [1, 1]} : vector<33x8xbf16> to vector<32x8xbf16>
    %cst_92 = arith.constant dense<0.000000e+00> : vector<48x8xf32>
    %193 = tpu.matmul %65, %192, %cst_92 {dimension_numbers = #tpu.dot_dimension_numbers<[1], [0], [0], [1], [0, 0, 1, 1], [], []>} : vector<48x32xbf16>, vector<32x8xbf16>, vector<48x8xf32> -> vector<48x8xf32>
    %cst_93 = arith.constant dense<0.000000e+00> : vector<48x48xf32>
    %194 = tpu.matmul %189, %191, %cst_93 {dimension_numbers = #tpu.dot_dimension_numbers<[1], [1], [0], [0], [0, 0, 1, 0], [], []>} : vector<48x8xf32>, vector<48x8xf32>, vector<48x48xf32> -> vector<48x48xf32>
    %195 = arith.addf %194, %40 : vector<48x48xf32>
    %cst_94 = arith.constant dense<0xFF800000> : vector<48xf32>
    %196 = vector.multi_reduction <maximumf>, %195, %cst_94 [1] : vector<48x48xf32> to vector<48xf32>
    %197 = vector.shape_cast %196 : vector<48xf32> to vector<48x1xf32>
    %198 = vector.broadcast %197 : vector<48x1xf32> to vector<48x48xf32>
    %199 = arith.subf %195, %198 : vector<48x48xf32>
    %200 = math.exp %199 : vector<48x48xf32>
    %cst_95 = arith.constant dense<0.000000e+00> : vector<48xf32>
    %201 = vector.multi_reduction <add>, %200, %cst_95 [1] : vector<48x48xf32> to vector<48xf32>
    %202 = vector.shape_cast %201 : vector<48xf32> to vector<48x1xf32>
    %203 = tpu.reciprocal %202 {approx = true} : vector<48x1xf32> -> vector<48x1xf32>
    %204 = vector.broadcast %203 : vector<48x1xf32> to vector<48x48xf32>
    %205 = arith.mulf %200, %204 : vector<48x48xf32>
    %206 = arith.truncf %205 : vector<48x48xf32> to vector<48x48xbf16>
    %207 = arith.truncf %193 : vector<48x8xf32> to vector<48x8xbf16>
    %cst_96 = arith.constant dense<0.000000e+00> : vector<48x8xf32>
    %208 = tpu.matmul %206, %207, %cst_96 {dimension_numbers = #tpu.dot_dimension_numbers<[1], [0], [0], [1], [0, 0, 1, 1], [], []>} : vector<48x48xbf16>, vector<48x8xbf16>, vector<48x8xf32> -> vector<48x8xf32>
    %209 = arith.truncf %208 : vector<48x8xf32> to vector<48x8xbf16>
    %210 = vector.extract_strided_slice %183 {offsets = [0, 0], sizes = [32, 8], strides = [1, 1]} : vector<33x8xbf16> to vector<32x8xbf16>
    %cst_97 = arith.constant dense<0.000000e+00> : vector<48x32xf32>
    %211 = tpu.matmul %209, %210, %cst_97 {dimension_numbers = #tpu.dot_dimension_numbers<[1], [1], [0], [0], [0, 0, 1, 0], [], []>} : vector<48x8xbf16>, vector<32x8xbf16>, vector<48x32xf32> -> vector<48x32xf32>
    %212 = arith.addf %175, %211 : vector<48x32xf32>
    %c29 = arith.constant 29 : index
    %c0_98 = arith.constant 0 : index
    %213 = vector.load %arg5[%c29, %c0_98] : memref<33x32xf32, #tpu.memory_space<vmem>>, vector<1x32xf32>
    %214 = vector.broadcast %213 : vector<1x32xf32> to vector<48x32xf32>
    %215 = arith.addf %212, %214 : vector<48x32xf32>
    %216 = arith.addf %39, %215 : vector<48x32xf32>
    %c25 = arith.constant 25 : index
    %c0_99 = arith.constant 0 : index
    %217 = vector.load %arg5[%c25, %c0_99] : memref<33x32xf32, #tpu.memory_space<vmem>>, vector<1x32xf32>
    %c27 = arith.constant 27 : index
    %c0_100 = arith.constant 0 : index
    %218 = vector.load %arg5[%c27, %c0_100] : memref<33x32xf32, #tpu.memory_space<vmem>>, vector<1x32xf32>
    %cst_101 = arith.constant dense<0.000000e+00> : vector<48xf32>
    %219 = vector.multi_reduction <add>, %216, %cst_101 [1] : vector<48x32xf32> to vector<48xf32>
    %220 = vector.shape_cast %219 : vector<48xf32> to vector<48x1xf32>
    %cst_102 = arith.constant 3.200000e+01 : f32
    %221 = vector.broadcast %cst_102 : f32 to vector<48x1xf32>
    %222 = arith.divf %220, %221 : vector<48x1xf32>
    %223 = vector.broadcast %222 : vector<48x1xf32> to vector<48x32xf32>
    %224 = arith.subf %216, %223 : vector<48x32xf32>
    %225 = arith.mulf %224, %224 : vector<48x32xf32>
    %cst_103 = arith.constant dense<0.000000e+00> : vector<48xf32>
    %226 = vector.multi_reduction <add>, %225, %cst_103 [1] : vector<48x32xf32> to vector<48xf32>
    %227 = vector.shape_cast %226 : vector<48xf32> to vector<48x1xf32>
    %cst_104 = arith.constant 3.200000e+01 : f32
    %228 = vector.broadcast %cst_104 : f32 to vector<48x1xf32>
    %229 = arith.divf %227, %228 : vector<48x1xf32>
    %230 = vector.broadcast %222 : vector<48x1xf32> to vector<48x32xf32>
    %231 = arith.subf %216, %230 : vector<48x32xf32>
    %cst_105 = arith.constant 9.99999974E-6 : f32
    %232 = vector.broadcast %cst_105 : f32 to vector<48x1xf32>
    %233 = arith.addf %229, %232 : vector<48x1xf32>
    %234 = math.rsqrt %233 : vector<48x1xf32>
    %235 = vector.broadcast %234 : vector<48x1xf32> to vector<48x32xf32>
    %236 = arith.mulf %231, %235 : vector<48x32xf32>
    %237 = vector.broadcast %217 : vector<1x32xf32> to vector<48x32xf32>
    %238 = arith.mulf %236, %237 : vector<48x32xf32>
    %239 = vector.broadcast %218 : vector<1x32xf32> to vector<48x32xf32>
    %240 = arith.addf %238, %239 : vector<48x32xf32>
    %c0_106 = arith.constant 0 : index
    %c0_107 = arith.constant 0 : index
    %c0_108 = arith.constant 0 : index
    %241 = vector.load %arg3[%c0_106, %c0_107, %c0_108] : memref<4x33x128xbf16, #tpu.memory_space<vmem>>, vector<1x33x128xbf16>
    %242 = vector.shape_cast %241 : vector<1x33x128xbf16> to vector<33x128xbf16>
    %c1_109 = arith.constant 1 : index
    %c0_110 = arith.constant 0 : index
    %c0_111 = arith.constant 0 : index
    %243 = vector.load %arg3[%c1_109, %c0_110, %c0_111] : memref<4x33x128xbf16, #tpu.memory_space<vmem>>, vector<1x33x128xbf16>
    %244 = vector.shape_cast %243 : vector<1x33x128xbf16> to vector<33x128xbf16>
    %245 = arith.truncf %240 : vector<48x32xf32> to vector<48x32xbf16>
    %246 = vector.extract_strided_slice %242 {offsets = [0, 0], sizes = [32, 128], strides = [1, 1]} : vector<33x128xbf16> to vector<32x128xbf16>
    %cst_112 = arith.constant dense<0.000000e+00> : vector<48x128xf32>
    %247 = tpu.matmul %245, %246, %cst_112 {dimension_numbers = #tpu.dot_dimension_numbers<[1], [0], [0], [1], [0, 0, 1, 1], [], []>} : vector<48x32xbf16>, vector<32x128xbf16>, vector<48x128xf32> -> vector<48x128xf32>
    %248 = vector.extract_strided_slice %242 {offsets = [32, 0], sizes = [1, 128], strides = [1, 1]} : vector<33x128xbf16> to vector<1x128xbf16>
    %249 = arith.extf %248 : vector<1x128xbf16> to vector<1x128xf32>
    %250 = vector.broadcast %249 : vector<1x128xf32> to vector<48x128xf32>
    %251 = arith.addf %247, %250 : vector<48x128xf32>
    %cst_113 = arith.constant 1.702000e+00 : f32
    %252 = vector.broadcast %cst_113 : f32 to vector<48x128xf32>
    %253 = arith.mulf %252, %251 : vector<48x128xf32>
    %254 = arith.negf %253 : vector<48x128xf32>
    %255 = math.exp %254 : vector<48x128xf32>
    %cst_114 = arith.constant 1.000000e+00 : f32
    %256 = vector.broadcast %cst_114 : f32 to vector<48x128xf32>
    %257 = arith.addf %256, %255 : vector<48x128xf32>
    %258 = arith.divf %256, %257 : vector<48x128xf32>
    %259 = arith.mulf %251, %258 : vector<48x128xf32>
    %260 = arith.truncf %259 : vector<48x128xf32> to vector<48x128xbf16>
    %261 = vector.extract_strided_slice %244 {offsets = [0, 0], sizes = [32, 128], strides = [1, 1]} : vector<33x128xbf16> to vector<32x128xbf16>
    %cst_115 = arith.constant dense<0.000000e+00> : vector<48x32xf32>
    %262 = tpu.matmul %260, %261, %cst_115 {dimension_numbers = #tpu.dot_dimension_numbers<[1], [1], [0], [0], [0, 0, 1, 0], [], []>} : vector<48x128xbf16>, vector<32x128xbf16>, vector<48x32xf32> -> vector<48x32xf32>
    %c31 = arith.constant 31 : index
    %c0_116 = arith.constant 0 : index
    %263 = vector.load %arg5[%c31, %c0_116] : memref<33x32xf32, #tpu.memory_space<vmem>>, vector<1x32xf32>
    %264 = vector.broadcast %263 : vector<1x32xf32> to vector<48x32xf32>
    %265 = arith.addf %262, %264 : vector<48x32xf32>
    %266 = arith.addf %216, %265 : vector<48x32xf32>
    %c22 = arith.constant 22 : index
    %c0_117 = arith.constant 0 : index
    %267 = vector.load %arg5[%c22, %c0_117] : memref<33x32xf32, #tpu.memory_space<vmem>>, vector<1x32xf32>
    %c24_118 = arith.constant 24 : index
    %c0_119 = arith.constant 0 : index
    %268 = vector.load %arg5[%c24_118, %c0_119] : memref<33x32xf32, #tpu.memory_space<vmem>>, vector<1x32xf32>
    %cst_120 = arith.constant dense<0.000000e+00> : vector<48xf32>
    %269 = vector.multi_reduction <add>, %266, %cst_120 [1] : vector<48x32xf32> to vector<48xf32>
    %270 = vector.shape_cast %269 : vector<48xf32> to vector<48x1xf32>
    %cst_121 = arith.constant 3.200000e+01 : f32
    %271 = vector.broadcast %cst_121 : f32 to vector<48x1xf32>
    %272 = arith.divf %270, %271 : vector<48x1xf32>
    %273 = vector.broadcast %272 : vector<48x1xf32> to vector<48x32xf32>
    %274 = arith.subf %266, %273 : vector<48x32xf32>
    %275 = arith.mulf %274, %274 : vector<48x32xf32>
    %cst_122 = arith.constant dense<0.000000e+00> : vector<48xf32>
    %276 = vector.multi_reduction <add>, %275, %cst_122 [1] : vector<48x32xf32> to vector<48xf32>
    %277 = vector.shape_cast %276 : vector<48xf32> to vector<48x1xf32>
    %cst_123 = arith.constant 3.200000e+01 : f32
    %278 = vector.broadcast %cst_123 : f32 to vector<48x1xf32>
    %279 = arith.divf %277, %278 : vector<48x1xf32>
    %280 = vector.broadcast %272 : vector<48x1xf32> to vector<48x32xf32>
    %281 = arith.subf %266, %280 : vector<48x32xf32>
    %cst_124 = arith.constant 9.99999974E-6 : f32
    %282 = vector.broadcast %cst_124 : f32 to vector<48x1xf32>
    %283 = arith.addf %279, %282 : vector<48x1xf32>
    %284 = math.rsqrt %283 : vector<48x1xf32>
    %285 = vector.broadcast %284 : vector<48x1xf32> to vector<48x32xf32>
    %286 = arith.mulf %281, %285 : vector<48x32xf32>
    %287 = vector.broadcast %267 : vector<1x32xf32> to vector<48x32xf32>
    %288 = arith.mulf %286, %287 : vector<48x32xf32>
    %289 = vector.broadcast %268 : vector<1x32xf32> to vector<48x32xf32>
    %290 = arith.addf %288, %289 : vector<48x32xf32>
    %291 = arith.truncf %290 : vector<48x32xf32> to vector<48x32xbf16>
    %c16_125 = arith.constant 16 : index
    %c0_126 = arith.constant 0 : index
    %c0_127 = arith.constant 0 : index
    %292 = vector.load %arg2[%c16_125, %c0_126, %c0_127] : memref<32x33x8xbf16, #tpu.memory_space<vmem>>, vector<1x33x8xbf16>
    %293 = vector.shape_cast %292 : vector<1x33x8xbf16> to vector<33x8xbf16>
    %c17_128 = arith.constant 17 : index
    %c0_129 = arith.constant 0 : index
    %c0_130 = arith.constant 0 : index
    %294 = vector.load %arg2[%c17_128, %c0_129, %c0_130] : memref<32x33x8xbf16, #tpu.memory_space<vmem>>, vector<1x33x8xbf16>
    %295 = vector.shape_cast %294 : vector<1x33x8xbf16> to vector<33x8xbf16>
    %c18_131 = arith.constant 18 : index
    %c0_132 = arith.constant 0 : index
    %c0_133 = arith.constant 0 : index
    %296 = vector.load %arg2[%c18_131, %c0_132, %c0_133] : memref<32x33x8xbf16, #tpu.memory_space<vmem>>, vector<1x33x8xbf16>
    %297 = vector.shape_cast %296 : vector<1x33x8xbf16> to vector<33x8xbf16>
    %c19 = arith.constant 19 : index
    %c0_134 = arith.constant 0 : index
    %c0_135 = arith.constant 0 : index
    %298 = vector.load %arg2[%c19, %c0_134, %c0_135] : memref<32x33x8xbf16, #tpu.memory_space<vmem>>, vector<1x33x8xbf16>
    %299 = vector.shape_cast %298 : vector<1x33x8xbf16> to vector<33x8xbf16>
    %300 = vector.extract_strided_slice %293 {offsets = [0, 0], sizes = [32, 8], strides = [1, 1]} : vector<33x8xbf16> to vector<32x8xbf16>
    %cst_136 = arith.constant dense<0.000000e+00> : vector<48x8xf32>
    %301 = tpu.matmul %291, %300, %cst_136 {dimension_numbers = #tpu.dot_dimension_numbers<[1], [0], [0], [1], [0, 0, 1, 1], [], []>} : vector<48x32xbf16>, vector<32x8xbf16>, vector<48x8xf32> -> vector<48x8xf32>
    %302 = vector.extract_strided_slice %293 {offsets = [32, 0], sizes = [1, 8], strides = [1, 1]} : vector<33x8xbf16> to vector<1x8xbf16>
    %303 = arith.extf %302 : vector<1x8xbf16> to vector<1x8xf32>
    %304 = vector.broadcast %303 : vector<1x8xf32> to vector<48x8xf32>
    %305 = arith.addf %301, %304 : vector<48x8xf32>
    %306 = vector.extract_strided_slice %295 {offsets = [0, 0], sizes = [32, 8], strides = [1, 1]} : vector<33x8xbf16> to vector<32x8xbf16>
    %cst_137 = arith.constant dense<0.000000e+00> : vector<48x8xf32>
    %307 = tpu.matmul %291, %306, %cst_137 {dimension_numbers = #tpu.dot_dimension_numbers<[1], [0], [0], [1], [0, 0, 1, 1], [], []>} : vector<48x32xbf16>, vector<32x8xbf16>, vector<48x8xf32> -> vector<48x8xf32>
    %308 = vector.extract_strided_slice %297 {offsets = [0, 0], sizes = [32, 8], strides = [1, 1]} : vector<33x8xbf16> to vector<32x8xbf16>
    %cst_138 = arith.constant dense<0.000000e+00> : vector<48x8xf32>
    %309 = tpu.matmul %291, %308, %cst_138 {dimension_numbers = #tpu.dot_dimension_numbers<[1], [0], [0], [1], [0, 0, 1, 1], [], []>} : vector<48x32xbf16>, vector<32x8xbf16>, vector<48x8xf32> -> vector<48x8xf32>
    %cst_139 = arith.constant dense<0.000000e+00> : vector<48x48xf32>
    %310 = tpu.matmul %305, %307, %cst_139 {dimension_numbers = #tpu.dot_dimension_numbers<[1], [1], [0], [0], [0, 0, 1, 0], [], []>} : vector<48x8xf32>, vector<48x8xf32>, vector<48x48xf32> -> vector<48x48xf32>
    %311 = arith.addf %310, %40 : vector<48x48xf32>
    %cst_140 = arith.constant dense<0xFF800000> : vector<48xf32>
    %312 = vector.multi_reduction <maximumf>, %311, %cst_140 [1] : vector<48x48xf32> to vector<48xf32>
    %313 = vector.shape_cast %312 : vector<48xf32> to vector<48x1xf32>
    %314 = vector.broadcast %313 : vector<48x1xf32> to vector<48x48xf32>
    %315 = arith.subf %311, %314 : vector<48x48xf32>
    %316 = math.exp %315 : vector<48x48xf32>
    %cst_141 = arith.constant dense<0.000000e+00> : vector<48xf32>
    %317 = vector.multi_reduction <add>, %316, %cst_141 [1] : vector<48x48xf32> to vector<48xf32>
    %318 = vector.shape_cast %317 : vector<48xf32> to vector<48x1xf32>
    %319 = tpu.reciprocal %318 {approx = true} : vector<48x1xf32> -> vector<48x1xf32>
    %320 = vector.broadcast %319 : vector<48x1xf32> to vector<48x48xf32>
    %321 = arith.mulf %316, %320 : vector<48x48xf32>
    %322 = arith.truncf %321 : vector<48x48xf32> to vector<48x48xbf16>
    %323 = arith.truncf %309 : vector<48x8xf32> to vector<48x8xbf16>
    %cst_142 = arith.constant dense<0.000000e+00> : vector<48x8xf32>
    %324 = tpu.matmul %322, %323, %cst_142 {dimension_numbers = #tpu.dot_dimension_numbers<[1], [0], [0], [1], [0, 0, 1, 1], [], []>} : vector<48x48xbf16>, vector<48x8xbf16>, vector<48x8xf32> -> vector<48x8xf32>
    %325 = arith.truncf %324 : vector<48x8xf32> to vector<48x8xbf16>
    %326 = vector.extract_strided_slice %299 {offsets = [0, 0], sizes = [32, 8], strides = [1, 1]} : vector<33x8xbf16> to vector<32x8xbf16>
    %cst_143 = arith.constant dense<0.000000e+00> : vector<48x32xf32>
    %327 = tpu.matmul %325, %326, %cst_143 {dimension_numbers = #tpu.dot_dimension_numbers<[1], [1], [0], [0], [0, 0, 1, 0], [], []>} : vector<48x8xbf16>, vector<32x8xbf16>, vector<48x32xf32> -> vector<48x32xf32>
    %c20 = arith.constant 20 : index
    %c0_144 = arith.constant 0 : index
    %c0_145 = arith.constant 0 : index
    %328 = vector.load %arg2[%c20, %c0_144, %c0_145] : memref<32x33x8xbf16, #tpu.memory_space<vmem>>, vector<1x33x8xbf16>
    %329 = vector.shape_cast %328 : vector<1x33x8xbf16> to vector<33x8xbf16>
    %c21_146 = arith.constant 21 : index
    %c0_147 = arith.constant 0 : index
    %c0_148 = arith.constant 0 : index
    %330 = vector.load %arg2[%c21_146, %c0_147, %c0_148] : memref<32x33x8xbf16, #tpu.memory_space<vmem>>, vector<1x33x8xbf16>
    %331 = vector.shape_cast %330 : vector<1x33x8xbf16> to vector<33x8xbf16>
    %c22_149 = arith.constant 22 : index
    %c0_150 = arith.constant 0 : index
    %c0_151 = arith.constant 0 : index
    %332 = vector.load %arg2[%c22_149, %c0_150, %c0_151] : memref<32x33x8xbf16, #tpu.memory_space<vmem>>, vector<1x33x8xbf16>
    %333 = vector.shape_cast %332 : vector<1x33x8xbf16> to vector<33x8xbf16>
    %c23_152 = arith.constant 23 : index
    %c0_153 = arith.constant 0 : index
    %c0_154 = arith.constant 0 : index
    %334 = vector.load %arg2[%c23_152, %c0_153, %c0_154] : memref<32x33x8xbf16, #tpu.memory_space<vmem>>, vector<1x33x8xbf16>
    %335 = vector.shape_cast %334 : vector<1x33x8xbf16> to vector<33x8xbf16>
    %336 = vector.extract_strided_slice %329 {offsets = [0, 0], sizes = [32, 8], strides = [1, 1]} : vector<33x8xbf16> to vector<32x8xbf16>
    %cst_155 = arith.constant dense<0.000000e+00> : vector<48x8xf32>
    %337 = tpu.matmul %291, %336, %cst_155 {dimension_numbers = #tpu.dot_dimension_numbers<[1], [0], [0], [1], [0, 0, 1, 1], [], []>} : vector<48x32xbf16>, vector<32x8xbf16>, vector<48x8xf32> -> vector<48x8xf32>
    %338 = vector.extract_strided_slice %329 {offsets = [32, 0], sizes = [1, 8], strides = [1, 1]} : vector<33x8xbf16> to vector<1x8xbf16>
    %339 = arith.extf %338 : vector<1x8xbf16> to vector<1x8xf32>
    %340 = vector.broadcast %339 : vector<1x8xf32> to vector<48x8xf32>
    %341 = arith.addf %337, %340 : vector<48x8xf32>
    %342 = vector.extract_strided_slice %331 {offsets = [0, 0], sizes = [32, 8], strides = [1, 1]} : vector<33x8xbf16> to vector<32x8xbf16>
    %cst_156 = arith.constant dense<0.000000e+00> : vector<48x8xf32>
    %343 = tpu.matmul %291, %342, %cst_156 {dimension_numbers = #tpu.dot_dimension_numbers<[1], [0], [0], [1], [0, 0, 1, 1], [], []>} : vector<48x32xbf16>, vector<32x8xbf16>, vector<48x8xf32> -> vector<48x8xf32>
    %344 = vector.extract_strided_slice %333 {offsets = [0, 0], sizes = [32, 8], strides = [1, 1]} : vector<33x8xbf16> to vector<32x8xbf16>
    %cst_157 = arith.constant dense<0.000000e+00> : vector<48x8xf32>
    %345 = tpu.matmul %291, %344, %cst_157 {dimension_numbers = #tpu.dot_dimension_numbers<[1], [0], [0], [1], [0, 0, 1, 1], [], []>} : vector<48x32xbf16>, vector<32x8xbf16>, vector<48x8xf32> -> vector<48x8xf32>
    %cst_158 = arith.constant dense<0.000000e+00> : vector<48x48xf32>
    %346 = tpu.matmul %341, %343, %cst_158 {dimension_numbers = #tpu.dot_dimension_numbers<[1], [1], [0], [0], [0, 0, 1, 0], [], []>} : vector<48x8xf32>, vector<48x8xf32>, vector<48x48xf32> -> vector<48x48xf32>
    %347 = arith.addf %346, %40 : vector<48x48xf32>
    %cst_159 = arith.constant dense<0xFF800000> : vector<48xf32>
    %348 = vector.multi_reduction <maximumf>, %347, %cst_159 [1] : vector<48x48xf32> to vector<48xf32>
    %349 = vector.shape_cast %348 : vector<48xf32> to vector<48x1xf32>
    %350 = vector.broadcast %349 : vector<48x1xf32> to vector<48x48xf32>
    %351 = arith.subf %347, %350 : vector<48x48xf32>
    %352 = math.exp %351 : vector<48x48xf32>
    %cst_160 = arith.constant dense<0.000000e+00> : vector<48xf32>
    %353 = vector.multi_reduction <add>, %352, %cst_160 [1] : vector<48x48xf32> to vector<48xf32>
    %354 = vector.shape_cast %353 : vector<48xf32> to vector<48x1xf32>
    %355 = tpu.reciprocal %354 {approx = true} : vector<48x1xf32> -> vector<48x1xf32>
    %356 = vector.broadcast %355 : vector<48x1xf32> to vector<48x48xf32>
    %357 = arith.mulf %352, %356 : vector<48x48xf32>
    %358 = arith.truncf %357 : vector<48x48xf32> to vector<48x48xbf16>
    %359 = arith.truncf %345 : vector<48x8xf32> to vector<48x8xbf16>
    %cst_161 = arith.constant dense<0.000000e+00> : vector<48x8xf32>
    %360 = tpu.matmul %358, %359, %cst_161 {dimension_numbers = #tpu.dot_dimension_numbers<[1], [0], [0], [1], [0, 0, 1, 1], [], []>} : vector<48x48xbf16>, vector<48x8xbf16>, vector<48x8xf32> -> vector<48x8xf32>
    %361 = arith.truncf %360 : vector<48x8xf32> to vector<48x8xbf16>
    %362 = vector.extract_strided_slice %335 {offsets = [0, 0], sizes = [32, 8], strides = [1, 1]} : vector<33x8xbf16> to vector<32x8xbf16>
    %cst_162 = arith.constant dense<0.000000e+00> : vector<48x32xf32>
    %363 = tpu.matmul %361, %362, %cst_162 {dimension_numbers = #tpu.dot_dimension_numbers<[1], [1], [0], [0], [0, 0, 1, 0], [], []>} : vector<48x8xbf16>, vector<32x8xbf16>, vector<48x32xf32> -> vector<48x32xf32>
    %364 = arith.addf %327, %363 : vector<48x32xf32>
    %c24_163 = arith.constant 24 : index
    %c0_164 = arith.constant 0 : index
    %c0_165 = arith.constant 0 : index
    %365 = vector.load %arg2[%c24_163, %c0_164, %c0_165] : memref<32x33x8xbf16, #tpu.memory_space<vmem>>, vector<1x33x8xbf16>
    %366 = vector.shape_cast %365 : vector<1x33x8xbf16> to vector<33x8xbf16>
    %c25_166 = arith.constant 25 : index
    %c0_167 = arith.constant 0 : index
    %c0_168 = arith.constant 0 : index
    %367 = vector.load %arg2[%c25_166, %c0_167, %c0_168] : memref<32x33x8xbf16, #tpu.memory_space<vmem>>, vector<1x33x8xbf16>
    %368 = vector.shape_cast %367 : vector<1x33x8xbf16> to vector<33x8xbf16>
    %c26 = arith.constant 26 : index
    %c0_169 = arith.constant 0 : index
    %c0_170 = arith.constant 0 : index
    %369 = vector.load %arg2[%c26, %c0_169, %c0_170] : memref<32x33x8xbf16, #tpu.memory_space<vmem>>, vector<1x33x8xbf16>
    %370 = vector.shape_cast %369 : vector<1x33x8xbf16> to vector<33x8xbf16>
    %c27_171 = arith.constant 27 : index
    %c0_172 = arith.constant 0 : index
    %c0_173 = arith.constant 0 : index
    %371 = vector.load %arg2[%c27_171, %c0_172, %c0_173] : memref<32x33x8xbf16, #tpu.memory_space<vmem>>, vector<1x33x8xbf16>
    %372 = vector.shape_cast %371 : vector<1x33x8xbf16> to vector<33x8xbf16>
    %373 = vector.extract_strided_slice %366 {offsets = [0, 0], sizes = [32, 8], strides = [1, 1]} : vector<33x8xbf16> to vector<32x8xbf16>
    %cst_174 = arith.constant dense<0.000000e+00> : vector<48x8xf32>
    %374 = tpu.matmul %291, %373, %cst_174 {dimension_numbers = #tpu.dot_dimension_numbers<[1], [0], [0], [1], [0, 0, 1, 1], [], []>} : vector<48x32xbf16>, vector<32x8xbf16>, vector<48x8xf32> -> vector<48x8xf32>
    %375 = vector.extract_strided_slice %366 {offsets = [32, 0], sizes = [1, 8], strides = [1, 1]} : vector<33x8xbf16> to vector<1x8xbf16>
    %376 = arith.extf %375 : vector<1x8xbf16> to vector<1x8xf32>
    %377 = vector.broadcast %376 : vector<1x8xf32> to vector<48x8xf32>
    %378 = arith.addf %374, %377 : vector<48x8xf32>
    %379 = vector.extract_strided_slice %368 {offsets = [0, 0], sizes = [32, 8], strides = [1, 1]} : vector<33x8xbf16> to vector<32x8xbf16>
    %cst_175 = arith.constant dense<0.000000e+00> : vector<48x8xf32>
    %380 = tpu.matmul %291, %379, %cst_175 {dimension_numbers = #tpu.dot_dimension_numbers<[1], [0], [0], [1], [0, 0, 1, 1], [], []>} : vector<48x32xbf16>, vector<32x8xbf16>, vector<48x8xf32> -> vector<48x8xf32>
    %381 = vector.extract_strided_slice %370 {offsets = [0, 0], sizes = [32, 8], strides = [1, 1]} : vector<33x8xbf16> to vector<32x8xbf16>
    %cst_176 = arith.constant dense<0.000000e+00> : vector<48x8xf32>
    %382 = tpu.matmul %291, %381, %cst_176 {dimension_numbers = #tpu.dot_dimension_numbers<[1], [0], [0], [1], [0, 0, 1, 1], [], []>} : vector<48x32xbf16>, vector<32x8xbf16>, vector<48x8xf32> -> vector<48x8xf32>
    %cst_177 = arith.constant dense<0.000000e+00> : vector<48x48xf32>
    %383 = tpu.matmul %378, %380, %cst_177 {dimension_numbers = #tpu.dot_dimension_numbers<[1], [1], [0], [0], [0, 0, 1, 0], [], []>} : vector<48x8xf32>, vector<48x8xf32>, vector<48x48xf32> -> vector<48x48xf32>
    %384 = arith.addf %383, %40 : vector<48x48xf32>
    %cst_178 = arith.constant dense<0xFF800000> : vector<48xf32>
    %385 = vector.multi_reduction <maximumf>, %384, %cst_178 [1] : vector<48x48xf32> to vector<48xf32>
    %386 = vector.shape_cast %385 : vector<48xf32> to vector<48x1xf32>
    %387 = vector.broadcast %386 : vector<48x1xf32> to vector<48x48xf32>
    %388 = arith.subf %384, %387 : vector<48x48xf32>
    %389 = math.exp %388 : vector<48x48xf32>
    %cst_179 = arith.constant dense<0.000000e+00> : vector<48xf32>
    %390 = vector.multi_reduction <add>, %389, %cst_179 [1] : vector<48x48xf32> to vector<48xf32>
    %391 = vector.shape_cast %390 : vector<48xf32> to vector<48x1xf32>
    %392 = tpu.reciprocal %391 {approx = true} : vector<48x1xf32> -> vector<48x1xf32>
    %393 = vector.broadcast %392 : vector<48x1xf32> to vector<48x48xf32>
    %394 = arith.mulf %389, %393 : vector<48x48xf32>
    %395 = arith.truncf %394 : vector<48x48xf32> to vector<48x48xbf16>
    %396 = arith.truncf %382 : vector<48x8xf32> to vector<48x8xbf16>
    %cst_180 = arith.constant dense<0.000000e+00> : vector<48x8xf32>
    %397 = tpu.matmul %395, %396, %cst_180 {dimension_numbers = #tpu.dot_dimension_numbers<[1], [0], [0], [1], [0, 0, 1, 1], [], []>} : vector<48x48xbf16>, vector<48x8xbf16>, vector<48x8xf32> -> vector<48x8xf32>
    %398 = arith.truncf %397 : vector<48x8xf32> to vector<48x8xbf16>
    %399 = vector.extract_strided_slice %372 {offsets = [0, 0], sizes = [32, 8], strides = [1, 1]} : vector<33x8xbf16> to vector<32x8xbf16>
    %cst_181 = arith.constant dense<0.000000e+00> : vector<48x32xf32>
    %400 = tpu.matmul %398, %399, %cst_181 {dimension_numbers = #tpu.dot_dimension_numbers<[1], [1], [0], [0], [0, 0, 1, 0], [], []>} : vector<48x8xbf16>, vector<32x8xbf16>, vector<48x32xf32> -> vector<48x32xf32>
    %401 = arith.addf %364, %400 : vector<48x32xf32>
    %c28 = arith.constant 28 : index
    %c0_182 = arith.constant 0 : index
    %c0_183 = arith.constant 0 : index
    %402 = vector.load %arg2[%c28, %c0_182, %c0_183] : memref<32x33x8xbf16, #tpu.memory_space<vmem>>, vector<1x33x8xbf16>
    %403 = vector.shape_cast %402 : vector<1x33x8xbf16> to vector<33x8xbf16>
    %c29_184 = arith.constant 29 : index
    %c0_185 = arith.constant 0 : index
    %c0_186 = arith.constant 0 : index
    %404 = vector.load %arg2[%c29_184, %c0_185, %c0_186] : memref<32x33x8xbf16, #tpu.memory_space<vmem>>, vector<1x33x8xbf16>
    %405 = vector.shape_cast %404 : vector<1x33x8xbf16> to vector<33x8xbf16>
    %c30 = arith.constant 30 : index
    %c0_187 = arith.constant 0 : index
    %c0_188 = arith.constant 0 : index
    %406 = vector.load %arg2[%c30, %c0_187, %c0_188] : memref<32x33x8xbf16, #tpu.memory_space<vmem>>, vector<1x33x8xbf16>
    %407 = vector.shape_cast %406 : vector<1x33x8xbf16> to vector<33x8xbf16>
    %c31_189 = arith.constant 31 : index
    %c0_190 = arith.constant 0 : index
    %c0_191 = arith.constant 0 : index
    %408 = vector.load %arg2[%c31_189, %c0_190, %c0_191] : memref<32x33x8xbf16, #tpu.memory_space<vmem>>, vector<1x33x8xbf16>
    %409 = vector.shape_cast %408 : vector<1x33x8xbf16> to vector<33x8xbf16>
    %410 = vector.extract_strided_slice %403 {offsets = [0, 0], sizes = [32, 8], strides = [1, 1]} : vector<33x8xbf16> to vector<32x8xbf16>
    %cst_192 = arith.constant dense<0.000000e+00> : vector<48x8xf32>
    %411 = tpu.matmul %291, %410, %cst_192 {dimension_numbers = #tpu.dot_dimension_numbers<[1], [0], [0], [1], [0, 0, 1, 1], [], []>} : vector<48x32xbf16>, vector<32x8xbf16>, vector<48x8xf32> -> vector<48x8xf32>
    %412 = vector.extract_strided_slice %403 {offsets = [32, 0], sizes = [1, 8], strides = [1, 1]} : vector<33x8xbf16> to vector<1x8xbf16>
    %413 = arith.extf %412 : vector<1x8xbf16> to vector<1x8xf32>
    %414 = vector.broadcast %413 : vector<1x8xf32> to vector<48x8xf32>
    %415 = arith.addf %411, %414 : vector<48x8xf32>
    %416 = vector.extract_strided_slice %405 {offsets = [0, 0], sizes = [32, 8], strides = [1, 1]} : vector<33x8xbf16> to vector<32x8xbf16>
    %cst_193 = arith.constant dense<0.000000e+00> : vector<48x8xf32>
    %417 = tpu.matmul %291, %416, %cst_193 {dimension_numbers = #tpu.dot_dimension_numbers<[1], [0], [0], [1], [0, 0, 1, 1], [], []>} : vector<48x32xbf16>, vector<32x8xbf16>, vector<48x8xf32> -> vector<48x8xf32>
    %418 = vector.extract_strided_slice %407 {offsets = [0, 0], sizes = [32, 8], strides = [1, 1]} : vector<33x8xbf16> to vector<32x8xbf16>
    %cst_194 = arith.constant dense<0.000000e+00> : vector<48x8xf32>
    %419 = tpu.matmul %291, %418, %cst_194 {dimension_numbers = #tpu.dot_dimension_numbers<[1], [0], [0], [1], [0, 0, 1, 1], [], []>} : vector<48x32xbf16>, vector<32x8xbf16>, vector<48x8xf32> -> vector<48x8xf32>
    %cst_195 = arith.constant dense<0.000000e+00> : vector<48x48xf32>
    %420 = tpu.matmul %415, %417, %cst_195 {dimension_numbers = #tpu.dot_dimension_numbers<[1], [1], [0], [0], [0, 0, 1, 0], [], []>} : vector<48x8xf32>, vector<48x8xf32>, vector<48x48xf32> -> vector<48x48xf32>
    %421 = arith.addf %420, %40 : vector<48x48xf32>
    %cst_196 = arith.constant dense<0xFF800000> : vector<48xf32>
    %422 = vector.multi_reduction <maximumf>, %421, %cst_196 [1] : vector<48x48xf32> to vector<48xf32>
    %423 = vector.shape_cast %422 : vector<48xf32> to vector<48x1xf32>
    %424 = vector.broadcast %423 : vector<48x1xf32> to vector<48x48xf32>
    %425 = arith.subf %421, %424 : vector<48x48xf32>
    %426 = math.exp %425 : vector<48x48xf32>
    %cst_197 = arith.constant dense<0.000000e+00> : vector<48xf32>
    %427 = vector.multi_reduction <add>, %426, %cst_197 [1] : vector<48x48xf32> to vector<48xf32>
    %428 = vector.shape_cast %427 : vector<48xf32> to vector<48x1xf32>
    %429 = tpu.reciprocal %428 {approx = true} : vector<48x1xf32> -> vector<48x1xf32>
    %430 = vector.broadcast %429 : vector<48x1xf32> to vector<48x48xf32>
    %431 = arith.mulf %426, %430 : vector<48x48xf32>
    %432 = arith.truncf %431 : vector<48x48xf32> to vector<48x48xbf16>
    %433 = arith.truncf %419 : vector<48x8xf32> to vector<48x8xbf16>
    %cst_198 = arith.constant dense<0.000000e+00> : vector<48x8xf32>
    %434 = tpu.matmul %432, %433, %cst_198 {dimension_numbers = #tpu.dot_dimension_numbers<[1], [0], [0], [1], [0, 0, 1, 1], [], []>} : vector<48x48xbf16>, vector<48x8xbf16>, vector<48x8xf32> -> vector<48x8xf32>
    %435 = arith.truncf %434 : vector<48x8xf32> to vector<48x8xbf16>
    %436 = vector.extract_strided_slice %409 {offsets = [0, 0], sizes = [32, 8], strides = [1, 1]} : vector<33x8xbf16> to vector<32x8xbf16>
    %cst_199 = arith.constant dense<0.000000e+00> : vector<48x32xf32>
    %437 = tpu.matmul %435, %436, %cst_199 {dimension_numbers = #tpu.dot_dimension_numbers<[1], [1], [0], [0], [0, 0, 1, 0], [], []>} : vector<48x8xbf16>, vector<32x8xbf16>, vector<48x32xf32> -> vector<48x32xf32>
    %438 = arith.addf %401, %437 : vector<48x32xf32>
    %c30_200 = arith.constant 30 : index
    %c0_201 = arith.constant 0 : index
    %439 = vector.load %arg5[%c30_200, %c0_201] : memref<33x32xf32, #tpu.memory_space<vmem>>, vector<1x32xf32>
    %440 = vector.broadcast %439 : vector<1x32xf32> to vector<48x32xf32>
    %441 = arith.addf %438, %440 : vector<48x32xf32>
    %442 = arith.addf %266, %441 : vector<48x32xf32>
    %c26_202 = arith.constant 26 : index
    %c0_203 = arith.constant 0 : index
    %443 = vector.load %arg5[%c26_202, %c0_203] : memref<33x32xf32, #tpu.memory_space<vmem>>, vector<1x32xf32>
    %c28_204 = arith.constant 28 : index
    %c0_205 = arith.constant 0 : index
    %444 = vector.load %arg5[%c28_204, %c0_205] : memref<33x32xf32, #tpu.memory_space<vmem>>, vector<1x32xf32>
    %cst_206 = arith.constant dense<0.000000e+00> : vector<48xf32>
    %445 = vector.multi_reduction <add>, %442, %cst_206 [1] : vector<48x32xf32> to vector<48xf32>
    %446 = vector.shape_cast %445 : vector<48xf32> to vector<48x1xf32>
    %cst_207 = arith.constant 3.200000e+01 : f32
    %447 = vector.broadcast %cst_207 : f32 to vector<48x1xf32>
    %448 = arith.divf %446, %447 : vector<48x1xf32>
    %449 = vector.broadcast %448 : vector<48x1xf32> to vector<48x32xf32>
    %450 = arith.subf %442, %449 : vector<48x32xf32>
    %451 = arith.mulf %450, %450 : vector<48x32xf32>
    %cst_208 = arith.constant dense<0.000000e+00> : vector<48xf32>
    %452 = vector.multi_reduction <add>, %451, %cst_208 [1] : vector<48x32xf32> to vector<48xf32>
    %453 = vector.shape_cast %452 : vector<48xf32> to vector<48x1xf32>
    %cst_209 = arith.constant 3.200000e+01 : f32
    %454 = vector.broadcast %cst_209 : f32 to vector<48x1xf32>
    %455 = arith.divf %453, %454 : vector<48x1xf32>
    %456 = vector.broadcast %448 : vector<48x1xf32> to vector<48x32xf32>
    %457 = arith.subf %442, %456 : vector<48x32xf32>
    %cst_210 = arith.constant 9.99999974E-6 : f32
    %458 = vector.broadcast %cst_210 : f32 to vector<48x1xf32>
    %459 = arith.addf %455, %458 : vector<48x1xf32>
    %460 = math.rsqrt %459 : vector<48x1xf32>
    %461 = vector.broadcast %460 : vector<48x1xf32> to vector<48x32xf32>
    %462 = arith.mulf %457, %461 : vector<48x32xf32>
    %463 = vector.broadcast %443 : vector<1x32xf32> to vector<48x32xf32>
    %464 = arith.mulf %462, %463 : vector<48x32xf32>
    %465 = vector.broadcast %444 : vector<1x32xf32> to vector<48x32xf32>
    %466 = arith.addf %464, %465 : vector<48x32xf32>
    %c2_211 = arith.constant 2 : index
    %c0_212 = arith.constant 0 : index
    %c0_213 = arith.constant 0 : index
    %467 = vector.load %arg3[%c2_211, %c0_212, %c0_213] : memref<4x33x128xbf16, #tpu.memory_space<vmem>>, vector<1x33x128xbf16>
    %468 = vector.shape_cast %467 : vector<1x33x128xbf16> to vector<33x128xbf16>
    %c3_214 = arith.constant 3 : index
    %c0_215 = arith.constant 0 : index
    %c0_216 = arith.constant 0 : index
    %469 = vector.load %arg3[%c3_214, %c0_215, %c0_216] : memref<4x33x128xbf16, #tpu.memory_space<vmem>>, vector<1x33x128xbf16>
    %470 = vector.shape_cast %469 : vector<1x33x128xbf16> to vector<33x128xbf16>
    %471 = arith.truncf %466 : vector<48x32xf32> to vector<48x32xbf16>
    %472 = vector.extract_strided_slice %468 {offsets = [0, 0], sizes = [32, 128], strides = [1, 1]} : vector<33x128xbf16> to vector<32x128xbf16>
    %cst_217 = arith.constant dense<0.000000e+00> : vector<48x128xf32>
    %473 = tpu.matmul %471, %472, %cst_217 {dimension_numbers = #tpu.dot_dimension_numbers<[1], [0], [0], [1], [0, 0, 1, 1], [], []>} : vector<48x32xbf16>, vector<32x128xbf16>, vector<48x128xf32> -> vector<48x128xf32>
    %474 = vector.extract_strided_slice %468 {offsets = [32, 0], sizes = [1, 128], strides = [1, 1]} : vector<33x128xbf16> to vector<1x128xbf16>
    %475 = arith.extf %474 : vector<1x128xbf16> to vector<1x128xf32>
    %476 = vector.broadcast %475 : vector<1x128xf32> to vector<48x128xf32>
    %477 = arith.addf %473, %476 : vector<48x128xf32>
    %cst_218 = arith.constant 1.702000e+00 : f32
    %478 = vector.broadcast %cst_218 : f32 to vector<48x128xf32>
    %479 = arith.mulf %478, %477 : vector<48x128xf32>
    %480 = arith.negf %479 : vector<48x128xf32>
    %481 = math.exp %480 : vector<48x128xf32>
    %cst_219 = arith.constant 1.000000e+00 : f32
    %482 = vector.broadcast %cst_219 : f32 to vector<48x128xf32>
    %483 = arith.addf %482, %481 : vector<48x128xf32>
    %484 = arith.divf %482, %483 : vector<48x128xf32>
    %485 = arith.mulf %477, %484 : vector<48x128xf32>
    %486 = arith.truncf %485 : vector<48x128xf32> to vector<48x128xbf16>
    %487 = vector.extract_strided_slice %470 {offsets = [0, 0], sizes = [32, 128], strides = [1, 1]} : vector<33x128xbf16> to vector<32x128xbf16>
    %cst_220 = arith.constant dense<0.000000e+00> : vector<48x32xf32>
    %488 = tpu.matmul %486, %487, %cst_220 {dimension_numbers = #tpu.dot_dimension_numbers<[1], [1], [0], [0], [0, 0, 1, 0], [], []>} : vector<48x128xbf16>, vector<32x128xbf16>, vector<48x32xf32> -> vector<48x32xf32>
    %c32 = arith.constant 32 : index
    %c0_221 = arith.constant 0 : index
    %489 = vector.load %arg5[%c32, %c0_221] : memref<33x32xf32, #tpu.memory_space<vmem>>, vector<1x32xf32>
    %490 = vector.broadcast %489 : vector<1x32xf32> to vector<48x32xf32>
    %491 = arith.addf %488, %490 : vector<48x32xf32>
    %492 = arith.addf %442, %491 : vector<48x32xf32>
    %c19_222 = arith.constant 19 : index
    %c0_223 = arith.constant 0 : index
    %493 = vector.load %arg5[%c19_222, %c0_223] : memref<33x32xf32, #tpu.memory_space<vmem>>, vector<1x32xf32>
    %c20_224 = arith.constant 20 : index
    %c0_225 = arith.constant 0 : index
    %494 = vector.load %arg5[%c20_224, %c0_225] : memref<33x32xf32, #tpu.memory_space<vmem>>, vector<1x32xf32>
    %cst_226 = arith.constant dense<0.000000e+00> : vector<48xf32>
    %495 = vector.multi_reduction <add>, %492, %cst_226 [1] : vector<48x32xf32> to vector<48xf32>
    %496 = vector.shape_cast %495 : vector<48xf32> to vector<48x1xf32>
    %cst_227 = arith.constant 3.200000e+01 : f32
    %497 = vector.broadcast %cst_227 : f32 to vector<48x1xf32>
    %498 = arith.divf %496, %497 : vector<48x1xf32>
    %499 = vector.broadcast %498 : vector<48x1xf32> to vector<48x32xf32>
    %500 = arith.subf %492, %499 : vector<48x32xf32>
    %501 = arith.mulf %500, %500 : vector<48x32xf32>
    %cst_228 = arith.constant dense<0.000000e+00> : vector<48xf32>
    %502 = vector.multi_reduction <add>, %501, %cst_228 [1] : vector<48x32xf32> to vector<48xf32>
    %503 = vector.shape_cast %502 : vector<48xf32> to vector<48x1xf32>
    %cst_229 = arith.constant 3.200000e+01 : f32
    %504 = vector.broadcast %cst_229 : f32 to vector<48x1xf32>
    %505 = arith.divf %503, %504 : vector<48x1xf32>
    %506 = vector.broadcast %498 : vector<48x1xf32> to vector<48x32xf32>
    %507 = arith.subf %492, %506 : vector<48x32xf32>
    %cst_230 = arith.constant 9.99999974E-6 : f32
    %508 = vector.broadcast %cst_230 : f32 to vector<48x1xf32>
    %509 = arith.addf %505, %508 : vector<48x1xf32>
    %510 = math.rsqrt %509 : vector<48x1xf32>
    %511 = vector.broadcast %510 : vector<48x1xf32> to vector<48x32xf32>
    %512 = arith.mulf %507, %511 : vector<48x32xf32>
    %513 = vector.broadcast %493 : vector<1x32xf32> to vector<48x32xf32>
    %514 = arith.mulf %512, %513 : vector<48x32xf32>
    %515 = vector.broadcast %494 : vector<1x32xf32> to vector<48x32xf32>
    %516 = arith.addf %514, %515 : vector<48x32xf32>
    %c48 = arith.constant 48 : index
    %c0_231 = arith.constant 0 : index
    %517 = vector.load %arg4[%c48, %c0_231] : memref<80x32xbf16, #tpu.memory_space<vmem>>, vector<32x16xbf16>
    %518 = arith.truncf %516 : vector<48x32xf32> to vector<48x32xbf16>
    %cst_232 = arith.constant dense<0.000000e+00> : vector<48x16xf32>
    %519 = tpu.matmul %518, %517, %cst_232 {dimension_numbers = #tpu.dot_dimension_numbers<[1], [0], [0], [1], [0, 0, 1, 1], [], []>} : vector<48x32xbf16>, vector<32x16xbf16>, vector<48x16xf32> -> vector<48x16xf32>
    %520 = vector.extract_strided_slice %519 {offsets = [16, 0], sizes = [1, 16], strides = [1, 1]} : vector<48x16xf32> to vector<1x16xf32>
    %c0_233 = arith.constant 0 : index
    %c0_234 = arith.constant 0 : index
    %521 = vector.load %arg7[%c0_233, %c0_234] : memref<2x16xf32, #tpu.memory_space<vmem>>, vector<1x16xf32>
    tpu.vector_store %arg7[%c0_233, %c0_234], %520 {strides = array<i32>} : memref<2x16xf32, #tpu.memory_space<vmem>>, vector<1x16xf32>,
    %522 = vector.extract_strided_slice %519 {offsets = [40, 0], sizes = [1, 16], strides = [1, 1]} : vector<48x16xf32> to vector<1x16xf32>
    %c1_235 = arith.constant 1 : index
    %c0_236 = arith.constant 0 : index
    %523 = vector.load %arg7[%c1_235, %c0_236] : memref<2x16xf32, #tpu.memory_space<vmem>>, vector<1x16xf32>
    tpu.vector_store %arg7[%c1_235, %c0_236], %522 {strides = array<i32>} : memref<2x16xf32, #tpu.memory_space<vmem>>, vector<1x16xf32>,
    return
  }
  func.func @transform_0(%arg0: i32) -> (i32, i32) {
    %c0_i32 = arith.constant 0 : i32
    %c0_i32_0 = arith.constant 0 : i32
    return %arg0, %c0_i32 : i32, i32
  }
  func.func @transform_1(%arg0: i32) -> (i32, i32, i32) {
    %c0_i32 = arith.constant 0 : i32
    %c0_i32_0 = arith.constant 0 : i32
    %c0_i32_1 = arith.constant 0 : i32
    %c0_i32_2 = arith.constant 0 : i32
    return %c0_i32, %c0_i32_0, %c0_i32_1 : i32, i32, i32
  }
  func.func @transform_2(%arg0: i32) -> (i32, i32, i32) {
    %c0_i32 = arith.constant 0 : i32
    %c0_i32_0 = arith.constant 0 : i32
    %c0_i32_1 = arith.constant 0 : i32
    %c0_i32_2 = arith.constant 0 : i32
    return %c0_i32, %c0_i32_0, %c0_i32_1 : i32, i32, i32
  }
  func.func @transform_3(%arg0: i32) -> (i32, i32) {
    %c0_i32 = arith.constant 0 : i32
    %c0_i32_0 = arith.constant 0 : i32
    %c0_i32_1 = arith.constant 0 : i32
    return %c0_i32, %c0_i32_0 : i32, i32
  }
  func.func @transform_4(%arg0: i32) -> (i32, i32) {
    %c0_i32 = arith.constant 0 : i32
    %c0_i32_0 = arith.constant 0 : i32
    %c0_i32_1 = arith.constant 0 : i32
    return %c0_i32, %c0_i32_0 : i32, i32
  }
  func.func @transform_5(%arg0: i32) -> (i32, i32) {
    %c0_i32 = arith.constant 0 : i32
    %c0_i32_0 = arith.constant 0 : i32
    %c0_i32_1 = arith.constant 0 : i32
    return %c0_i32, %c0_i32_0 : i32, i32
  }
  func.func @transform_6(%arg0: i32) -> (i32, i32) {
    %c0_i32 = arith.constant 0 : i32
    %c0_i32_0 = arith.constant 0 : i32
    return %arg0, %c0_i32 : i32, i32
  }
}

</mosaic_0001>

<llo_original>
// kernel: tpu_custom_call.1
$region0: #{tpu_custom_call.1}
  #allocation0 [shape = 'u32[]', space=smem, size = 0x4, offset = 0x4, fixed_abs, tag = 'smem constant byte address 0x4 - core index']
  #allocation1 [shape = 'u32[144,128]{1,0:T(1,128)}', space=vmem, size = 0x12000, scoped, tag = 'internal scratch']
  #allocation2 [shape = 'f32[48,32]{1,0:T(8,128)}', space=vmem, size = 0x6000, scoped, tag = 'scratch operand']
  %s0 = inlined_call_operand.vmem [shape: bf16[32,48], index: 0, kind: input, shape index: {}]
  %s1 = inlined_call_operand.vmem [shape: bf16[32,33,8], index: 1, kind: input, shape index: {}]
  %s2 = inlined_call_operand.vmem [shape: bf16[4,33,128], index: 2, kind: input, shape index: {}]
  %s3 = inlined_call_operand.vmem [shape: bf16[80,32], index: 3, kind: input, shape index: {}]
  %s4 = inlined_call_operand.vmem [shape: f32[33,32], index: 4, kind: input, shape index: {}]
  %s5 = inlined_call_operand.vmem [shape: f32[48,48], index: 5, kind: input, shape index: {}]
  %s6 = inlined_call_operand.hbm [shape: f32[2,16], index: 6, kind: output, shape index: {}]
  %s7 = sld [smem:[#allocation0]]
  $region34: #{tpu_custom_call.1} parent=0
    _
  %s9 = ssub.s32 1, %s7
  %s10 = scalar_select 0, %s9, %s7
  $region1: #{tpu_custom_call.1} parent=0
    #allocation3 [shape = 'u8[1024]{0}', space=vmem, size = 0x400, scoped, tag = 'output window, operand 0, single buffered']
    #allocation4 [shape = 's32[1]{0}', space=sflag, size = 0x4, scoped, tag = 'scoped memory for tpu_custom_call.1']
    %11 = vsyncpa [#allocation4], 0
    // Predicated region
    $region2: #{tpu_custom_call.1} parent=1 // pred_check
      _
    $region3: #{tpu_custom_call.1} parent=1 // pred_check_branch
      %13 = sbr.rel (0) target = $region5
    $region4: #{tpu_custom_call.1} parent=1 // pred_region
      _
    $region5: #{tpu_custom_call.1} parent=1 // pred_fallthru
      _
    // Predicated region
    $region6: #{tpu_custom_call.1} parent=1 // pred_check
      _
    $region7: #{tpu_custom_call.1} parent=1 // pred_check_branch
      %15 = sbr.rel (0) target = $region9
    $region8: #{tpu_custom_call.1} parent=1 // pred_region
      _
    $region9: #{tpu_custom_call.1} parent=1 // pred_fallthru
      _
    // Predicated region
    $region10: #{tpu_custom_call.1} parent=1 // pred_check
      _
    $region11: #{tpu_custom_call.1} parent=1 // pred_check_branch
      %17 = sbr.rel (0) target = $region13
    $region12: #{tpu_custom_call.1} parent=1 // pred_region
      _
    $region13: #{tpu_custom_call.1} parent=1 // pred_fallthru
      _
    // Predicated region
    $region14: #{tpu_custom_call.1} parent=1 // pred_check
      _
    $region15: #{tpu_custom_call.1} parent=1 // pred_check_branch
      %19 = sbr.rel (0) target = $region17
    $region16: #{tpu_custom_call.1} parent=1 // pred_region
      _
    $region17: #{tpu_custom_call.1} parent=1 // pred_fallthru
      _
    // Predicated region
    $region18: #{tpu_custom_call.1} parent=1 // pred_check
      _
    $region19: #{tpu_custom_call.1} parent=1 // pred_check_branch
      %21 = sbr.rel (0) target = $region21
    $region20: #{tpu_custom_call.1} parent=1 // pred_region
      _
    $region21: #{tpu_custom_call.1} parent=1 // pred_fallthru
      _
    // Predicated region
    $region22: #{tpu_custom_call.1} parent=1 // pred_check
      _
    $region23: #{tpu_custom_call.1} parent=1 // pred_check_branch
      %23 = sbr.rel (0) target = $region25
    $region24: #{tpu_custom_call.1} parent=1 // pred_region
      _
    $region25: #{tpu_custom_call.1} parent=1 // pred_fallthru
      _
    %v25 = vld [vmem:[%s3] sm:$0xf]
    %v26 = vld [vmem:[%s3 + $0x4] sm:$0xf]
    %v27 = vld [vmem:[%s3 + $0x8] sm:$0xf]
    %v28 = vld [vmem:[%s3 + $0xc] sm:$0xf]
    %v29 = vld [vmem:[%s3 + $0x10] sm:$0xf]
    %v30 = vld [vmem:[%s3 + $0x14] sm:$0xf]
    %v31 = vld [vmem:[%s0] sm:$0xf]
    %v32 = vld [vmem:[%s0 + $0x4] sm:$0xf]
    %v33 = vld [vmem:[%s0 + $0x8] sm:$0xf]
    %v34 = vld [vmem:[%s0 + $0xc] sm:$0xf]
    %v39 = vunpack.c.l.b16 %v31
    %v40 = vunpack.c.l.b16 %v32
    %v41 = vunpack.c.l.b16 %v33
    %v42 = vunpack.c.l.b16 %v34
    %v43 = vpack.c.b16 %v40, %v39
    %v44 = vpack.c.b16 %v42, %v41
    %v51 = vunpack.c.l.b16 %v25
    %v52 = vunpack.c.l.b16 %v26
    %v53 = vunpack.c.l.b16 %v27
    %v54 = vunpack.c.l.b16 %v28
    %v55 = vunpack.c.l.b16 %v29
    %v56 = vunpack.c.l.b16 %v30
    %v57 = vpack.c.b16 %v52, %v51
    %v58 = vpack.c.b16 %v54, %v53
    %v59 = vpack.c.b16 %v56, %v55
    %vm63 = vcmask 392192
    %v65 = vsel %vm63, %v43, 0
    %v68 = vsel %vm63, %v44, 0
    %70 = vmatprep.subr.bf16.mxu0 0
    %71 = vmatpush1.bf16.msra.mxu0 0
    %72 = vmatprep.subr.bf16.mxu0 0
    %73 = vmatpush1.bf16.msra.mxu0 0
    %74 = vmatprep.subr.bf16.mxu0 0
    %75 = vmatpush1.bf16.msra.mxu0 0
    %76 = vmatprep.subr.bf16.mxu0 0
    %77 = vmatpush1.bf16.msra.mxu0 0
    %78 = vmatprep.subr.bf16.mxu0 0
    %79 = vmatpush1.bf16.msra.mxu0 0
    %80 = vmatprep.subr.bf16.mxu0 0
    %81 = vmatpush1.bf16.msra.mxu0 %v59
    %82 = vmatprep.subr.bf16.mxu0 0
    %83 = vmatpush1.bf16.msra.mxu0 %v58
    %84 = vmatprep.subr.bf16.mxu0 0
    %85 = vmatpush1.bf16.msra.mxu0 %v57
    %86 = vmatprep.subr.bf16.mxu0 0
    %87 = vmatpush2.bf16.msra.mxu0 0
    %88 = vmatprep.subr.bf16.mxu0 0
    %89 = vmatpush2.bf16.msra.mxu0 0
    %90 = vmatprep.subr.bf16.mxu0 0
    %91 = vmatpush2.bf16.msra.mxu0 0
    %92 = vmatprep.subr.bf16.mxu0 0
    %93 = vmatpush2.bf16.msra.mxu0 0
    %94 = vmatprep.subr.bf16.mxu0 0
    %95 = vmatpush2.bf16.msra.mxu0 0
    %96 = vmatprep.subr.bf16.mxu0 0
    %97 = vmatpush2.bf16.msra.mxu0 0
    %98 = vmatprep.subr.bf16.mxu0 0
    %99 = vmatpush2.bf16.msra.mxu0 0
    %100 = vmatprep.subr.bf16.mxu0 0
    %101 = vmatpush2.bf16.msra.mxu0 0
    %102 = vmatprep.mubr.bf16.mxu0 0
    %103 = vmatmul.mubr.bf16.gmra.mxu0 %v65
    %v104 = vpop.f32.mrf.mxu0
    %v105 = vadd.f32 0.0, %v104
    %v106 = vpop.f32.mrf.mxu0
    %v107 = vpop.f32.mrf.mxu0
    %v108 = vadd.f32 0.0, %v107
    %v109 = vpop.f32.mrf.mxu0
    %110 = vmatprep.mubr.bf16.mxu0 0
    %111 = vmatmul.mubr.bf16.gmra.mxu0 %v68
    %v112 = vpop.f32.mrf.mxu0
    %v113 = vadd.f32 0.0, %v112
    %v114 = vpop.f32.mrf.mxu0
    %v115 = vpop.f32.mrf.mxu0
    %v116 = vadd.f32 0.0, %v115
    %v117 = vpop.f32.mrf.mxu0
    %118 = vdwg.mxu0
    %v119 = vld [vmem:[%s4] sm:$0xff]
    %v120 = vld [vmem:[%s4 + $0x8] sm:$0xff]
    %v121 = vld [vmem:[%s4 + $0x10] sm:$0x1]
    %vm122 = vcmask 261120
    %123 = vst.msk [vmem:[#allocation2] sm:$0xff] %vm122, 0.0
    %124 = vst.msk [vmem:[#allocation2 + $0x8] sm:$0xff] %vm122, 0.0
    %125 = vst.msk [vmem:[#allocation2 + $0x10] sm:$0xff] %vm122, 0.0
    %126 = vst.msk [vmem:[#allocation2 + $0x18] sm:$0xff] %vm122, 0.0
    %127 = vst.msk [vmem:[#allocation2 + $0x20] sm:$0xff] %vm122, 0.0
    %128 = vst.msk [vmem:[#allocation2 + $0x28] sm:$0xff] %vm122, 0.0
    %v129 = vadd.f32 %v105, %v119
    %v130 = vadd.f32 %v108, %v120
    %131 = vst.msk [vmem:[#allocation2] sm:$0xff] %vm122, %v129
    %132 = vst.msk [vmem:[#allocation2 + $0x8] sm:$0xff] %vm122, %v130
    %vm133 = vcmask 253952
    %134 = vst.msk [vmem:[#allocation2 + $0x10] sm:$0x1] %vm133, %v121
    %v135 = vadd.f32 %v113, %v119
    %v136 = vadd.f32 %v116, %v120
    %137 = vst.msk [vmem:[#allocation2 + $0x18] sm:$0xff] %vm122, %v135
    %138 = vst.msk [vmem:[#allocation2 + $0x20] sm:$0xff] %vm122, %v136
    %139 = vst.msk [vmem:[#allocation2 + $0x28] sm:$0x1] %vm133, %v121
    %v140 = vld [vmem:[#allocation2] sm:$0xff]
    %v141 = vld [vmem:[#allocation2 + $0x8] sm:$0xff]
    %v142 = vld [vmem:[#allocation2 + $0x10] sm:$0xff]
    %v143 = vld [vmem:[#allocation2 + $0x18] sm:$0xff]
    %v144 = vld [vmem:[#allocation2 + $0x20] sm:$0xff]
    %v145 = vld [vmem:[#allocation2 + $0x28] sm:$0xff]
    %v146 = vld [vmem:[%s4 + $0x11] sm:$0x1]
    %v147 = vld [vmem:[%s4 + $0x12] sm:$0x1]
    %v148 = vsel %vm122, %v140, 0.0
    %149 = vadd.xlane.f32.xlu0 %v148
    %v150 = vpop.xlane.xlu0 %149
    %v151 = vsel %vm122, %v141, 0.0
    %152 = vadd.xlane.f32.xlu0 %v151
    %v153 = vpop.xlane.xlu0 %152
    %v154 = vsel %vm122, %v142, 0.0
    %155 = vadd.xlane.f32.xlu0 %v154
    %v156 = vpop.xlane.xlu0 %155
    %v157 = vsel %vm122, %v143, 0.0
    %158 = vadd.xlane.f32.xlu0 %v157
    %v159 = vpop.xlane.xlu0 %158
    %v160 = vsel %vm122, %v144, 0.0
    %161 = vadd.xlane.f32.xlu0 %v160
    %v162 = vpop.xlane.xlu0 %161
    %v163 = vsel %vm122, %v145, 0.0
    %164 = vadd.xlane.f32.xlu0 %v163
    %v165 = vpop.xlane.xlu0 %164
    %v166 = vrcp.pop 32.0
    %v167 = vmul.f32 %v150, %v166
    %v168 = vmul.f32 %v153, %v166
    %v169 = vmul.f32 %v156, %v166
    %v170 = vmul.f32 %v159, %v166
    %v171 = vmul.f32 %v162, %v166
    %v172 = vmul.f32 %v165, %v166
    %v173 = vsub.f32 %v140, %v167
    %v174 = vsub.f32 %v141, %v168
    %v175 = vsub.f32 %v142, %v169
    %v176 = vsub.f32 %v143, %v170
    %v177 = vsub.f32 %v144, %v171
    %v178 = vsub.f32 %v145, %v172
    %v179 = vmul.f32 %v173, %v173
    %v180 = vmul.f32 %v174, %v174
    %v181 = vmul.f32 %v175, %v175
    %v182 = vmul.f32 %v176, %v176
    %v183 = vmul.f32 %v177, %v177
    %v184 = vmul.f32 %v178, %v178
    %v185 = vsel %vm122, %v179, 0.0
    %186 = vadd.xlane.f32.xlu0 %v185
    %v187 = vpop.xlane.xlu0 %186
    %v188 = vsel %vm122, %v180, 0.0
    %189 = vadd.xlane.f32.xlu0 %v188
    %v190 = vpop.xlane.xlu0 %189
    %v191 = vsel %vm122, %v181, 0.0
    %192 = vadd.xlane.f32.xlu0 %v191
    %v193 = vpop.xlane.xlu0 %192
    %v194 = vsel %vm122, %v182, 0.0
    %195 = vadd.xlane.f32.xlu0 %v194
    %v196 = vpop.xlane.xlu0 %195
    %v197 = vsel %vm122, %v183, 0.0
    %198 = vadd.xlane.f32.xlu0 %v197
    %v199 = vpop.xlane.xlu0 %198
    %v200 = vsel %vm122, %v184, 0.0
    %201 = vadd.xlane.f32.xlu0 %v200
    %v202 = vpop.xlane.xlu0 %201
    %v203 = vmul.f32 %v187, %v166
    %v204 = vmul.f32 %v190, %v166
    %v205 = vmul.f32 %v193, %v166
    %v206 = vmul.f32 %v196, %v166
    %v207 = vmul.f32 %v199, %v166
    %v208 = vmul.f32 %v202, %v166
    %v209 = vadd.f32 %v203, 1e-05
    %v210 = vadd.f32 %v204, 1e-05
    %v211 = vadd.f32 %v205, 1e-05
    %v212 = vadd.f32 %v206, 1e-05
    %v213 = vadd.f32 %v207, 1e-05
    %v214 = vadd.f32 %v208, 1e-05
    %v215 = vrsqrt.pop %v209
    %v216 = vrsqrt.pop %v210
    %v217 = vrsqrt.pop %v211
    %v218 = vrsqrt.pop %v212
    %v219 = vrsqrt.pop %v213
    %v220 = vrsqrt.pop %v214
    %v221 = vmul.f32 %v173, %v215
    %v222 = vmul.f32 %v174, %v216
    %v223 = vmul.f32 %v175, %v217
    %v224 = vmul.f32 %v176, %v218
    %v225 = vmul.f32 %v177, %v219
    %v226 = vmul.f32 %v178, %v220
    %v227 = vlaneseq
    %v228 = vshrl.u32 %v227, 7
    %v229 = vsub.s32 0, %v228
    %v230 = vrot.slane %v146, %v229
    %v231 = vmul.f32 %v221, %v230
    %v232 = vmul.f32 %v222, %v230
    %v233 = vmul.f32 %v223, %v230
    %v234 = vmul.f32 %v224, %v230
    %v235 = vmul.f32 %v225, %v230
    %v236 = vmul.f32 %v226, %v230
    %v237 = vlaneseq
    %v238 = vshrl.u32 %v237, 7
    %v239 = vsub.s32 0, %v238
    %v240 = vrot.slane %v147, %v239
    %v241 = vadd.f32 %v231, %v240
    %v242 = vadd.f32 %v232, %v240
    %v243 = vadd.f32 %v233, %v240
    %v244 = vadd.f32 %v234, %v240
    %v245 = vadd.f32 %v235, %v240
    %v246 = vadd.f32 %v236, %v240
    %v247 = vld [vmem:[%s5] sm:$0xff]
    %v248 = vld [vmem:[%s5 + $0x8] sm:$0xff]
    %v249 = vld [vmem:[%s5 + $0x10] sm:$0xff]
    %v250 = vld [vmem:[%s5 + $0x18] sm:$0xff]
    %v251 = vld [vmem:[%s5 + $0x20] sm:$0xff]
    %v252 = vld [vmem:[%s5 + $0x28] sm:$0xff]
    %v253 = vld [vmem:[%s4 + $0x15] sm:$0x1]
    %v254 = vld [vmem:[%s4 + $0x17] sm:$0x1]
    %v255 = vsel %vm122, %v241, 0.0
    %256 = vadd.xlane.f32.xlu0 %v255
    %v257 = vpop.xlane.xlu0 %256
    %v258 = vsel %vm122, %v242, 0.0
    %259 = vadd.xlane.f32.xlu0 %v258
    %v260 = vpop.xlane.xlu0 %259
    %v261 = vsel %vm122, %v243, 0.0
    %262 = vadd.xlane.f32.xlu0 %v261
    %v263 = vpop.xlane.xlu0 %262
    %v264 = vsel %vm122, %v244, 0.0
    %265 = vadd.xlane.f32.xlu0 %v264
    %v266 = vpop.xlane.xlu0 %265
    %v267 = vsel %vm122, %v245, 0.0
    %268 = vadd.xlane.f32.xlu0 %v267
    %v269 = vpop.xlane.xlu0 %268
    %v270 = vsel %vm122, %v246, 0.0
    %271 = vadd.xlane.f32.xlu0 %v270
    %v272 = vpop.xlane.xlu0 %271
    %v273 = vmul.f32 %v257, %v166
    %v274 = vmul.f32 %v260, %v166
    %v275 = vmul.f32 %v263, %v166
    %v276 = vmul.f32 %v266, %v166
    %v277 = vmul.f32 %v269, %v166
    %v278 = vmul.f32 %v272, %v166
    %v279 = vsub.f32 %v241, %v273
    %v280 = vsub.f32 %v242, %v274
    %v281 = vsub.f32 %v243, %v275
    %v282 = vsub.f32 %v244, %v276
    %v283 = vsub.f32 %v245, %v277
    %v284 = vsub.f32 %v246, %v278
    %v285 = vmul.f32 %v279, %v279
    %v286 = vmul.f32 %v280, %v280
    %v287 = vmul.f32 %v281, %v281
    %v288 = vmul.f32 %v282, %v282
    %v289 = vmul.f32 %v283, %v283
    %v290 = vmul.f32 %v284, %v284
    %v291 = vsel %vm122, %v285, 0.0
    %292 = vadd.xlane.f32.xlu0 %v291
    %v293 = vpop.xlane.xlu0 %292
    %v294 = vsel %vm122, %v286, 0.0
    %295 = vadd.xlane.f32.xlu0 %v294
    %v296 = vpop.xlane.xlu0 %295
    %v297 = vsel %vm122, %v287, 0.0
    %298 = vadd.xlane.f32.xlu0 %v297
    %v299 = vpop.xlane.xlu0 %298
    %v300 = vsel %vm122, %v288, 0.0
    %301 = vadd.xlane.f32.xlu0 %v300
    %v302 = vpop.xlane.xlu0 %301
    %v303 = vsel %vm122, %v289, 0.0
    %304 = vadd.xlane.f32.xlu0 %v303
    %v305 = vpop.xlane.xlu0 %304
    %v306 = vsel %vm122, %v290, 0.0
    %307 = vadd.xlane.f32.xlu0 %v306
    %v308 = vpop.xlane.xlu0 %307
    %v309 = vmul.f32 %v293, %v166
    %v310 = vmul.f32 %v296, %v166
    %v311 = vmul.f32 %v299, %v166
    %v312 = vmul.f32 %v302, %v166
    %v313 = vmul.f32 %v305, %v166
    %v314 = vmul.f32 %v308, %v166
    %v315 = vadd.f32 %v309, 1e-05
    %v316 = vadd.f32 %v310, 1e-05
    %v317 = vadd.f32 %v311, 1e-05
    %v318 = vadd.f32 %v312, 1e-05
    %v319 = vadd.f32 %v313, 1e-05
    %v320 = vadd.f32 %v314, 1e-05
    %v321 = vrsqrt.pop %v315
    %v322 = vrsqrt.pop %v316
    %v323 = vrsqrt.pop %v317
    %v324 = vrsqrt.pop %v318
    %v325 = vrsqrt.pop %v319
    %v326 = vrsqrt.pop %v320
    %v327 = vmul.f32 %v279, %v321
    %v328 = vmul.f32 %v280, %v322
    %v329 = vmul.f32 %v281, %v323
    %v330 = vmul.f32 %v282, %v324
    %v331 = vmul.f32 %v283, %v325
    %v332 = vmul.f32 %v284, %v326
    %v333 = vlaneseq
    %v334 = vshrl.u32 %v333, 7
    %v335 = vsub.s32 0, %v334
    %v336 = vrot.slane %v253, %v335
    %v337 = vmul.f32 %v327, %v336
    %v338 = vmul.f32 %v328, %v336
    %v339 = vmul.f32 %v329, %v336
    %v340 = vmul.f32 %v330, %v336
    %v341 = vmul.f32 %v331, %v336
    %v342 = vmul.f32 %v332, %v336
    %v343 = vlaneseq
    %v344 = vshrl.u32 %v343, 7
    %v345 = vsub.s32 0, %v344
    %v346 = vrot.slane %v254, %v345
    %v347 = vadd.f32 %v337, %v346
    %v348 = vadd.f32 %v338, %v346
    %v349 = vadd.f32 %v339, %v346
    %v350 = vadd.f32 %v340, %v346
    %v351 = vadd.f32 %v341, %v346
    %v352 = vadd.f32 %v342, %v346
    %v353 = vpack.c.bf16 %v348, %v347
    %v354 = vpack.c.bf16 %v350, %v349
    %v355 = vpack.c.bf16 %v352, %v351
    %v356 = vld [vmem:[%s1] sm:$0xf]
    %v357 = vld [vmem:[%s1 + $0x4] sm:$0xf]
    %v358 = vld [vmem:[%s1 + $0x8] sm:$0xf]
    %v359 = vld [vmem:[%s1 + $0xc] sm:$0xf]
    %v360 = vld [vmem:[%s1 + $0x10] sm:$0x1]
    %s361 = scalar_lea.vmem %s1, 20
    %v362 = vld [vmem:[%s361] sm:$0xf]
    %v363 = vld [vmem:[%s361 + $0x4] sm:$0xf]
    %v364 = vld [vmem:[%s361 + $0x8] sm:$0xf]
    %v365 = vld [vmem:[%s361 + $0xc] sm:$0xf]
    %s366 = scalar_lea.vmem %s1, 40
    %v367 = vld [vmem:[%s366] sm:$0xf]
    %v368 = vld [vmem:[%s366 + $0x4] sm:$0xf]
    %v369 = vld [vmem:[%s366 + $0x8] sm:$0xf]
    %v370 = vld [vmem:[%s366 + $0xc] sm:$0xf]
    %s371 = scalar_lea.vmem %s1, 60
    %v372 = vld [vmem:[%s371] sm:$0xf]
    %v373 = vld [vmem:[%s371 + $0x4] sm:$0xf]
    %v374 = vld [vmem:[%s371 + $0x8] sm:$0xf]
    %v375 = vld [vmem:[%s371 + $0xc] sm:$0xf]
    %v376 = vunpack.c.l.bf16 %v360
    %v377 = vlaneseq
    %v378 = vshrl.u32 %v377, 7
    %v379 = vsub.s32 0, %v378
    %v380 = vrot.slane %v376, %v379
    %v385 = vunpack.c.l.b16 %v356
    %v386 = vunpack.c.l.b16 %v357
    %v387 = vunpack.c.l.b16 %v358
    %v388 = vunpack.c.l.b16 %v359
    %v389 = vpack.c.b16 %v386, %v385
    %v390 = vpack.c.b16 %v388, %v387
    %v394 = vsel %vm122, %v353, 0
    %v397 = vsel %vm122, %v354, 0
    %v400 = vsel %vm122, %v355, 0
    %402 = vmatprep.subr.bf16.mxu0 0
    %403 = vmatpush1.bf16.msra.mxu0 0
    %404 = vmatprep.subr.bf16.mxu0 0
    %405 = vmatpush1.bf16.msra.mxu0 0
    %406 = vmatprep.subr.bf16.mxu0 0
    %407 = vmatpush1.bf16.msra.mxu0 0
    %408 = vmatprep.subr.bf16.mxu0 0
    %409 = vmatpush1.bf16.msra.mxu0 0
    %410 = vmatprep.subr.bf16.mxu0 0
    %411 = vmatpush1.bf16.msra.mxu0 0
    %412 = vmatprep.subr.bf16.mxu0 0
    %413 = vmatpush1.bf16.msra.mxu0 0
    %414 = vmatprep.subr.bf16.mxu0 0
    %415 = vmatpush1.bf16.msra.mxu0 %v390
    %416 = vmatprep.subr.bf16.mxu0 0
    %417 = vmatpush1.bf16.msra.mxu0 %v389
    %418 = vmatprep.subr.bf16.mxu0 0
    %419 = vmatpush2.bf16.msra.mxu0 0
    %420 = vmatprep.subr.bf16.mxu0 0
    %421 = vmatpush2.bf16.msra.mxu0 0
    %422 = vmatprep.subr.bf16.mxu0 0
    %423 = vmatpush2.bf16.msra.mxu0 0
    %424 = vmatprep.subr.bf16.mxu0 0
    %425 = vmatpush2.bf16.msra.mxu0 0
    %426 = vmatprep.subr.bf16.mxu0 0
    %427 = vmatpush2.bf16.msra.mxu0 0
    %428 = vmatprep.subr.bf16.mxu0 0
    %429 = vmatpush2.bf16.msra.mxu0 0
    %430 = vmatprep.subr.bf16.mxu0 0
    %431 = vmatpush2.bf16.msra.mxu0 0
    %432 = vmatprep.subr.bf16.mxu0 0
    %433 = vmatpush2.bf16.msra.mxu0 0
    %434 = vmatprep.mubr.bf16.mxu0 0
    %435 = vmatmul.mubr.bf16.gmra.mxu0 %v394
    %v436 = vpop.f32.mrf.mxu0
    %v437 = vadd.f32 %v380, %v436
    %v438 = vpop.f32.mrf.mxu0
    %v439 = vpop.f32.mrf.mxu0
    %v440 = vadd.f32 %v380, %v439
    %v441 = vpop.f32.mrf.mxu0
    %442 = vmatprep.mubr.bf16.mxu0 0
    %443 = vmatmul.mubr.bf16.gmra.mxu0 %v397
    %v444 = vpop.f32.mrf.mxu0
    %v445 = vadd.f32 %v380, %v444
    %v446 = vpop.f32.mrf.mxu0
    %v447 = vpop.f32.mrf.mxu0
    %v448 = vadd.f32 %v380, %v447
    %v449 = vpop.f32.mrf.mxu0
    %450 = vmatprep.mubr.bf16.mxu0 0
    %451 = vmatmul.mubr.bf16.gmra.mxu0 %v400
    %v452 = vpop.f32.mrf.mxu0
    %v453 = vadd.f32 %v380, %v452
    %v454 = vpop.f32.mrf.mxu0
    %v455 = vpop.f32.mrf.mxu0
    %v456 = vadd.f32 %v380, %v455
    %v457 = vpop.f32.mrf.mxu0
    %458 = vdwg.mxu0
    %v463 = vunpack.c.l.b16 %v362
    %v464 = vunpack.c.l.b16 %v363
    %v465 = vunpack.c.l.b16 %v364
    %v466 = vunpack.c.l.b16 %v365
    %v467 = vpack.c.b16 %v464, %v463
    %v468 = vpack.c.b16 %v466, %v465
    %471 = vmatprep.subr.bf16.mxu0 0
    %472 = vmatpush1.bf16.msra.mxu0 0
    %473 = vmatprep.subr.bf16.mxu0 0
    %474 = vmatpush1.bf16.msra.mxu0 0
    %475 = vmatprep.subr.bf16.mxu0 0
    %476 = vmatpush1.bf16.msra.mxu0 0
    %477 = vmatprep.subr.bf16.mxu0 0
    %478 = vmatpush1.bf16.msra.mxu0 0
    %479 = vmatprep.subr.bf16.mxu0 0
    %480 = vmatpush1.bf16.msra.mxu0 0
    %481 = vmatprep.subr.bf16.mxu0 0
    %482 = vmatpush1.bf16.msra.mxu0 0
    %483 = vmatprep.subr.bf16.mxu0 0
    %484 = vmatpush1.bf16.msra.mxu0 %v468
    %485 = vmatprep.subr.bf16.mxu0 0
    %486 = vmatpush1.bf16.msra.mxu0 %v467
    %487 = vmatprep.subr.bf16.mxu0 0
    %488 = vmatpush2.bf16.msra.mxu0 0
    %489 = vmatprep.subr.bf16.mxu0 0
    %490 = vmatpush2.bf16.msra.mxu0 0
    %491 = vmatprep.subr.bf16.mxu0 0
    %492 = vmatpush2.bf16.msra.mxu0 0
    %493 = vmatprep.subr.bf16.mxu0 0
    %494 = vmatpush2.bf16.msra.mxu0 0
    %495 = vmatprep.subr.bf16.mxu0 0
    %496 = vmatpush2.bf16.msra.mxu0 0
    %497 = vmatprep.subr.bf16.mxu0 0
    %498 = vmatpush2.bf16.msra.mxu0 0
    %499 = vmatprep.subr.bf16.mxu0 0
    %500 = vmatpush2.bf16.msra.mxu0 0
    %501 = vmatprep.subr.bf16.mxu0 0
    %502 = vmatpush2.bf16.msra.mxu0 0
    %503 = vmatprep.mubr.bf16.mxu0 0
    %504 = vmatmul.mubr.bf16.gmra.mxu0 %v394
    %v505 = vpop.f32.mrf.mxu0
    %v506 = vadd.f32 0.0, %v505
    %v507 = vpop.f32.mrf.mxu0
    %v508 = vpop.f32.mrf.mxu0
    %v509 = vadd.f32 0.0, %v508
    %v510 = vpop.f32.mrf.mxu0
    %511 = vmatprep.mubr.bf16.mxu0 0
    %512 = vmatmul.mubr.bf16.gmra.mxu0 %v397
    %v513 = vpop.f32.mrf.mxu0
    %v514 = vadd.f32 0.0, %v513
    %v515 = vpop.f32.mrf.mxu0
    %v516 = vpop.f32.mrf.mxu0
    %v517 = vadd.f32 0.0, %v516
    %v518 = vpop.f32.mrf.mxu0
    %519 = vmatprep.mubr.bf16.mxu0 0
    %520 = vmatmul.mubr.bf16.gmra.mxu0 %v400
    %v521 = vpop.f32.mrf.mxu0
    %v522 = vadd.f32 0.0, %v521
    %v523 = vpop.f32.mrf.mxu0
    %v524 = vpop.f32.mrf.mxu0
    %v525 = vadd.f32 0.0, %v524
    %v526 = vpop.f32.mrf.mxu0
    %527 = vdwg.mxu0
    %v532 = vunpack.c.l.b16 %v367
    %v533 = vunpack.c.l.b16 %v368
    %v534 = vunpack.c.l.b16 %v369
    %v535 = vunpack.c.l.b16 %v370
    %v536 = vpack.c.b16 %v533, %v532
    %v537 = vpack.c.b16 %v535, %v534
    %540 = vmatprep.subr.bf16.mxu0 0
    %541 = vmatpush1.bf16.msra.mxu0 0
    %542 = vmatprep.subr.bf16.mxu0 0
    %543 = vmatpush1.bf16.msra.mxu0 0
    %544 = vmatprep.subr.bf16.mxu0 0
    %545 = vmatpush1.bf16.msra.mxu0 0
    %546 = vmatprep.subr.bf16.mxu0 0
    %547 = vmatpush1.bf16.msra.mxu0 0
    %548 = vmatprep.subr.bf16.mxu0 0
    %549 = vmatpush1.bf16.msra.mxu0 0
    %550 = vmatprep.subr.bf16.mxu0 0
    %551 = vmatpush1.bf16.msra.mxu0 0
    %552 = vmatprep.subr.bf16.mxu0 0
    %553 = vmatpush1.bf16.msra.mxu0 %v537
    %554 = vmatprep.subr.bf16.mxu0 0
    %555 = vmatpush1.bf16.msra.mxu0 %v536
    %556 = vmatprep.subr.bf16.mxu0 0
    %557 = vmatpush2.bf16.msra.mxu0 0
    %558 = vmatprep.subr.bf16.mxu0 0
    %559 = vmatpush2.bf16.msra.mxu0 0
    %560 = vmatprep.subr.bf16.mxu0 0
    %561 = vmatpush2.bf16.msra.mxu0 0
    %562 = vmatprep.subr.bf16.mxu0 0
    %563 = vmatpush2.bf16.msra.mxu0 0
    %564 = vmatprep.subr.bf16.mxu0 0
    %565 = vmatpush2.bf16.msra.mxu0 0
    %566 = vmatprep.subr.bf16.mxu0 0
    %567 = vmatpush2.bf16.msra.mxu0 0
    %568 = vmatprep.subr.bf16.mxu0 0
    %569 = vmatpush2.bf16.msra.mxu0 0
    %570 = vmatprep.subr.bf16.mxu0 0
    %571 = vmatpush2.bf16.msra.mxu0 0
    %572 = vmatprep.mubr.bf16.mxu0 0
    %573 = vmatmul.mubr.bf16.gmra.mxu0 %v394
    %v574 = vpop.f32.mrf.mxu0
    %v575 = vadd.f32 0.0, %v574
    %v576 = vpop.f32.mrf.mxu0
    %v577 = vpop.f32.mrf.mxu0
    %v578 = vadd.f32 0.0, %v577
    %v579 = vpop.f32.mrf.mxu0
    %580 = vmatprep.mubr.bf16.mxu0 0
    %581 = vmatmul.mubr.bf16.gmra.mxu0 %v397
    %v582 = vpop.f32.mrf.mxu0
    %v583 = vadd.f32 0.0, %v582
    %v584 = vpop.f32.mrf.mxu0
    %v585 = vpop.f32.mrf.mxu0
    %v586 = vadd.f32 0.0, %v585
    %v587 = vpop.f32.mrf.mxu0
    %588 = vmatprep.mubr.bf16.mxu0 0
    %589 = vmatmul.mubr.bf16.gmra.mxu0 %v400
    %v590 = vpop.f32.mrf.mxu0
    %v591 = vadd.f32 0.0, %v590
    %v592 = vpop.f32.mrf.mxu0
    %v593 = vpop.f32.mrf.mxu0
    %v594 = vadd.f32 0.0, %v593
    %v595 = vpop.f32.mrf.mxu0
    %596 = vdwg.mxu0
    %vm597 = vcmask 64512
    %v599 = vsel %vm597, %v437, 0
    %v602 = vsel %vm597, %v440, 0
    %v605 = vsel %vm597, %v445, 0
    %v608 = vsel %vm597, %v448, 0
    %v611 = vsel %vm597, %v453, 0
    %v614 = vsel %vm597, %v456, 0
    %v617 = vsel %vm597, %v506, 0
    %v620 = vsel %vm597, %v509, 0
    %v623 = vsel %vm597, %v514, 0
    %v626 = vsel %vm597, %v517, 0
    %v629 = vsel %vm597, %v522, 0
    %v632 = vsel %vm597, %v525, 0
    %634 = vmatprep.subr.mxu0 0.0
    %635 = vmatpush1.xpose.msra.mxu0 0.0
    %636 = vmatprep.subr.mxu0 0.0
    %637 = vmatpush1.xpose.msra.mxu0 0.0
    %638 = vmatprep.subr.mxu0 0.0
    %639 = vmatpush1.xpose.msra.mxu0 0.0
    %640 = vmatprep.subr.mxu0 0.0
    %641 = vmatpush1.xpose.msra.mxu0 0.0
    %642 = vmatprep.subr.mxu0 0.0
    %643 = vmatpush1.xpose.msra.mxu0 0.0
    %644 = vmatprep.subr.mxu0 0.0
    %645 = vmatpush1.xpose.msra.mxu0 0.0
    %646 = vmatprep.subr.mxu0 0.0
    %647 = vmatpush1.xpose.msra.mxu0 0.0
    %648 = vmatprep.subr.mxu0 0.0
    %649 = vmatpush1.xpose.msra.mxu0 0.0
    %650 = vmatprep.subr.mxu0 0.0
    %651 = vmatpush1.xpose.msra.mxu0 0.0
    %652 = vmatprep.subr.mxu0 0.0
    %653 = vmatpush1.xpose.msra.mxu0 0.0
    %654 = vmatprep.subr.mxu0 0.0
    %655 = vmatpush1.xpose.msra.mxu0 %v632
    %656 = vmatprep.subr.mxu0 0.0
    %657 = vmatpush1.xpose.msra.mxu0 %v629
    %658 = vmatprep.subr.mxu0 0.0
    %659 = vmatpush1.xpose.msra.mxu0 %v626
    %660 = vmatprep.subr.mxu0 0.0
    %661 = vmatpush1.xpose.msra.mxu0 %v623
    %662 = vmatprep.subr.mxu0 0.0
    %663 = vmatpush1.xpose.msra.mxu0 %v620
    %664 = vmatprep.subr.mxu0 0.0
    %665 = vmatpush1.xpose.msra.mxu0 %v617
    %666 = vmatprep.subr.mxu0 0.0
    %667 = vmatpush2.xpose.msra.mxu0 0.0
    %668 = vmatprep.subr.mxu0 0.0
    %669 = vmatpush2.xpose.msra.mxu0 0.0
    %670 = vmatprep.subr.mxu0 0.0
    %671 = vmatpush2.xpose.msra.mxu0 0.0
    %672 = vmatprep.subr.mxu0 0.0
    %673 = vmatpush2.xpose.msra.mxu0 0.0
    %674 = vmatprep.subr.mxu0 0.0
    %675 = vmatpush2.xpose.msra.mxu0 0.0
    %676 = vmatprep.subr.mxu0 0.0
    %677 = vmatpush2.xpose.msra.mxu0 0.0
    %678 = vmatprep.subr.mxu0 0.0
    %679 = vmatpush2.xpose.msra.mxu0 0.0
    %680 = vmatprep.subr.mxu0 0.0
    %681 = vmatpush2.xpose.msra.mxu0 0.0
    %682 = vmatprep.subr.mxu0 0.0
    %683 = vmatpush2.xpose.msra.mxu0 0.0
    %684 = vmatprep.subr.mxu0 0.0
    %685 = vmatpush2.xpose.msra.mxu0 0.0
    %686 = vmatprep.subr.mxu0 0.0
    %687 = vmatpush2.xpose.msra.mxu0 0.0
    %688 = vmatprep.subr.mxu0 0.0
    %689 = vmatpush2.xpose.msra.mxu0 0.0
    %690 = vmatprep.subr.mxu0 0.0
    %691 = vmatpush2.xpose.msra.mxu0 0.0
    %692 = vmatprep.subr.mxu0 0.0
    %693 = vmatpush2.xpose.msra.mxu0 0.0
    %694 = vmatprep.subr.mxu0 0.0
    %695 = vmatpush2.xpose.msra.mxu0 0.0
    %696 = vmatprep.subr.mxu0 0.0
    %697 = vmatpush2.xpose.msra.mxu0 0.0
    %698 = vmatprep.mubr.f32.mxu0 0.0
    %699 = vmatmul.mubr.f32.gmra.mxu0 %v599
    %v700 = vpop.f32.mrf.mxu0
    %v701 = vadd.f32 %v247, %v700
    %v702 = vpop.f32.mrf.mxu0
    %703 = vmatprep.mubr.f32.mxu0 0.0
    %704 = vmatmul.mubr.f32.gmra.mxu0 %v602
    %v705 = vpop.f32.mrf.mxu0
    %v706 = vadd.f32 %v248, %v705
    %v707 = vpop.f32.mrf.mxu0
    %708 = vmatprep.mubr.f32.mxu0 0.0
    %709 = vmatmul.mubr.f32.gmra.mxu0 %v605
    %v710 = vpop.f32.mrf.mxu0
    %v711 = vadd.f32 %v249, %v710
    %v712 = vpop.f32.mrf.mxu0
    %713 = vmatprep.mubr.f32.mxu0 0.0
    %714 = vmatmul.mubr.f32.gmra.mxu0 %v608
    %v715 = vpop.f32.mrf.mxu0
    %v716 = vadd.f32 %v250, %v715
    %v717 = vpop.f32.mrf.mxu0
    %718 = vmatprep.mubr.f32.mxu0 0.0
    %719 = vmatmul.mubr.f32.gmra.mxu0 %v611
    %v720 = vpop.f32.mrf.mxu0
    %v721 = vadd.f32 %v251, %v720
    %v722 = vpop.f32.mrf.mxu0
    %723 = vmatprep.mubr.f32.mxu0 0.0
    %724 = vmatmul.mubr.f32.gmra.mxu0 %v614
    %v725 = vpop.f32.mrf.mxu0
    %v726 = vadd.f32 %v252, %v725
    %v727 = vpop.f32.mrf.mxu0
    %728 = vdwg.mxu0
    %v729 = vsel %vm63, %v701, -inf
    %730 = vmax.xlane.f32.xlu0 %v729
    %v731 = vpop.xlane.xlu0 %730
    %v732 = vsel %vm63, %v706, -inf
    %733 = vmax.xlane.f32.xlu0 %v732
    %v734 = vpop.xlane.xlu0 %733
    %v735 = vsel %vm63, %v711, -inf
    %736 = vmax.xlane.f32.xlu0 %v735
    %v737 = vpop.xlane.xlu0 %736
    %v738 = vsel %vm63, %v716, -inf
    %739 = vmax.xlane.f32.xlu0 %v738
    %v740 = vpop.xlane.xlu0 %739
    %v741 = vsel %vm63, %v721, -inf
    %742 = vmax.xlane.f32.xlu0 %v741
    %v743 = vpop.xlane.xlu0 %742
    %v744 = vsel %vm63, %v726, -inf
    %745 = vmax.xlane.f32.xlu0 %v744
    %v746 = vpop.xlane.xlu0 %745
    %v747 = vsub.f32 %v701, %v731
    %v748 = vsub.f32 %v706, %v734
    %v749 = vsub.f32 %v711, %v737
    %v750 = vsub.f32 %v716, %v740
    %v751 = vsub.f32 %v721, %v743
    %v752 = vsub.f32 %v726, %v746
    %v753 = vmul.f32 %v747, 1.442695
    %v754 = vpow.pop %v753
    %v755 = vmul.f32 %v748, 1.442695
    %v756 = vpow.pop %v755
    %v757 = vmul.f32 %v749, 1.442695
    %v758 = vpow.pop %v757
    %v759 = vmul.f32 %v750, 1.442695
    %v760 = vpow.pop %v759
    %v761 = vmul.f32 %v751, 1.442695
    %v762 = vpow.pop %v761
    %v763 = vmul.f32 %v752, 1.442695
    %v764 = vpow.pop %v763
    %v765 = vsel %vm63, %v754, 0.0
    %766 = vadd.xlane.f32.xlu0 %v765
    %v767 = vpop.xlane.xlu0 %766
    %v768 = vsel %vm63, %v756, 0.0
    %769 = vadd.xlane.f32.xlu0 %v768
    %v770 = vpop.xlane.xlu0 %769
    %v771 = vsel %vm63, %v758, 0.0
    %772 = vadd.xlane.f32.xlu0 %v771
    %v773 = vpop.xlane.xlu0 %772
    %v774 = vsel %vm63, %v760, 0.0
    %775 = vadd.xlane.f32.xlu0 %v774
    %v776 = vpop.xlane.xlu0 %775
    %v777 = vsel %vm63, %v762, 0.0
    %778 = vadd.xlane.f32.xlu0 %v777
    %v779 = vpop.xlane.xlu0 %778
    %v780 = vsel %vm63, %v764, 0.0
    %781 = vadd.xlane.f32.xlu0 %v780
    %v782 = vpop.xlane.xlu0 %781
    %v783 = vrcp.pop %v767
    %v784 = vrcp.pop %v770
    %v785 = vrcp.pop %v773
    %v786 = vrcp.pop %v776
    %v787 = vrcp.pop %v779
    %v788 = vrcp.pop %v782
    %v789 = vmul.f32 %v754, %v783
    %v790 = vmul.f32 %v756, %v784
    %v791 = vmul.f32 %v758, %v785
    %v792 = vmul.f32 %v760, %v786
    %v793 = vmul.f32 %v762, %v787
    %v794 = vmul.f32 %v764, %v788
    %v795 = vpack.c.bf16 %v790, %v789
    %v796 = vpack.c.bf16 %v792, %v791
    %v797 = vpack.c.bf16 %v794, %v793
    %v798 = vpack.c.bf16 %v578, %v575
    %v799 = vpack.c.bf16 %v586, %v583
    %v800 = vpack.c.bf16 %v594, %v591
    %v802 = vsel %vm63, %v795, 0
    %v805 = vsel %vm63, %v796, 0
    %v808 = vsel %vm63, %v797, 0
    %810 = vmatprep.subr.bf16.mxu0 0
    %811 = vmatpush1.bf16.msra.mxu0 0
    %812 = vmatprep.subr.bf16.mxu0 0
    %813 = vmatpush1.bf16.msra.mxu0 0
    %814 = vmatprep.subr.bf16.mxu0 0
    %815 = vmatpush1.bf16.msra.mxu0 0
    %816 = vmatprep.subr.bf16.mxu0 0
    %817 = vmatpush1.bf16.msra.mxu0 0
    %818 = vmatprep.subr.bf16.mxu0 0
    %819 = vmatpush1.bf16.msra.mxu0 0
    %820 = vmatprep.subr.bf16.mxu0 0
    %821 = vmatpush1.bf16.msra.mxu0 %v800
    %822 = vmatprep.subr.bf16.mxu0 0
    %823 = vmatpush1.bf16.msra.mxu0 %v799
    %824 = vmatprep.subr.bf16.mxu0 0
    %825 = vmatpush1.bf16.msra.mxu0 %v798
    %826 = vmatprep.subr.bf16.mxu0 0
    %827 = vmatpush2.bf16.msra.mxu0 0
    %828 = vmatprep.subr.bf16.mxu0 0
    %829 = vmatpush2.bf16.msra.mxu0 0
    %830 = vmatprep.subr.bf16.mxu0 0
    %831 = vmatpush2.bf16.msra.mxu0 0
    %832 = vmatprep.subr.bf16.mxu0 0
    %833 = vmatpush2.bf16.msra.mxu0 0
    %834 = vmatprep.subr.bf16.mxu0 0
    %835 = vmatpush2.bf16.msra.mxu0 0
    %836 = vmatprep.subr.bf16.mxu0 0
    %837 = vmatpush2.bf16.msra.mxu0 0
    %838 = vmatprep.subr.bf16.mxu0 0
    %839 = vmatpush2.bf16.msra.mxu0 0
    %840 = vmatprep.subr.bf16.mxu0 0
    %841 = vmatpush2.bf16.msra.mxu0 0
    %842 = vmatprep.mubr.bf16.mxu0 0
    %843 = vmatmul.mubr.bf16.gmra.mxu0 %v802
    %v844 = vpop.f32.mrf.mxu0
    %v845 = vadd.f32 0.0, %v844
    %v846 = vpop.f32.mrf.mxu0
    %v847 = vpop.f32.mrf.mxu0
    %v848 = vadd.f32 0.0, %v847
    %v849 = vpop.f32.mrf.mxu0
    %850 = vmatprep.mubr.bf16.mxu0 0
    %851 = vmatmul.mubr.bf16.gmra.mxu0 %v805
    %v852 = vpop.f32.mrf.mxu0
    %v853 = vadd.f32 0.0, %v852
    %v854 = vpop.f32.mrf.mxu0
    %v855 = vpop.f32.mrf.mxu0
    %v856 = vadd.f32 0.0, %v855
    %v857 = vpop.f32.mrf.mxu0
    %858 = vmatprep.mubr.bf16.mxu0 0
    %859 = vmatmul.mubr.bf16.gmra.mxu0 %v808
    %v860 = vpop.f32.mrf.mxu0
    %v861 = vadd.f32 0.0, %v860
    %v862 = vpop.f32.mrf.mxu0
    %v863 = vpop.f32.mrf.mxu0
    %v864 = vadd.f32 0.0, %v863
    %v865 = vpop.f32.mrf.mxu0
    %866 = vdwg.mxu0
    %v867 = vpack.c.bf16 %v848, %v845
    %v868 = vpack.c.bf16 %v856, %v853
    %v869 = vpack.c.bf16 %v864, %v861
    %s870 = scalar_lea.vmem %s1, 80
    %v871 = vld [vmem:[%s870] sm:$0xf]
    %v872 = vld [vmem:[%s870 + $0x4] sm:$0xf]
    %v873 = vld [vmem:[%s870 + $0x8] sm:$0xf]
    %v874 = vld [vmem:[%s870 + $0xc] sm:$0xf]
    %v875 = vld [vmem:[%s870 + $0x10] sm:$0x1]
    %s876 = scalar_lea.vmem %s1, 100
    %v877 = vld [vmem:[%s876] sm:$0xf]
    %v878 = vld [vmem:[%s876 + $0x4] sm:$0xf]
    %v879 = vld [vmem:[%s876 + $0x8] sm:$0xf]
    %v880 = vld [vmem:[%s876 + $0xc] sm:$0xf]
    %s881 = scalar_lea.vmem %s1, 120
    %v882 = vld [vmem:[%s881] sm:$0xf]
    %v883 = vld [vmem:[%s881 + $0x4] sm:$0xf]
    %v884 = vld [vmem:[%s881 + $0x8] sm:$0xf]
    %v885 = vld [vmem:[%s881 + $0xc] sm:$0xf]
    %s886 = scalar_lea.vmem %s1, 140
    %v887 = vld [vmem:[%s886] sm:$0xf]
    %v888 = vld [vmem:[%s886 + $0x4] sm:$0xf]
    %v889 = vld [vmem:[%s886 + $0x8] sm:$0xf]
    %v890 = vld [vmem:[%s886 + $0xc] sm:$0xf]
    %v891 = vunpack.c.l.bf16 %v875
    %v892 = vlaneseq
    %v893 = vshrl.u32 %v892, 7
    %v894 = vsub.s32 0, %v893
    %v895 = vrot.slane %v891, %v894
    %v900 = vunpack.c.l.b16 %v871
    %v901 = vunpack.c.l.b16 %v872
    %v902 = vunpack.c.l.b16 %v873
    %v903 = vunpack.c.l.b16 %v874
    %v904 = vpack.c.b16 %v901, %v900
    %v905 = vpack.c.b16 %v903, %v902
    %908 = vmatprep.subr.bf16.mxu0 0
    %909 = vmatpush1.bf16.msra.mxu0 0
    %910 = vmatprep.subr.bf16.mxu0 0
    %911 = vmatpush1.bf16.msra.mxu0 0
    %912 = vmatprep.subr.bf16.mxu0 0
    %913 = vmatpush1.bf16.msra.mxu0 0
    %914 = vmatprep.subr.bf16.mxu0 0
    %915 = vmatpush1.bf16.msra.mxu0 0
    %916 = vmatprep.subr.bf16.mxu0 0
    %917 = vmatpush1.bf16.msra.mxu0 0
    %918 = vmatprep.subr.bf16.mxu0 0
    %919 = vmatpush1.bf16.msra.mxu0 0
    %920 = vmatprep.subr.bf16.mxu0 0
    %921 = vmatpush1.bf16.msra.mxu0 %v905
    %922 = vmatprep.subr.bf16.mxu0 0
    %923 = vmatpush1.bf16.msra.mxu0 %v904
    %924 = vmatprep.subr.bf16.mxu0 0
    %925 = vmatpush2.bf16.msra.mxu0 0
    %926 = vmatprep.subr.bf16.mxu0 0
    %927 = vmatpush2.bf16.msra.mxu0 0
    %928 = vmatprep.subr.bf16.mxu0 0
    %929 = vmatpush2.bf16.msra.mxu0 0
    %930 = vmatprep.subr.bf16.mxu0 0
    %931 = vmatpush2.bf16.msra.mxu0 0
    %932 = vmatprep.subr.bf16.mxu0 0
    %933 = vmatpush2.bf16.msra.mxu0 0
    %934 = vmatprep.subr.bf16.mxu0 0
    %935 = vmatpush2.bf16.msra.mxu0 0
    %936 = vmatprep.subr.bf16.mxu0 0
    %937 = vmatpush2.bf16.msra.mxu0 0
    %938 = vmatprep.subr.bf16.mxu0 0
    %939 = vmatpush2.bf16.msra.mxu0 0
    %940 = vmatprep.mubr.bf16.mxu0 0
    %941 = vmatmul.mubr.bf16.gmra.mxu0 %v394
    %v942 = vpop.f32.mrf.mxu0
    %v943 = vadd.f32 %v895, %v942
    %v944 = vpop.f32.mrf.mxu0
    %v945 = vpop.f32.mrf.mxu0
    %v946 = vadd.f32 %v895, %v945
    %v947 = vpop.f32.mrf.mxu0
    %948 = vmatprep.mubr.bf16.mxu0 0
    %949 = vmatmul.mubr.bf16.gmra.mxu0 %v397
    %v950 = vpop.f32.mrf.mxu0
    %v951 = vadd.f32 %v895, %v950
    %v952 = vpop.f32.mrf.mxu0
    %v953 = vpop.f32.mrf.mxu0
    %v954 = vadd.f32 %v895, %v953
    %v955 = vpop.f32.mrf.mxu0
    %956 = vmatprep.mubr.bf16.mxu0 0
    %957 = vmatmul.mubr.bf16.gmra.mxu0 %v400
    %v958 = vpop.f32.mrf.mxu0
    %v959 = vadd.f32 %v895, %v958
    %v960 = vpop.f32.mrf.mxu0
    %v961 = vpop.f32.mrf.mxu0
    %v962 = vadd.f32 %v895, %v961
    %v963 = vpop.f32.mrf.mxu0
    %964 = vdwg.mxu0
    %v969 = vunpack.c.l.b16 %v877
    %v970 = vunpack.c.l.b16 %v878
    %v971 = vunpack.c.l.b16 %v879
    %v972 = vunpack.c.l.b16 %v880
    %v973 = vpack.c.b16 %v970, %v969
    %v974 = vpack.c.b16 %v972, %v971
    %977 = vmatprep.subr.bf16.mxu0 0
    %978 = vmatpush1.bf16.msra.mxu0 0
    %979 = vmatprep.subr.bf16.mxu0 0
    %980 = vmatpush1.bf16.msra.mxu0 0
    %981 = vmatprep.subr.bf16.mxu0 0
    %982 = vmatpush1.bf16.msra.mxu0 0
    %983 = vmatprep.subr.bf16.mxu0 0
    %984 = vmatpush1.bf16.msra.mxu0 0
    %985 = vmatprep.subr.bf16.mxu0 0
    %986 = vmatpush1.bf16.msra.mxu0 0
    %987 = vmatprep.subr.bf16.mxu0 0
    %988 = vmatpush1.bf16.msra.mxu0 0
    %989 = vmatprep.subr.bf16.mxu0 0
    %990 = vmatpush1.bf16.msra.mxu0 %v974
    %991 = vmatprep.subr.bf16.mxu0 0
    %992 = vmatpush1.bf16.msra.mxu0 %v973
    %993 = vmatprep.subr.bf16.mxu0 0
    %994 = vmatpush2.bf16.msra.mxu0 0
    %995 = vmatprep.subr.bf16.mxu0 0
    %996 = vmatpush2.bf16.msra.mxu0 0
    %997 = vmatprep.subr.bf16.mxu0 0
    %998 = vmatpush2.bf16.msra.mxu0 0
    %999 = vmatprep.subr.bf16.mxu0 0
    %1000 = vmatpush2.bf16.msra.mxu0 0
    %1001 = vmatprep.subr.bf16.mxu0 0
    %1002 = vmatpush2.bf16.msra.mxu0 0
    %1003 = vmatprep.subr.bf16.mxu0 0
    %1004 = vmatpush2.bf16.msra.mxu0 0
    %1005 = vmatprep.subr.bf16.mxu0 0
    %1006 = vmatpush2.bf16.msra.mxu0 0
    %1007 = vmatprep.subr.bf16.mxu0 0
    %1008 = vmatpush2.bf16.msra.mxu0 0
    %1009 = vmatprep.mubr.bf16.mxu0 0
    %1010 = vmatmul.mubr.bf16.gmra.mxu0 %v394
    %v1011 = vpop.f32.mrf.mxu0
    %v1012 = vadd.f32 0.0, %v1011
    %v1013 = vpop.f32.mrf.mxu0
    %v1014 = vpop.f32.mrf.mxu0
    %v1015 = vadd.f32 0.0, %v1014
    %v1016 = vpop.f32.mrf.mxu0
    %1017 = vmatprep.mubr.bf16.mxu0 0
    %1018 = vmatmul.mubr.bf16.gmra.mxu0 %v397
    %v1019 = vpop.f32.mrf.mxu0
    %v1020 = vadd.f32 0.0, %v1019
    %v1021 = vpop.f32.mrf.mxu0
    %v1022 = vpop.f32.mrf.mxu0
    %v1023 = vadd.f32 0.0, %v1022
    %v1024 = vpop.f32.mrf.mxu0
    %1025 = vmatprep.mubr.bf16.mxu0 0
    %1026 = vmatmul.mubr.bf16.gmra.mxu0 %v400
    %v1027 = vpop.f32.mrf.mxu0
    %v1028 = vadd.f32 0.0, %v1027
    %v1029 = vpop.f32.mrf.mxu0
    %v1030 = vpop.f32.mrf.mxu0
    %v1031 = vadd.f32 0.0, %v1030
    %v1032 = vpop.f32.mrf.mxu0
    %1033 = vdwg.mxu0
    %v1038 = vunpack.c.l.b16 %v882
    %v1039 = vunpack.c.l.b16 %v883
    %v1040 = vunpack.c.l.b16 %v884
    %v1041 = vunpack.c.l.b16 %v885
    %v1042 = vpack.c.b16 %v1039, %v1038
    %v1043 = vpack.c.b16 %v1041, %v1040
    %1046 = vmatprep.subr.bf16.mxu0 0
    %1047 = vmatpush1.bf16.msra.mxu0 0
    %1048 = vmatprep.subr.bf16.mxu0 0
    %1049 = vmatpush1.bf16.msra.mxu0 0
    %1050 = vmatprep.subr.bf16.mxu0 0
    %1051 = vmatpush1.bf16.msra.mxu0 0
    %1052 = vmatprep.subr.bf16.mxu0 0
    %1053 = vmatpush1.bf16.msra.mxu0 0
    %1054 = vmatprep.subr.bf16.mxu0 0
    %1055 = vmatpush1.bf16.msra.mxu0 0
    %1056 = vmatprep.subr.bf16.mxu0 0
    %1057 = vmatpush1.bf16.msra.mxu0 0
    %1058 = vmatprep.subr.bf16.mxu0 0
    %1059 = vmatpush1.bf16.msra.mxu0 %v1043
    %1060 = vmatprep.subr.bf16.mxu0 0
    %1061 = vmatpush1.bf16.msra.mxu0 %v1042
    %1062 = vmatprep.subr.bf16.mxu0 0
    %1063 = vmatpush2.bf16.msra.mxu0 0
    %1064 = vmatprep.subr.bf16.mxu0 0
    %1065 = vmatpush2.bf16.msra.mxu0 0
    %1066 = vmatprep.subr.bf16.mxu0 0
    %1067 = vmatpush2.bf16.msra.mxu0 0
    %1068 = vmatprep.subr.bf16.mxu0 0
    %1069 = vmatpush2.bf16.msra.mxu0 0
    %1070 = vmatprep.subr.bf16.mxu0 0
    %1071 = vmatpush2.bf16.msra.mxu0 0
    %1072 = vmatprep.subr.bf16.mxu0 0
    %1073 = vmatpush2.bf16.msra.mxu0 0
    %1074 = vmatprep.subr.bf16.mxu0 0
    %1075 = vmatpush2.bf16.msra.mxu0 0
    %1076 = vmatprep.subr.bf16.mxu0 0
    %1077 = vmatpush2.bf16.msra.mxu0 0
    %1078 = vmatprep.mubr.bf16.mxu0 0
    %1079 = vmatmul.mubr.bf16.gmra.mxu0 %v394
    %v1080 = vpop.f32.mrf.mxu0
    %v1081 = vadd.f32 0.0, %v1080
    %v1082 = vpop.f32.mrf.mxu0
    %v1083 = vpop.f32.mrf.mxu0
    %v1084 = vadd.f32 0.0, %v1083
    %v1085 = vpop.f32.mrf.mxu0
    %1086 = vmatprep.mubr.bf16.mxu0 0
    %1087 = vmatmul.mubr.bf16.gmra.mxu0 %v397
    %v1088 = vpop.f32.mrf.mxu0
    %v1089 = vadd.f32 0.0, %v1088
    %v1090 = vpop.f32.mrf.mxu0
    %v1091 = vpop.f32.mrf.mxu0
    %v1092 = vadd.f32 0.0, %v1091
    %v1093 = vpop.f32.mrf.mxu0
    %1094 = vmatprep.mubr.bf16.mxu0 0
    %1095 = vmatmul.mubr.bf16.gmra.mxu0 %v400
    %v1096 = vpop.f32.mrf.mxu0
    %v1097 = vadd.f32 0.0, %v1096
    %v1098 = vpop.f32.mrf.mxu0
    %v1099 = vpop.f32.mrf.mxu0
    %v1100 = vadd.f32 0.0, %v1099
    %v1101 = vpop.f32.mrf.mxu0
    %1102 = vdwg.mxu0
    %v1104 = vsel %vm597, %v943, 0
    %v1107 = vsel %vm597, %v946, 0
    %v1110 = vsel %vm597, %v951, 0
    %v1113 = vsel %vm597, %v954, 0
    %v1116 = vsel %vm597, %v959, 0
    %v1119 = vsel %vm597, %v962, 0
    %v1122 = vsel %vm597, %v1012, 0
    %v1125 = vsel %vm597, %v1015, 0
    %v1128 = vsel %vm597, %v1020, 0
    %v1131 = vsel %vm597, %v1023, 0
    %v1134 = vsel %vm597, %v1028, 0
    %v1137 = vsel %vm597, %v1031, 0
    %1139 = vmatprep.subr.mxu0 0.0
    %1140 = vmatpush1.xpose.msra.mxu0 0.0
    %1141 = vmatprep.subr.mxu0 0.0
    %1142 = vmatpush1.xpose.msra.mxu0 0.0
    %1143 = vmatprep.subr.mxu0 0.0
    %1144 = vmatpush1.xpose.msra.mxu0 0.0
    %1145 = vmatprep.subr.mxu0 0.0
    %1146 = vmatpush1.xpose.msra.mxu0 0.0
    %1147 = vmatprep.subr.mxu0 0.0
    %1148 = vmatpush1.xpose.msra.mxu0 0.0
    %1149 = vmatprep.subr.mxu0 0.0
    %1150 = vmatpush1.xpose.msra.mxu0 0.0
    %1151 = vmatprep.subr.mxu0 0.0
    %1152 = vmatpush1.xpose.msra.mxu0 0.0
    %1153 = vmatprep.subr.mxu0 0.0
    %1154 = vmatpush1.xpose.msra.mxu0 0.0
    %1155 = vmatprep.subr.mxu0 0.0
    %1156 = vmatpush1.xpose.msra.mxu0 0.0
    %1157 = vmatprep.subr.mxu0 0.0
    %1158 = vmatpush1.xpose.msra.mxu0 0.0
    %1159 = vmatprep.subr.mxu0 0.0
    %1160 = vmatpush1.xpose.msra.mxu0 %v1137
    %1161 = vmatprep.subr.mxu0 0.0
    %1162 = vmatpush1.xpose.msra.mxu0 %v1134
    %1163 = vmatprep.subr.mxu0 0.0
    %1164 = vmatpush1.xpose.msra.mxu0 %v1131
    %1165 = vmatprep.subr.mxu0 0.0
    %1166 = vmatpush1.xpose.msra.mxu0 %v1128
    %1167 = vmatprep.subr.mxu0 0.0
    %1168 = vmatpush1.xpose.msra.mxu0 %v1125
    %1169 = vmatprep.subr.mxu0 0.0
    %1170 = vmatpush1.xpose.msra.mxu0 %v1122
    %1171 = vmatprep.subr.mxu0 0.0
    %1172 = vmatpush2.xpose.msra.mxu0 0.0
    %1173 = vmatprep.subr.mxu0 0.0
    %1174 = vmatpush2.xpose.msra.mxu0 0.0
    %1175 = vmatprep.subr.mxu0 0.0
    %1176 = vmatpush2.xpose.msra.mxu0 0.0
    %1177 = vmatprep.subr.mxu0 0.0
    %1178 = vmatpush2.xpose.msra.mxu0 0.0
    %1179 = vmatprep.subr.mxu0 0.0
    %1180 = vmatpush2.xpose.msra.mxu0 0.0
    %1181 = vmatprep.subr.mxu0 0.0
    %1182 = vmatpush2.xpose.msra.mxu0 0.0
    %1183 = vmatprep.subr.mxu0 0.0
    %1184 = vmatpush2.xpose.msra.mxu0 0.0
    %1185 = vmatprep.subr.mxu0 0.0
    %1186 = vmatpush2.xpose.msra.mxu0 0.0
    %1187 = vmatprep.subr.mxu0 0.0
    %1188 = vmatpush2.xpose.msra.mxu0 0.0
    %1189 = vmatprep.subr.mxu0 0.0
    %1190 = vmatpush2.xpose.msra.mxu0 0.0
    %1191 = vmatprep.subr.mxu0 0.0
    %1192 = vmatpush2.xpose.msra.mxu0 0.0
    %1193 = vmatprep.subr.mxu0 0.0
    %1194 = vmatpush2.xpose.msra.mxu0 0.0
    %1195 = vmatprep.subr.mxu0 0.0
    %1196 = vmatpush2.xpose.msra.mxu0 0.0
    %1197 = vmatprep.subr.mxu0 0.0
    %1198 = vmatpush2.xpose.msra.mxu0 0.0
    %1199 = vmatprep.subr.mxu0 0.0
    %1200 = vmatpush2.xpose.msra.mxu0 0.0
    %1201 = vmatprep.subr.mxu0 0.0
    %1202 = vmatpush2.xpose.msra.mxu0 0.0
    %1203 = vmatprep.mubr.f32.mxu0 0.0
    %1204 = vmatmul.mubr.f32.gmra.mxu0 %v1104
    %v1205 = vpop.f32.mrf.mxu0
    %v1206 = vadd.f32 %v247, %v1205
    %v1207 = vpop.f32.mrf.mxu0
    %1208 = vmatprep.mubr.f32.mxu0 0.0
    %1209 = vmatmul.mubr.f32.gmra.mxu0 %v1107
    %v1210 = vpop.f32.mrf.mxu0
    %v1211 = vadd.f32 %v248, %v1210
    %v1212 = vpop.f32.mrf.mxu0
    %1213 = vmatprep.mubr.f32.mxu0 0.0
    %1214 = vmatmul.mubr.f32.gmra.mxu0 %v1110
    %v1215 = vpop.f32.mrf.mxu0
    %v1216 = vadd.f32 %v249, %v1215
    %v1217 = vpop.f32.mrf.mxu0
    %1218 = vmatprep.mubr.f32.mxu0 0.0
    %1219 = vmatmul.mubr.f32.gmra.mxu0 %v1113
    %v1220 = vpop.f32.mrf.mxu0
    %v1221 = vadd.f32 %v250, %v1220
    %v1222 = vpop.f32.mrf.mxu0
    %1223 = vmatprep.mubr.f32.mxu0 0.0
    %1224 = vmatmul.mubr.f32.gmra.mxu0 %v1116
    %v1225 = vpop.f32.mrf.mxu0
    %v1226 = vadd.f32 %v251, %v1225
    %v1227 = vpop.f32.mrf.mxu0
    %1228 = vmatprep.mubr.f32.mxu0 0.0
    %1229 = vmatmul.mubr.f32.gmra.mxu0 %v1119
    %v1230 = vpop.f32.mrf.mxu0
    %v1231 = vadd.f32 %v252, %v1230
    %v1232 = vpop.f32.mrf.mxu0
    %1233 = vdwg.mxu0
    %v1234 = vsel %vm63, %v1206, -inf
    %1235 = vmax.xlane.f32.xlu0 %v1234
    %v1236 = vpop.xlane.xlu0 %1235
    %v1237 = vsel %vm63, %v1211, -inf
    %1238 = vmax.xlane.f32.xlu0 %v1237
    %v1239 = vpop.xlane.xlu0 %1238
    %v1240 = vsel %vm63, %v1216, -inf
    %1241 = vmax.xlane.f32.xlu0 %v1240
    %v1242 = vpop.xlane.xlu0 %1241
    %v1243 = vsel %vm63, %v1221, -inf
    %1244 = vmax.xlane.f32.xlu0 %v1243
    %v1245 = vpop.xlane.xlu0 %1244
    %v1246 = vsel %vm63, %v1226, -inf
    %1247 = vmax.xlane.f32.xlu0 %v1246
    %v1248 = vpop.xlane.xlu0 %1247
    %v1249 = vsel %vm63, %v1231, -inf
    %1250 = vmax.xlane.f32.xlu0 %v1249
    %v1251 = vpop.xlane.xlu0 %1250
    %v1252 = vsub.f32 %v1206, %v1236
    %v1253 = vsub.f32 %v1211, %v1239
    %v1254 = vsub.f32 %v1216, %v1242
    %v1255 = vsub.f32 %v1221, %v1245
    %v1256 = vsub.f32 %v1226, %v1248
    %v1257 = vsub.f32 %v1231, %v1251
    %v1258 = vmul.f32 %v1252, 1.442695
    %v1259 = vpow.pop %v1258
    %v1260 = vmul.f32 %v1253, 1.442695
    %v1261 = vpow.pop %v1260
    %v1262 = vmul.f32 %v1254, 1.442695
    %v1263 = vpow.pop %v1262
    %v1264 = vmul.f32 %v1255, 1.442695
    %v1265 = vpow.pop %v1264
    %v1266 = vmul.f32 %v1256, 1.442695
    %v1267 = vpow.pop %v1266
    %v1268 = vmul.f32 %v1257, 1.442695
    %v1269 = vpow.pop %v1268
    %v1270 = vsel %vm63, %v1259, 0.0
    %1271 = vadd.xlane.f32.xlu0 %v1270
    %v1272 = vpop.xlane.xlu0 %1271
    %v1273 = vsel %vm63, %v1261, 0.0
    %1274 = vadd.xlane.f32.xlu0 %v1273
    %v1275 = vpop.xlane.xlu0 %1274
    %v1276 = vsel %vm63, %v1263, 0.0
    %1277 = vadd.xlane.f32.xlu0 %v1276
    %v1278 = vpop.xlane.xlu0 %1277
    %v1279 = vsel %vm63, %v1265, 0.0
    %1280 = vadd.xlane.f32.xlu0 %v1279
    %v1281 = vpop.xlane.xlu0 %1280
    %v1282 = vsel %vm63, %v1267, 0.0
    %1283 = vadd.xlane.f32.xlu0 %v1282
    %v1284 = vpop.xlane.xlu0 %1283
    %v1285 = vsel %vm63, %v1269, 0.0
    %1286 = vadd.xlane.f32.xlu0 %v1285
    %v1287 = vpop.xlane.xlu0 %1286
    %v1288 = vrcp.pop %v1272
    %v1289 = vrcp.pop %v1275
    %v1290 = vrcp.pop %v1278
    %v1291 = vrcp.pop %v1281
    %v1292 = vrcp.pop %v1284
    %v1293 = vrcp.pop %v1287
    %v1294 = vmul.f32 %v1259, %v1288
    %v1295 = vmul.f32 %v1261, %v1289
    %v1296 = vmul.f32 %v1263, %v1290
    %v1297 = vmul.f32 %v1265, %v1291
    %v1298 = vmul.f32 %v1267, %v1292
    %v1299 = vmul.f32 %v1269, %v1293
    %v1300 = vpack.c.bf16 %v1295, %v1294
    %v1301 = vpack.c.bf16 %v1297, %v1296
    %v1302 = vpack.c.bf16 %v1299, %v1298
    %v1303 = vpack.c.bf16 %v1084, %v1081
    %v1304 = vpack.c.bf16 %v1092, %v1089
    %v1305 = vpack.c.bf16 %v1100, %v1097
    %v1307 = vsel %vm63, %v1300, 0
    %v1310 = vsel %vm63, %v1301, 0
    %v1313 = vsel %vm63, %v1302, 0
    %1315 = vmatprep.subr.bf16.mxu0 0
    %1316 = vmatpush1.bf16.msra.mxu0 0
    %1317 = vmatprep.subr.bf16.mxu0 0
    %1318 = vmatpush1.bf16.msra.mxu0 0
    %1319 = vmatprep.subr.bf16.mxu0 0
    %1320 = vmatpush1.bf16.msra.mxu0 0
    %1321 = vmatprep.subr.bf16.mxu0 0
    %1322 = vmatpush1.bf16.msra.mxu0 0
    %1323 = vmatprep.subr.bf16.mxu0 0
    %1324 = vmatpush1.bf16.msra.mxu0 0
    %1325 = vmatprep.subr.bf16.mxu0 0
    %1326 = vmatpush1.bf16.msra.mxu0 %v1305
    %1327 = vmatprep.subr.bf16.mxu0 0
    %1328 = vmatpush1.bf16.msra.mxu0 %v1304
    %1329 = vmatprep.subr.bf16.mxu0 0
    %1330 = vmatpush1.bf16.msra.mxu0 %v1303
    %1331 = vmatprep.subr.bf16.mxu0 0
    %1332 = vmatpush2.bf16.msra.mxu0 0
    %1333 = vmatprep.subr.bf16.mxu0 0
    %1334 = vmatpush2.bf16.msra.mxu0 0
    %1335 = vmatprep.subr.bf16.mxu0 0
    %1336 = vmatpush2.bf16.msra.mxu0 0
    %1337 = vmatprep.subr.bf16.mxu0 0
    %1338 = vmatpush2.bf16.msra.mxu0 0
    %1339 = vmatprep.subr.bf16.mxu0 0
    %1340 = vmatpush2.bf16.msra.mxu0 0
    %1341 = vmatprep.subr.bf16.mxu0 0
    %1342 = vmatpush2.bf16.msra.mxu0 0
    %1343 = vmatprep.subr.bf16.mxu0 0
    %1344 = vmatpush2.bf16.msra.mxu0 0
    %1345 = vmatprep.subr.bf16.mxu0 0
    %1346 = vmatpush2.bf16.msra.mxu0 0
    %1347 = vmatprep.mubr.bf16.mxu0 0
    %1348 = vmatmul.mubr.bf16.gmra.mxu0 %v1307
    %v1349 = vpop.f32.mrf.mxu0
    %v1350 = vadd.f32 0.0, %v1349
    %v1351 = vpop.f32.mrf.mxu0
    %v1352 = vpop.f32.mrf.mxu0
    %v1353 = vadd.f32 0.0, %v1352
    %v1354 = vpop.f32.mrf.mxu0
    %1355 = vmatprep.mubr.bf16.mxu0 0
    %1356 = vmatmul.mubr.bf16.gmra.mxu0 %v1310
    %v1357 = vpop.f32.mrf.mxu0
    %v1358 = vadd.f32 0.0, %v1357
    %v1359 = vpop.f32.mrf.mxu0
    %v1360 = vpop.f32.mrf.mxu0
    %v1361 = vadd.f32 0.0, %v1360
    %v1362 = vpop.f32.mrf.mxu0
    %1363 = vmatprep.mubr.bf16.mxu0 0
    %1364 = vmatmul.mubr.bf16.gmra.mxu0 %v1313
    %v1365 = vpop.f32.mrf.mxu0
    %v1366 = vadd.f32 0.0, %v1365
    %v1367 = vpop.f32.mrf.mxu0
    %v1368 = vpop.f32.mrf.mxu0
    %v1369 = vadd.f32 0.0, %v1368
    %v1370 = vpop.f32.mrf.mxu0
    %1371 = vdwg.mxu0
    %v1372 = vpack.c.bf16 %v1353, %v1350
    %v1373 = vpack.c.bf16 %v1361, %v1358
    %v1374 = vpack.c.bf16 %v1369, %v1366
    %v1379 = vunpack.c.l.b16 %v887
    %v1380 = vunpack.c.l.b16 %v888
    %v1381 = vunpack.c.l.b16 %v889
    %v1382 = vunpack.c.l.b16 %v890
    %v1383 = vpack.c.b16 %v1380, %v1379
    %v1384 = vpack.c.b16 %v1382, %v1381
    %v1386 = vsel %vm597, %v1372, 0
    %v1389 = vsel %vm597, %v1373, 0
    %v1392 = vsel %vm597, %v1374, 0
    %v1395 = vsel %vm597, %v1383, 0
    %v1398 = vsel %vm597, %v1384, 0
    %1400 = vmatprep.subr.bf16.mxu0 0
    %1401 = vmatpush1.bf16.xpose.msra.mxu0 0
    %1402 = vmatprep.subr.bf16.mxu0 0
    %1403 = vmatpush1.bf16.xpose.msra.mxu0 0
    %1404 = vmatprep.subr.bf16.mxu0 0
    %1405 = vmatpush1.bf16.xpose.msra.mxu0 0
    %1406 = vmatprep.subr.bf16.mxu0 0
    %1407 = vmatpush1.bf16.xpose.msra.mxu0 0
    %1408 = vmatprep.subr.bf16.mxu0 0
    %1409 = vmatpush1.bf16.xpose.msra.mxu0 0
    %1410 = vmatprep.subr.bf16.mxu0 0
    %1411 = vmatpush1.bf16.xpose.msra.mxu0 0
    %1412 = vmatprep.subr.bf16.mxu0 0
    %1413 = vmatpush1.bf16.xpose.msra.mxu0 %v1398
    %1414 = vmatprep.subr.bf16.mxu0 0
    %1415 = vmatpush1.bf16.xpose.msra.mxu0 %v1395
    %1416 = vmatprep.subr.bf16.mxu0 0
    %1417 = vmatpush2.bf16.xpose.msra.mxu0 0
    %1418 = vmatprep.subr.bf16.mxu0 0
    %1419 = vmatpush2.bf16.xpose.msra.mxu0 0
    %1420 = vmatprep.subr.bf16.mxu0 0
    %1421 = vmatpush2.bf16.xpose.msra.mxu0 0
    %1422 = vmatprep.subr.bf16.mxu0 0
    %1423 = vmatpush2.bf16.xpose.msra.mxu0 0
    %1424 = vmatprep.subr.bf16.mxu0 0
    %1425 = vmatpush2.bf16.xpose.msra.mxu0 0
    %1426 = vmatprep.subr.bf16.mxu0 0
    %1427 = vmatpush2.bf16.xpose.msra.mxu0 0
    %1428 = vmatprep.subr.bf16.mxu0 0
    %1429 = vmatpush2.bf16.xpose.msra.mxu0 0
    %1430 = vmatprep.subr.bf16.mxu0 0
    %1431 = vmatpush2.bf16.xpose.msra.mxu0 0
    %1432 = vmatprep.mubr.bf16.mxu0 0
    %1433 = vmatmul.mubr.bf16.gmra.mxu0 %v1386
    %v1434 = vpop.f32.mrf.mxu0
    %v1435 = vadd.f32 0.0, %v1434
    %v1436 = vpop.f32.mrf.mxu0
    %v1437 = vpop.f32.mrf.mxu0
    %v1438 = vadd.f32 0.0, %v1437
    %v1439 = vpop.f32.mrf.mxu0
    %1440 = vmatprep.mubr.bf16.mxu0 0
    %1441 = vmatmul.mubr.bf16.gmra.mxu0 %v1389
    %v1442 = vpop.f32.mrf.mxu0
    %v1443 = vadd.f32 0.0, %v1442
    %v1444 = vpop.f32.mrf.mxu0
    %v1445 = vpop.f32.mrf.mxu0
    %v1446 = vadd.f32 0.0, %v1445
    %v1447 = vpop.f32.mrf.mxu0
    %1448 = vmatprep.mubr.bf16.mxu0 0
    %1449 = vmatmul.mubr.bf16.gmra.mxu0 %v1392
    %v1450 = vpop.f32.mrf.mxu0
    %v1451 = vadd.f32 0.0, %v1450
    %v1452 = vpop.f32.mrf.mxu0
    %v1453 = vpop.f32.mrf.mxu0
    %v1454 = vadd.f32 0.0, %v1453
    %v1455 = vpop.f32.mrf.mxu0
    %1456 = vdwg.mxu0
    %v1461 = vunpack.c.l.b16 %v372
    %v1462 = vunpack.c.l.b16 %v373
    %v1463 = vunpack.c.l.b16 %v374
    %v1464 = vunpack.c.l.b16 %v375
    %v1465 = vpack.c.b16 %v1462, %v1461
    %v1466 = vpack.c.b16 %v1464, %v1463
    %v1468 = vsel %vm597, %v867, 0
    %v1471 = vsel %vm597, %v868, 0
    %v1474 = vsel %vm597, %v869, 0
    %v1477 = vsel %vm597, %v1465, 0
    %v1480 = vsel %vm597, %v1466, 0
    %1482 = vmatprep.subr.bf16.mxu0 0
    %1483 = vmatpush1.bf16.xpose.msra.mxu0 0
    %1484 = vmatprep.subr.bf16.mxu0 0
    %1485 = vmatpush1.bf16.xpose.msra.mxu0 0
    %1486 = vmatprep.subr.bf16.mxu0 0
    %1487 = vmatpush1.bf16.xpose.msra.mxu0 0
    %1488 = vmatprep.subr.bf16.mxu0 0
    %1489 = vmatpush1.bf16.xpose.msra.mxu0 0
    %1490 = vmatprep.subr.bf16.mxu0 0
    %1491 = vmatpush1.bf16.xpose.msra.mxu0 0
    %1492 = vmatprep.subr.bf16.mxu0 0
    %1493 = vmatpush1.bf16.xpose.msra.mxu0 0
    %1494 = vmatprep.subr.bf16.mxu0 0
    %1495 = vmatpush1.bf16.xpose.msra.mxu0 %v1480
    %1496 = vmatprep.subr.bf16.mxu0 0
    %1497 = vmatpush1.bf16.xpose.msra.mxu0 %v1477
    %1498 = vmatprep.subr.bf16.mxu0 0
    %1499 = vmatpush2.bf16.xpose.msra.mxu0 0
    %1500 = vmatprep.subr.bf16.mxu0 0
    %1501 = vmatpush2.bf16.xpose.msra.mxu0 0
    %1502 = vmatprep.subr.bf16.mxu0 0
    %1503 = vmatpush2.bf16.xpose.msra.mxu0 0
    %1504 = vmatprep.subr.bf16.mxu0 0
    %1505 = vmatpush2.bf16.xpose.msra.mxu0 0
    %1506 = vmatprep.subr.bf16.mxu0 0
    %1507 = vmatpush2.bf16.xpose.msra.mxu0 0
    %1508 = vmatprep.subr.bf16.mxu0 0
    %1509 = vmatpush2.bf16.xpose.msra.mxu0 0
    %1510 = vmatprep.subr.bf16.mxu0 0
    %1511 = vmatpush2.bf16.xpose.msra.mxu0 0
    %1512 = vmatprep.subr.bf16.mxu0 0
    %1513 = vmatpush2.bf16.xpose.msra.mxu0 0
    %1514 = vmatprep.mubr.bf16.mxu0 0
    %1515 = vmatmul.mubr.bf16.gmra.mxu0 %v1468
    %v1516 = vpop.f32.mrf.mxu0
    %v1517 = vadd.f32 %v1435, %v1516
    %v1518 = vpop.f32.mrf.mxu0
    %v1519 = vpop.f32.mrf.mxu0
    %v1520 = vadd.f32 %v1438, %v1519
    %v1521 = vpop.f32.mrf.mxu0
    %1522 = vmatprep.mubr.bf16.mxu0 0
    %1523 = vmatmul.mubr.bf16.gmra.mxu0 %v1471
    %v1524 = vpop.f32.mrf.mxu0
    %v1525 = vadd.f32 %v1443, %v1524
    %v1526 = vpop.f32.mrf.mxu0
    %v1527 = vpop.f32.mrf.mxu0
    %v1528 = vadd.f32 %v1446, %v1527
    %v1529 = vpop.f32.mrf.mxu0
    %1530 = vmatprep.mubr.bf16.mxu0 0
    %1531 = vmatmul.mubr.bf16.gmra.mxu0 %v1474
    %v1532 = vpop.f32.mrf.mxu0
    %v1533 = vadd.f32 %v1451, %v1532
    %v1534 = vpop.f32.mrf.mxu0
    %v1535 = vpop.f32.mrf.mxu0
    %v1536 = vadd.f32 %v1454, %v1535
    %v1537 = vpop.f32.mrf.mxu0
    %1538 = vdwg.mxu0
    %s1539 = scalar_lea.vmem %s1, 160
    %v1540 = vld [vmem:[%s1539] sm:$0xf]
    %v1541 = vld [vmem:[%s1539 + $0x4] sm:$0xf]
    %v1542 = vld [vmem:[%s1539 + $0x8] sm:$0xf]
    %v1543 = vld [vmem:[%s1539 + $0xc] sm:$0xf]
    %v1544 = vld [vmem:[%s1539 + $0x10] sm:$0x1]
    %s1545 = scalar_lea.vmem %s1, 180
    %v1546 = vld [vmem:[%s1545] sm:$0xf]
    %v1547 = vld [vmem:[%s1545 + $0x4] sm:$0xf]
    %v1548 = vld [vmem:[%s1545 + $0x8] sm:$0xf]
    %v1549 = vld [vmem:[%s1545 + $0xc] sm:$0xf]
    %s1550 = scalar_lea.vmem %s1, 200
    %v1551 = vld [vmem:[%s1550] sm:$0xf]
    %v1552 = vld [vmem:[%s1550 + $0x4] sm:$0xf]
    %v1553 = vld [vmem:[%s1550 + $0x8] sm:$0xf]
    %v1554 = vld [vmem:[%s1550 + $0xc] sm:$0xf]
    %s1555 = scalar_lea.vmem %s1, 220
    %v1556 = vld [vmem:[%s1555] sm:$0xf]
    %v1557 = vld [vmem:[%s1555 + $0x4] sm:$0xf]
    %v1558 = vld [vmem:[%s1555 + $0x8] sm:$0xf]
    %v1559 = vld [vmem:[%s1555 + $0xc] sm:$0xf]
    %v1560 = vunpack.c.l.bf16 %v1544
    %v1561 = vlaneseq
    %v1562 = vshrl.u32 %v1561, 7
    %v1563 = vsub.s32 0, %v1562
    %v1564 = vrot.slane %v1560, %v1563
    %v1569 = vunpack.c.l.b16 %v1540
    %v1570 = vunpack.c.l.b16 %v1541
    %v1571 = vunpack.c.l.b16 %v1542
    %v1572 = vunpack.c.l.b16 %v1543
    %v1573 = vpack.c.b16 %v1570, %v1569
    %v1574 = vpack.c.b16 %v1572, %v1571
    %1577 = vmatprep.subr.bf16.mxu0 0
    %1578 = vmatpush1.bf16.msra.mxu0 0
    %1579 = vmatprep.subr.bf16.mxu0 0
    %1580 = vmatpush1.bf16.msra.mxu0 0
    %1581 = vmatprep.subr.bf16.mxu0 0
    %1582 = vmatpush1.bf16.msra.mxu0 0
    %1583 = vmatprep.subr.bf16.mxu0 0
    %1584 = vmatpush1.bf16.msra.mxu0 0
    %1585 = vmatprep.subr.bf16.mxu0 0
    %1586 = vmatpush1.bf16.msra.mxu0 0
    %1587 = vmatprep.subr.bf16.mxu0 0
    %1588 = vmatpush1.bf16.msra.mxu0 0
    %1589 = vmatprep.subr.bf16.mxu0 0
    %1590 = vmatpush1.bf16.msra.mxu0 %v1574
    %1591 = vmatprep.subr.bf16.mxu0 0
    %1592 = vmatpush1.bf16.msra.mxu0 %v1573
    %1593 = vmatprep.subr.bf16.mxu0 0
    %1594 = vmatpush2.bf16.msra.mxu0 0
    %1595 = vmatprep.subr.bf16.mxu0 0
    %1596 = vmatpush2.bf16.msra.mxu0 0
    %1597 = vmatprep.subr.bf16.mxu0 0
    %1598 = vmatpush2.bf16.msra.mxu0 0
    %1599 = vmatprep.subr.bf16.mxu0 0
    %1600 = vmatpush2.bf16.msra.mxu0 0
    %1601 = vmatprep.subr.bf16.mxu0 0
    %1602 = vmatpush2.bf16.msra.mxu0 0
    %1603 = vmatprep.subr.bf16.mxu0 0
    %1604 = vmatpush2.bf16.msra.mxu0 0
    %1605 = vmatprep.subr.bf16.mxu0 0
    %1606 = vmatpush2.bf16.msra.mxu0 0
    %1607 = vmatprep.subr.bf16.mxu0 0
    %1608 = vmatpush2.bf16.msra.mxu0 0
    %1609 = vmatprep.mubr.bf16.mxu0 0
    %1610 = vmatmul.mubr.bf16.gmra.mxu0 %v394
    %v1611 = vpop.f32.mrf.mxu0
    %v1612 = vadd.f32 %v1564, %v1611
    %v1613 = vpop.f32.mrf.mxu0
    %v1614 = vpop.f32.mrf.mxu0
    %v1615 = vadd.f32 %v1564, %v1614
    %v1616 = vpop.f32.mrf.mxu0
    %1617 = vmatprep.mubr.bf16.mxu0 0
    %1618 = vmatmul.mubr.bf16.gmra.mxu0 %v397
    %v1619 = vpop.f32.mrf.mxu0
    %v1620 = vadd.f32 %v1564, %v1619
    %v1621 = vpop.f32.mrf.mxu0
    %v1622 = vpop.f32.mrf.mxu0
    %v1623 = vadd.f32 %v1564, %v1622
    %v1624 = vpop.f32.mrf.mxu0
    %1625 = vmatprep.mubr.bf16.mxu0 0
    %1626 = vmatmul.mubr.bf16.gmra.mxu0 %v400
    %v1627 = vpop.f32.mrf.mxu0
    %v1628 = vadd.f32 %v1564, %v1627
    %v1629 = vpop.f32.mrf.mxu0
    %v1630 = vpop.f32.mrf.mxu0
    %v1631 = vadd.f32 %v1564, %v1630
    %v1632 = vpop.f32.mrf.mxu0
    %1633 = vdwg.mxu0
    %v1638 = vunpack.c.l.b16 %v1546
    %v1639 = vunpack.c.l.b16 %v1547
    %v1640 = vunpack.c.l.b16 %v1548
    %v1641 = vunpack.c.l.b16 %v1549
    %v1642 = vpack.c.b16 %v1639, %v1638
    %v1643 = vpack.c.b16 %v1641, %v1640
    %1646 = vmatprep.subr.bf16.mxu0 0
    %1647 = vmatpush1.bf16.msra.mxu0 0
    %1648 = vmatprep.subr.bf16.mxu0 0
    %1649 = vmatpush1.bf16.msra.mxu0 0
    %1650 = vmatprep.subr.bf16.mxu0 0
    %1651 = vmatpush1.bf16.msra.mxu0 0
    %1652 = vmatprep.subr.bf16.mxu0 0
    %1653 = vmatpush1.bf16.msra.mxu0 0
    %1654 = vmatprep.subr.bf16.mxu0 0
    %1655 = vmatpush1.bf16.msra.mxu0 0
    %1656 = vmatprep.subr.bf16.mxu0 0
    %1657 = vmatpush1.bf16.msra.mxu0 0
    %1658 = vmatprep.subr.bf16.mxu0 0
    %1659 = vmatpush1.bf16.msra.mxu0 %v1643
    %1660 = vmatprep.subr.bf16.mxu0 0
    %1661 = vmatpush1.bf16.msra.mxu0 %v1642
    %1662 = vmatprep.subr.bf16.mxu0 0
    %1663 = vmatpush2.bf16.msra.mxu0 0
    %1664 = vmatprep.subr.bf16.mxu0 0
    %1665 = vmatpush2.bf16.msra.mxu0 0
    %1666 = vmatprep.subr.bf16.mxu0 0
    %1667 = vmatpush2.bf16.msra.mxu0 0
    %1668 = vmatprep.subr.bf16.mxu0 0
    %1669 = vmatpush2.bf16.msra.mxu0 0
    %1670 = vmatprep.subr.bf16.mxu0 0
    %1671 = vmatpush2.bf16.msra.mxu0 0
    %1672 = vmatprep.subr.bf16.mxu0 0
    %1673 = vmatpush2.bf16.msra.mxu0 0
    %1674 = vmatprep.subr.bf16.mxu0 0
    %1675 = vmatpush2.bf16.msra.mxu0 0
    %1676 = vmatprep.subr.bf16.mxu0 0
    %1677 = vmatpush2.bf16.msra.mxu0 0
    %1678 = vmatprep.mubr.bf16.mxu0 0
    %1679 = vmatmul.mubr.bf16.gmra.mxu0 %v394
    %v1680 = vpop.f32.mrf.mxu0
    %v1681 = vadd.f32 0.0, %v1680
    %v1682 = vpop.f32.mrf.mxu0
    %v1683 = vpop.f32.mrf.mxu0
    %v1684 = vadd.f32 0.0, %v1683
    %v1685 = vpop.f32.mrf.mxu0
    %1686 = vmatprep.mubr.bf16.mxu0 0
    %1687 = vmatmul.mubr.bf16.gmra.mxu0 %v397
    %v1688 = vpop.f32.mrf.mxu0
    %v1689 = vadd.f32 0.0, %v1688
    %v1690 = vpop.f32.mrf.mxu0
    %v1691 = vpop.f32.mrf.mxu0
    %v1692 = vadd.f32 0.0, %v1691
    %v1693 = vpop.f32.mrf.mxu0
    %1694 = vmatprep.mubr.bf16.mxu0 0
    %1695 = vmatmul.mubr.bf16.gmra.mxu0 %v400
    %v1696 = vpop.f32.mrf.mxu0
    %v1697 = vadd.f32 0.0, %v1696
    %v1698 = vpop.f32.mrf.mxu0
    %v1699 = vpop.f32.mrf.mxu0
    %v1700 = vadd.f32 0.0, %v1699
    %v1701 = vpop.f32.mrf.mxu0
    %1702 = vdwg.mxu0
    %v1707 = vunpack.c.l.b16 %v1551
    %v1708 = vunpack.c.l.b16 %v1552
    %v1709 = vunpack.c.l.b16 %v1553
    %v1710 = vunpack.c.l.b16 %v1554
    %v1711 = vpack.c.b16 %v1708, %v1707
    %v1712 = vpack.c.b16 %v1710, %v1709
    %1715 = vmatprep.subr.bf16.mxu0 0
    %1716 = vmatpush1.bf16.msra.mxu0 0
    %1717 = vmatprep.subr.bf16.mxu0 0
    %1718 = vmatpush1.bf16.msra.mxu0 0
    %1719 = vmatprep.subr.bf16.mxu0 0
    %1720 = vmatpush1.bf16.msra.mxu0 0
    %1721 = vmatprep.subr.bf16.mxu0 0
    %1722 = vmatpush1.bf16.msra.mxu0 0
    %1723 = vmatprep.subr.bf16.mxu0 0
    %1724 = vmatpush1.bf16.msra.mxu0 0
    %1725 = vmatprep.subr.bf16.mxu0 0
    %1726 = vmatpush1.bf16.msra.mxu0 0
    %1727 = vmatprep.subr.bf16.mxu0 0
    %1728 = vmatpush1.bf16.msra.mxu0 %v1712
    %1729 = vmatprep.subr.bf16.mxu0 0
    %1730 = vmatpush1.bf16.msra.mxu0 %v1711
    %1731 = vmatprep.subr.bf16.mxu0 0
    %1732 = vmatpush2.bf16.msra.mxu0 0
    %1733 = vmatprep.subr.bf16.mxu0 0
    %1734 = vmatpush2.bf16.msra.mxu0 0
    %1735 = vmatprep.subr.bf16.mxu0 0
    %1736 = vmatpush2.bf16.msra.mxu0 0
    %1737 = vmatprep.subr.bf16.mxu0 0
    %1738 = vmatpush2.bf16.msra.mxu0 0
    %1739 = vmatprep.subr.bf16.mxu0 0
    %1740 = vmatpush2.bf16.msra.mxu0 0
    %1741 = vmatprep.subr.bf16.mxu0 0
    %1742 = vmatpush2.bf16.msra.mxu0 0
    %1743 = vmatprep.subr.bf16.mxu0 0
    %1744 = vmatpush2.bf16.msra.mxu0 0
    %1745 = vmatprep.subr.bf16.mxu0 0
    %1746 = vmatpush2.bf16.msra.mxu0 0
    %1747 = vmatprep.mubr.bf16.mxu0 0
    %1748 = vmatmul.mubr.bf16.gmra.mxu0 %v394
    %v1749 = vpop.f32.mrf.mxu0
    %v1750 = vadd.f32 0.0, %v1749
    %v1751 = vpop.f32.mrf.mxu0
    %v1752 = vpop.f32.mrf.mxu0
    %v1753 = vadd.f32 0.0, %v1752
    %v1754 = vpop.f32.mrf.mxu0
    %1755 = vmatprep.mubr.bf16.mxu0 0
    %1756 = vmatmul.mubr.bf16.gmra.mxu0 %v397
    %v1757 = vpop.f32.mrf.mxu0
    %v1758 = vadd.f32 0.0, %v1757
    %v1759 = vpop.f32.mrf.mxu0
    %v1760 = vpop.f32.mrf.mxu0
    %v1761 = vadd.f32 0.0, %v1760
    %v1762 = vpop.f32.mrf.mxu0
    %1763 = vmatprep.mubr.bf16.mxu0 0
    %1764 = vmatmul.mubr.bf16.gmra.mxu0 %v400
    %v1765 = vpop.f32.mrf.mxu0
    %v1766 = vadd.f32 0.0, %v1765
    %v1767 = vpop.f32.mrf.mxu0
    %v1768 = vpop.f32.mrf.mxu0
    %v1769 = vadd.f32 0.0, %v1768
    %v1770 = vpop.f32.mrf.mxu0
    %1771 = vdwg.mxu0
    %v1773 = vsel %vm597, %v1612, 0
    %v1776 = vsel %vm597, %v1615, 0
    %v1779 = vsel %vm597, %v1620, 0
    %v1782 = vsel %vm597, %v1623, 0
    %v1785 = vsel %vm597, %v1628, 0
    %v1788 = vsel %vm597, %v1631, 0
    %v1791 = vsel %vm597, %v1681, 0
    %v1794 = vsel %vm597, %v1684, 0
    %v1797 = vsel %vm597, %v1689, 0
    %v1800 = vsel %vm597, %v1692, 0
    %v1803 = vsel %vm597, %v1697, 0
    %v1806 = vsel %vm597, %v1700, 0
    %1808 = vmatprep.subr.mxu0 0.0
    %1809 = vmatpush1.xpose.msra.mxu0 0.0
    %1810 = vmatprep.subr.mxu0 0.0
    %1811 = vmatpush1.xpose.msra.mxu0 0.0
    %1812 = vmatprep.subr.mxu0 0.0
    %1813 = vmatpush1.xpose.msra.mxu0 0.0
    %1814 = vmatprep.subr.mxu0 0.0
    %1815 = vmatpush1.xpose.msra.mxu0 0.0
    %1816 = vmatprep.subr.mxu0 0.0
    %1817 = vmatpush1.xpose.msra.mxu0 0.0
    %1818 = vmatprep.subr.mxu0 0.0
    %1819 = vmatpush1.xpose.msra.mxu0 0.0
    %1820 = vmatprep.subr.mxu0 0.0
    %1821 = vmatpush1.xpose.msra.mxu0 0.0
    %1822 = vmatprep.subr.mxu0 0.0
    %1823 = vmatpush1.xpose.msra.mxu0 0.0
    %1824 = vmatprep.subr.mxu0 0.0
    %1825 = vmatpush1.xpose.msra.mxu0 0.0
    %1826 = vmatprep.subr.mxu0 0.0
    %1827 = vmatpush1.xpose.msra.mxu0 0.0
    %1828 = vmatprep.subr.mxu0 0.0
    %1829 = vmatpush1.xpose.msra.mxu0 %v1806
    %1830 = vmatprep.subr.mxu0 0.0
    %1831 = vmatpush1.xpose.msra.mxu0 %v1803
    %1832 = vmatprep.subr.mxu0 0.0
    %1833 = vmatpush1.xpose.msra.mxu0 %v1800
    %1834 = vmatprep.subr.mxu0 0.0
    %1835 = vmatpush1.xpose.msra.mxu0 %v1797
    %1836 = vmatprep.subr.mxu0 0.0
    %1837 = vmatpush1.xpose.msra.mxu0 %v1794
    %1838 = vmatprep.subr.mxu0 0.0
    %1839 = vmatpush1.xpose.msra.mxu0 %v1791
    %1840 = vmatprep.subr.mxu0 0.0
    %1841 = vmatpush2.xpose.msra.mxu0 0.0
    %1842 = vmatprep.subr.mxu0 0.0
    %1843 = vmatpush2.xpose.msra.mxu0 0.0
    %1844 = vmatprep.subr.mxu0 0.0
    %1845 = vmatpush2.xpose.msra.mxu0 0.0
    %1846 = vmatprep.subr.mxu0 0.0
    %1847 = vmatpush2.xpose.msra.mxu0 0.0
    %1848 = vmatprep.subr.mxu0 0.0
    %1849 = vmatpush2.xpose.msra.mxu0 0.0
    %1850 = vmatprep.subr.mxu0 0.0
    %1851 = vmatpush2.xpose.msra.mxu0 0.0
    %1852 = vmatprep.subr.mxu0 0.0
    %1853 = vmatpush2.xpose.msra.mxu0 0.0
    %1854 = vmatprep.subr.mxu0 0.0
    %1855 = vmatpush2.xpose.msra.mxu0 0.0
    %1856 = vmatprep.subr.mxu0 0.0
    %1857 = vmatpush2.xpose.msra.mxu0 0.0
    %1858 = vmatprep.subr.mxu0 0.0
    %1859 = vmatpush2.xpose.msra.mxu0 0.0
    %1860 = vmatprep.subr.mxu0 0.0
    %1861 = vmatpush2.xpose.msra.mxu0 0.0
    %1862 = vmatprep.subr.mxu0 0.0
    %1863 = vmatpush2.xpose.msra.mxu0 0.0
    %1864 = vmatprep.subr.mxu0 0.0
    %1865 = vmatpush2.xpose.msra.mxu0 0.0
    %1866 = vmatprep.subr.mxu0 0.0
    %1867 = vmatpush2.xpose.msra.mxu0 0.0
    %1868 = vmatprep.subr.mxu0 0.0
    %1869 = vmatpush2.xpose.msra.mxu0 0.0
    %1870 = vmatprep.subr.mxu0 0.0
    %1871 = vmatpush2.xpose.msra.mxu0 0.0
    %1872 = vmatprep.mubr.f32.mxu0 0.0
    %1873 = vmatmul.mubr.f32.gmra.mxu0 %v1773
    %v1874 = vpop.f32.mrf.mxu0
    %v1875 = vadd.f32 %v247, %v1874
    %v1876 = vpop.f32.mrf.mxu0
    %1877 = vmatprep.mubr.f32.mxu0 0.0
    %1878 = vmatmul.mubr.f32.gmra.mxu0 %v1776
    %v1879 = vpop.f32.mrf.mxu0
    %v1880 = vadd.f32 %v248, %v1879
    %v1881 = vpop.f32.mrf.mxu0
    %1882 = vmatprep.mubr.f32.mxu0 0.0
    %1883 = vmatmul.mubr.f32.gmra.mxu0 %v1779
    %v1884 = vpop.f32.mrf.mxu0
    %v1885 = vadd.f32 %v249, %v1884
    %v1886 = vpop.f32.mrf.mxu0
    %1887 = vmatprep.mubr.f32.mxu0 0.0
    %1888 = vmatmul.mubr.f32.gmra.mxu0 %v1782
    %v1889 = vpop.f32.mrf.mxu0
    %v1890 = vadd.f32 %v250, %v1889
    %v1891 = vpop.f32.mrf.mxu0
    %1892 = vmatprep.mubr.f32.mxu0 0.0
    %1893 = vmatmul.mubr.f32.gmra.mxu0 %v1785
    %v1894 = vpop.f32.mrf.mxu0
    %v1895 = vadd.f32 %v251, %v1894
    %v1896 = vpop.f32.mrf.mxu0
    %1897 = vmatprep.mubr.f32.mxu0 0.0
    %1898 = vmatmul.mubr.f32.gmra.mxu0 %v1788
    %v1899 = vpop.f32.mrf.mxu0
    %v1900 = vadd.f32 %v252, %v1899
    %v1901 = vpop.f32.mrf.mxu0
    %1902 = vdwg.mxu0
    %v1903 = vsel %vm63, %v1875, -inf
    %1904 = vmax.xlane.f32.xlu0 %v1903
    %v1905 = vpop.xlane.xlu0 %1904
    %v1906 = vsel %vm63, %v1880, -inf
    %1907 = vmax.xlane.f32.xlu0 %v1906
    %v1908 = vpop.xlane.xlu0 %1907
    %v1909 = vsel %vm63, %v1885, -inf
    %1910 = vmax.xlane.f32.xlu0 %v1909
    %v1911 = vpop.xlane.xlu0 %1910
    %v1912 = vsel %vm63, %v1890, -inf
    %1913 = vmax.xlane.f32.xlu0 %v1912
    %v1914 = vpop.xlane.xlu0 %1913
    %v1915 = vsel %vm63, %v1895, -inf
    %1916 = vmax.xlane.f32.xlu0 %v1915
    %v1917 = vpop.xlane.xlu0 %1916
    %v1918 = vsel %vm63, %v1900, -inf
    %1919 = vmax.xlane.f32.xlu0 %v1918
    %v1920 = vpop.xlane.xlu0 %1919
    %v1921 = vsub.f32 %v1875, %v1905
    %v1922 = vsub.f32 %v1880, %v1908
    %v1923 = vsub.f32 %v1885, %v1911
    %v1924 = vsub.f32 %v1890, %v1914
    %v1925 = vsub.f32 %v1895, %v1917
    %v1926 = vsub.f32 %v1900, %v1920
    %v1927 = vmul.f32 %v1921, 1.442695
    %v1928 = vpow.pop %v1927
    %v1929 = vmul.f32 %v1922, 1.442695
    %v1930 = vpow.pop %v1929
    %v1931 = vmul.f32 %v1923, 1.442695
    %v1932 = vpow.pop %v1931
    %v1933 = vmul.f32 %v1924, 1.442695
    %v1934 = vpow.pop %v1933
    %v1935 = vmul.f32 %v1925, 1.442695
    %v1936 = vpow.pop %v1935
    %v1937 = vmul.f32 %v1926, 1.442695
    %v1938 = vpow.pop %v1937
    %v1939 = vsel %vm63, %v1928, 0.0
    %1940 = vadd.xlane.f32.xlu0 %v1939
    %v1941 = vpop.xlane.xlu0 %1940
    %v1942 = vsel %vm63, %v1930, 0.0
    %1943 = vadd.xlane.f32.xlu0 %v1942
    %v1944 = vpop.xlane.xlu0 %1943
    %v1945 = vsel %vm63, %v1932, 0.0
    %1946 = vadd.xlane.f32.xlu0 %v1945
    %v1947 = vpop.xlane.xlu0 %1946
    %v1948 = vsel %vm63, %v1934, 0.0
    %1949 = vadd.xlane.f32.xlu0 %v1948
    %v1950 = vpop.xlane.xlu0 %1949
    %v1951 = vsel %vm63, %v1936, 0.0
    %1952 = vadd.xlane.f32.xlu0 %v1951
    %v1953 = vpop.xlane.xlu0 %1952
    %v1954 = vsel %vm63, %v1938, 0.0
    %1955 = vadd.xlane.f32.xlu0 %v1954
    %v1956 = vpop.xlane.xlu0 %1955
    %v1957 = vrcp.pop %v1941
    %v1958 = vrcp.pop %v1944
    %v1959 = vrcp.pop %v1947
    %v1960 = vrcp.pop %v1950
    %v1961 = vrcp.pop %v1953
    %v1962 = vrcp.pop %v1956
    %v1963 = vmul.f32 %v1928, %v1957
    %v1964 = vmul.f32 %v1930, %v1958
    %v1965 = vmul.f32 %v1932, %v1959
    %v1966 = vmul.f32 %v1934, %v1960
    %v1967 = vmul.f32 %v1936, %v1961
    %v1968 = vmul.f32 %v1938, %v1962
    %v1969 = vpack.c.bf16 %v1964, %v1963
    %v1970 = vpack.c.bf16 %v1966, %v1965
    %v1971 = vpack.c.bf16 %v1968, %v1967
    %v1972 = vpack.c.bf16 %v1753, %v1750
    %v1973 = vpack.c.bf16 %v1761, %v1758
    %v1974 = vpack.c.bf16 %v1769, %v1766
    %v1976 = vsel %vm63, %v1969, 0
    %v1979 = vsel %vm63, %v1970, 0
    %v1982 = vsel %vm63, %v1971, 0
    %1984 = vmatprep.subr.bf16.mxu0 0
    %1985 = vmatpush1.bf16.msra.mxu0 0
    %1986 = vmatprep.subr.bf16.mxu0 0
    %1987 = vmatpush1.bf16.msra.mxu0 0
    %1988 = vmatprep.subr.bf16.mxu0 0
    %1989 = vmatpush1.bf16.msra.mxu0 0
    %1990 = vmatprep.subr.bf16.mxu0 0
    %1991 = vmatpush1.bf16.msra.mxu0 0
    %1992 = vmatprep.subr.bf16.mxu0 0
    %1993 = vmatpush1.bf16.msra.mxu0 0
    %1994 = vmatprep.subr.bf16.mxu0 0
    %1995 = vmatpush1.bf16.msra.mxu0 %v1974
    %1996 = vmatprep.subr.bf16.mxu0 0
    %1997 = vmatpush1.bf16.msra.mxu0 %v1973
    %1998 = vmatprep.subr.bf16.mxu0 0
    %1999 = vmatpush1.bf16.msra.mxu0 %v1972
    %2000 = vmatprep.subr.bf16.mxu0 0
    %2001 = vmatpush2.bf16.msra.mxu0 0
    %2002 = vmatprep.subr.bf16.mxu0 0
    %2003 = vmatpush2.bf16.msra.mxu0 0
    %2004 = vmatprep.subr.bf16.mxu0 0
    %2005 = vmatpush2.bf16.msra.mxu0 0
    %2006 = vmatprep.subr.bf16.mxu0 0
    %2007 = vmatpush2.bf16.msra.mxu0 0
    %2008 = vmatprep.subr.bf16.mxu0 0
    %2009 = vmatpush2.bf16.msra.mxu0 0
    %2010 = vmatprep.subr.bf16.mxu0 0
    %2011 = vmatpush2.bf16.msra.mxu0 0
    %2012 = vmatprep.subr.bf16.mxu0 0
    %2013 = vmatpush2.bf16.msra.mxu0 0
    %2014 = vmatprep.subr.bf16.mxu0 0
    %2015 = vmatpush2.bf16.msra.mxu0 0
    %2016 = vmatprep.mubr.bf16.mxu0 0
    %2017 = vmatmul.mubr.bf16.gmra.mxu0 %v1976
    %v2018 = vpop.f32.mrf.mxu0
    %v2019 = vadd.f32 0.0, %v2018
    %v2020 = vpop.f32.mrf.mxu0
    %v2021 = vpop.f32.mrf.mxu0
    %v2022 = vadd.f32 0.0, %v2021
    %v2023 = vpop.f32.mrf.mxu0
    %2024 = vmatprep.mubr.bf16.mxu0 0
    %2025 = vmatmul.mubr.bf16.gmra.mxu0 %v1979
    %v2026 = vpop.f32.mrf.mxu0
    %v2027 = vadd.f32 0.0, %v2026
    %v2028 = vpop.f32.mrf.mxu0
    %v2029 = vpop.f32.mrf.mxu0
    %v2030 = vadd.f32 0.0, %v2029
    %v2031 = vpop.f32.mrf.mxu0
    %2032 = vmatprep.mubr.bf16.mxu0 0
    %2033 = vmatmul.mubr.bf16.gmra.mxu0 %v1982
    %v2034 = vpop.f32.mrf.mxu0
    %v2035 = vadd.f32 0.0, %v2034
    %v2036 = vpop.f32.mrf.mxu0
    %v2037 = vpop.f32.mrf.mxu0
    %v2038 = vadd.f32 0.0, %v2037
    %v2039 = vpop.f32.mrf.mxu0
    %2040 = vdwg.mxu0
    %v2041 = vpack.c.bf16 %v2022, %v2019
    %v2042 = vpack.c.bf16 %v2030, %v2027
    %v2043 = vpack.c.bf16 %v2038, %v2035
    %v2048 = vunpack.c.l.b16 %v1556
    %v2049 = vunpack.c.l.b16 %v1557
    %v2050 = vunpack.c.l.b16 %v1558
    %v2051 = vunpack.c.l.b16 %v1559
    %v2052 = vpack.c.b16 %v2049, %v2048
    %v2053 = vpack.c.b16 %v2051, %v2050
    %v2055 = vsel %vm597, %v2041, 0
    %v2058 = vsel %vm597, %v2042, 0
    %v2061 = vsel %vm597, %v2043, 0
    %v2064 = vsel %vm597, %v2052, 0
    %v2067 = vsel %vm597, %v2053, 0
    %2069 = vmatprep.subr.bf16.mxu0 0
    %2070 = vmatpush1.bf16.xpose.msra.mxu0 0
    %2071 = vmatprep.subr.bf16.mxu0 0
    %2072 = vmatpush1.bf16.xpose.msra.mxu0 0
    %2073 = vmatprep.subr.bf16.mxu0 0
    %2074 = vmatpush1.bf16.xpose.msra.mxu0 0
    %2075 = vmatprep.subr.bf16.mxu0 0
    %2076 = vmatpush1.bf16.xpose.msra.mxu0 0
    %2077 = vmatprep.subr.bf16.mxu0 0
    %2078 = vmatpush1.bf16.xpose.msra.mxu0 0
    %2079 = vmatprep.subr.bf16.mxu0 0
    %2080 = vmatpush1.bf16.xpose.msra.mxu0 0
    %2081 = vmatprep.subr.bf16.mxu0 0
    %2082 = vmatpush1.bf16.xpose.msra.mxu0 %v2067
    %2083 = vmatprep.subr.bf16.mxu0 0
    %2084 = vmatpush1.bf16.xpose.msra.mxu0 %v2064
    %2085 = vmatprep.subr.bf16.mxu0 0
    %2086 = vmatpush2.bf16.xpose.msra.mxu0 0
    %2087 = vmatprep.subr.bf16.mxu0 0
    %2088 = vmatpush2.bf16.xpose.msra.mxu0 0
    %2089 = vmatprep.subr.bf16.mxu0 0
    %2090 = vmatpush2.bf16.xpose.msra.mxu0 0
    %2091 = vmatprep.subr.bf16.mxu0 0
    %2092 = vmatpush2.bf16.xpose.msra.mxu0 0
    %2093 = vmatprep.subr.bf16.mxu0 0
    %2094 = vmatpush2.bf16.xpose.msra.mxu0 0
    %2095 = vmatprep.subr.bf16.mxu0 0
    %2096 = vmatpush2.bf16.xpose.msra.mxu0 0
    %2097 = vmatprep.subr.bf16.mxu0 0
    %2098 = vmatpush2.bf16.xpose.msra.mxu0 0
    %2099 = vmatprep.subr.bf16.mxu0 0
    %2100 = vmatpush2.bf16.xpose.msra.mxu0 0
    %2101 = vmatprep.mubr.bf16.mxu0 0
    %2102 = vmatmul.mubr.bf16.gmra.mxu0 %v2055
    %v2103 = vpop.f32.mrf.mxu0
    %v2104 = vadd.f32 0.0, %v2103
    %v2105 = vpop.f32.mrf.mxu0
    %v2106 = vpop.f32.mrf.mxu0
    %v2107 = vadd.f32 0.0, %v2106
    %v2108 = vpop.f32.mrf.mxu0
    %2109 = vmatprep.mubr.bf16.mxu0 0
    %2110 = vmatmul.mubr.bf16.gmra.mxu0 %v2058
    %v2111 = vpop.f32.mrf.mxu0
    %v2112 = vadd.f32 0.0, %v2111
    %v2113 = vpop.f32.mrf.mxu0
    %v2114 = vpop.f32.mrf.mxu0
    %v2115 = vadd.f32 0.0, %v2114
    %v2116 = vpop.f32.mrf.mxu0
    %2117 = vmatprep.mubr.bf16.mxu0 0
    %2118 = vmatmul.mubr.bf16.gmra.mxu0 %v2061
    %v2119 = vpop.f32.mrf.mxu0
    %v2120 = vadd.f32 0.0, %v2119
    %v2121 = vpop.f32.mrf.mxu0
    %v2122 = vpop.f32.mrf.mxu0
    %v2123 = vadd.f32 0.0, %v2122
    %v2124 = vpop.f32.mrf.mxu0
    %2125 = vdwg.mxu0
    %v2126 = vadd.f32 %v1517, %v2104
    %v2127 = vadd.f32 %v1520, %v2107
    %v2128 = vadd.f32 %v1525, %v2112
    %v2129 = vadd.f32 %v1528, %v2115
    %v2130 = vadd.f32 %v1533, %v2120
    %v2131 = vadd.f32 %v1536, %v2123
    %s2132 = scalar_lea.vmem %s1, 240
    %v2133 = vld [vmem:[%s2132] sm:$0xf]
    %v2134 = vld [vmem:[%s2132 + $0x4] sm:$0xf]
    %v2135 = vld [vmem:[%s2132 + $0x8] sm:$0xf]
    %v2136 = vld [vmem:[%s2132 + $0xc] sm:$0xf]
    %v2137 = vld [vmem:[%s2132 + $0x10] sm:$0x1]
    %s2138 = scalar_lea.vmem %s1, 260
    %v2139 = vld [vmem:[%s2138] sm:$0xf]
    %v2140 = vld [vmem:[%s2138 + $0x4] sm:$0xf]
    %v2141 = vld [vmem:[%s2138 + $0x8] sm:$0xf]
    %v2142 = vld [vmem:[%s2138 + $0xc] sm:$0xf]
    %s2143 = scalar_lea.vmem %s1, 280
    %v2144 = vld [vmem:[%s2143] sm:$0xf]
    %v2145 = vld [vmem:[%s2143 + $0x4] sm:$0xf]
    %v2146 = vld [vmem:[%s2143 + $0x8] sm:$0xf]
    %v2147 = vld [vmem:[%s2143 + $0xc] sm:$0xf]
    %s2148 = scalar_lea.vmem %s1, 300
    %v2149 = vld [vmem:[%s2148] sm:$0xf]
    %v2150 = vld [vmem:[%s2148 + $0x4] sm:$0xf]
    %v2151 = vld [vmem:[%s2148 + $0x8] sm:$0xf]
    %v2152 = vld [vmem:[%s2148 + $0xc] sm:$0xf]
    %v2153 = vunpack.c.l.bf16 %v2137
    %v2154 = vlaneseq
    %v2155 = vshrl.u32 %v2154, 7
    %v2156 = vsub.s32 0, %v2155
    %v2157 = vrot.slane %v2153, %v2156
    %v2162 = vunpack.c.l.b16 %v2133
    %v2163 = vunpack.c.l.b16 %v2134
    %v2164 = vunpack.c.l.b16 %v2135
    %v2165 = vunpack.c.l.b16 %v2136
    %v2166 = vpack.c.b16 %v2163, %v2162
    %v2167 = vpack.c.b16 %v2165, %v2164
    %2170 = vmatprep.subr.bf16.mxu0 0
    %2171 = vmatpush1.bf16.msra.mxu0 0
    %2172 = vmatprep.subr.bf16.mxu0 0
    %2173 = vmatpush1.bf16.msra.mxu0 0
    %2174 = vmatprep.subr.bf16.mxu0 0
    %2175 = vmatpush1.bf16.msra.mxu0 0
    %2176 = vmatprep.subr.bf16.mxu0 0
    %2177 = vmatpush1.bf16.msra.mxu0 0
    %2178 = vmatprep.subr.bf16.mxu0 0
    %2179 = vmatpush1.bf16.msra.mxu0 0
    %2180 = vmatprep.subr.bf16.mxu0 0
    %2181 = vmatpush1.bf16.msra.mxu0 0
    %2182 = vmatprep.subr.bf16.mxu0 0
    %2183 = vmatpush1.bf16.msra.mxu0 %v2167
    %2184 = vmatprep.subr.bf16.mxu0 0
    %2185 = vmatpush1.bf16.msra.mxu0 %v2166
    %2186 = vmatprep.subr.bf16.mxu0 0
    %2187 = vmatpush2.bf16.msra.mxu0 0
    %2188 = vmatprep.subr.bf16.mxu0 0
    %2189 = vmatpush2.bf16.msra.mxu0 0
    %2190 = vmatprep.subr.bf16.mxu0 0
    %2191 = vmatpush2.bf16.msra.mxu0 0
    %2192 = vmatprep.subr.bf16.mxu0 0
    %2193 = vmatpush2.bf16.msra.mxu0 0
    %2194 = vmatprep.subr.bf16.mxu0 0
    %2195 = vmatpush2.bf16.msra.mxu0 0
    %2196 = vmatprep.subr.bf16.mxu0 0
    %2197 = vmatpush2.bf16.msra.mxu0 0
    %2198 = vmatprep.subr.bf16.mxu0 0
    %2199 = vmatpush2.bf16.msra.mxu0 0
    %2200 = vmatprep.subr.bf16.mxu0 0
    %2201 = vmatpush2.bf16.msra.mxu0 0
    %2202 = vmatprep.mubr.bf16.mxu0 0
    %2203 = vmatmul.mubr.bf16.gmra.mxu0 %v394
    %v2204 = vpop.f32.mrf.mxu0
    %v2205 = vadd.f32 %v2157, %v2204
    %v2206 = vpop.f32.mrf.mxu0
    %v2207 = vpop.f32.mrf.mxu0
    %v2208 = vadd.f32 %v2157, %v2207
    %v2209 = vpop.f32.mrf.mxu0
    %2210 = vmatprep.mubr.bf16.mxu0 0
    %2211 = vmatmul.mubr.bf16.gmra.mxu0 %v397
    %v2212 = vpop.f32.mrf.mxu0
    %v2213 = vadd.f32 %v2157, %v2212
    %v2214 = vpop.f32.mrf.mxu0
    %v2215 = vpop.f32.mrf.mxu0
    %v2216 = vadd.f32 %v2157, %v2215
    %v2217 = vpop.f32.mrf.mxu0
    %2218 = vmatprep.mubr.bf16.mxu0 0
    %2219 = vmatmul.mubr.bf16.gmra.mxu0 %v400
    %v2220 = vpop.f32.mrf.mxu0
    %v2221 = vadd.f32 %v2157, %v2220
    %v2222 = vpop.f32.mrf.mxu0
    %v2223 = vpop.f32.mrf.mxu0
    %v2224 = vadd.f32 %v2157, %v2223
    %v2225 = vpop.f32.mrf.mxu0
    %2226 = vdwg.mxu0
    %v2231 = vunpack.c.l.b16 %v2139
    %v2232 = vunpack.c.l.b16 %v2140
    %v2233 = vunpack.c.l.b16 %v2141
    %v2234 = vunpack.c.l.b16 %v2142
    %v2235 = vpack.c.b16 %v2232, %v2231
    %v2236 = vpack.c.b16 %v2234, %v2233
    %2239 = vmatprep.subr.bf16.mxu0 0
    %2240 = vmatpush1.bf16.msra.mxu0 0
    %2241 = vmatprep.subr.bf16.mxu0 0
    %2242 = vmatpush1.bf16.msra.mxu0 0
    %2243 = vmatprep.subr.bf16.mxu0 0
    %2244 = vmatpush1.bf16.msra.mxu0 0
    %2245 = vmatprep.subr.bf16.mxu0 0
    %2246 = vmatpush1.bf16.msra.mxu0 0
    %2247 = vmatprep.subr.bf16.mxu0 0
    %2248 = vmatpush1.bf16.msra.mxu0 0
    %2249 = vmatprep.subr.bf16.mxu0 0
    %2250 = vmatpush1.bf16.msra.mxu0 0
    %2251 = vmatprep.subr.bf16.mxu0 0
    %2252 = vmatpush1.bf16.msra.mxu0 %v2236
    %2253 = vmatprep.subr.bf16.mxu0 0
    %2254 = vmatpush1.bf16.msra.mxu0 %v2235
    %2255 = vmatprep.subr.bf16.mxu0 0
    %2256 = vmatpush2.bf16.msra.mxu0 0
    %2257 = vmatprep.subr.bf16.mxu0 0
    %2258 = vmatpush2.bf16.msra.mxu0 0
    %2259 = vmatprep.subr.bf16.mxu0 0
    %2260 = vmatpush2.bf16.msra.mxu0 0
    %2261 = vmatprep.subr.bf16.mxu0 0
    %2262 = vmatpush2.bf16.msra.mxu0 0
    %2263 = vmatprep.subr.bf16.mxu0 0
    %2264 = vmatpush2.bf16.msra.mxu0 0
    %2265 = vmatprep.subr.bf16.mxu0 0
    %2266 = vmatpush2.bf16.msra.mxu0 0
    %2267 = vmatprep.subr.bf16.mxu0 0
    %2268 = vmatpush2.bf16.msra.mxu0 0
    %2269 = vmatprep.subr.bf16.mxu0 0
    %2270 = vmatpush2.bf16.msra.mxu0 0
    %2271 = vmatprep.mubr.bf16.mxu0 0
    %2272 = vmatmul.mubr.bf16.gmra.mxu0 %v394
    %v2273 = vpop.f32.mrf.mxu0
    %v2274 = vadd.f32 0.0, %v2273
    %v2275 = vpop.f32.mrf.mxu0
    %v2276 = vpop.f32.mrf.mxu0
    %v2277 = vadd.f32 0.0, %v2276
    %v2278 = vpop.f32.mrf.mxu0
    %2279 = vmatprep.mubr.bf16.mxu0 0
    %2280 = vmatmul.mubr.bf16.gmra.mxu0 %v397
    %v2281 = vpop.f32.mrf.mxu0
    %v2282 = vadd.f32 0.0, %v2281
    %v2283 = vpop.f32.mrf.mxu0
    %v2284 = vpop.f32.mrf.mxu0
    %v2285 = vadd.f32 0.0, %v2284
    %v2286 = vpop.f32.mrf.mxu0
    %2287 = vmatprep.mubr.bf16.mxu0 0
    %2288 = vmatmul.mubr.bf16.gmra.mxu0 %v400
    %v2289 = vpop.f32.mrf.mxu0
    %v2290 = vadd.f32 0.0, %v2289
    %v2291 = vpop.f32.mrf.mxu0
    %v2292 = vpop.f32.mrf.mxu0
    %v2293 = vadd.f32 0.0, %v2292
    %v2294 = vpop.f32.mrf.mxu0
    %2295 = vdwg.mxu0
    %v2300 = vunpack.c.l.b16 %v2144
    %v2301 = vunpack.c.l.b16 %v2145
    %v2302 = vunpack.c.l.b16 %v2146
    %v2303 = vunpack.c.l.b16 %v2147
    %v2304 = vpack.c.b16 %v2301, %v2300
    %v2305 = vpack.c.b16 %v2303, %v2302
    %2308 = vmatprep.subr.bf16.mxu0 0
    %2309 = vmatpush1.bf16.msra.mxu0 0
    %2310 = vmatprep.subr.bf16.mxu0 0
    %2311 = vmatpush1.bf16.msra.mxu0 0
    %2312 = vmatprep.subr.bf16.mxu0 0
    %2313 = vmatpush1.bf16.msra.mxu0 0
    %2314 = vmatprep.subr.bf16.mxu0 0
    %2315 = vmatpush1.bf16.msra.mxu0 0
    %2316 = vmatprep.subr.bf16.mxu0 0
    %2317 = vmatpush1.bf16.msra.mxu0 0
    %2318 = vmatprep.subr.bf16.mxu0 0
    %2319 = vmatpush1.bf16.msra.mxu0 0
    %2320 = vmatprep.subr.bf16.mxu0 0
    %2321 = vmatpush1.bf16.msra.mxu0 %v2305
    %2322 = vmatprep.subr.bf16.mxu0 0
    %2323 = vmatpush1.bf16.msra.mxu0 %v2304
    %2324 = vmatprep.subr.bf16.mxu0 0
    %2325 = vmatpush2.bf16.msra.mxu0 0
    %2326 = vmatprep.subr.bf16.mxu0 0
    %2327 = vmatpush2.bf16.msra.mxu0 0
    %2328 = vmatprep.subr.bf16.mxu0 0
    %2329 = vmatpush2.bf16.msra.mxu0 0
    %2330 = vmatprep.subr.bf16.mxu0 0
    %2331 = vmatpush2.bf16.msra.mxu0 0
    %2332 = vmatprep.subr.bf16.mxu0 0
    %2333 = vmatpush2.bf16.msra.mxu0 0
    %2334 = vmatprep.subr.bf16.mxu0 0
    %2335 = vmatpush2.bf16.msra.mxu0 0
    %2336 = vmatprep.subr.bf16.mxu0 0
    %2337 = vmatpush2.bf16.msra.mxu0 0
    %2338 = vmatprep.subr.bf16.mxu0 0
    %2339 = vmatpush2.bf16.msra.mxu0 0
    %2340 = vmatprep.mubr.bf16.mxu0 0
    %2341 = vmatmul.mubr.bf16.gmra.mxu0 %v394
    %v2342 = vpop.f32.mrf.mxu0
    %v2343 = vadd.f32 0.0, %v2342
    %v2344 = vpop.f32.mrf.mxu0
    %v2345 = vpop.f32.mrf.mxu0
    %v2346 = vadd.f32 0.0, %v2345
    %v2347 = vpop.f32.mrf.mxu0
    %2348 = vmatprep.mubr.bf16.mxu0 0
    %2349 = vmatmul.mubr.bf16.gmra.mxu0 %v397
    %v2350 = vpop.f32.mrf.mxu0
    %v2351 = vadd.f32 0.0, %v2350
    %v2352 = vpop.f32.mrf.mxu0
    %v2353 = vpop.f32.mrf.mxu0
    %v2354 = vadd.f32 0.0, %v2353
    %v2355 = vpop.f32.mrf.mxu0
    %2356 = vmatprep.mubr.bf16.mxu0 0
    %2357 = vmatmul.mubr.bf16.gmra.mxu0 %v400
    %v2358 = vpop.f32.mrf.mxu0
    %v2359 = vadd.f32 0.0, %v2358
    %v2360 = vpop.f32.mrf.mxu0
    %v2361 = vpop.f32.mrf.mxu0
    %v2362 = vadd.f32 0.0, %v2361
    %v2363 = vpop.f32.mrf.mxu0
    %2364 = vdwg.mxu0
    %v2366 = vsel %vm597, %v2205, 0
    %v2369 = vsel %vm597, %v2208, 0
    %v2372 = vsel %vm597, %v2213, 0
    %v2375 = vsel %vm597, %v2216, 0
    %v2378 = vsel %vm597, %v2221, 0
    %v2381 = vsel %vm597, %v2224, 0
    %v2384 = vsel %vm597, %v2274, 0
    %v2387 = vsel %vm597, %v2277, 0
    %v2390 = vsel %vm597, %v2282, 0
    %v2393 = vsel %vm597, %v2285, 0
    %v2396 = vsel %vm597, %v2290, 0
    %v2399 = vsel %vm597, %v2293, 0
    %2401 = vmatprep.subr.mxu0 0.0
    %2402 = vmatpush1.xpose.msra.mxu0 0.0
    %2403 = vmatprep.subr.mxu0 0.0
    %2404 = vmatpush1.xpose.msra.mxu0 0.0
    %2405 = vmatprep.subr.mxu0 0.0
    %2406 = vmatpush1.xpose.msra.mxu0 0.0
    %2407 = vmatprep.subr.mxu0 0.0
    %2408 = vmatpush1.xpose.msra.mxu0 0.0
    %2409 = vmatprep.subr.mxu0 0.0
    %2410 = vmatpush1.xpose.msra.mxu0 0.0
    %2411 = vmatprep.subr.mxu0 0.0
    %2412 = vmatpush1.xpose.msra.mxu0 0.0
    %2413 = vmatprep.subr.mxu0 0.0
    %2414 = vmatpush1.xpose.msra.mxu0 0.0
    %2415 = vmatprep.subr.mxu0 0.0
    %2416 = vmatpush1.xpose.msra.mxu0 0.0
    %2417 = vmatprep.subr.mxu0 0.0
    %2418 = vmatpush1.xpose.msra.mxu0 0.0
    %2419 = vmatprep.subr.mxu0 0.0
    %2420 = vmatpush1.xpose.msra.mxu0 0.0
    %2421 = vmatprep.subr.mxu0 0.0
    %2422 = vmatpush1.xpose.msra.mxu0 %v2399
    %2423 = vmatprep.subr.mxu0 0.0
    %2424 = vmatpush1.xpose.msra.mxu0 %v2396
    %2425 = vmatprep.subr.mxu0 0.0
    %2426 = vmatpush1.xpose.msra.mxu0 %v2393
    %2427 = vmatprep.subr.mxu0 0.0
    %2428 = vmatpush1.xpose.msra.mxu0 %v2390
    %2429 = vmatprep.subr.mxu0 0.0
    %2430 = vmatpush1.xpose.msra.mxu0 %v2387
    %2431 = vmatprep.subr.mxu0 0.0
    %2432 = vmatpush1.xpose.msra.mxu0 %v2384
    %2433 = vmatprep.subr.mxu0 0.0
    %2434 = vmatpush2.xpose.msra.mxu0 0.0
    %2435 = vmatprep.subr.mxu0 0.0
    %2436 = vmatpush2.xpose.msra.mxu0 0.0
    %2437 = vmatprep.subr.mxu0 0.0
    %2438 = vmatpush2.xpose.msra.mxu0 0.0
    %2439 = vmatprep.subr.mxu0 0.0
    %2440 = vmatpush2.xpose.msra.mxu0 0.0
    %2441 = vmatprep.subr.mxu0 0.0
    %2442 = vmatpush2.xpose.msra.mxu0 0.0
    %2443 = vmatprep.subr.mxu0 0.0
    %2444 = vmatpush2.xpose.msra.mxu0 0.0
    %2445 = vmatprep.subr.mxu0 0.0
    %2446 = vmatpush2.xpose.msra.mxu0 0.0
    %2447 = vmatprep.subr.mxu0 0.0
    %2448 = vmatpush2.xpose.msra.mxu0 0.0
    %2449 = vmatprep.subr.mxu0 0.0
    %2450 = vmatpush2.xpose.msra.mxu0 0.0
    %2451 = vmatprep.subr.mxu0 0.0
    %2452 = vmatpush2.xpose.msra.mxu0 0.0
    %2453 = vmatprep.subr.mxu0 0.0
    %2454 = vmatpush2.xpose.msra.mxu0 0.0
    %2455 = vmatprep.subr.mxu0 0.0
    %2456 = vmatpush2.xpose.msra.mxu0 0.0
    %2457 = vmatprep.subr.mxu0 0.0
    %2458 = vmatpush2.xpose.msra.mxu0 0.0
    %2459 = vmatprep.subr.mxu0 0.0
    %2460 = vmatpush2.xpose.msra.mxu0 0.0
    %2461 = vmatprep.subr.mxu0 0.0
    %2462 = vmatpush2.xpose.msra.mxu0 0.0
    %2463 = vmatprep.subr.mxu0 0.0
    %2464 = vmatpush2.xpose.msra.mxu0 0.0
    %2465 = vmatprep.mubr.f32.mxu0 0.0
    %2466 = vmatmul.mubr.f32.gmra.mxu0 %v2366
    %v2467 = vpop.f32.mrf.mxu0
    %v2468 = vadd.f32 %v247, %v2467
    %v2469 = vpop.f32.mrf.mxu0
    %2470 = vmatprep.mubr.f32.mxu0 0.0
    %2471 = vmatmul.mubr.f32.gmra.mxu0 %v2369
    %v2472 = vpop.f32.mrf.mxu0
    %v2473 = vadd.f32 %v248, %v2472
    %v2474 = vpop.f32.mrf.mxu0
    %2475 = vmatprep.mubr.f32.mxu0 0.0
    %2476 = vmatmul.mubr.f32.gmra.mxu0 %v2372
    %v2477 = vpop.f32.mrf.mxu0
    %v2478 = vadd.f32 %v249, %v2477
    %v2479 = vpop.f32.mrf.mxu0
    %2480 = vmatprep.mubr.f32.mxu0 0.0
    %2481 = vmatmul.mubr.f32.gmra.mxu0 %v2375
    %v2482 = vpop.f32.mrf.mxu0
    %v2483 = vadd.f32 %v250, %v2482
    %v2484 = vpop.f32.mrf.mxu0
    %2485 = vmatprep.mubr.f32.mxu0 0.0
    %2486 = vmatmul.mubr.f32.gmra.mxu0 %v2378
    %v2487 = vpop.f32.mrf.mxu0
    %v2488 = vadd.f32 %v251, %v2487
    %v2489 = vpop.f32.mrf.mxu0
    %2490 = vmatprep.mubr.f32.mxu0 0.0
    %2491 = vmatmul.mubr.f32.gmra.mxu0 %v2381
    %v2492 = vpop.f32.mrf.mxu0
    %v2493 = vadd.f32 %v252, %v2492
    %v2494 = vpop.f32.mrf.mxu0
    %2495 = vdwg.mxu0
    %v2496 = vsel %vm63, %v2468, -inf
    %2497 = vmax.xlane.f32.xlu0 %v2496
    %v2498 = vpop.xlane.xlu0 %2497
    %v2499 = vsel %vm63, %v2473, -inf
    %2500 = vmax.xlane.f32.xlu0 %v2499
    %v2501 = vpop.xlane.xlu0 %2500
    %v2502 = vsel %vm63, %v2478, -inf
    %2503 = vmax.xlane.f32.xlu0 %v2502
    %v2504 = vpop.xlane.xlu0 %2503
    %v2505 = vsel %vm63, %v2483, -inf
    %2506 = vmax.xlane.f32.xlu0 %v2505
    %v2507 = vpop.xlane.xlu0 %2506
    %v2508 = vsel %vm63, %v2488, -inf
    %2509 = vmax.xlane.f32.xlu0 %v2508
    %v2510 = vpop.xlane.xlu0 %2509
    %v2511 = vsel %vm63, %v2493, -inf
    %2512 = vmax.xlane.f32.xlu0 %v2511
    %v2513 = vpop.xlane.xlu0 %2512
    %v2514 = vsub.f32 %v2468, %v2498
    %v2515 = vsub.f32 %v2473, %v2501
    %v2516 = vsub.f32 %v2478, %v2504
    %v2517 = vsub.f32 %v2483, %v2507
    %v2518 = vsub.f32 %v2488, %v2510
    %v2519 = vsub.f32 %v2493, %v2513
    %v2520 = vmul.f32 %v2514, 1.442695
    %v2521 = vpow.pop %v2520
    %v2522 = vmul.f32 %v2515, 1.442695
    %v2523 = vpow.pop %v2522
    %v2524 = vmul.f32 %v2516, 1.442695
    %v2525 = vpow.pop %v2524
    %v2526 = vmul.f32 %v2517, 1.442695
    %v2527 = vpow.pop %v2526
    %v2528 = vmul.f32 %v2518, 1.442695
    %v2529 = vpow.pop %v2528
    %v2530 = vmul.f32 %v2519, 1.442695
    %v2531 = vpow.pop %v2530
    %v2532 = vsel %vm63, %v2521, 0.0
    %2533 = vadd.xlane.f32.xlu0 %v2532
    %v2534 = vpop.xlane.xlu0 %2533
    %v2535 = vsel %vm63, %v2523, 0.0
    %2536 = vadd.xlane.f32.xlu0 %v2535
    %v2537 = vpop.xlane.xlu0 %2536
    %v2538 = vsel %vm63, %v2525, 0.0
    %2539 = vadd.xlane.f32.xlu0 %v2538
    %v2540 = vpop.xlane.xlu0 %2539
    %v2541 = vsel %vm63, %v2527, 0.0
    %2542 = vadd.xlane.f32.xlu0 %v2541
    %v2543 = vpop.xlane.xlu0 %2542
    %v2544 = vsel %vm63, %v2529, 0.0
    %2545 = vadd.xlane.f32.xlu0 %v2544
    %v2546 = vpop.xlane.xlu0 %2545
    %v2547 = vsel %vm63, %v2531, 0.0
    %2548 = vadd.xlane.f32.xlu0 %v2547
    %v2549 = vpop.xlane.xlu0 %2548
    %v2550 = vrcp.pop %v2534
    %v2551 = vrcp.pop %v2537
    %v2552 = vrcp.pop %v2540
    %v2553 = vrcp.pop %v2543
    %v2554 = vrcp.pop %v2546
    %v2555 = vrcp.pop %v2549
    %v2556 = vmul.f32 %v2521, %v2550
    %v2557 = vmul.f32 %v2523, %v2551
    %v2558 = vmul.f32 %v2525, %v2552
    %v2559 = vmul.f32 %v2527, %v2553
    %v2560 = vmul.f32 %v2529, %v2554
    %v2561 = vmul.f32 %v2531, %v2555
    %v2562 = vpack.c.bf16 %v2557, %v2556
    %v2563 = vpack.c.bf16 %v2559, %v2558
    %v2564 = vpack.c.bf16 %v2561, %v2560
    %v2565 = vpack.c.bf16 %v2346, %v2343
    %v2566 = vpack.c.bf16 %v2354, %v2351
    %v2567 = vpack.c.bf16 %v2362, %v2359
    %v2569 = vsel %vm63, %v2562, 0
    %v2572 = vsel %vm63, %v2563, 0
    %v2575 = vsel %vm63, %v2564, 0
    %2577 = vmatprep.subr.bf16.mxu0 0
    %2578 = vmatpush1.bf16.msra.mxu0 0
    %2579 = vmatprep.subr.bf16.mxu0 0
    %2580 = vmatpush1.bf16.msra.mxu0 0
    %2581 = vmatprep.subr.bf16.mxu0 0
    %2582 = vmatpush1.bf16.msra.mxu0 0
    %2583 = vmatprep.subr.bf16.mxu0 0
    %2584 = vmatpush1.bf16.msra.mxu0 0
    %2585 = vmatprep.subr.bf16.mxu0 0
    %2586 = vmatpush1.bf16.msra.mxu0 0
    %2587 = vmatprep.subr.bf16.mxu0 0
    %2588 = vmatpush1.bf16.msra.mxu0 %v2567
    %2589 = vmatprep.subr.bf16.mxu0 0
    %2590 = vmatpush1.bf16.msra.mxu0 %v2566
    %2591 = vmatprep.subr.bf16.mxu0 0
    %2592 = vmatpush1.bf16.msra.mxu0 %v2565
    %2593 = vmatprep.subr.bf16.mxu0 0
    %2594 = vmatpush2.bf16.msra.mxu0 0
    %2595 = vmatprep.subr.bf16.mxu0 0
    %2596 = vmatpush2.bf16.msra.mxu0 0
    %2597 = vmatprep.subr.bf16.mxu0 0
    %2598 = vmatpush2.bf16.msra.mxu0 0
    %2599 = vmatprep.subr.bf16.mxu0 0
    %2600 = vmatpush2.bf16.msra.mxu0 0
    %2601 = vmatprep.subr.bf16.mxu0 0
    %2602 = vmatpush2.bf16.msra.mxu0 0
    %2603 = vmatprep.subr.bf16.mxu0 0
    %2604 = vmatpush2.bf16.msra.mxu0 0
    %2605 = vmatprep.subr.bf16.mxu0 0
    %2606 = vmatpush2.bf16.msra.mxu0 0
    %2607 = vmatprep.subr.bf16.mxu0 0
    %2608 = vmatpush2.bf16.msra.mxu0 0
    %2609 = vmatprep.mubr.bf16.mxu0 0
    %2610 = vmatmul.mubr.bf16.gmra.mxu0 %v2569
    %v2611 = vpop.f32.mrf.mxu0
    %v2612 = vadd.f32 0.0, %v2611
    %v2613 = vpop.f32.mrf.mxu0
    %v2614 = vpop.f32.mrf.mxu0
    %v2615 = vadd.f32 0.0, %v2614
    %v2616 = vpop.f32.mrf.mxu0
    %2617 = vmatprep.mubr.bf16.mxu0 0
    %2618 = vmatmul.mubr.bf16.gmra.mxu0 %v2572
    %v2619 = vpop.f32.mrf.mxu0
    %v2620 = vadd.f32 0.0, %v2619
    %v2621 = vpop.f32.mrf.mxu0
    %v2622 = vpop.f32.mrf.mxu0
    %v2623 = vadd.f32 0.0, %v2622
    %v2624 = vpop.f32.mrf.mxu0
    %2625 = vmatprep.mubr.bf16.mxu0 0
    %2626 = vmatmul.mubr.bf16.gmra.mxu0 %v2575
    %v2627 = vpop.f32.mrf.mxu0
    %v2628 = vadd.f32 0.0, %v2627
    %v2629 = vpop.f32.mrf.mxu0
    %v2630 = vpop.f32.mrf.mxu0
    %v2631 = vadd.f32 0.0, %v2630
    %v2632 = vpop.f32.mrf.mxu0
    %2633 = vdwg.mxu0
    %v2634 = vpack.c.bf16 %v2615, %v2612
    %v2635 = vpack.c.bf16 %v2623, %v2620
    %v2636 = vpack.c.bf16 %v2631, %v2628
    %v2641 = vunpack.c.l.b16 %v2149
    %v2642 = vunpack.c.l.b16 %v2150
    %v2643 = vunpack.c.l.b16 %v2151
    %v2644 = vunpack.c.l.b16 %v2152
    %v2645 = vpack.c.b16 %v2642, %v2641
    %v2646 = vpack.c.b16 %v2644, %v2643
    %v2648 = vsel %vm597, %v2634, 0
    %v2651 = vsel %vm597, %v2635, 0
    %v2654 = vsel %vm597, %v2636, 0
    %v2657 = vsel %vm597, %v2645, 0
    %v2660 = vsel %vm597, %v2646, 0
    %2662 = vmatprep.subr.bf16.mxu0 0
    %2663 = vmatpush1.bf16.xpose.msra.mxu0 0
    %2664 = vmatprep.subr.bf16.mxu0 0
    %2665 = vmatpush1.bf16.xpose.msra.mxu0 0
    %2666 = vmatprep.subr.bf16.mxu0 0
    %2667 = vmatpush1.bf16.xpose.msra.mxu0 0
    %2668 = vmatprep.subr.bf16.mxu0 0
    %2669 = vmatpush1.bf16.xpose.msra.mxu0 0
    %2670 = vmatprep.subr.bf16.mxu0 0
    %2671 = vmatpush1.bf16.xpose.msra.mxu0 0
    %2672 = vmatprep.subr.bf16.mxu0 0
    %2673 = vmatpush1.bf16.xpose.msra.mxu0 0
    %2674 = vmatprep.subr.bf16.mxu0 0
    %2675 = vmatpush1.bf16.xpose.msra.mxu0 %v2660
    %2676 = vmatprep.subr.bf16.mxu0 0
    %2677 = vmatpush1.bf16.xpose.msra.mxu0 %v2657
    %2678 = vmatprep.subr.bf16.mxu0 0
    %2679 = vmatpush2.bf16.xpose.msra.mxu0 0
    %2680 = vmatprep.subr.bf16.mxu0 0
    %2681 = vmatpush2.bf16.xpose.msra.mxu0 0
    %2682 = vmatprep.subr.bf16.mxu0 0
    %2683 = vmatpush2.bf16.xpose.msra.mxu0 0
    %2684 = vmatprep.subr.bf16.mxu0 0
    %2685 = vmatpush2.bf16.xpose.msra.mxu0 0
    %2686 = vmatprep.subr.bf16.mxu0 0
    %2687 = vmatpush2.bf16.xpose.msra.mxu0 0
    %2688 = vmatprep.subr.bf16.mxu0 0
    %2689 = vmatpush2.bf16.xpose.msra.mxu0 0
    %2690 = vmatprep.subr.bf16.mxu0 0
    %2691 = vmatpush2.bf16.xpose.msra.mxu0 0
    %2692 = vmatprep.subr.bf16.mxu0 0
    %2693 = vmatpush2.bf16.xpose.msra.mxu0 0
    %2694 = vmatprep.mubr.bf16.mxu0 0
    %2695 = vmatmul.mubr.bf16.gmra.mxu0 %v2648
    %v2696 = vpop.f32.mrf.mxu0
    %v2697 = vadd.f32 0.0, %v2696
    %v2698 = vpop.f32.mrf.mxu0
    %v2699 = vpop.f32.mrf.mxu0
    %v2700 = vadd.f32 0.0, %v2699
    %v2701 = vpop.f32.mrf.mxu0
    %2702 = vmatprep.mubr.bf16.mxu0 0
    %2703 = vmatmul.mubr.bf16.gmra.mxu0 %v2651
    %v2704 = vpop.f32.mrf.mxu0
    %v2705 = vadd.f32 0.0, %v2704
    %v2706 = vpop.f32.mrf.mxu0
    %v2707 = vpop.f32.mrf.mxu0
    %v2708 = vadd.f32 0.0, %v2707
    %v2709 = vpop.f32.mrf.mxu0
    %2710 = vmatprep.mubr.bf16.mxu0 0
    %2711 = vmatmul.mubr.bf16.gmra.mxu0 %v2654
    %v2712 = vpop.f32.mrf.mxu0
    %v2713 = vadd.f32 0.0, %v2712
    %v2714 = vpop.f32.mrf.mxu0
    %v2715 = vpop.f32.mrf.mxu0
    %v2716 = vadd.f32 0.0, %v2715
    %v2717 = vpop.f32.mrf.mxu0
    %2718 = vdwg.mxu0
    %v2719 = vadd.f32 %v2126, %v2697
    %v2720 = vadd.f32 %v2127, %v2700
    %v2721 = vadd.f32 %v2128, %v2705
    %v2722 = vadd.f32 %v2129, %v2708
    %v2723 = vadd.f32 %v2130, %v2713
    %v2724 = vadd.f32 %v2131, %v2716
    %v2725 = vld [vmem:[%s4 + $0x1d] sm:$0x1]
    %v2726 = vlaneseq
    %v2727 = vshrl.u32 %v2726, 7
    %v2728 = vsub.s32 0, %v2727
    %v2729 = vrot.slane %v2725, %v2728
    %v2730 = vadd.f32 %v2719, %v2729
    %v2731 = vadd.f32 %v2720, %v2729
    %v2732 = vadd.f32 %v2721, %v2729
    %v2733 = vadd.f32 %v2722, %v2729
    %v2734 = vadd.f32 %v2723, %v2729
    %v2735 = vadd.f32 %v2724, %v2729
    %v2736 = vadd.f32 %v241, %v2730
    %v2737 = vadd.f32 %v242, %v2731
    %v2738 = vadd.f32 %v243, %v2732
    %v2739 = vadd.f32 %v244, %v2733
    %v2740 = vadd.f32 %v245, %v2734
    %v2741 = vadd.f32 %v246, %v2735
    %v2742 = vld [vmem:[%s4 + $0x19] sm:$0x1]
    %v2743 = vld [vmem:[%s4 + $0x1b] sm:$0x1]
    %v2744 = vsel %vm122, %v2736, 0.0
    %2745 = vadd.xlane.f32.xlu0 %v2744
    %v2746 = vpop.xlane.xlu0 %2745
    %v2747 = vsel %vm122, %v2737, 0.0
    %2748 = vadd.xlane.f32.xlu0 %v2747
    %v2749 = vpop.xlane.xlu0 %2748
    %v2750 = vsel %vm122, %v2738, 0.0
    %2751 = vadd.xlane.f32.xlu0 %v2750
    %v2752 = vpop.xlane.xlu0 %2751
    %v2753 = vsel %vm122, %v2739, 0.0
    %2754 = vadd.xlane.f32.xlu0 %v2753
    %v2755 = vpop.xlane.xlu0 %2754
    %v2756 = vsel %vm122, %v2740, 0.0
    %2757 = vadd.xlane.f32.xlu0 %v2756
    %v2758 = vpop.xlane.xlu0 %2757
    %v2759 = vsel %vm122, %v2741, 0.0
    %2760 = vadd.xlane.f32.xlu0 %v2759
    %v2761 = vpop.xlane.xlu0 %2760
    %v2762 = vmul.f32 %v2746, %v166
    %v2763 = vmul.f32 %v2749, %v166
    %v2764 = vmul.f32 %v2752, %v166
    %v2765 = vmul.f32 %v2755, %v166
    %v2766 = vmul.f32 %v2758, %v166
    %v2767 = vmul.f32 %v2761, %v166
    %v2768 = vsub.f32 %v2736, %v2762
    %v2769 = vsub.f32 %v2737, %v2763
    %v2770 = vsub.f32 %v2738, %v2764
    %v2771 = vsub.f32 %v2739, %v2765
    %v2772 = vsub.f32 %v2740, %v2766
    %v2773 = vsub.f32 %v2741, %v2767
    %v2774 = vmul.f32 %v2768, %v2768
    %v2775 = vmul.f32 %v2769, %v2769
    %v2776 = vmul.f32 %v2770, %v2770
    %v2777 = vmul.f32 %v2771, %v2771
    %v2778 = vmul.f32 %v2772, %v2772
    %v2779 = vmul.f32 %v2773, %v2773
    %v2780 = vsel %vm122, %v2774, 0.0
    %2781 = vadd.xlane.f32.xlu0 %v2780
    %v2782 = vpop.xlane.xlu0 %2781
    %v2783 = vsel %vm122, %v2775, 0.0
    %2784 = vadd.xlane.f32.xlu0 %v2783
    %v2785 = vpop.xlane.xlu0 %2784
    %v2786 = vsel %vm122, %v2776, 0.0
    %2787 = vadd.xlane.f32.xlu0 %v2786
    %v2788 = vpop.xlane.xlu0 %2787
    %v2789 = vsel %vm122, %v2777, 0.0
    %2790 = vadd.xlane.f32.xlu0 %v2789
    %v2791 = vpop.xlane.xlu0 %2790
    %v2792 = vsel %vm122, %v2778, 0.0
    %2793 = vadd.xlane.f32.xlu0 %v2792
    %v2794 = vpop.xlane.xlu0 %2793
    %v2795 = vsel %vm122, %v2779, 0.0
    %2796 = vadd.xlane.f32.xlu0 %v2795
    %v2797 = vpop.xlane.xlu0 %2796
    %v2798 = vmul.f32 %v2782, %v166
    %v2799 = vmul.f32 %v2785, %v166
    %v2800 = vmul.f32 %v2788, %v166
    %v2801 = vmul.f32 %v2791, %v166
    %v2802 = vmul.f32 %v2794, %v166
    %v2803 = vmul.f32 %v2797, %v166
    %v2804 = vadd.f32 %v2798, 1e-05
    %v2805 = vadd.f32 %v2799, 1e-05
    %v2806 = vadd.f32 %v2800, 1e-05
    %v2807 = vadd.f32 %v2801, 1e-05
    %v2808 = vadd.f32 %v2802, 1e-05
    %v2809 = vadd.f32 %v2803, 1e-05
    %v2810 = vrsqrt.pop %v2804
    %v2811 = vrsqrt.pop %v2805
    %v2812 = vrsqrt.pop %v2806
    %v2813 = vrsqrt.pop %v2807
    %v2814 = vrsqrt.pop %v2808
    %v2815 = vrsqrt.pop %v2809
    %v2816 = vmul.f32 %v2768, %v2810
    %v2817 = vmul.f32 %v2769, %v2811
    %v2818 = vmul.f32 %v2770, %v2812
    %v2819 = vmul.f32 %v2771, %v2813
    %v2820 = vmul.f32 %v2772, %v2814
    %v2821 = vmul.f32 %v2773, %v2815
    %v2822 = vlaneseq
    %v2823 = vshrl.u32 %v2822, 7
    %v2824 = vsub.s32 0, %v2823
    %v2825 = vrot.slane %v2742, %v2824
    %v2826 = vmul.f32 %v2816, %v2825
    %v2827 = vmul.f32 %v2817, %v2825
    %v2828 = vmul.f32 %v2818, %v2825
    %v2829 = vmul.f32 %v2819, %v2825
    %v2830 = vmul.f32 %v2820, %v2825
    %v2831 = vmul.f32 %v2821, %v2825
    %v2832 = vlaneseq
    %v2833 = vshrl.u32 %v2832, 7
    %v2834 = vsub.s32 0, %v2833
    %v2835 = vrot.slane %v2743, %v2834
    %v2836 = vadd.f32 %v2826, %v2835
    %v2837 = vadd.f32 %v2827, %v2835
    %v2838 = vadd.f32 %v2828, %v2835
    %v2839 = vadd.f32 %v2829, %v2835
    %v2840 = vadd.f32 %v2830, %v2835
    %v2841 = vadd.f32 %v2831, %v2835
    %v2842 = vld [vmem:[%s2] sm:$0xf]
    %v2843 = vld [vmem:[%s2 + $0x4] sm:$0xf]
    %v2844 = vld [vmem:[%s2 + $0x8] sm:$0xf]
    %v2845 = vld [vmem:[%s2 + $0xc] sm:$0xf]
    %v2846 = vld [vmem:[%s2 + $0x10] sm:$0x1]
    %s2847 = scalar_lea.vmem %s2, 20
    %v2848 = vld [vmem:[%s2847] sm:$0xf]
    %v2849 = vld [vmem:[%s2847 + $0x4] sm:$0xf]
    %v2850 = vld [vmem:[%s2847 + $0x8] sm:$0xf]
    %v2851 = vld [vmem:[%s2847 + $0xc] sm:$0xf]
    %v2852 = vpack.c.bf16 %v2837, %v2836
    %v2853 = vpack.c.bf16 %v2839, %v2838
    %v2854 = vpack.c.bf16 %v2841, %v2840
    %v2855 = vunpack.c.l.bf16 %v2846
    %v2856 = vlaneseq
    %v2857 = vshrl.u32 %v2856, 7
    %v2858 = vsub.s32 0, %v2857
    %v2859 = vrot.slane %v2855, %v2858
    %v2864 = vunpack.c.l.b16 %v2842
    %v2865 = vunpack.c.l.b16 %v2843
    %v2866 = vunpack.c.l.b16 %v2844
    %v2867 = vunpack.c.l.b16 %v2845
    %v2868 = vpack.c.b16 %v2865, %v2864
    %v2869 = vpack.c.b16 %v2867, %v2866
    %v2873 = vsel %vm122, %v2852, 0
    %v2876 = vsel %vm122, %v2853, 0
    %v2879 = vsel %vm122, %v2854, 0
    %2881 = vmatprep.subr.bf16.mxu0 0
    %2882 = vmatpush1.bf16.msra.mxu0 0
    %2883 = vmatprep.subr.bf16.mxu0 0
    %2884 = vmatpush1.bf16.msra.mxu0 0
    %2885 = vmatprep.subr.bf16.mxu0 0
    %2886 = vmatpush1.bf16.msra.mxu0 0
    %2887 = vmatprep.subr.bf16.mxu0 0
    %2888 = vmatpush1.bf16.msra.mxu0 0
    %2889 = vmatprep.subr.bf16.mxu0 0
    %2890 = vmatpush1.bf16.msra.mxu0 0
    %2891 = vmatprep.subr.bf16.mxu0 0
    %2892 = vmatpush1.bf16.msra.mxu0 0
    %2893 = vmatprep.subr.bf16.mxu0 0
    %2894 = vmatpush1.bf16.msra.mxu0 %v2869
    %2895 = vmatprep.subr.bf16.mxu0 0
    %2896 = vmatpush1.bf16.msra.mxu0 %v2868
    %2897 = vmatprep.subr.bf16.mxu0 0
    %2898 = vmatpush2.bf16.msra.mxu0 0
    %2899 = vmatprep.subr.bf16.mxu0 0
    %2900 = vmatpush2.bf16.msra.mxu0 0
    %2901 = vmatprep.subr.bf16.mxu0 0
    %2902 = vmatpush2.bf16.msra.mxu0 0
    %2903 = vmatprep.subr.bf16.mxu0 0
    %2904 = vmatpush2.bf16.msra.mxu0 0
    %2905 = vmatprep.subr.bf16.mxu0 0
    %2906 = vmatpush2.bf16.msra.mxu0 0
    %2907 = vmatprep.subr.bf16.mxu0 0
    %2908 = vmatpush2.bf16.msra.mxu0 0
    %2909 = vmatprep.subr.bf16.mxu0 0
    %2910 = vmatpush2.bf16.msra.mxu0 0
    %2911 = vmatprep.subr.bf16.mxu0 0
    %2912 = vmatpush2.bf16.msra.mxu0 0
    %2913 = vmatprep.mubr.bf16.mxu0 0
    %2914 = vmatmul.mubr.bf16.gmra.mxu0 %v2873
    %v2915 = vpop.f32.mrf.mxu0
    %v2916 = vadd.f32 %v2859, %v2915
    %v2917 = vpop.f32.mrf.mxu0
    %v2918 = vpop.f32.mrf.mxu0
    %v2919 = vadd.f32 %v2859, %v2918
    %v2920 = vpop.f32.mrf.mxu0
    %2921 = vmatprep.mubr.bf16.mxu0 0
    %2922 = vmatmul.mubr.bf16.gmra.mxu0 %v2876
    %v2923 = vpop.f32.mrf.mxu0
    %v2924 = vadd.f32 %v2859, %v2923
    %v2925 = vpop.f32.mrf.mxu0
    %v2926 = vpop.f32.mrf.mxu0
    %v2927 = vadd.f32 %v2859, %v2926
    %v2928 = vpop.f32.mrf.mxu0
    %2929 = vmatprep.mubr.bf16.mxu0 0
    %2930 = vmatmul.mubr.bf16.gmra.mxu0 %v2879
    %v2931 = vpop.f32.mrf.mxu0
    %v2932 = vadd.f32 %v2859, %v2931
    %v2933 = vpop.f32.mrf.mxu0
    %v2934 = vpop.f32.mrf.mxu0
    %v2935 = vadd.f32 %v2859, %v2934
    %v2936 = vpop.f32.mrf.mxu0
    %2937 = vdwg.mxu0
    %v2938 = vmul.f32 %v2916, 1.702
    %v2939 = vmul.f32 %v2919, 1.702
    %v2940 = vmul.f32 %v2924, 1.702
    %v2941 = vmul.f32 %v2927, 1.702
    %v2942 = vmul.f32 %v2932, 1.702
    %v2943 = vmul.f32 %v2935, 1.702
    %v2944 = vxor.u32 %v2938, 2147483648
    %v2945 = vxor.u32 %v2939, 2147483648
    %v2946 = vxor.u32 %v2940, 2147483648
    %v2947 = vxor.u32 %v2941, 2147483648
    %v2948 = vxor.u32 %v2942, 2147483648
    %v2949 = vxor.u32 %v2943, 2147483648
    %v2950 = vmul.f32 %v2944, 1.442695
    %v2951 = vpow.pop %v2950
    %v2952 = vmul.f32 %v2945, 1.442695
    %v2953 = vpow.pop %v2952
    %v2954 = vmul.f32 %v2946, 1.442695
    %v2955 = vpow.pop %v2954
    %v2956 = vmul.f32 %v2947, 1.442695
    %v2957 = vpow.pop %v2956
    %v2958 = vmul.f32 %v2948, 1.442695
    %v2959 = vpow.pop %v2958
    %v2960 = vmul.f32 %v2949, 1.442695
    %v2961 = vpow.pop %v2960
    %v2962 = vadd.f32 %v2951, 1.0
    %v2963 = vadd.f32 %v2953, 1.0
    %v2964 = vadd.f32 %v2955, 1.0
    %v2965 = vadd.f32 %v2957, 1.0
    %v2966 = vadd.f32 %v2959, 1.0
    %v2967 = vadd.f32 %v2961, 1.0
    %v2968 = vrcp.pop %v2962
    %v2969 = vmul.f32 1.0, %v2968
    %v2970 = vrcp.pop %v2963
    %v2971 = vmul.f32 1.0, %v2970
    %v2972 = vrcp.pop %v2964
    %v2973 = vmul.f32 1.0, %v2972
    %v2974 = vrcp.pop %v2965
    %v2975 = vmul.f32 1.0, %v2974
    %v2976 = vrcp.pop %v2966
    %v2977 = vmul.f32 1.0, %v2976
    %v2978 = vrcp.pop %v2967
    %v2979 = vmul.f32 1.0, %v2978
    %v2980 = vmul.f32 %v2916, %v2969
    %v2981 = vmul.f32 %v2919, %v2971
    %v2982 = vmul.f32 %v2924, %v2973
    %v2983 = vmul.f32 %v2927, %v2975
    %v2984 = vmul.f32 %v2932, %v2977
    %v2985 = vmul.f32 %v2935, %v2979
    %v2986 = vpack.c.bf16 %v2981, %v2980
    %v2987 = vpack.c.bf16 %v2983, %v2982
    %v2988 = vpack.c.bf16 %v2985, %v2984
    %v2989 = vld [vmem:[%s4 + $0x1f] sm:$0x1]
    %v2990 = vlaneseq
    %v2991 = vshrl.u32 %v2990, 7
    %v2992 = vsub.s32 0, %v2991
    %v2993 = vrot.slane %v2989, %v2992
    %v2998 = vunpack.c.l.b16 %v2848
    %v2999 = vunpack.c.l.b16 %v2849
    %v3000 = vunpack.c.l.b16 %v2850
    %v3001 = vunpack.c.l.b16 %v2851
    %v3002 = vpack.c.b16 %v2999, %v2998
    %v3003 = vpack.c.b16 %v3001, %v3000
    %3006 = vmatprep.subr.bf16.mxu0 0
    %3007 = vmatpush1.bf16.xpose.msra.mxu0 0
    %3008 = vmatprep.subr.bf16.mxu0 0
    %3009 = vmatpush1.bf16.xpose.msra.mxu0 0
    %3010 = vmatprep.subr.bf16.mxu0 0
    %3011 = vmatpush1.bf16.xpose.msra.mxu0 0
    %3012 = vmatprep.subr.bf16.mxu0 0
    %3013 = vmatpush1.bf16.xpose.msra.mxu0 0
    %3014 = vmatprep.subr.bf16.mxu0 0
    %3015 = vmatpush1.bf16.xpose.msra.mxu0 0
    %3016 = vmatprep.subr.bf16.mxu0 0
    %3017 = vmatpush1.bf16.xpose.msra.mxu0 0
    %3018 = vmatprep.subr.bf16.mxu0 0
    %3019 = vmatpush1.bf16.xpose.msra.mxu0 %v3003
    %3020 = vmatprep.subr.bf16.mxu0 0
    %3021 = vmatpush1.bf16.xpose.msra.mxu0 %v3002
    %3022 = vmatprep.subr.bf16.mxu0 0
    %3023 = vmatpush2.bf16.xpose.msra.mxu0 0
    %3024 = vmatprep.subr.bf16.mxu0 0
    %3025 = vmatpush2.bf16.xpose.msra.mxu0 0
    %3026 = vmatprep.subr.bf16.mxu0 0
    %3027 = vmatpush2.bf16.xpose.msra.mxu0 0
    %3028 = vmatprep.subr.bf16.mxu0 0
    %3029 = vmatpush2.bf16.xpose.msra.mxu0 0
    %3030 = vmatprep.subr.bf16.mxu0 0
    %3031 = vmatpush2.bf16.xpose.msra.mxu0 0
    %3032 = vmatprep.subr.bf16.mxu0 0
    %3033 = vmatpush2.bf16.xpose.msra.mxu0 0
    %3034 = vmatprep.subr.bf16.mxu0 0
    %3035 = vmatpush2.bf16.xpose.msra.mxu0 0
    %3036 = vmatprep.subr.bf16.mxu0 0
    %3037 = vmatpush2.bf16.xpose.msra.mxu0 0
    %3038 = vmatprep.mubr.bf16.mxu0 0
    %3039 = vmatmul.mubr.bf16.gmra.mxu0 %v2986
    %v3040 = vpop.f32.mrf.mxu0
    %v3041 = vadd.f32 %v2993, %v3040
    %v3042 = vpop.f32.mrf.mxu0
    %v3043 = vpop.f32.mrf.mxu0
    %v3044 = vadd.f32 %v2993, %v3043
    %v3045 = vpop.f32.mrf.mxu0
    %3046 = vmatprep.mubr.bf16.mxu0 0
    %3047 = vmatmul.mubr.bf16.gmra.mxu0 %v2987
    %v3048 = vpop.f32.mrf.mxu0
    %v3049 = vadd.f32 %v2993, %v3048
    %v3050 = vpop.f32.mrf.mxu0
    %v3051 = vpop.f32.mrf.mxu0
    %v3052 = vadd.f32 %v2993, %v3051
    %v3053 = vpop.f32.mrf.mxu0
    %3054 = vmatprep.mubr.bf16.mxu0 0
    %3055 = vmatmul.mubr.bf16.gmra.mxu0 %v2988
    %v3056 = vpop.f32.mrf.mxu0
    %v3057 = vadd.f32 %v2993, %v3056
    %v3058 = vpop.f32.mrf.mxu0
    %v3059 = vpop.f32.mrf.mxu0
    %v3060 = vadd.f32 %v2993, %v3059
    %v3061 = vpop.f32.mrf.mxu0
    %3062 = vdwg.mxu0
    %v3063 = vadd.f32 %v2736, %v3041
    %v3064 = vadd.f32 %v2737, %v3044
    %v3065 = vadd.f32 %v2738, %v3049
    %v3066 = vadd.f32 %v2739, %v3052
    %v3067 = vadd.f32 %v2740, %v3057
    %v3068 = vadd.f32 %v2741, %v3060
    %v3069 = vld [vmem:[%s4 + $0x16] sm:$0x1]
    %v3070 = vld [vmem:[%s4 + $0x18] sm:$0x1]
    %v3071 = vsel %vm122, %v3063, 0.0
    %3072 = vadd.xlane.f32.xlu0 %v3071
    %v3073 = vpop.xlane.xlu0 %3072
    %v3074 = vsel %vm122, %v3064, 0.0
    %3075 = vadd.xlane.f32.xlu0 %v3074
    %v3076 = vpop.xlane.xlu0 %3075
    %v3077 = vsel %vm122, %v3065, 0.0
    %3078 = vadd.xlane.f32.xlu0 %v3077
    %v3079 = vpop.xlane.xlu0 %3078
    %v3080 = vsel %vm122, %v3066, 0.0
    %3081 = vadd.xlane.f32.xlu0 %v3080
    %v3082 = vpop.xlane.xlu0 %3081
    %v3083 = vsel %vm122, %v3067, 0.0
    %3084 = vadd.xlane.f32.xlu0 %v3083
    %v3085 = vpop.xlane.xlu0 %3084
    %v3086 = vsel %vm122, %v3068, 0.0
    %3087 = vadd.xlane.f32.xlu0 %v3086
    %v3088 = vpop.xlane.xlu0 %3087
    %v3089 = vmul.f32 %v3073, %v166
    %v3090 = vmul.f32 %v3076, %v166
    %v3091 = vmul.f32 %v3079, %v166
    %v3092 = vmul.f32 %v3082, %v166
    %v3093 = vmul.f32 %v3085, %v166
    %v3094 = vmul.f32 %v3088, %v166
    %v3095 = vsub.f32 %v3063, %v3089
    %v3096 = vsub.f32 %v3064, %v3090
    %v3097 = vsub.f32 %v3065, %v3091
    %v3098 = vsub.f32 %v3066, %v3092
    %v3099 = vsub.f32 %v3067, %v3093
    %v3100 = vsub.f32 %v3068, %v3094
    %v3101 = vmul.f32 %v3095, %v3095
    %v3102 = vmul.f32 %v3096, %v3096
    %v3103 = vmul.f32 %v3097, %v3097
    %v3104 = vmul.f32 %v3098, %v3098
    %v3105 = vmul.f32 %v3099, %v3099
    %v3106 = vmul.f32 %v3100, %v3100
    %v3107 = vsel %vm122, %v3101, 0.0
    %3108 = vadd.xlane.f32.xlu0 %v3107
    %v3109 = vpop.xlane.xlu0 %3108
    %v3110 = vsel %vm122, %v3102, 0.0
    %3111 = vadd.xlane.f32.xlu0 %v3110
    %v3112 = vpop.xlane.xlu0 %3111
    %v3113 = vsel %vm122, %v3103, 0.0
    %3114 = vadd.xlane.f32.xlu0 %v3113
    %v3115 = vpop.xlane.xlu0 %3114
    %v3116 = vsel %vm122, %v3104, 0.0
    %3117 = vadd.xlane.f32.xlu0 %v3116
    %v3118 = vpop.xlane.xlu0 %3117
    %v3119 = vsel %vm122, %v3105, 0.0
    %3120 = vadd.xlane.f32.xlu0 %v3119
    %v3121 = vpop.xlane.xlu0 %3120
    %v3122 = vsel %vm122, %v3106, 0.0
    %3123 = vadd.xlane.f32.xlu0 %v3122
    %v3124 = vpop.xlane.xlu0 %3123
    %v3125 = vmul.f32 %v3109, %v166
    %v3126 = vmul.f32 %v3112, %v166
    %v3127 = vmul.f32 %v3115, %v166
    %v3128 = vmul.f32 %v3118, %v166
    %v3129 = vmul.f32 %v3121, %v166
    %v3130 = vmul.f32 %v3124, %v166
    %v3131 = vadd.f32 %v3125, 1e-05
    %v3132 = vadd.f32 %v3126, 1e-05
    %v3133 = vadd.f32 %v3127, 1e-05
    %v3134 = vadd.f32 %v3128, 1e-05
    %v3135 = vadd.f32 %v3129, 1e-05
    %v3136 = vadd.f32 %v3130, 1e-05
    %v3137 = vrsqrt.pop %v3131
    %v3138 = vrsqrt.pop %v3132
    %v3139 = vrsqrt.pop %v3133
    %v3140 = vrsqrt.pop %v3134
    %v3141 = vrsqrt.pop %v3135
    %v3142 = vrsqrt.pop %v3136
    %v3143 = vmul.f32 %v3095, %v3137
    %v3144 = vmul.f32 %v3096, %v3138
    %v3145 = vmul.f32 %v3097, %v3139
    %v3146 = vmul.f32 %v3098, %v3140
    %v3147 = vmul.f32 %v3099, %v3141
    %v3148 = vmul.f32 %v3100, %v3142
    %v3149 = vlaneseq
    %v3150 = vshrl.u32 %v3149, 7
    %v3151 = vsub.s32 0, %v3150
    %v3152 = vrot.slane %v3069, %v3151
    %v3153 = vmul.f32 %v3143, %v3152
    %v3154 = vmul.f32 %v3144, %v3152
    %v3155 = vmul.f32 %v3145, %v3152
    %v3156 = vmul.f32 %v3146, %v3152
    %v3157 = vmul.f32 %v3147, %v3152
    %v3158 = vmul.f32 %v3148, %v3152
    %v3159 = vlaneseq
    %v3160 = vshrl.u32 %v3159, 7
    %v3161 = vsub.s32 0, %v3160
    %v3162 = vrot.slane %v3070, %v3161
    %v3163 = vadd.f32 %v3153, %v3162
    %v3164 = vadd.f32 %v3154, %v3162
    %v3165 = vadd.f32 %v3155, %v3162
    %v3166 = vadd.f32 %v3156, %v3162
    %v3167 = vadd.f32 %v3157, %v3162
    %v3168 = vadd.f32 %v3158, %v3162
    %v3169 = vpack.c.bf16 %v3164, %v3163
    %v3170 = vpack.c.bf16 %v3166, %v3165
    %v3171 = vpack.c.bf16 %v3168, %v3167
    %s3172 = scalar_lea.vmem %s1, 320
    %v3173 = vld [vmem:[%s3172] sm:$0xf]
    %v3174 = vld [vmem:[%s3172 + $0x4] sm:$0xf]
    %v3175 = vld [vmem:[%s3172 + $0x8] sm:$0xf]
    %v3176 = vld [vmem:[%s3172 + $0xc] sm:$0xf]
    %v3177 = vld [vmem:[%s3172 + $0x10] sm:$0x1]
    %s3178 = scalar_lea.vmem %s1, 340
    %v3179 = vld [vmem:[%s3178] sm:$0xf]
    %v3180 = vld [vmem:[%s3178 + $0x4] sm:$0xf]
    %v3181 = vld [vmem:[%s3178 + $0x8] sm:$0xf]
    %v3182 = vld [vmem:[%s3178 + $0xc] sm:$0xf]
    %s3183 = scalar_lea.vmem %s1, 360
    %v3184 = vld [vmem:[%s3183] sm:$0xf]
    %v3185 = vld [vmem:[%s3183 + $0x4] sm:$0xf]
    %v3186 = vld [vmem:[%s3183 + $0x8] sm:$0xf]
    %v3187 = vld [vmem:[%s3183 + $0xc] sm:$0xf]
    %s3188 = scalar_lea.vmem %s1, 380
    %v3189 = vld [vmem:[%s3188] sm:$0xf]
    %v3190 = vld [vmem:[%s3188 + $0x4] sm:$0xf]
    %v3191 = vld [vmem:[%s3188 + $0x8] sm:$0xf]
    %v3192 = vld [vmem:[%s3188 + $0xc] sm:$0xf]
    %v3193 = vunpack.c.l.bf16 %v3177
    %v3194 = vlaneseq
    %v3195 = vshrl.u32 %v3194, 7
    %v3196 = vsub.s32 0, %v3195
    %v3197 = vrot.slane %v3193, %v3196
    %v3202 = vunpack.c.l.b16 %v3173
    %v3203 = vunpack.c.l.b16 %v3174
    %v3204 = vunpack.c.l.b16 %v3175
    %v3205 = vunpack.c.l.b16 %v3176
    %v3206 = vpack.c.b16 %v3203, %v3202
    %v3207 = vpack.c.b16 %v3205, %v3204
    %v3211 = vsel %vm122, %v3169, 0
    %v3214 = vsel %vm122, %v3170, 0
    %v3217 = vsel %vm122, %v3171, 0
    %3219 = vmatprep.subr.bf16.mxu0 0
    %3220 = vmatpush1.bf16.msra.mxu0 0
    %3221 = vmatprep.subr.bf16.mxu0 0
    %3222 = vmatpush1.bf16.msra.mxu0 0
    %3223 = vmatprep.subr.bf16.mxu0 0
    %3224 = vmatpush1.bf16.msra.mxu0 0
    %3225 = vmatprep.subr.bf16.mxu0 0
    %3226 = vmatpush1.bf16.msra.mxu0 0
    %3227 = vmatprep.subr.bf16.mxu0 0
    %3228 = vmatpush1.bf16.msra.mxu0 0
    %3229 = vmatprep.subr.bf16.mxu0 0
    %3230 = vmatpush1.bf16.msra.mxu0 0
    %3231 = vmatprep.subr.bf16.mxu0 0
    %3232 = vmatpush1.bf16.msra.mxu0 %v3207
    %3233 = vmatprep.subr.bf16.mxu0 0
    %3234 = vmatpush1.bf16.msra.mxu0 %v3206
    %3235 = vmatprep.subr.bf16.mxu0 0
    %3236 = vmatpush2.bf16.msra.mxu0 0
    %3237 = vmatprep.subr.bf16.mxu0 0
    %3238 = vmatpush2.bf16.msra.mxu0 0
    %3239 = vmatprep.subr.bf16.mxu0 0
    %3240 = vmatpush2.bf16.msra.mxu0 0
    %3241 = vmatprep.subr.bf16.mxu0 0
    %3242 = vmatpush2.bf16.msra.mxu0 0
    %3243 = vmatprep.subr.bf16.mxu0 0
    %3244 = vmatpush2.bf16.msra.mxu0 0
    %3245 = vmatprep.subr.bf16.mxu0 0
    %3246 = vmatpush2.bf16.msra.mxu0 0
    %3247 = vmatprep.subr.bf16.mxu0 0
    %3248 = vmatpush2.bf16.msra.mxu0 0
    %3249 = vmatprep.subr.bf16.mxu0 0
    %3250 = vmatpush2.bf16.msra.mxu0 0
    %3251 = vmatprep.mubr.bf16.mxu0 0
    %3252 = vmatmul.mubr.bf16.gmra.mxu0 %v3211
    %v3253 = vpop.f32.mrf.mxu0
    %v3254 = vadd.f32 %v3197, %v3253
    %v3255 = vpop.f32.mrf.mxu0
    %v3256 = vpop.f32.mrf.mxu0
    %v3257 = vadd.f32 %v3197, %v3256
    %v3258 = vpop.f32.mrf.mxu0
    %3259 = vmatprep.mubr.bf16.mxu0 0
    %3260 = vmatmul.mubr.bf16.gmra.mxu0 %v3214
    %v3261 = vpop.f32.mrf.mxu0
    %v3262 = vadd.f32 %v3197, %v3261
    %v3263 = vpop.f32.mrf.mxu0
    %v3264 = vpop.f32.mrf.mxu0
    %v3265 = vadd.f32 %v3197, %v3264
    %v3266 = vpop.f32.mrf.mxu0
    %3267 = vmatprep.mubr.bf16.mxu0 0
    %3268 = vmatmul.mubr.bf16.gmra.mxu0 %v3217
    %v3269 = vpop.f32.mrf.mxu0
    %v3270 = vadd.f32 %v3197, %v3269
    %v3271 = vpop.f32.mrf.mxu0
    %v3272 = vpop.f32.mrf.mxu0
    %v3273 = vadd.f32 %v3197, %v3272
    %v3274 = vpop.f32.mrf.mxu0
    %3275 = vdwg.mxu0
    %v3280 = vunpack.c.l.b16 %v3179
    %v3281 = vunpack.c.l.b16 %v3180
    %v3282 = vunpack.c.l.b16 %v3181
    %v3283 = vunpack.c.l.b16 %v3182
    %v3284 = vpack.c.b16 %v3281, %v3280
    %v3285 = vpack.c.b16 %v3283, %v3282
    %3288 = vmatprep.subr.bf16.mxu0 0
    %3289 = vmatpush1.bf16.msra.mxu0 0
    %3290 = vmatprep.subr.bf16.mxu0 0
    %3291 = vmatpush1.bf16.msra.mxu0 0
    %3292 = vmatprep.subr.bf16.mxu0 0
    %3293 = vmatpush1.bf16.msra.mxu0 0
    %3294 = vmatprep.subr.bf16.mxu0 0
    %3295 = vmatpush1.bf16.msra.mxu0 0
    %3296 = vmatprep.subr.bf16.mxu0 0
    %3297 = vmatpush1.bf16.msra.mxu0 0
    %3298 = vmatprep.subr.bf16.mxu0 0
    %3299 = vmatpush1.bf16.msra.mxu0 0
    %3300 = vmatprep.subr.bf16.mxu0 0
    %3301 = vmatpush1.bf16.msra.mxu0 %v3285
    %3302 = vmatprep.subr.bf16.mxu0 0
    %3303 = vmatpush1.bf16.msra.mxu0 %v3284
    %3304 = vmatprep.subr.bf16.mxu0 0
    %3305 = vmatpush2.bf16.msra.mxu0 0
    %3306 = vmatprep.subr.bf16.mxu0 0
    %3307 = vmatpush2.bf16.msra.mxu0 0
    %3308 = vmatprep.subr.bf16.mxu0 0
    %3309 = vmatpush2.bf16.msra.mxu0 0
    %3310 = vmatprep.subr.bf16.mxu0 0
    %3311 = vmatpush2.bf16.msra.mxu0 0
    %3312 = vmatprep.subr.bf16.mxu0 0
    %3313 = vmatpush2.bf16.msra.mxu0 0
    %3314 = vmatprep.subr.bf16.mxu0 0
    %3315 = vmatpush2.bf16.msra.mxu0 0
    %3316 = vmatprep.subr.bf16.mxu0 0
    %3317 = vmatpush2.bf16.msra.mxu0 0
    %3318 = vmatprep.subr.bf16.mxu0 0
    %3319 = vmatpush2.bf16.msra.mxu0 0
    %3320 = vmatprep.mubr.bf16.mxu0 0
    %3321 = vmatmul.mubr.bf16.gmra.mxu0 %v3211
    %v3322 = vpop.f32.mrf.mxu0
    %v3323 = vadd.f32 0.0, %v3322
    %v3324 = vpop.f32.mrf.mxu0
    %v3325 = vpop.f32.mrf.mxu0
    %v3326 = vadd.f32 0.0, %v3325
    %v3327 = vpop.f32.mrf.mxu0
    %3328 = vmatprep.mubr.bf16.mxu0 0
    %3329 = vmatmul.mubr.bf16.gmra.mxu0 %v3214
    %v3330 = vpop.f32.mrf.mxu0
    %v3331 = vadd.f32 0.0, %v3330
    %v3332 = vpop.f32.mrf.mxu0
    %v3333 = vpop.f32.mrf.mxu0
    %v3334 = vadd.f32 0.0, %v3333
    %v3335 = vpop.f32.mrf.mxu0
    %3336 = vmatprep.mubr.bf16.mxu0 0
    %3337 = vmatmul.mubr.bf16.gmra.mxu0 %v3217
    %v3338 = vpop.f32.mrf.mxu0
    %v3339 = vadd.f32 0.0, %v3338
    %v3340 = vpop.f32.mrf.mxu0
    %v3341 = vpop.f32.mrf.mxu0
    %v3342 = vadd.f32 0.0, %v3341
    %v3343 = vpop.f32.mrf.mxu0
    %3344 = vdwg.mxu0
    %v3349 = vunpack.c.l.b16 %v3184
    %v3350 = vunpack.c.l.b16 %v3185
    %v3351 = vunpack.c.l.b16 %v3186
    %v3352 = vunpack.c.l.b16 %v3187
    %v3353 = vpack.c.b16 %v3350, %v3349
    %v3354 = vpack.c.b16 %v3352, %v3351
    %3357 = vmatprep.subr.bf16.mxu0 0
    %3358 = vmatpush1.bf16.msra.mxu0 0
    %3359 = vmatprep.subr.bf16.mxu0 0
    %3360 = vmatpush1.bf16.msra.mxu0 0
    %3361 = vmatprep.subr.bf16.mxu0 0
    %3362 = vmatpush1.bf16.msra.mxu0 0
    %3363 = vmatprep.subr.bf16.mxu0 0
    %3364 = vmatpush1.bf16.msra.mxu0 0
    %3365 = vmatprep.subr.bf16.mxu0 0
    %3366 = vmatpush1.bf16.msra.mxu0 0
    %3367 = vmatprep.subr.bf16.mxu0 0
    %3368 = vmatpush1.bf16.msra.mxu0 0
    %3369 = vmatprep.subr.bf16.mxu0 0
    %3370 = vmatpush1.bf16.msra.mxu0 %v3354
    %3371 = vmatprep.subr.bf16.mxu0 0
    %3372 = vmatpush1.bf16.msra.mxu0 %v3353
    %3373 = vmatprep.subr.bf16.mxu0 0
    %3374 = vmatpush2.bf16.msra.mxu0 0
    %3375 = vmatprep.subr.bf16.mxu0 0
    %3376 = vmatpush2.bf16.msra.mxu0 0
    %3377 = vmatprep.subr.bf16.mxu0 0
    %3378 = vmatpush2.bf16.msra.mxu0 0
    %3379 = vmatprep.subr.bf16.mxu0 0
    %3380 = vmatpush2.bf16.msra.mxu0 0
    %3381 = vmatprep.subr.bf16.mxu0 0
    %3382 = vmatpush2.bf16.msra.mxu0 0
    %3383 = vmatprep.subr.bf16.mxu0 0
    %3384 = vmatpush2.bf16.msra.mxu0 0
    %3385 = vmatprep.subr.bf16.mxu0 0
    %3386 = vmatpush2.bf16.msra.mxu0 0
    %3387 = vmatprep.subr.bf16.mxu0 0
    %3388 = vmatpush2.bf16.msra.mxu0 0
    %3389 = vmatprep.mubr.bf16.mxu0 0
    %3390 = vmatmul.mubr.bf16.gmra.mxu0 %v3211
    %v3391 = vpop.f32.mrf.mxu0
    %v3392 = vadd.f32 0.0, %v3391
    %v3393 = vpop.f32.mrf.mxu0
    %v3394 = vpop.f32.mrf.mxu0
    %v3395 = vadd.f32 0.0, %v3394
    %v3396 = vpop.f32.mrf.mxu0
    %3397 = vmatprep.mubr.bf16.mxu0 0
    %3398 = vmatmul.mubr.bf16.gmra.mxu0 %v3214
    %v3399 = vpop.f32.mrf.mxu0
    %v3400 = vadd.f32 0.0, %v3399
    %v3401 = vpop.f32.mrf.mxu0
    %v3402 = vpop.f32.mrf.mxu0
    %v3403 = vadd.f32 0.0, %v3402
    %v3404 = vpop.f32.mrf.mxu0
    %3405 = vmatprep.mubr.bf16.mxu0 0
    %3406 = vmatmul.mubr.bf16.gmra.mxu0 %v3217
    %v3407 = vpop.f32.mrf.mxu0
    %v3408 = vadd.f32 0.0, %v3407
    %v3409 = vpop.f32.mrf.mxu0
    %v3410 = vpop.f32.mrf.mxu0
    %v3411 = vadd.f32 0.0, %v3410
    %v3412 = vpop.f32.mrf.mxu0
    %3413 = vdwg.mxu0
    %v3415 = vsel %vm597, %v3254, 0
    %v3418 = vsel %vm597, %v3257, 0
    %v3421 = vsel %vm597, %v3262, 0
    %v3424 = vsel %vm597, %v3265, 0
    %v3427 = vsel %vm597, %v3270, 0
    %v3430 = vsel %vm597, %v3273, 0
    %v3433 = vsel %vm597, %v3323, 0
    %v3436 = vsel %vm597, %v3326, 0
    %v3439 = vsel %vm597, %v3331, 0
    %v3442 = vsel %vm597, %v3334, 0
    %v3445 = vsel %vm597, %v3339, 0
    %v3448 = vsel %vm597, %v3342, 0
    %3450 = vmatprep.subr.mxu0 0.0
    %3451 = vmatpush1.xpose.msra.mxu0 0.0
    %3452 = vmatprep.subr.mxu0 0.0
    %3453 = vmatpush1.xpose.msra.mxu0 0.0
    %3454 = vmatprep.subr.mxu0 0.0
    %3455 = vmatpush1.xpose.msra.mxu0 0.0
    %3456 = vmatprep.subr.mxu0 0.0
    %3457 = vmatpush1.xpose.msra.mxu0 0.0
    %3458 = vmatprep.subr.mxu0 0.0
    %3459 = vmatpush1.xpose.msra.mxu0 0.0
    %3460 = vmatprep.subr.mxu0 0.0
    %3461 = vmatpush1.xpose.msra.mxu0 0.0
    %3462 = vmatprep.subr.mxu0 0.0
    %3463 = vmatpush1.xpose.msra.mxu0 0.0
    %3464 = vmatprep.subr.mxu0 0.0
    %3465 = vmatpush1.xpose.msra.mxu0 0.0
    %3466 = vmatprep.subr.mxu0 0.0
    %3467 = vmatpush1.xpose.msra.mxu0 0.0
    %3468 = vmatprep.subr.mxu0 0.0
    %3469 = vmatpush1.xpose.msra.mxu0 0.0
    %3470 = vmatprep.subr.mxu0 0.0
    %3471 = vmatpush1.xpose.msra.mxu0 %v3448
    %3472 = vmatprep.subr.mxu0 0.0
    %3473 = vmatpush1.xpose.msra.mxu0 %v3445
    %3474 = vmatprep.subr.mxu0 0.0
    %3475 = vmatpush1.xpose.msra.mxu0 %v3442
    %3476 = vmatprep.subr.mxu0 0.0
    %3477 = vmatpush1.xpose.msra.mxu0 %v3439
    %3478 = vmatprep.subr.mxu0 0.0
    %3479 = vmatpush1.xpose.msra.mxu0 %v3436
    %3480 = vmatprep.subr.mxu0 0.0
    %3481 = vmatpush1.xpose.msra.mxu0 %v3433
    %3482 = vmatprep.subr.mxu0 0.0
    %3483 = vmatpush2.xpose.msra.mxu0 0.0
    %3484 = vmatprep.subr.mxu0 0.0
    %3485 = vmatpush2.xpose.msra.mxu0 0.0
    %3486 = vmatprep.subr.mxu0 0.0
    %3487 = vmatpush2.xpose.msra.mxu0 0.0
    %3488 = vmatprep.subr.mxu0 0.0
    %3489 = vmatpush2.xpose.msra.mxu0 0.0
    %3490 = vmatprep.subr.mxu0 0.0
    %3491 = vmatpush2.xpose.msra.mxu0 0.0
    %3492 = vmatprep.subr.mxu0 0.0
    %3493 = vmatpush2.xpose.msra.mxu0 0.0
    %3494 = vmatprep.subr.mxu0 0.0
    %3495 = vmatpush2.xpose.msra.mxu0 0.0
    %3496 = vmatprep.subr.mxu0 0.0
    %3497 = vmatpush2.xpose.msra.mxu0 0.0
    %3498 = vmatprep.subr.mxu0 0.0
    %3499 = vmatpush2.xpose.msra.mxu0 0.0
    %3500 = vmatprep.subr.mxu0 0.0
    %3501 = vmatpush2.xpose.msra.mxu0 0.0
    %3502 = vmatprep.subr.mxu0 0.0
    %3503 = vmatpush2.xpose.msra.mxu0 0.0
    %3504 = vmatprep.subr.mxu0 0.0
    %3505 = vmatpush2.xpose.msra.mxu0 0.0
    %3506 = vmatprep.subr.mxu0 0.0
    %3507 = vmatpush2.xpose.msra.mxu0 0.0
    %3508 = vmatprep.subr.mxu0 0.0
    %3509 = vmatpush2.xpose.msra.mxu0 0.0
    %3510 = vmatprep.subr.mxu0 0.0
    %3511 = vmatpush2.xpose.msra.mxu0 0.0
    %3512 = vmatprep.subr.mxu0 0.0
    %3513 = vmatpush2.xpose.msra.mxu0 0.0
    %3514 = vmatprep.mubr.f32.mxu0 0.0
    %3515 = vmatmul.mubr.f32.gmra.mxu0 %v3415
    %v3516 = vpop.f32.mrf.mxu0
    %v3517 = vadd.f32 %v247, %v3516
    %v3518 = vpop.f32.mrf.mxu0
    %3519 = vmatprep.mubr.f32.mxu0 0.0
    %3520 = vmatmul.mubr.f32.gmra.mxu0 %v3418
    %v3521 = vpop.f32.mrf.mxu0
    %v3522 = vadd.f32 %v248, %v3521
    %v3523 = vpop.f32.mrf.mxu0
    %3524 = vmatprep.mubr.f32.mxu0 0.0
    %3525 = vmatmul.mubr.f32.gmra.mxu0 %v3421
    %v3526 = vpop.f32.mrf.mxu0
    %v3527 = vadd.f32 %v249, %v3526
    %v3528 = vpop.f32.mrf.mxu0
    %3529 = vmatprep.mubr.f32.mxu0 0.0
    %3530 = vmatmul.mubr.f32.gmra.mxu0 %v3424
    %v3531 = vpop.f32.mrf.mxu0
    %v3532 = vadd.f32 %v250, %v3531
    %v3533 = vpop.f32.mrf.mxu0
    %3534 = vmatprep.mubr.f32.mxu0 0.0
    %3535 = vmatmul.mubr.f32.gmra.mxu0 %v3427
    %v3536 = vpop.f32.mrf.mxu0
    %v3537 = vadd.f32 %v251, %v3536
    %v3538 = vpop.f32.mrf.mxu0
    %3539 = vmatprep.mubr.f32.mxu0 0.0
    %3540 = vmatmul.mubr.f32.gmra.mxu0 %v3430
    %v3541 = vpop.f32.mrf.mxu0
    %v3542 = vadd.f32 %v252, %v3541
    %v3543 = vpop.f32.mrf.mxu0
    %3544 = vdwg.mxu0
    %v3545 = vsel %vm63, %v3517, -inf
    %3546 = vmax.xlane.f32.xlu0 %v3545
    %v3547 = vpop.xlane.xlu0 %3546
    %v3548 = vsel %vm63, %v3522, -inf
    %3549 = vmax.xlane.f32.xlu0 %v3548
    %v3550 = vpop.xlane.xlu0 %3549
    %v3551 = vsel %vm63, %v3527, -inf
    %3552 = vmax.xlane.f32.xlu0 %v3551
    %v3553 = vpop.xlane.xlu0 %3552
    %v3554 = vsel %vm63, %v3532, -inf
    %3555 = vmax.xlane.f32.xlu0 %v3554
    %v3556 = vpop.xlane.xlu0 %3555
    %v3557 = vsel %vm63, %v3537, -inf
    %3558 = vmax.xlane.f32.xlu0 %v3557
    %v3559 = vpop.xlane.xlu0 %3558
    %v3560 = vsel %vm63, %v3542, -inf
    %3561 = vmax.xlane.f32.xlu0 %v3560
    %v3562 = vpop.xlane.xlu0 %3561
    %v3563 = vsub.f32 %v3517, %v3547
    %v3564 = vsub.f32 %v3522, %v3550
    %v3565 = vsub.f32 %v3527, %v3553
    %v3566 = vsub.f32 %v3532, %v3556
    %v3567 = vsub.f32 %v3537, %v3559
    %v3568 = vsub.f32 %v3542, %v3562
    %v3569 = vmul.f32 %v3563, 1.442695
    %v3570 = vpow.pop %v3569
    %v3571 = vmul.f32 %v3564, 1.442695
    %v3572 = vpow.pop %v3571
    %v3573 = vmul.f32 %v3565, 1.442695
    %v3574 = vpow.pop %v3573
    %v3575 = vmul.f32 %v3566, 1.442695
    %v3576 = vpow.pop %v3575
    %v3577 = vmul.f32 %v3567, 1.442695
    %v3578 = vpow.pop %v3577
    %v3579 = vmul.f32 %v3568, 1.442695
    %v3580 = vpow.pop %v3579
    %v3581 = vsel %vm63, %v3570, 0.0
    %3582 = vadd.xlane.f32.xlu0 %v3581
    %v3583 = vpop.xlane.xlu0 %3582
    %v3584 = vsel %vm63, %v3572, 0.0
    %3585 = vadd.xlane.f32.xlu0 %v3584
    %v3586 = vpop.xlane.xlu0 %3585
    %v3587 = vsel %vm63, %v3574, 0.0
    %3588 = vadd.xlane.f32.xlu0 %v3587
    %v3589 = vpop.xlane.xlu0 %3588
    %v3590 = vsel %vm63, %v3576, 0.0
    %3591 = vadd.xlane.f32.xlu0 %v3590
    %v3592 = vpop.xlane.xlu0 %3591
    %v3593 = vsel %vm63, %v3578, 0.0
    %3594 = vadd.xlane.f32.xlu0 %v3593
    %v3595 = vpop.xlane.xlu0 %3594
    %v3596 = vsel %vm63, %v3580, 0.0
    %3597 = vadd.xlane.f32.xlu0 %v3596
    %v3598 = vpop.xlane.xlu0 %3597
    %v3599 = vrcp.pop %v3583
    %v3600 = vrcp.pop %v3586
    %v3601 = vrcp.pop %v3589
    %v3602 = vrcp.pop %v3592
    %v3603 = vrcp.pop %v3595
    %v3604 = vrcp.pop %v3598
    %v3605 = vmul.f32 %v3570, %v3599
    %v3606 = vmul.f32 %v3572, %v3600
    %v3607 = vmul.f32 %v3574, %v3601
    %v3608 = vmul.f32 %v3576, %v3602
    %v3609 = vmul.f32 %v3578, %v3603
    %v3610 = vmul.f32 %v3580, %v3604
    %v3611 = vpack.c.bf16 %v3606, %v3605
    %v3612 = vpack.c.bf16 %v3608, %v3607
    %v3613 = vpack.c.bf16 %v3610, %v3609
    %v3614 = vpack.c.bf16 %v3395, %v3392
    %v3615 = vpack.c.bf16 %v3403, %v3400
    %v3616 = vpack.c.bf16 %v3411, %v3408
    %v3618 = vsel %vm63, %v3611, 0
    %v3621 = vsel %vm63, %v3612, 0
    %v3624 = vsel %vm63, %v3613, 0
    %3626 = vmatprep.subr.bf16.mxu0 0
    %3627 = vmatpush1.bf16.msra.mxu0 0
    %3628 = vmatprep.subr.bf16.mxu0 0
    %3629 = vmatpush1.bf16.msra.mxu0 0
    %3630 = vmatprep.subr.bf16.mxu0 0
    %3631 = vmatpush1.bf16.msra.mxu0 0
    %3632 = vmatprep.subr.bf16.mxu0 0
    %3633 = vmatpush1.bf16.msra.mxu0 0
    %3634 = vmatprep.subr.bf16.mxu0 0
    %3635 = vmatpush1.bf16.msra.mxu0 0
    %3636 = vmatprep.subr.bf16.mxu0 0
    %3637 = vmatpush1.bf16.msra.mxu0 %v3616
    %3638 = vmatprep.subr.bf16.mxu0 0
    %3639 = vmatpush1.bf16.msra.mxu0 %v3615
    %3640 = vmatprep.subr.bf16.mxu0 0
    %3641 = vmatpush1.bf16.msra.mxu0 %v3614
    %3642 = vmatprep.subr.bf16.mxu0 0
    %3643 = vmatpush2.bf16.msra.mxu0 0
    %3644 = vmatprep.subr.bf16.mxu0 0
    %3645 = vmatpush2.bf16.msra.mxu0 0
    %3646 = vmatprep.subr.bf16.mxu0 0
    %3647 = vmatpush2.bf16.msra.mxu0 0
    %3648 = vmatprep.subr.bf16.mxu0 0
    %3649 = vmatpush2.bf16.msra.mxu0 0
    %3650 = vmatprep.subr.bf16.mxu0 0
    %3651 = vmatpush2.bf16.msra.mxu0 0
    %3652 = vmatprep.subr.bf16.mxu0 0
    %3653 = vmatpush2.bf16.msra.mxu0 0
    %3654 = vmatprep.subr.bf16.mxu0 0
    %3655 = vmatpush2.bf16.msra.mxu0 0
    %3656 = vmatprep.subr.bf16.mxu0 0
    %3657 = vmatpush2.bf16.msra.mxu0 0
    %3658 = vmatprep.mubr.bf16.mxu0 0
    %3659 = vmatmul.mubr.bf16.gmra.mxu0 %v3618
    %v3660 = vpop.f32.mrf.mxu0
    %v3661 = vadd.f32 0.0, %v3660
    %v3662 = vpop.f32.mrf.mxu0
    %v3663 = vpop.f32.mrf.mxu0
    %v3664 = vadd.f32 0.0, %v3663
    %v3665 = vpop.f32.mrf.mxu0
    %3666 = vmatprep.mubr.bf16.mxu0 0
    %3667 = vmatmul.mubr.bf16.gmra.mxu0 %v3621
    %v3668 = vpop.f32.mrf.mxu0
    %v3669 = vadd.f32 0.0, %v3668
    %v3670 = vpop.f32.mrf.mxu0
    %v3671 = vpop.f32.mrf.mxu0
    %v3672 = vadd.f32 0.0, %v3671
    %v3673 = vpop.f32.mrf.mxu0
    %3674 = vmatprep.mubr.bf16.mxu0 0
    %3675 = vmatmul.mubr.bf16.gmra.mxu0 %v3624
    %v3676 = vpop.f32.mrf.mxu0
    %v3677 = vadd.f32 0.0, %v3676
    %v3678 = vpop.f32.mrf.mxu0
    %v3679 = vpop.f32.mrf.mxu0
    %v3680 = vadd.f32 0.0, %v3679
    %v3681 = vpop.f32.mrf.mxu0
    %3682 = vdwg.mxu0
    %v3683 = vpack.c.bf16 %v3664, %v3661
    %v3684 = vpack.c.bf16 %v3672, %v3669
    %v3685 = vpack.c.bf16 %v3680, %v3677
    %s3686 = scalar_lea.vmem %s1, 400
    %v3687 = vld [vmem:[%s3686] sm:$0xf]
    %v3688 = vld [vmem:[%s3686 + $0x4] sm:$0xf]
    %v3689 = vld [vmem:[%s3686 + $0x8] sm:$0xf]
    %v3690 = vld [vmem:[%s3686 + $0xc] sm:$0xf]
    %v3691 = vld [vmem:[%s3686 + $0x10] sm:$0x1]
    %s3692 = scalar_lea.vmem %s1, 420
    %v3693 = vld [vmem:[%s3692] sm:$0xf]
    %v3694 = vld [vmem:[%s3692 + $0x4] sm:$0xf]
    %v3695 = vld [vmem:[%s3692 + $0x8] sm:$0xf]
    %v3696 = vld [vmem:[%s3692 + $0xc] sm:$0xf]
    %s3697 = scalar_lea.vmem %s1, 440
    %v3698 = vld [vmem:[%s3697] sm:$0xf]
    %v3699 = vld [vmem:[%s3697 + $0x4] sm:$0xf]
    %v3700 = vld [vmem:[%s3697 + $0x8] sm:$0xf]
    %v3701 = vld [vmem:[%s3697 + $0xc] sm:$0xf]
    %s3702 = scalar_lea.vmem %s1, 460
    %v3703 = vld [vmem:[%s3702] sm:$0xf]
    %v3704 = vld [vmem:[%s3702 + $0x4] sm:$0xf]
    %v3705 = vld [vmem:[%s3702 + $0x8] sm:$0xf]
    %v3706 = vld [vmem:[%s3702 + $0xc] sm:$0xf]
    %v3707 = vunpack.c.l.bf16 %v3691
    %v3708 = vlaneseq
    %v3709 = vshrl.u32 %v3708, 7
    %v3710 = vsub.s32 0, %v3709
    %v3711 = vrot.slane %v3707, %v3710
    %v3716 = vunpack.c.l.b16 %v3687
    %v3717 = vunpack.c.l.b16 %v3688
    %v3718 = vunpack.c.l.b16 %v3689
    %v3719 = vunpack.c.l.b16 %v3690
    %v3720 = vpack.c.b16 %v3717, %v3716
    %v3721 = vpack.c.b16 %v3719, %v3718
    %3724 = vmatprep.subr.bf16.mxu0 0
    %3725 = vmatpush1.bf16.msra.mxu0 0
    %3726 = vmatprep.subr.bf16.mxu0 0
    %3727 = vmatpush1.bf16.msra.mxu0 0
    %3728 = vmatprep.subr.bf16.mxu0 0
    %3729 = vmatpush1.bf16.msra.mxu0 0
    %3730 = vmatprep.subr.bf16.mxu0 0
    %3731 = vmatpush1.bf16.msra.mxu0 0
    %3732 = vmatprep.subr.bf16.mxu0 0
    %3733 = vmatpush1.bf16.msra.mxu0 0
    %3734 = vmatprep.subr.bf16.mxu0 0
    %3735 = vmatpush1.bf16.msra.mxu0 0
    %3736 = vmatprep.subr.bf16.mxu0 0
    %3737 = vmatpush1.bf16.msra.mxu0 %v3721
    %3738 = vmatprep.subr.bf16.mxu0 0
    %3739 = vmatpush1.bf16.msra.mxu0 %v3720
    %3740 = vmatprep.subr.bf16.mxu0 0
    %3741 = vmatpush2.bf16.msra.mxu0 0
    %3742 = vmatprep.subr.bf16.mxu0 0
    %3743 = vmatpush2.bf16.msra.mxu0 0
    %3744 = vmatprep.subr.bf16.mxu0 0
    %3745 = vmatpush2.bf16.msra.mxu0 0
    %3746 = vmatprep.subr.bf16.mxu0 0
    %3747 = vmatpush2.bf16.msra.mxu0 0
    %3748 = vmatprep.subr.bf16.mxu0 0
    %3749 = vmatpush2.bf16.msra.mxu0 0
    %3750 = vmatprep.subr.bf16.mxu0 0
    %3751 = vmatpush2.bf16.msra.mxu0 0
    %3752 = vmatprep.subr.bf16.mxu0 0
    %3753 = vmatpush2.bf16.msra.mxu0 0
    %3754 = vmatprep.subr.bf16.mxu0 0
    %3755 = vmatpush2.bf16.msra.mxu0 0
    %3756 = vmatprep.mubr.bf16.mxu0 0
    %3757 = vmatmul.mubr.bf16.gmra.mxu0 %v3211
    %v3758 = vpop.f32.mrf.mxu0
    %v3759 = vadd.f32 %v3711, %v3758
    %v3760 = vpop.f32.mrf.mxu0
    %v3761 = vpop.f32.mrf.mxu0
    %v3762 = vadd.f32 %v3711, %v3761
    %v3763 = vpop.f32.mrf.mxu0
    %3764 = vmatprep.mubr.bf16.mxu0 0
    %3765 = vmatmul.mubr.bf16.gmra.mxu0 %v3214
    %v3766 = vpop.f32.mrf.mxu0
    %v3767 = vadd.f32 %v3711, %v3766
    %v3768 = vpop.f32.mrf.mxu0
    %v3769 = vpop.f32.mrf.mxu0
    %v3770 = vadd.f32 %v3711, %v3769
    %v3771 = vpop.f32.mrf.mxu0
    %3772 = vmatprep.mubr.bf16.mxu0 0
    %3773 = vmatmul.mubr.bf16.gmra.mxu0 %v3217
    %v3774 = vpop.f32.mrf.mxu0
    %v3775 = vadd.f32 %v3711, %v3774
    %v3776 = vpop.f32.mrf.mxu0
    %v3777 = vpop.f32.mrf.mxu0
    %v3778 = vadd.f32 %v3711, %v3777
    %v3779 = vpop.f32.mrf.mxu0
    %3780 = vdwg.mxu0
    %v3785 = vunpack.c.l.b16 %v3693
    %v3786 = vunpack.c.l.b16 %v3694
    %v3787 = vunpack.c.l.b16 %v3695
    %v3788 = vunpack.c.l.b16 %v3696
    %v3789 = vpack.c.b16 %v3786, %v3785
    %v3790 = vpack.c.b16 %v3788, %v3787
    %3793 = vmatprep.subr.bf16.mxu0 0
    %3794 = vmatpush1.bf16.msra.mxu0 0
    %3795 = vmatprep.subr.bf16.mxu0 0
    %3796 = vmatpush1.bf16.msra.mxu0 0
    %3797 = vmatprep.subr.bf16.mxu0 0
    %3798 = vmatpush1.bf16.msra.mxu0 0
    %3799 = vmatprep.subr.bf16.mxu0 0
    %3800 = vmatpush1.bf16.msra.mxu0 0
    %3801 = vmatprep.subr.bf16.mxu0 0
    %3802 = vmatpush1.bf16.msra.mxu0 0
    %3803 = vmatprep.subr.bf16.mxu0 0
    %3804 = vmatpush1.bf16.msra.mxu0 0
    %3805 = vmatprep.subr.bf16.mxu0 0
    %3806 = vmatpush1.bf16.msra.mxu0 %v3790
    %3807 = vmatprep.subr.bf16.mxu0 0
    %3808 = vmatpush1.bf16.msra.mxu0 %v3789
    %3809 = vmatprep.subr.bf16.mxu0 0
    %3810 = vmatpush2.bf16.msra.mxu0 0
    %3811 = vmatprep.subr.bf16.mxu0 0
    %3812 = vmatpush2.bf16.msra.mxu0 0
    %3813 = vmatprep.subr.bf16.mxu0 0
    %3814 = vmatpush2.bf16.msra.mxu0 0
    %3815 = vmatprep.subr.bf16.mxu0 0
    %3816 = vmatpush2.bf16.msra.mxu0 0
    %3817 = vmatprep.subr.bf16.mxu0 0
    %3818 = vmatpush2.bf16.msra.mxu0 0
    %3819 = vmatprep.subr.bf16.mxu0 0
    %3820 = vmatpush2.bf16.msra.mxu0 0
    %3821 = vmatprep.subr.bf16.mxu0 0
    %3822 = vmatpush2.bf16.msra.mxu0 0
    %3823 = vmatprep.subr.bf16.mxu0 0
    %3824 = vmatpush2.bf16.msra.mxu0 0
    %3825 = vmatprep.mubr.bf16.mxu0 0
    %3826 = vmatmul.mubr.bf16.gmra.mxu0 %v3211
    %v3827 = vpop.f32.mrf.mxu0
    %v3828 = vadd.f32 0.0, %v3827
    %v3829 = vpop.f32.mrf.mxu0
    %v3830 = vpop.f32.mrf.mxu0
    %v3831 = vadd.f32 0.0, %v3830
    %v3832 = vpop.f32.mrf.mxu0
    %3833 = vmatprep.mubr.bf16.mxu0 0
    %3834 = vmatmul.mubr.bf16.gmra.mxu0 %v3214
    %v3835 = vpop.f32.mrf.mxu0
    %v3836 = vadd.f32 0.0, %v3835
    %v3837 = vpop.f32.mrf.mxu0
    %v3838 = vpop.f32.mrf.mxu0
    %v3839 = vadd.f32 0.0, %v3838
    %v3840 = vpop.f32.mrf.mxu0
    %3841 = vmatprep.mubr.bf16.mxu0 0
    %3842 = vmatmul.mubr.bf16.gmra.mxu0 %v3217
    %v3843 = vpop.f32.mrf.mxu0
    %v3844 = vadd.f32 0.0, %v3843
    %v3845 = vpop.f32.mrf.mxu0
    %v3846 = vpop.f32.mrf.mxu0
    %v3847 = vadd.f32 0.0, %v3846
    %v3848 = vpop.f32.mrf.mxu0
    %3849 = vdwg.mxu0
    %v3854 = vunpack.c.l.b16 %v3698
    %v3855 = vunpack.c.l.b16 %v3699
    %v3856 = vunpack.c.l.b16 %v3700
    %v3857 = vunpack.c.l.b16 %v3701
    %v3858 = vpack.c.b16 %v3855, %v3854
    %v3859 = vpack.c.b16 %v3857, %v3856
    %3862 = vmatprep.subr.bf16.mxu0 0
    %3863 = vmatpush1.bf16.msra.mxu0 0
    %3864 = vmatprep.subr.bf16.mxu0 0
    %3865 = vmatpush1.bf16.msra.mxu0 0
    %3866 = vmatprep.subr.bf16.mxu0 0
    %3867 = vmatpush1.bf16.msra.mxu0 0
    %3868 = vmatprep.subr.bf16.mxu0 0
    %3869 = vmatpush1.bf16.msra.mxu0 0
    %3870 = vmatprep.subr.bf16.mxu0 0
    %3871 = vmatpush1.bf16.msra.mxu0 0
    %3872 = vmatprep.subr.bf16.mxu0 0
    %3873 = vmatpush1.bf16.msra.mxu0 0
    %3874 = vmatprep.subr.bf16.mxu0 0
    %3875 = vmatpush1.bf16.msra.mxu0 %v3859
    %3876 = vmatprep.subr.bf16.mxu0 0
    %3877 = vmatpush1.bf16.msra.mxu0 %v3858
    %3878 = vmatprep.subr.bf16.mxu0 0
    %3879 = vmatpush2.bf16.msra.mxu0 0
    %3880 = vmatprep.subr.bf16.mxu0 0
    %3881 = vmatpush2.bf16.msra.mxu0 0
    %3882 = vmatprep.subr.bf16.mxu0 0
    %3883 = vmatpush2.bf16.msra.mxu0 0
    %3884 = vmatprep.subr.bf16.mxu0 0
    %3885 = vmatpush2.bf16.msra.mxu0 0
    %3886 = vmatprep.subr.bf16.mxu0 0
    %3887 = vmatpush2.bf16.msra.mxu0 0
    %3888 = vmatprep.subr.bf16.mxu0 0
    %3889 = vmatpush2.bf16.msra.mxu0 0
    %3890 = vmatprep.subr.bf16.mxu0 0
    %3891 = vmatpush2.bf16.msra.mxu0 0
    %3892 = vmatprep.subr.bf16.mxu0 0
    %3893 = vmatpush2.bf16.msra.mxu0 0
    %3894 = vmatprep.mubr.bf16.mxu0 0
    %3895 = vmatmul.mubr.bf16.gmra.mxu0 %v3211
    %v3896 = vpop.f32.mrf.mxu0
    %v3897 = vadd.f32 0.0, %v3896
    %v3898 = vpop.f32.mrf.mxu0
    %v3899 = vpop.f32.mrf.mxu0
    %v3900 = vadd.f32 0.0, %v3899
    %v3901 = vpop.f32.mrf.mxu0
    %3902 = vmatprep.mubr.bf16.mxu0 0
    %3903 = vmatmul.mubr.bf16.gmra.mxu0 %v3214
    %v3904 = vpop.f32.mrf.mxu0
    %v3905 = vadd.f32 0.0, %v3904
    %v3906 = vpop.f32.mrf.mxu0
    %v3907 = vpop.f32.mrf.mxu0
    %v3908 = vadd.f32 0.0, %v3907
    %v3909 = vpop.f32.mrf.mxu0
    %3910 = vmatprep.mubr.bf16.mxu0 0
    %3911 = vmatmul.mubr.bf16.gmra.mxu0 %v3217
    %v3912 = vpop.f32.mrf.mxu0
    %v3913 = vadd.f32 0.0, %v3912
    %v3914 = vpop.f32.mrf.mxu0
    %v3915 = vpop.f32.mrf.mxu0
    %v3916 = vadd.f32 0.0, %v3915
    %v3917 = vpop.f32.mrf.mxu0
    %3918 = vdwg.mxu0
    %v3920 = vsel %vm597, %v3759, 0
    %v3923 = vsel %vm597, %v3762, 0
    %v3926 = vsel %vm597, %v3767, 0
    %v3929 = vsel %vm597, %v3770, 0
    %v3932 = vsel %vm597, %v3775, 0
    %v3935 = vsel %vm597, %v3778, 0
    %v3938 = vsel %vm597, %v3828, 0
    %v3941 = vsel %vm597, %v3831, 0
    %v3944 = vsel %vm597, %v3836, 0
    %v3947 = vsel %vm597, %v3839, 0
    %v3950 = vsel %vm597, %v3844, 0
    %v3953 = vsel %vm597, %v3847, 0
    %3955 = vmatprep.subr.mxu0 0.0
    %3956 = vmatpush1.xpose.msra.mxu0 0.0
    %3957 = vmatprep.subr.mxu0 0.0
    %3958 = vmatpush1.xpose.msra.mxu0 0.0
    %3959 = vmatprep.subr.mxu0 0.0
    %3960 = vmatpush1.xpose.msra.mxu0 0.0
    %3961 = vmatprep.subr.mxu0 0.0
    %3962 = vmatpush1.xpose.msra.mxu0 0.0
    %3963 = vmatprep.subr.mxu0 0.0
    %3964 = vmatpush1.xpose.msra.mxu0 0.0
    %3965 = vmatprep.subr.mxu0 0.0
    %3966 = vmatpush1.xpose.msra.mxu0 0.0
    %3967 = vmatprep.subr.mxu0 0.0
    %3968 = vmatpush1.xpose.msra.mxu0 0.0
    %3969 = vmatprep.subr.mxu0 0.0
    %3970 = vmatpush1.xpose.msra.mxu0 0.0
    %3971 = vmatprep.subr.mxu0 0.0
    %3972 = vmatpush1.xpose.msra.mxu0 0.0
    %3973 = vmatprep.subr.mxu0 0.0
    %3974 = vmatpush1.xpose.msra.mxu0 0.0
    %3975 = vmatprep.subr.mxu0 0.0
    %3976 = vmatpush1.xpose.msra.mxu0 %v3953
    %3977 = vmatprep.subr.mxu0 0.0
    %3978 = vmatpush1.xpose.msra.mxu0 %v3950
    %3979 = vmatprep.subr.mxu0 0.0
    %3980 = vmatpush1.xpose.msra.mxu0 %v3947
    %3981 = vmatprep.subr.mxu0 0.0
    %3982 = vmatpush1.xpose.msra.mxu0 %v3944
    %3983 = vmatprep.subr.mxu0 0.0
    %3984 = vmatpush1.xpose.msra.mxu0 %v3941
    %3985 = vmatprep.subr.mxu0 0.0
    %3986 = vmatpush1.xpose.msra.mxu0 %v3938
    %3987 = vmatprep.subr.mxu0 0.0
    %3988 = vmatpush2.xpose.msra.mxu0 0.0
    %3989 = vmatprep.subr.mxu0 0.0
    %3990 = vmatpush2.xpose.msra.mxu0 0.0
    %3991 = vmatprep.subr.mxu0 0.0
    %3992 = vmatpush2.xpose.msra.mxu0 0.0
    %3993 = vmatprep.subr.mxu0 0.0
    %3994 = vmatpush2.xpose.msra.mxu0 0.0
    %3995 = vmatprep.subr.mxu0 0.0
    %3996 = vmatpush2.xpose.msra.mxu0 0.0
    %3997 = vmatprep.subr.mxu0 0.0
    %3998 = vmatpush2.xpose.msra.mxu0 0.0
    %3999 = vmatprep.subr.mxu0 0.0
    %4000 = vmatpush2.xpose.msra.mxu0 0.0
    %4001 = vmatprep.subr.mxu0 0.0
    %4002 = vmatpush2.xpose.msra.mxu0 0.0
    %4003 = vmatprep.subr.mxu0 0.0
    %4004 = vmatpush2.xpose.msra.mxu0 0.0
    %4005 = vmatprep.subr.mxu0 0.0
    %4006 = vmatpush2.xpose.msra.mxu0 0.0
    %4007 = vmatprep.subr.mxu0 0.0
    %4008 = vmatpush2.xpose.msra.mxu0 0.0
    %4009 = vmatprep.subr.mxu0 0.0
    %4010 = vmatpush2.xpose.msra.mxu0 0.0
    %4011 = vmatprep.subr.mxu0 0.0
    %4012 = vmatpush2.xpose.msra.mxu0 0.0
    %4013 = vmatprep.subr.mxu0 0.0
    %4014 = vmatpush2.xpose.msra.mxu0 0.0
    %4015 = vmatprep.subr.mxu0 0.0
    %4016 = vmatpush2.xpose.msra.mxu0 0.0
    %4017 = vmatprep.subr.mxu0 0.0
    %4018 = vmatpush2.xpose.msra.mxu0 0.0
    %4019 = vmatprep.mubr.f32.mxu0 0.0
    %4020 = vmatmul.mubr.f32.gmra.mxu0 %v3920
    %v4021 = vpop.f32.mrf.mxu0
    %v4022 = vadd.f32 %v247, %v4021
    %v4023 = vpop.f32.mrf.mxu0
    %4024 = vmatprep.mubr.f32.mxu0 0.0
    %4025 = vmatmul.mubr.f32.gmra.mxu0 %v3923
    %v4026 = vpop.f32.mrf.mxu0
    %v4027 = vadd.f32 %v248, %v4026
    %v4028 = vpop.f32.mrf.mxu0
    %4029 = vmatprep.mubr.f32.mxu0 0.0
    %4030 = vmatmul.mubr.f32.gmra.mxu0 %v3926
    %v4031 = vpop.f32.mrf.mxu0
    %v4032 = vadd.f32 %v249, %v4031
    %v4033 = vpop.f32.mrf.mxu0
    %4034 = vmatprep.mubr.f32.mxu0 0.0
    %4035 = vmatmul.mubr.f32.gmra.mxu0 %v3929
    %v4036 = vpop.f32.mrf.mxu0
    %v4037 = vadd.f32 %v250, %v4036
    %v4038 = vpop.f32.mrf.mxu0
    %4039 = vmatprep.mubr.f32.mxu0 0.0
    %4040 = vmatmul.mubr.f32.gmra.mxu0 %v3932
    %v4041 = vpop.f32.mrf.mxu0
    %v4042 = vadd.f32 %v251, %v4041
    %v4043 = vpop.f32.mrf.mxu0
    %4044 = vmatprep.mubr.f32.mxu0 0.0
    %4045 = vmatmul.mubr.f32.gmra.mxu0 %v3935
    %v4046 = vpop.f32.mrf.mxu0
    %v4047 = vadd.f32 %v252, %v4046
    %v4048 = vpop.f32.mrf.mxu0
    %4049 = vdwg.mxu0
    %v4050 = vsel %vm63, %v4022, -inf
    %4051 = vmax.xlane.f32.xlu0 %v4050
    %v4052 = vpop.xlane.xlu0 %4051
    %v4053 = vsel %vm63, %v4027, -inf
    %4054 = vmax.xlane.f32.xlu0 %v4053
    %v4055 = vpop.xlane.xlu0 %4054
    %v4056 = vsel %vm63, %v4032, -inf
    %4057 = vmax.xlane.f32.xlu0 %v4056
    %v4058 = vpop.xlane.xlu0 %4057
    %v4059 = vsel %vm63, %v4037, -inf
    %4060 = vmax.xlane.f32.xlu0 %v4059
    %v4061 = vpop.xlane.xlu0 %4060
    %v4062 = vsel %vm63, %v4042, -inf
    %4063 = vmax.xlane.f32.xlu0 %v4062
    %v4064 = vpop.xlane.xlu0 %4063
    %v4065 = vsel %vm63, %v4047, -inf
    %4066 = vmax.xlane.f32.xlu0 %v4065
    %v4067 = vpop.xlane.xlu0 %4066
    %v4068 = vsub.f32 %v4022, %v4052
    %v4069 = vsub.f32 %v4027, %v4055
    %v4070 = vsub.f32 %v4032, %v4058
    %v4071 = vsub.f32 %v4037, %v4061
    %v4072 = vsub.f32 %v4042, %v4064
    %v4073 = vsub.f32 %v4047, %v4067
    %v4074 = vmul.f32 %v4068, 1.442695
    %v4075 = vpow.pop %v4074
    %v4076 = vmul.f32 %v4069, 1.442695
    %v4077 = vpow.pop %v4076
    %v4078 = vmul.f32 %v4070, 1.442695
    %v4079 = vpow.pop %v4078
    %v4080 = vmul.f32 %v4071, 1.442695
    %v4081 = vpow.pop %v4080
    %v4082 = vmul.f32 %v4072, 1.442695
    %v4083 = vpow.pop %v4082
    %v4084 = vmul.f32 %v4073, 1.442695
    %v4085 = vpow.pop %v4084
    %v4086 = vsel %vm63, %v4075, 0.0
    %4087 = vadd.xlane.f32.xlu0 %v4086
    %v4088 = vpop.xlane.xlu0 %4087
    %v4089 = vsel %vm63, %v4077, 0.0
    %4090 = vadd.xlane.f32.xlu0 %v4089
    %v4091 = vpop.xlane.xlu0 %4090
    %v4092 = vsel %vm63, %v4079, 0.0
    %4093 = vadd.xlane.f32.xlu0 %v4092
    %v4094 = vpop.xlane.xlu0 %4093
    %v4095 = vsel %vm63, %v4081, 0.0
    %4096 = vadd.xlane.f32.xlu0 %v4095
    %v4097 = vpop.xlane.xlu0 %4096
    %v4098 = vsel %vm63, %v4083, 0.0
    %4099 = vadd.xlane.f32.xlu0 %v4098
    %v4100 = vpop.xlane.xlu0 %4099
    %v4101 = vsel %vm63, %v4085, 0.0
    %4102 = vadd.xlane.f32.xlu0 %v4101
    %v4103 = vpop.xlane.xlu0 %4102
    %v4104 = vrcp.pop %v4088
    %v4105 = vrcp.pop %v4091
    %v4106 = vrcp.pop %v4094
    %v4107 = vrcp.pop %v4097
    %v4108 = vrcp.pop %v4100
    %v4109 = vrcp.pop %v4103
    %v4110 = vmul.f32 %v4075, %v4104
    %v4111 = vmul.f32 %v4077, %v4105
    %v4112 = vmul.f32 %v4079, %v4106
    %v4113 = vmul.f32 %v4081, %v4107
    %v4114 = vmul.f32 %v4083, %v4108
    %v4115 = vmul.f32 %v4085, %v4109
    %v4116 = vpack.c.bf16 %v4111, %v4110
    %v4117 = vpack.c.bf16 %v4113, %v4112
    %v4118 = vpack.c.bf16 %v4115, %v4114
    %v4119 = vpack.c.bf16 %v3900, %v3897
    %v4120 = vpack.c.bf16 %v3908, %v3905
    %v4121 = vpack.c.bf16 %v3916, %v3913
    %v4123 = vsel %vm63, %v4116, 0
    %v4126 = vsel %vm63, %v4117, 0
    %v4129 = vsel %vm63, %v4118, 0
    %4131 = vmatprep.subr.bf16.mxu0 0
    %4132 = vmatpush1.bf16.msra.mxu0 0
    %4133 = vmatprep.subr.bf16.mxu0 0
    %4134 = vmatpush1.bf16.msra.mxu0 0
    %4135 = vmatprep.subr.bf16.mxu0 0
    %4136 = vmatpush1.bf16.msra.mxu0 0
    %4137 = vmatprep.subr.bf16.mxu0 0
    %4138 = vmatpush1.bf16.msra.mxu0 0
    %4139 = vmatprep.subr.bf16.mxu0 0
    %4140 = vmatpush1.bf16.msra.mxu0 0
    %4141 = vmatprep.subr.bf16.mxu0 0
    %4142 = vmatpush1.bf16.msra.mxu0 %v4121
    %4143 = vmatprep.subr.bf16.mxu0 0
    %4144 = vmatpush1.bf16.msra.mxu0 %v4120
    %4145 = vmatprep.subr.bf16.mxu0 0
    %4146 = vmatpush1.bf16.msra.mxu0 %v4119
    %4147 = vmatprep.subr.bf16.mxu0 0
    %4148 = vmatpush2.bf16.msra.mxu0 0
    %4149 = vmatprep.subr.bf16.mxu0 0
    %4150 = vmatpush2.bf16.msra.mxu0 0
    %4151 = vmatprep.subr.bf16.mxu0 0
    %4152 = vmatpush2.bf16.msra.mxu0 0
    %4153 = vmatprep.subr.bf16.mxu0 0
    %4154 = vmatpush2.bf16.msra.mxu0 0
    %4155 = vmatprep.subr.bf16.mxu0 0
    %4156 = vmatpush2.bf16.msra.mxu0 0
    %4157 = vmatprep.subr.bf16.mxu0 0
    %4158 = vmatpush2.bf16.msra.mxu0 0
    %4159 = vmatprep.subr.bf16.mxu0 0
    %4160 = vmatpush2.bf16.msra.mxu0 0
    %4161 = vmatprep.subr.bf16.mxu0 0
    %4162 = vmatpush2.bf16.msra.mxu0 0
    %4163 = vmatprep.mubr.bf16.mxu0 0
    %4164 = vmatmul.mubr.bf16.gmra.mxu0 %v4123
    %v4165 = vpop.f32.mrf.mxu0
    %v4166 = vadd.f32 0.0, %v4165
    %v4167 = vpop.f32.mrf.mxu0
    %v4168 = vpop.f32.mrf.mxu0
    %v4169 = vadd.f32 0.0, %v4168
    %v4170 = vpop.f32.mrf.mxu0
    %4171 = vmatprep.mubr.bf16.mxu0 0
    %4172 = vmatmul.mubr.bf16.gmra.mxu0 %v4126
    %v4173 = vpop.f32.mrf.mxu0
    %v4174 = vadd.f32 0.0, %v4173
    %v4175 = vpop.f32.mrf.mxu0
    %v4176 = vpop.f32.mrf.mxu0
    %v4177 = vadd.f32 0.0, %v4176
    %v4178 = vpop.f32.mrf.mxu0
    %4179 = vmatprep.mubr.bf16.mxu0 0
    %4180 = vmatmul.mubr.bf16.gmra.mxu0 %v4129
    %v4181 = vpop.f32.mrf.mxu0
    %v4182 = vadd.f32 0.0, %v4181
    %v4183 = vpop.f32.mrf.mxu0
    %v4184 = vpop.f32.mrf.mxu0
    %v4185 = vadd.f32 0.0, %v4184
    %v4186 = vpop.f32.mrf.mxu0
    %4187 = vdwg.mxu0
    %v4188 = vpack.c.bf16 %v4169, %v4166
    %v4189 = vpack.c.bf16 %v4177, %v4174
    %v4190 = vpack.c.bf16 %v4185, %v4182
    %v4195 = vunpack.c.l.b16 %v3703
    %v4196 = vunpack.c.l.b16 %v3704
    %v4197 = vunpack.c.l.b16 %v3705
    %v4198 = vunpack.c.l.b16 %v3706
    %v4199 = vpack.c.b16 %v4196, %v4195
    %v4200 = vpack.c.b16 %v4198, %v4197
    %v4202 = vsel %vm597, %v4188, 0
    %v4205 = vsel %vm597, %v4189, 0
    %v4208 = vsel %vm597, %v4190, 0
    %v4211 = vsel %vm597, %v4199, 0
    %v4214 = vsel %vm597, %v4200, 0
    %4216 = vmatprep.subr.bf16.mxu0 0
    %4217 = vmatpush1.bf16.xpose.msra.mxu0 0
    %4218 = vmatprep.subr.bf16.mxu0 0
    %4219 = vmatpush1.bf16.xpose.msra.mxu0 0
    %4220 = vmatprep.subr.bf16.mxu0 0
    %4221 = vmatpush1.bf16.xpose.msra.mxu0 0
    %4222 = vmatprep.subr.bf16.mxu0 0
    %4223 = vmatpush1.bf16.xpose.msra.mxu0 0
    %4224 = vmatprep.subr.bf16.mxu0 0
    %4225 = vmatpush1.bf16.xpose.msra.mxu0 0
    %4226 = vmatprep.subr.bf16.mxu0 0
    %4227 = vmatpush1.bf16.xpose.msra.mxu0 0
    %4228 = vmatprep.subr.bf16.mxu0 0
    %4229 = vmatpush1.bf16.xpose.msra.mxu0 %v4214
    %4230 = vmatprep.subr.bf16.mxu0 0
    %4231 = vmatpush1.bf16.xpose.msra.mxu0 %v4211
    %4232 = vmatprep.subr.bf16.mxu0 0
    %4233 = vmatpush2.bf16.xpose.msra.mxu0 0
    %4234 = vmatprep.subr.bf16.mxu0 0
    %4235 = vmatpush2.bf16.xpose.msra.mxu0 0
    %4236 = vmatprep.subr.bf16.mxu0 0
    %4237 = vmatpush2.bf16.xpose.msra.mxu0 0
    %4238 = vmatprep.subr.bf16.mxu0 0
    %4239 = vmatpush2.bf16.xpose.msra.mxu0 0
    %4240 = vmatprep.subr.bf16.mxu0 0
    %4241 = vmatpush2.bf16.xpose.msra.mxu0 0
    %4242 = vmatprep.subr.bf16.mxu0 0
    %4243 = vmatpush2.bf16.xpose.msra.mxu0 0
    %4244 = vmatprep.subr.bf16.mxu0 0
    %4245 = vmatpush2.bf16.xpose.msra.mxu0 0
    %4246 = vmatprep.subr.bf16.mxu0 0
    %4247 = vmatpush2.bf16.xpose.msra.mxu0 0
    %4248 = vmatprep.mubr.bf16.mxu0 0
    %4249 = vmatmul.mubr.bf16.gmra.mxu0 %v4202
    %v4250 = vpop.f32.mrf.mxu0
    %v4251 = vadd.f32 0.0, %v4250
    %v4252 = vpop.f32.mrf.mxu0
    %v4253 = vpop.f32.mrf.mxu0
    %v4254 = vadd.f32 0.0, %v4253
    %v4255 = vpop.f32.mrf.mxu0
    %4256 = vmatprep.mubr.bf16.mxu0 0
    %4257 = vmatmul.mubr.bf16.gmra.mxu0 %v4205
    %v4258 = vpop.f32.mrf.mxu0
    %v4259 = vadd.f32 0.0, %v4258
    %v4260 = vpop.f32.mrf.mxu0
    %v4261 = vpop.f32.mrf.mxu0
    %v4262 = vadd.f32 0.0, %v4261
    %v4263 = vpop.f32.mrf.mxu0
    %4264 = vmatprep.mubr.bf16.mxu0 0
    %4265 = vmatmul.mubr.bf16.gmra.mxu0 %v4208
    %v4266 = vpop.f32.mrf.mxu0
    %v4267 = vadd.f32 0.0, %v4266
    %v4268 = vpop.f32.mrf.mxu0
    %v4269 = vpop.f32.mrf.mxu0
    %v4270 = vadd.f32 0.0, %v4269
    %v4271 = vpop.f32.mrf.mxu0
    %4272 = vdwg.mxu0
    %v4277 = vunpack.c.l.b16 %v3189
    %v4278 = vunpack.c.l.b16 %v3190
    %v4279 = vunpack.c.l.b16 %v3191
    %v4280 = vunpack.c.l.b16 %v3192
    %v4281 = vpack.c.b16 %v4278, %v4277
    %v4282 = vpack.c.b16 %v4280, %v4279
    %v4284 = vsel %vm597, %v3683, 0
    %v4287 = vsel %vm597, %v3684, 0
    %v4290 = vsel %vm597, %v3685, 0
    %v4293 = vsel %vm597, %v4281, 0
    %v4296 = vsel %vm597, %v4282, 0
    %4298 = vmatprep.subr.bf16.mxu0 0
    %4299 = vmatpush1.bf16.xpose.msra.mxu0 0
    %4300 = vmatprep.subr.bf16.mxu0 0
    %4301 = vmatpush1.bf16.xpose.msra.mxu0 0
    %4302 = vmatprep.subr.bf16.mxu0 0
    %4303 = vmatpush1.bf16.xpose.msra.mxu0 0
    %4304 = vmatprep.subr.bf16.mxu0 0
    %4305 = vmatpush1.bf16.xpose.msra.mxu0 0
    %4306 = vmatprep.subr.bf16.mxu0 0
    %4307 = vmatpush1.bf16.xpose.msra.mxu0 0
    %4308 = vmatprep.subr.bf16.mxu0 0
    %4309 = vmatpush1.bf16.xpose.msra.mxu0 0
    %4310 = vmatprep.subr.bf16.mxu0 0
    %4311 = vmatpush1.bf16.xpose.msra.mxu0 %v4296
    %4312 = vmatprep.subr.bf16.mxu0 0
    %4313 = vmatpush1.bf16.xpose.msra.mxu0 %v4293
    %4314 = vmatprep.subr.bf16.mxu0 0
    %4315 = vmatpush2.bf16.xpose.msra.mxu0 0
    %4316 = vmatprep.subr.bf16.mxu0 0
    %4317 = vmatpush2.bf16.xpose.msra.mxu0 0
    %4318 = vmatprep.subr.bf16.mxu0 0
    %4319 = vmatpush2.bf16.xpose.msra.mxu0 0
    %4320 = vmatprep.subr.bf16.mxu0 0
    %4321 = vmatpush2.bf16.xpose.msra.mxu0 0
    %4322 = vmatprep.subr.bf16.mxu0 0
    %4323 = vmatpush2.bf16.xpose.msra.mxu0 0
    %4324 = vmatprep.subr.bf16.mxu0 0
    %4325 = vmatpush2.bf16.xpose.msra.mxu0 0
    %4326 = vmatprep.subr.bf16.mxu0 0
    %4327 = vmatpush2.bf16.xpose.msra.mxu0 0
    %4328 = vmatprep.subr.bf16.mxu0 0
    %4329 = vmatpush2.bf16.xpose.msra.mxu0 0
    %4330 = vmatprep.mubr.bf16.mxu0 0
    %4331 = vmatmul.mubr.bf16.gmra.mxu0 %v4284
    %v4332 = vpop.f32.mrf.mxu0
    %v4333 = vadd.f32 %v4251, %v4332
    %v4334 = vpop.f32.mrf.mxu0
    %v4335 = vpop.f32.mrf.mxu0
    %v4336 = vadd.f32 %v4254, %v4335
    %v4337 = vpop.f32.mrf.mxu0
    %4338 = vmatprep.mubr.bf16.mxu0 0
    %4339 = vmatmul.mubr.bf16.gmra.mxu0 %v4287
    %v4340 = vpop.f32.mrf.mxu0
    %v4341 = vadd.f32 %v4259, %v4340
    %v4342 = vpop.f32.mrf.mxu0
    %v4343 = vpop.f32.mrf.mxu0
    %v4344 = vadd.f32 %v4262, %v4343
    %v4345 = vpop.f32.mrf.mxu0
    %4346 = vmatprep.mubr.bf16.mxu0 0
    %4347 = vmatmul.mubr.bf16.gmra.mxu0 %v4290
    %v4348 = vpop.f32.mrf.mxu0
    %v4349 = vadd.f32 %v4267, %v4348
    %v4350 = vpop.f32.mrf.mxu0
    %v4351 = vpop.f32.mrf.mxu0
    %v4352 = vadd.f32 %v4270, %v4351
    %v4353 = vpop.f32.mrf.mxu0
    %4354 = vdwg.mxu0
    %s4355 = scalar_lea.vmem %s1, 480
    %v4356 = vld [vmem:[%s4355] sm:$0xf]
    %v4357 = vld [vmem:[%s4355 + $0x4] sm:$0xf]
    %v4358 = vld [vmem:[%s4355 + $0x8] sm:$0xf]
    %v4359 = vld [vmem:[%s4355 + $0xc] sm:$0xf]
    %v4360 = vld [vmem:[%s4355 + $0x10] sm:$0x1]
    %s4361 = scalar_lea.vmem %s1, 500
    %v4362 = vld [vmem:[%s4361] sm:$0xf]
    %v4363 = vld [vmem:[%s4361 + $0x4] sm:$0xf]
    %v4364 = vld [vmem:[%s4361 + $0x8] sm:$0xf]
    %v4365 = vld [vmem:[%s4361 + $0xc] sm:$0xf]
    %s4366 = scalar_lea.vmem %s1, 520
    %v4367 = vld [vmem:[%s4366] sm:$0xf]
    %v4368 = vld [vmem:[%s4366 + $0x4] sm:$0xf]
    %v4369 = vld [vmem:[%s4366 + $0x8] sm:$0xf]
    %v4370 = vld [vmem:[%s4366 + $0xc] sm:$0xf]
    %s4371 = scalar_lea.vmem %s1, 540
    %v4372 = vld [vmem:[%s4371] sm:$0xf]
    %v4373 = vld [vmem:[%s4371 + $0x4] sm:$0xf]
    %v4374 = vld [vmem:[%s4371 + $0x8] sm:$0xf]
    %v4375 = vld [vmem:[%s4371 + $0xc] sm:$0xf]
    %v4376 = vunpack.c.l.bf16 %v4360
    %v4377 = vlaneseq
    %v4378 = vshrl.u32 %v4377, 7
    %v4379 = vsub.s32 0, %v4378
    %v4380 = vrot.slane %v4376, %v4379
    %v4385 = vunpack.c.l.b16 %v4356
    %v4386 = vunpack.c.l.b16 %v4357
    %v4387 = vunpack.c.l.b16 %v4358
    %v4388 = vunpack.c.l.b16 %v4359
    %v4389 = vpack.c.b16 %v4386, %v4385
    %v4390 = vpack.c.b16 %v4388, %v4387
    %4393 = vmatprep.subr.bf16.mxu0 0
    %4394 = vmatpush1.bf16.msra.mxu0 0
    %4395 = vmatprep.subr.bf16.mxu0 0
    %4396 = vmatpush1.bf16.msra.mxu0 0
    %4397 = vmatprep.subr.bf16.mxu0 0
    %4398 = vmatpush1.bf16.msra.mxu0 0
    %4399 = vmatprep.subr.bf16.mxu0 0
    %4400 = vmatpush1.bf16.msra.mxu0 0
    %4401 = vmatprep.subr.bf16.mxu0 0
    %4402 = vmatpush1.bf16.msra.mxu0 0
    %4403 = vmatprep.subr.bf16.mxu0 0
    %4404 = vmatpush1.bf16.msra.mxu0 0
    %4405 = vmatprep.subr.bf16.mxu0 0
    %4406 = vmatpush1.bf16.msra.mxu0 %v4390
    %4407 = vmatprep.subr.bf16.mxu0 0
    %4408 = vmatpush1.bf16.msra.mxu0 %v4389
    %4409 = vmatprep.subr.bf16.mxu0 0
    %4410 = vmatpush2.bf16.msra.mxu0 0
    %4411 = vmatprep.subr.bf16.mxu0 0
    %4412 = vmatpush2.bf16.msra.mxu0 0
    %4413 = vmatprep.subr.bf16.mxu0 0
    %4414 = vmatpush2.bf16.msra.mxu0 0
    %4415 = vmatprep.subr.bf16.mxu0 0
    %4416 = vmatpush2.bf16.msra.mxu0 0
    %4417 = vmatprep.subr.bf16.mxu0 0
    %4418 = vmatpush2.bf16.msra.mxu0 0
    %4419 = vmatprep.subr.bf16.mxu0 0
    %4420 = vmatpush2.bf16.msra.mxu0 0
    %4421 = vmatprep.subr.bf16.mxu0 0
    %4422 = vmatpush2.bf16.msra.mxu0 0
    %4423 = vmatprep.subr.bf16.mxu0 0
    %4424 = vmatpush2.bf16.msra.mxu0 0
    %4425 = vmatprep.mubr.bf16.mxu0 0
    %4426 = vmatmul.mubr.bf16.gmra.mxu0 %v3211
    %v4427 = vpop.f32.mrf.mxu0
    %v4428 = vadd.f32 %v4380, %v4427
    %v4429 = vpop.f32.mrf.mxu0
    %v4430 = vpop.f32.mrf.mxu0
    %v4431 = vadd.f32 %v4380, %v4430
    %v4432 = vpop.f32.mrf.mxu0
    %4433 = vmatprep.mubr.bf16.mxu0 0
    %4434 = vmatmul.mubr.bf16.gmra.mxu0 %v3214
    %v4435 = vpop.f32.mrf.mxu0
    %v4436 = vadd.f32 %v4380, %v4435
    %v4437 = vpop.f32.mrf.mxu0
    %v4438 = vpop.f32.mrf.mxu0
    %v4439 = vadd.f32 %v4380, %v4438
    %v4440 = vpop.f32.mrf.mxu0
    %4441 = vmatprep.mubr.bf16.mxu0 0
    %4442 = vmatmul.mubr.bf16.gmra.mxu0 %v3217
    %v4443 = vpop.f32.mrf.mxu0
    %v4444 = vadd.f32 %v4380, %v4443
    %v4445 = vpop.f32.mrf.mxu0
    %v4446 = vpop.f32.mrf.mxu0
    %v4447 = vadd.f32 %v4380, %v4446
    %v4448 = vpop.f32.mrf.mxu0
    %4449 = vdwg.mxu0
    %v4454 = vunpack.c.l.b16 %v4362
    %v4455 = vunpack.c.l.b16 %v4363
    %v4456 = vunpack.c.l.b16 %v4364
    %v4457 = vunpack.c.l.b16 %v4365
    %v4458 = vpack.c.b16 %v4455, %v4454
    %v4459 = vpack.c.b16 %v4457, %v4456
    %4462 = vmatprep.subr.bf16.mxu0 0
    %4463 = vmatpush1.bf16.msra.mxu0 0
    %4464 = vmatprep.subr.bf16.mxu0 0
    %4465 = vmatpush1.bf16.msra.mxu0 0
    %4466 = vmatprep.subr.bf16.mxu0 0
    %4467 = vmatpush1.bf16.msra.mxu0 0
    %4468 = vmatprep.subr.bf16.mxu0 0
    %4469 = vmatpush1.bf16.msra.mxu0 0
    %4470 = vmatprep.subr.bf16.mxu0 0
    %4471 = vmatpush1.bf16.msra.mxu0 0
    %4472 = vmatprep.subr.bf16.mxu0 0
    %4473 = vmatpush1.bf16.msra.mxu0 0
    %4474 = vmatprep.subr.bf16.mxu0 0
    %4475 = vmatpush1.bf16.msra.mxu0 %v4459
    %4476 = vmatprep.subr.bf16.mxu0 0
    %4477 = vmatpush1.bf16.msra.mxu0 %v4458
    %4478 = vmatprep.subr.bf16.mxu0 0
    %4479 = vmatpush2.bf16.msra.mxu0 0
    %4480 = vmatprep.subr.bf16.mxu0 0
    %4481 = vmatpush2.bf16.msra.mxu0 0
    %4482 = vmatprep.subr.bf16.mxu0 0
    %4483 = vmatpush2.bf16.msra.mxu0 0
    %4484 = vmatprep.subr.bf16.mxu0 0
    %4485 = vmatpush2.bf16.msra.mxu0 0
    %4486 = vmatprep.subr.bf16.mxu0 0
    %4487 = vmatpush2.bf16.msra.mxu0 0
    %4488 = vmatprep.subr.bf16.mxu0 0
    %4489 = vmatpush2.bf16.msra.mxu0 0
    %4490 = vmatprep.subr.bf16.mxu0 0
    %4491 = vmatpush2.bf16.msra.mxu0 0
    %4492 = vmatprep.subr.bf16.mxu0 0
    %4493 = vmatpush2.bf16.msra.mxu0 0
    %4494 = vmatprep.mubr.bf16.mxu0 0
    %4495 = vmatmul.mubr.bf16.gmra.mxu0 %v3211
    %v4496 = vpop.f32.mrf.mxu0
    %v4497 = vadd.f32 0.0, %v4496
    %v4498 = vpop.f32.mrf.mxu0
    %v4499 = vpop.f32.mrf.mxu0
    %v4500 = vadd.f32 0.0, %v4499
    %v4501 = vpop.f32.mrf.mxu0
    %4502 = vmatprep.mubr.bf16.mxu0 0
    %4503 = vmatmul.mubr.bf16.gmra.mxu0 %v3214
    %v4504 = vpop.f32.mrf.mxu0
    %v4505 = vadd.f32 0.0, %v4504
    %v4506 = vpop.f32.mrf.mxu0
    %v4507 = vpop.f32.mrf.mxu0
    %v4508 = vadd.f32 0.0, %v4507
    %v4509 = vpop.f32.mrf.mxu0
    %4510 = vmatprep.mubr.bf16.mxu0 0
    %4511 = vmatmul.mubr.bf16.gmra.mxu0 %v3217
    %v4512 = vpop.f32.mrf.mxu0
    %v4513 = vadd.f32 0.0, %v4512
    %v4514 = vpop.f32.mrf.mxu0
    %v4515 = vpop.f32.mrf.mxu0
    %v4516 = vadd.f32 0.0, %v4515
    %v4517 = vpop.f32.mrf.mxu0
    %4518 = vdwg.mxu0
    %v4523 = vunpack.c.l.b16 %v4367
    %v4524 = vunpack.c.l.b16 %v4368
    %v4525 = vunpack.c.l.b16 %v4369
    %v4526 = vunpack.c.l.b16 %v4370
    %v4527 = vpack.c.b16 %v4524, %v4523
    %v4528 = vpack.c.b16 %v4526, %v4525
    %4531 = vmatprep.subr.bf16.mxu0 0
    %4532 = vmatpush1.bf16.msra.mxu0 0
    %4533 = vmatprep.subr.bf16.mxu0 0
    %4534 = vmatpush1.bf16.msra.mxu0 0
    %4535 = vmatprep.subr.bf16.mxu0 0
    %4536 = vmatpush1.bf16.msra.mxu0 0
    %4537 = vmatprep.subr.bf16.mxu0 0
    %4538 = vmatpush1.bf16.msra.mxu0 0
    %4539 = vmatprep.subr.bf16.mxu0 0
    %4540 = vmatpush1.bf16.msra.mxu0 0
    %4541 = vmatprep.subr.bf16.mxu0 0
    %4542 = vmatpush1.bf16.msra.mxu0 0
    %4543 = vmatprep.subr.bf16.mxu0 0
    %4544 = vmatpush1.bf16.msra.mxu0 %v4528
    %4545 = vmatprep.subr.bf16.mxu0 0
    %4546 = vmatpush1.bf16.msra.mxu0 %v4527
    %4547 = vmatprep.subr.bf16.mxu0 0
    %4548 = vmatpush2.bf16.msra.mxu0 0
    %4549 = vmatprep.subr.bf16.mxu0 0
    %4550 = vmatpush2.bf16.msra.mxu0 0
    %4551 = vmatprep.subr.bf16.mxu0 0
    %4552 = vmatpush2.bf16.msra.mxu0 0
    %4553 = vmatprep.subr.bf16.mxu0 0
    %4554 = vmatpush2.bf16.msra.mxu0 0
    %4555 = vmatprep.subr.bf16.mxu0 0
    %4556 = vmatpush2.bf16.msra.mxu0 0
    %4557 = vmatprep.subr.bf16.mxu0 0
    %4558 = vmatpush2.bf16.msra.mxu0 0
    %4559 = vmatprep.subr.bf16.mxu0 0
    %4560 = vmatpush2.bf16.msra.mxu0 0
    %4561 = vmatprep.subr.bf16.mxu0 0
    %4562 = vmatpush2.bf16.msra.mxu0 0
    %4563 = vmatprep.mubr.bf16.mxu0 0
    %4564 = vmatmul.mubr.bf16.gmra.mxu0 %v3211
    %v4565 = vpop.f32.mrf.mxu0
    %v4566 = vadd.f32 0.0, %v4565
    %v4567 = vpop.f32.mrf.mxu0
    %v4568 = vpop.f32.mrf.mxu0
    %v4569 = vadd.f32 0.0, %v4568
    %v4570 = vpop.f32.mrf.mxu0
    %4571 = vmatprep.mubr.bf16.mxu0 0
    %4572 = vmatmul.mubr.bf16.gmra.mxu0 %v3214
    %v4573 = vpop.f32.mrf.mxu0
    %v4574 = vadd.f32 0.0, %v4573
    %v4575 = vpop.f32.mrf.mxu0
    %v4576 = vpop.f32.mrf.mxu0
    %v4577 = vadd.f32 0.0, %v4576
    %v4578 = vpop.f32.mrf.mxu0
    %4579 = vmatprep.mubr.bf16.mxu0 0
    %4580 = vmatmul.mubr.bf16.gmra.mxu0 %v3217
    %v4581 = vpop.f32.mrf.mxu0
    %v4582 = vadd.f32 0.0, %v4581
    %v4583 = vpop.f32.mrf.mxu0
    %v4584 = vpop.f32.mrf.mxu0
    %v4585 = vadd.f32 0.0, %v4584
    %v4586 = vpop.f32.mrf.mxu0
    %4587 = vdwg.mxu0
    %v4589 = vsel %vm597, %v4428, 0
    %v4592 = vsel %vm597, %v4431, 0
    %v4595 = vsel %vm597, %v4436, 0
    %v4598 = vsel %vm597, %v4439, 0
    %v4601 = vsel %vm597, %v4444, 0
    %v4604 = vsel %vm597, %v4447, 0
    %v4607 = vsel %vm597, %v4497, 0
    %v4610 = vsel %vm597, %v4500, 0
    %v4613 = vsel %vm597, %v4505, 0
    %v4616 = vsel %vm597, %v4508, 0
    %v4619 = vsel %vm597, %v4513, 0
    %v4622 = vsel %vm597, %v4516, 0
    %4624 = vmatprep.subr.mxu0 0.0
    %4625 = vmatpush1.xpose.msra.mxu0 0.0
    %4626 = vmatprep.subr.mxu0 0.0
    %4627 = vmatpush1.xpose.msra.mxu0 0.0
    %4628 = vmatprep.subr.mxu0 0.0
    %4629 = vmatpush1.xpose.msra.mxu0 0.0
    %4630 = vmatprep.subr.mxu0 0.0
    %4631 = vmatpush1.xpose.msra.mxu0 0.0
    %4632 = vmatprep.subr.mxu0 0.0
    %4633 = vmatpush1.xpose.msra.mxu0 0.0
    %4634 = vmatprep.subr.mxu0 0.0
    %4635 = vmatpush1.xpose.msra.mxu0 0.0
    %4636 = vmatprep.subr.mxu0 0.0
    %4637 = vmatpush1.xpose.msra.mxu0 0.0
    %4638 = vmatprep.subr.mxu0 0.0
    %4639 = vmatpush1.xpose.msra.mxu0 0.0
    %4640 = vmatprep.subr.mxu0 0.0
    %4641 = vmatpush1.xpose.msra.mxu0 0.0
    %4642 = vmatprep.subr.mxu0 0.0
    %4643 = vmatpush1.xpose.msra.mxu0 0.0
    %4644 = vmatprep.subr.mxu0 0.0
    %4645 = vmatpush1.xpose.msra.mxu0 %v4622
    %4646 = vmatprep.subr.mxu0 0.0
    %4647 = vmatpush1.xpose.msra.mxu0 %v4619
    %4648 = vmatprep.subr.mxu0 0.0
    %4649 = vmatpush1.xpose.msra.mxu0 %v4616
    %4650 = vmatprep.subr.mxu0 0.0
    %4651 = vmatpush1.xpose.msra.mxu0 %v4613
    %4652 = vmatprep.subr.mxu0 0.0
    %4653 = vmatpush1.xpose.msra.mxu0 %v4610
    %4654 = vmatprep.subr.mxu0 0.0
    %4655 = vmatpush1.xpose.msra.mxu0 %v4607
    %4656 = vmatprep.subr.mxu0 0.0
    %4657 = vmatpush2.xpose.msra.mxu0 0.0
    %4658 = vmatprep.subr.mxu0 0.0
    %4659 = vmatpush2.xpose.msra.mxu0 0.0
    %4660 = vmatprep.subr.mxu0 0.0
    %4661 = vmatpush2.xpose.msra.mxu0 0.0
    %4662 = vmatprep.subr.mxu0 0.0
    %4663 = vmatpush2.xpose.msra.mxu0 0.0
    %4664 = vmatprep.subr.mxu0 0.0
    %4665 = vmatpush2.xpose.msra.mxu0 0.0
    %4666 = vmatprep.subr.mxu0 0.0
    %4667 = vmatpush2.xpose.msra.mxu0 0.0
    %4668 = vmatprep.subr.mxu0 0.0
    %4669 = vmatpush2.xpose.msra.mxu0 0.0
    %4670 = vmatprep.subr.mxu0 0.0
    %4671 = vmatpush2.xpose.msra.mxu0 0.0
    %4672 = vmatprep.subr.mxu0 0.0
    %4673 = vmatpush2.xpose.msra.mxu0 0.0
    %4674 = vmatprep.subr.mxu0 0.0
    %4675 = vmatpush2.xpose.msra.mxu0 0.0
    %4676 = vmatprep.subr.mxu0 0.0
    %4677 = vmatpush2.xpose.msra.mxu0 0.0
    %4678 = vmatprep.subr.mxu0 0.0
    %4679 = vmatpush2.xpose.msra.mxu0 0.0
    %4680 = vmatprep.subr.mxu0 0.0
    %4681 = vmatpush2.xpose.msra.mxu0 0.0
    %4682 = vmatprep.subr.mxu0 0.0
    %4683 = vmatpush2.xpose.msra.mxu0 0.0
    %4684 = vmatprep.subr.mxu0 0.0
    %4685 = vmatpush2.xpose.msra.mxu0 0.0
    %4686 = vmatprep.subr.mxu0 0.0
    %4687 = vmatpush2.xpose.msra.mxu0 0.0
    %4688 = vmatprep.mubr.f32.mxu0 0.0
    %4689 = vmatmul.mubr.f32.gmra.mxu0 %v4589
    %v4690 = vpop.f32.mrf.mxu0
    %v4691 = vadd.f32 %v247, %v4690
    %v4692 = vpop.f32.mrf.mxu0
    %4693 = vmatprep.mubr.f32.mxu0 0.0
    %4694 = vmatmul.mubr.f32.gmra.mxu0 %v4592
    %v4695 = vpop.f32.mrf.mxu0
    %v4696 = vadd.f32 %v248, %v4695
    %v4697 = vpop.f32.mrf.mxu0
    %4698 = vmatprep.mubr.f32.mxu0 0.0
    %4699 = vmatmul.mubr.f32.gmra.mxu0 %v4595
    %v4700 = vpop.f32.mrf.mxu0
    %v4701 = vadd.f32 %v249, %v4700
    %v4702 = vpop.f32.mrf.mxu0
    %4703 = vmatprep.mubr.f32.mxu0 0.0
    %4704 = vmatmul.mubr.f32.gmra.mxu0 %v4598
    %v4705 = vpop.f32.mrf.mxu0
    %v4706 = vadd.f32 %v250, %v4705
    %v4707 = vpop.f32.mrf.mxu0
    %4708 = vmatprep.mubr.f32.mxu0 0.0
    %4709 = vmatmul.mubr.f32.gmra.mxu0 %v4601
    %v4710 = vpop.f32.mrf.mxu0
    %v4711 = vadd.f32 %v251, %v4710
    %v4712 = vpop.f32.mrf.mxu0
    %4713 = vmatprep.mubr.f32.mxu0 0.0
    %4714 = vmatmul.mubr.f32.gmra.mxu0 %v4604
    %v4715 = vpop.f32.mrf.mxu0
    %v4716 = vadd.f32 %v252, %v4715
    %v4717 = vpop.f32.mrf.mxu0
    %4718 = vdwg.mxu0
    %v4719 = vsel %vm63, %v4691, -inf
    %4720 = vmax.xlane.f32.xlu0 %v4719
    %v4721 = vpop.xlane.xlu0 %4720
    %v4722 = vsel %vm63, %v4696, -inf
    %4723 = vmax.xlane.f32.xlu0 %v4722
    %v4724 = vpop.xlane.xlu0 %4723
    %v4725 = vsel %vm63, %v4701, -inf
    %4726 = vmax.xlane.f32.xlu0 %v4725
    %v4727 = vpop.xlane.xlu0 %4726
    %v4728 = vsel %vm63, %v4706, -inf
    %4729 = vmax.xlane.f32.xlu0 %v4728
    %v4730 = vpop.xlane.xlu0 %4729
    %v4731 = vsel %vm63, %v4711, -inf
    %4732 = vmax.xlane.f32.xlu0 %v4731
    %v4733 = vpop.xlane.xlu0 %4732
    %v4734 = vsel %vm63, %v4716, -inf
    %4735 = vmax.xlane.f32.xlu0 %v4734
    %v4736 = vpop.xlane.xlu0 %4735
    %v4737 = vsub.f32 %v4691, %v4721
    %v4738 = vsub.f32 %v4696, %v4724
    %v4739 = vsub.f32 %v4701, %v4727
    %v4740 = vsub.f32 %v4706, %v4730
    %v4741 = vsub.f32 %v4711, %v4733
    %v4742 = vsub.f32 %v4716, %v4736
    %v4743 = vmul.f32 %v4737, 1.442695
    %v4744 = vpow.pop %v4743
    %v4745 = vmul.f32 %v4738, 1.442695
    %v4746 = vpow.pop %v4745
    %v4747 = vmul.f32 %v4739, 1.442695
    %v4748 = vpow.pop %v4747
    %v4749 = vmul.f32 %v4740, 1.442695
    %v4750 = vpow.pop %v4749
    %v4751 = vmul.f32 %v4741, 1.442695
    %v4752 = vpow.pop %v4751
    %v4753 = vmul.f32 %v4742, 1.442695
    %v4754 = vpow.pop %v4753
    %v4755 = vsel %vm63, %v4744, 0.0
    %4756 = vadd.xlane.f32.xlu0 %v4755
    %v4757 = vpop.xlane.xlu0 %4756
    %v4758 = vsel %vm63, %v4746, 0.0
    %4759 = vadd.xlane.f32.xlu0 %v4758
    %v4760 = vpop.xlane.xlu0 %4759
    %v4761 = vsel %vm63, %v4748, 0.0
    %4762 = vadd.xlane.f32.xlu0 %v4761
    %v4763 = vpop.xlane.xlu0 %4762
    %v4764 = vsel %vm63, %v4750, 0.0
    %4765 = vadd.xlane.f32.xlu0 %v4764
    %v4766 = vpop.xlane.xlu0 %4765
    %v4767 = vsel %vm63, %v4752, 0.0
    %4768 = vadd.xlane.f32.xlu0 %v4767
    %v4769 = vpop.xlane.xlu0 %4768
    %v4770 = vsel %vm63, %v4754, 0.0
    %4771 = vadd.xlane.f32.xlu0 %v4770
    %v4772 = vpop.xlane.xlu0 %4771
    %v4773 = vrcp.pop %v4757
    %v4774 = vrcp.pop %v4760
    %v4775 = vrcp.pop %v4763
    %v4776 = vrcp.pop %v4766
    %v4777 = vrcp.pop %v4769
    %v4778 = vrcp.pop %v4772
    %v4779 = vmul.f32 %v4744, %v4773
    %v4780 = vmul.f32 %v4746, %v4774
    %v4781 = vmul.f32 %v4748, %v4775
    %v4782 = vmul.f32 %v4750, %v4776
    %v4783 = vmul.f32 %v4752, %v4777
    %v4784 = vmul.f32 %v4754, %v4778
    %v4785 = vpack.c.bf16 %v4780, %v4779
    %v4786 = vpack.c.bf16 %v4782, %v4781
    %v4787 = vpack.c.bf16 %v4784, %v4783
    %v4788 = vpack.c.bf16 %v4569, %v4566
    %v4789 = vpack.c.bf16 %v4577, %v4574
    %v4790 = vpack.c.bf16 %v4585, %v4582
    %v4792 = vsel %vm63, %v4785, 0
    %v4795 = vsel %vm63, %v4786, 0
    %v4798 = vsel %vm63, %v4787, 0
    %4800 = vmatprep.subr.bf16.mxu0 0
    %4801 = vmatpush1.bf16.msra.mxu0 0
    %4802 = vmatprep.subr.bf16.mxu0 0
    %4803 = vmatpush1.bf16.msra.mxu0 0
    %4804 = vmatprep.subr.bf16.mxu0 0
    %4805 = vmatpush1.bf16.msra.mxu0 0
    %4806 = vmatprep.subr.bf16.mxu0 0
    %4807 = vmatpush1.bf16.msra.mxu0 0
    %4808 = vmatprep.subr.bf16.mxu0 0
    %4809 = vmatpush1.bf16.msra.mxu0 0
    %4810 = vmatprep.subr.bf16.mxu0 0
    %4811 = vmatpush1.bf16.msra.mxu0 %v4790
    %4812 = vmatprep.subr.bf16.mxu0 0
    %4813 = vmatpush1.bf16.msra.mxu0 %v4789
    %4814 = vmatprep.subr.bf16.mxu0 0
    %4815 = vmatpush1.bf16.msra.mxu0 %v4788
    %4816 = vmatprep.subr.bf16.mxu0 0
    %4817 = vmatpush2.bf16.msra.mxu0 0
    %4818 = vmatprep.subr.bf16.mxu0 0
    %4819 = vmatpush2.bf16.msra.mxu0 0
    %4820 = vmatprep.subr.bf16.mxu0 0
    %4821 = vmatpush2.bf16.msra.mxu0 0
    %4822 = vmatprep.subr.bf16.mxu0 0
    %4823 = vmatpush2.bf16.msra.mxu0 0
    %4824 = vmatprep.subr.bf16.mxu0 0
    %4825 = vmatpush2.bf16.msra.mxu0 0
    %4826 = vmatprep.subr.bf16.mxu0 0
    %4827 = vmatpush2.bf16.msra.mxu0 0
    %4828 = vmatprep.subr.bf16.mxu0 0
    %4829 = vmatpush2.bf16.msra.mxu0 0
    %4830 = vmatprep.subr.bf16.mxu0 0
    %4831 = vmatpush2.bf16.msra.mxu0 0
    %4832 = vmatprep.mubr.bf16.mxu0 0
    %4833 = vmatmul.mubr.bf16.gmra.mxu0 %v4792
    %v4834 = vpop.f32.mrf.mxu0
    %v4835 = vadd.f32 0.0, %v4834
    %v4836 = vpop.f32.mrf.mxu0
    %v4837 = vpop.f32.mrf.mxu0
    %v4838 = vadd.f32 0.0, %v4837
    %v4839 = vpop.f32.mrf.mxu0
    %4840 = vmatprep.mubr.bf16.mxu0 0
    %4841 = vmatmul.mubr.bf16.gmra.mxu0 %v4795
    %v4842 = vpop.f32.mrf.mxu0
    %v4843 = vadd.f32 0.0, %v4842
    %v4844 = vpop.f32.mrf.mxu0
    %v4845 = vpop.f32.mrf.mxu0
    %v4846 = vadd.f32 0.0, %v4845
    %v4847 = vpop.f32.mrf.mxu0
    %4848 = vmatprep.mubr.bf16.mxu0 0
    %4849 = vmatmul.mubr.bf16.gmra.mxu0 %v4798
    %v4850 = vpop.f32.mrf.mxu0
    %v4851 = vadd.f32 0.0, %v4850
    %v4852 = vpop.f32.mrf.mxu0
    %v4853 = vpop.f32.mrf.mxu0
    %v4854 = vadd.f32 0.0, %v4853
    %v4855 = vpop.f32.mrf.mxu0
    %4856 = vdwg.mxu0
    %v4857 = vpack.c.bf16 %v4838, %v4835
    %v4858 = vpack.c.bf16 %v4846, %v4843
    %v4859 = vpack.c.bf16 %v4854, %v4851
    %v4864 = vunpack.c.l.b16 %v4372
    %v4865 = vunpack.c.l.b16 %v4373
    %v4866 = vunpack.c.l.b16 %v4374
    %v4867 = vunpack.c.l.b16 %v4375
    %v4868 = vpack.c.b16 %v4865, %v4864
    %v4869 = vpack.c.b16 %v4867, %v4866
    %v4871 = vsel %vm597, %v4857, 0
    %v4874 = vsel %vm597, %v4858, 0
    %v4877 = vsel %vm597, %v4859, 0
    %v4880 = vsel %vm597, %v4868, 0
    %v4883 = vsel %vm597, %v4869, 0
    %4885 = vmatprep.subr.bf16.mxu0 0
    %4886 = vmatpush1.bf16.xpose.msra.mxu0 0
    %4887 = vmatprep.subr.bf16.mxu0 0
    %4888 = vmatpush1.bf16.xpose.msra.mxu0 0
    %4889 = vmatprep.subr.bf16.mxu0 0
    %4890 = vmatpush1.bf16.xpose.msra.mxu0 0
    %4891 = vmatprep.subr.bf16.mxu0 0
    %4892 = vmatpush1.bf16.xpose.msra.mxu0 0
    %4893 = vmatprep.subr.bf16.mxu0 0
    %4894 = vmatpush1.bf16.xpose.msra.mxu0 0
    %4895 = vmatprep.subr.bf16.mxu0 0
    %4896 = vmatpush1.bf16.xpose.msra.mxu0 0
    %4897 = vmatprep.subr.bf16.mxu0 0
    %4898 = vmatpush1.bf16.xpose.msra.mxu0 %v4883
    %4899 = vmatprep.subr.bf16.mxu0 0
    %4900 = vmatpush1.bf16.xpose.msra.mxu0 %v4880
    %4901 = vmatprep.subr.bf16.mxu0 0
    %4902 = vmatpush2.bf16.xpose.msra.mxu0 0
    %4903 = vmatprep.subr.bf16.mxu0 0
    %4904 = vmatpush2.bf16.xpose.msra.mxu0 0
    %4905 = vmatprep.subr.bf16.mxu0 0
    %4906 = vmatpush2.bf16.xpose.msra.mxu0 0
    %4907 = vmatprep.subr.bf16.mxu0 0
    %4908 = vmatpush2.bf16.xpose.msra.mxu0 0
    %4909 = vmatprep.subr.bf16.mxu0 0
    %4910 = vmatpush2.bf16.xpose.msra.mxu0 0
    %4911 = vmatprep.subr.bf16.mxu0 0
    %4912 = vmatpush2.bf16.xpose.msra.mxu0 0
    %4913 = vmatprep.subr.bf16.mxu0 0
    %4914 = vmatpush2.bf16.xpose.msra.mxu0 0
    %4915 = vmatprep.subr.bf16.mxu0 0
    %4916 = vmatpush2.bf16.xpose.msra.mxu0 0
    %4917 = vmatprep.mubr.bf16.mxu0 0
    %4918 = vmatmul.mubr.bf16.gmra.mxu0 %v4871
    %v4919 = vpop.f32.mrf.mxu0
    %v4920 = vadd.f32 0.0, %v4919
    %v4921 = vpop.f32.mrf.mxu0
    %v4922 = vpop.f32.mrf.mxu0
    %v4923 = vadd.f32 0.0, %v4922
    %v4924 = vpop.f32.mrf.mxu0
    %4925 = vmatprep.mubr.bf16.mxu0 0
    %4926 = vmatmul.mubr.bf16.gmra.mxu0 %v4874
    %v4927 = vpop.f32.mrf.mxu0
    %v4928 = vadd.f32 0.0, %v4927
    %v4929 = vpop.f32.mrf.mxu0
    %v4930 = vpop.f32.mrf.mxu0
    %v4931 = vadd.f32 0.0, %v4930
    %v4932 = vpop.f32.mrf.mxu0
    %4933 = vmatprep.mubr.bf16.mxu0 0
    %4934 = vmatmul.mubr.bf16.gmra.mxu0 %v4877
    %v4935 = vpop.f32.mrf.mxu0
    %v4936 = vadd.f32 0.0, %v4935
    %v4937 = vpop.f32.mrf.mxu0
    %v4938 = vpop.f32.mrf.mxu0
    %v4939 = vadd.f32 0.0, %v4938
    %v4940 = vpop.f32.mrf.mxu0
    %4941 = vdwg.mxu0
    %v4942 = vadd.f32 %v4333, %v4920
    %v4943 = vadd.f32 %v4336, %v4923
    %v4944 = vadd.f32 %v4341, %v4928
    %v4945 = vadd.f32 %v4344, %v4931
    %v4946 = vadd.f32 %v4349, %v4936
    %v4947 = vadd.f32 %v4352, %v4939
    %s4948 = scalar_lea.vmem %s1, 560
    %v4949 = vld [vmem:[%s4948] sm:$0xf]
    %v4950 = vld [vmem:[%s4948 + $0x4] sm:$0xf]
    %v4951 = vld [vmem:[%s4948 + $0x8] sm:$0xf]
    %v4952 = vld [vmem:[%s4948 + $0xc] sm:$0xf]
    %v4953 = vld [vmem:[%s4948 + $0x10] sm:$0x1]
    %s4954 = scalar_lea.vmem %s1, 580
    %v4955 = vld [vmem:[%s4954] sm:$0xf]
    %v4956 = vld [vmem:[%s4954 + $0x4] sm:$0xf]
    %v4957 = vld [vmem:[%s4954 + $0x8] sm:$0xf]
    %v4958 = vld [vmem:[%s4954 + $0xc] sm:$0xf]
    %s4959 = scalar_lea.vmem %s1, 600
    %v4960 = vld [vmem:[%s4959] sm:$0xf]
    %v4961 = vld [vmem:[%s4959 + $0x4] sm:$0xf]
    %v4962 = vld [vmem:[%s4959 + $0x8] sm:$0xf]
    %v4963 = vld [vmem:[%s4959 + $0xc] sm:$0xf]
    %s4964 = scalar_lea.vmem %s1, 620
    %v4965 = vld [vmem:[%s4964] sm:$0xf]
    %v4966 = vld [vmem:[%s4964 + $0x4] sm:$0xf]
    %v4967 = vld [vmem:[%s4964 + $0x8] sm:$0xf]
    %v4968 = vld [vmem:[%s4964 + $0xc] sm:$0xf]
    %v4969 = vunpack.c.l.bf16 %v4953
    %v4970 = vlaneseq
    %v4971 = vshrl.u32 %v4970, 7
    %v4972 = vsub.s32 0, %v4971
    %v4973 = vrot.slane %v4969, %v4972
    %v4978 = vunpack.c.l.b16 %v4949
    %v4979 = vunpack.c.l.b16 %v4950
    %v4980 = vunpack.c.l.b16 %v4951
    %v4981 = vunpack.c.l.b16 %v4952
    %v4982 = vpack.c.b16 %v4979, %v4978
    %v4983 = vpack.c.b16 %v4981, %v4980
    %4986 = vmatprep.subr.bf16.mxu0 0
    %4987 = vmatpush1.bf16.msra.mxu0 0
    %4988 = vmatprep.subr.bf16.mxu0 0
    %4989 = vmatpush1.bf16.msra.mxu0 0
    %4990 = vmatprep.subr.bf16.mxu0 0
    %4991 = vmatpush1.bf16.msra.mxu0 0
    %4992 = vmatprep.subr.bf16.mxu0 0
    %4993 = vmatpush1.bf16.msra.mxu0 0
    %4994 = vmatprep.subr.bf16.mxu0 0
    %4995 = vmatpush1.bf16.msra.mxu0 0
    %4996 = vmatprep.subr.bf16.mxu0 0
    %4997 = vmatpush1.bf16.msra.mxu0 0
    %4998 = vmatprep.subr.bf16.mxu0 0
    %4999 = vmatpush1.bf16.msra.mxu0 %v4983
    %5000 = vmatprep.subr.bf16.mxu0 0
    %5001 = vmatpush1.bf16.msra.mxu0 %v4982
    %5002 = vmatprep.subr.bf16.mxu0 0
    %5003 = vmatpush2.bf16.msra.mxu0 0
    %5004 = vmatprep.subr.bf16.mxu0 0
    %5005 = vmatpush2.bf16.msra.mxu0 0
    %5006 = vmatprep.subr.bf16.mxu0 0
    %5007 = vmatpush2.bf16.msra.mxu0 0
    %5008 = vmatprep.subr.bf16.mxu0 0
    %5009 = vmatpush2.bf16.msra.mxu0 0
    %5010 = vmatprep.subr.bf16.mxu0 0
    %5011 = vmatpush2.bf16.msra.mxu0 0
    %5012 = vmatprep.subr.bf16.mxu0 0
    %5013 = vmatpush2.bf16.msra.mxu0 0
    %5014 = vmatprep.subr.bf16.mxu0 0
    %5015 = vmatpush2.bf16.msra.mxu0 0
    %5016 = vmatprep.subr.bf16.mxu0 0
    %5017 = vmatpush2.bf16.msra.mxu0 0
    %5018 = vmatprep.mubr.bf16.mxu0 0
    %5019 = vmatmul.mubr.bf16.gmra.mxu0 %v3211
    %v5020 = vpop.f32.mrf.mxu0
    %v5021 = vadd.f32 %v4973, %v5020
    %v5022 = vpop.f32.mrf.mxu0
    %v5023 = vpop.f32.mrf.mxu0
    %v5024 = vadd.f32 %v4973, %v5023
    %v5025 = vpop.f32.mrf.mxu0
    %5026 = vmatprep.mubr.bf16.mxu0 0
    %5027 = vmatmul.mubr.bf16.gmra.mxu0 %v3214
    %v5028 = vpop.f32.mrf.mxu0
    %v5029 = vadd.f32 %v4973, %v5028
    %v5030 = vpop.f32.mrf.mxu0
    %v5031 = vpop.f32.mrf.mxu0
    %v5032 = vadd.f32 %v4973, %v5031
    %v5033 = vpop.f32.mrf.mxu0
    %5034 = vmatprep.mubr.bf16.mxu0 0
    %5035 = vmatmul.mubr.bf16.gmra.mxu0 %v3217
    %v5036 = vpop.f32.mrf.mxu0
    %v5037 = vadd.f32 %v4973, %v5036
    %v5038 = vpop.f32.mrf.mxu0
    %v5039 = vpop.f32.mrf.mxu0
    %v5040 = vadd.f32 %v4973, %v5039
    %v5041 = vpop.f32.mrf.mxu0
    %5042 = vdwg.mxu0
    %v5047 = vunpack.c.l.b16 %v4955
    %v5048 = vunpack.c.l.b16 %v4956
    %v5049 = vunpack.c.l.b16 %v4957
    %v5050 = vunpack.c.l.b16 %v4958
    %v5051 = vpack.c.b16 %v5048, %v5047
    %v5052 = vpack.c.b16 %v5050, %v5049
    %5055 = vmatprep.subr.bf16.mxu0 0
    %5056 = vmatpush1.bf16.msra.mxu0 0
    %5057 = vmatprep.subr.bf16.mxu0 0
    %5058 = vmatpush1.bf16.msra.mxu0 0
    %5059 = vmatprep.subr.bf16.mxu0 0
    %5060 = vmatpush1.bf16.msra.mxu0 0
    %5061 = vmatprep.subr.bf16.mxu0 0
    %5062 = vmatpush1.bf16.msra.mxu0 0
    %5063 = vmatprep.subr.bf16.mxu0 0
    %5064 = vmatpush1.bf16.msra.mxu0 0
    %5065 = vmatprep.subr.bf16.mxu0 0
    %5066 = vmatpush1.bf16.msra.mxu0 0
    %5067 = vmatprep.subr.bf16.mxu0 0
    %5068 = vmatpush1.bf16.msra.mxu0 %v5052
    %5069 = vmatprep.subr.bf16.mxu0 0
    %5070 = vmatpush1.bf16.msra.mxu0 %v5051
    %5071 = vmatprep.subr.bf16.mxu0 0
    %5072 = vmatpush2.bf16.msra.mxu0 0
    %5073 = vmatprep.subr.bf16.mxu0 0
    %5074 = vmatpush2.bf16.msra.mxu0 0
    %5075 = vmatprep.subr.bf16.mxu0 0
    %5076 = vmatpush2.bf16.msra.mxu0 0
    %5077 = vmatprep.subr.bf16.mxu0 0
    %5078 = vmatpush2.bf16.msra.mxu0 0
    %5079 = vmatprep.subr.bf16.mxu0 0
    %5080 = vmatpush2.bf16.msra.mxu0 0
    %5081 = vmatprep.subr.bf16.mxu0 0
    %5082 = vmatpush2.bf16.msra.mxu0 0
    %5083 = vmatprep.subr.bf16.mxu0 0
    %5084 = vmatpush2.bf16.msra.mxu0 0
    %5085 = vmatprep.subr.bf16.mxu0 0
    %5086 = vmatpush2.bf16.msra.mxu0 0
    %5087 = vmatprep.mubr.bf16.mxu0 0
    %5088 = vmatmul.mubr.bf16.gmra.mxu0 %v3211
    %v5089 = vpop.f32.mrf.mxu0
    %v5090 = vadd.f32 0.0, %v5089
    %v5091 = vpop.f32.mrf.mxu0
    %v5092 = vpop.f32.mrf.mxu0
    %v5093 = vadd.f32 0.0, %v5092
    %v5094 = vpop.f32.mrf.mxu0
    %5095 = vmatprep.mubr.bf16.mxu0 0
    %5096 = vmatmul.mubr.bf16.gmra.mxu0 %v3214
    %v5097 = vpop.f32.mrf.mxu0
    %v5098 = vadd.f32 0.0, %v5097
    %v5099 = vpop.f32.mrf.mxu0
    %v5100 = vpop.f32.mrf.mxu0
    %v5101 = vadd.f32 0.0, %v5100
    %v5102 = vpop.f32.mrf.mxu0
    %5103 = vmatprep.mubr.bf16.mxu0 0
    %5104 = vmatmul.mubr.bf16.gmra.mxu0 %v3217
    %v5105 = vpop.f32.mrf.mxu0
    %v5106 = vadd.f32 0.0, %v5105
    %v5107 = vpop.f32.mrf.mxu0
    %v5108 = vpop.f32.mrf.mxu0
    %v5109 = vadd.f32 0.0, %v5108
    %v5110 = vpop.f32.mrf.mxu0
    %5111 = vdwg.mxu0
    %v5116 = vunpack.c.l.b16 %v4960
    %v5117 = vunpack.c.l.b16 %v4961
    %v5118 = vunpack.c.l.b16 %v4962
    %v5119 = vunpack.c.l.b16 %v4963
    %v5120 = vpack.c.b16 %v5117, %v5116
    %v5121 = vpack.c.b16 %v5119, %v5118
    %5124 = vmatprep.subr.bf16.mxu0 0
    %5125 = vmatpush1.bf16.msra.mxu0 0
    %5126 = vmatprep.subr.bf16.mxu0 0
    %5127 = vmatpush1.bf16.msra.mxu0 0
    %5128 = vmatprep.subr.bf16.mxu0 0
    %5129 = vmatpush1.bf16.msra.mxu0 0
    %5130 = vmatprep.subr.bf16.mxu0 0
    %5131 = vmatpush1.bf16.msra.mxu0 0
    %5132 = vmatprep.subr.bf16.mxu0 0
    %5133 = vmatpush1.bf16.msra.mxu0 0
    %5134 = vmatprep.subr.bf16.mxu0 0
    %5135 = vmatpush1.bf16.msra.mxu0 0
    %5136 = vmatprep.subr.bf16.mxu0 0
    %5137 = vmatpush1.bf16.msra.mxu0 %v5121
    %5138 = vmatprep.subr.bf16.mxu0 0
    %5139 = vmatpush1.bf16.msra.mxu0 %v5120
    %5140 = vmatprep.subr.bf16.mxu0 0
    %5141 = vmatpush2.bf16.msra.mxu0 0
    %5142 = vmatprep.subr.bf16.mxu0 0
    %5143 = vmatpush2.bf16.msra.mxu0 0
    %5144 = vmatprep.subr.bf16.mxu0 0
    %5145 = vmatpush2.bf16.msra.mxu0 0
    %5146 = vmatprep.subr.bf16.mxu0 0
    %5147 = vmatpush2.bf16.msra.mxu0 0
    %5148 = vmatprep.subr.bf16.mxu0 0
    %5149 = vmatpush2.bf16.msra.mxu0 0
    %5150 = vmatprep.subr.bf16.mxu0 0
    %5151 = vmatpush2.bf16.msra.mxu0 0
    %5152 = vmatprep.subr.bf16.mxu0 0
    %5153 = vmatpush2.bf16.msra.mxu0 0
    %5154 = vmatprep.subr.bf16.mxu0 0
    %5155 = vmatpush2.bf16.msra.mxu0 0
    %5156 = vmatprep.mubr.bf16.mxu0 0
    %5157 = vmatmul.mubr.bf16.gmra.mxu0 %v3211
    %v5158 = vpop.f32.mrf.mxu0
    %v5159 = vadd.f32 0.0, %v5158
    %v5160 = vpop.f32.mrf.mxu0
    %v5161 = vpop.f32.mrf.mxu0
    %v5162 = vadd.f32 0.0, %v5161
    %v5163 = vpop.f32.mrf.mxu0
    %5164 = vmatprep.mubr.bf16.mxu0 0
    %5165 = vmatmul.mubr.bf16.gmra.mxu0 %v3214
    %v5166 = vpop.f32.mrf.mxu0
    %v5167 = vadd.f32 0.0, %v5166
    %v5168 = vpop.f32.mrf.mxu0
    %v5169 = vpop.f32.mrf.mxu0
    %v5170 = vadd.f32 0.0, %v5169
    %v5171 = vpop.f32.mrf.mxu0
    %5172 = vmatprep.mubr.bf16.mxu0 0
    %5173 = vmatmul.mubr.bf16.gmra.mxu0 %v3217
    %v5174 = vpop.f32.mrf.mxu0
    %v5175 = vadd.f32 0.0, %v5174
    %v5176 = vpop.f32.mrf.mxu0
    %v5177 = vpop.f32.mrf.mxu0
    %v5178 = vadd.f32 0.0, %v5177
    %v5179 = vpop.f32.mrf.mxu0
    %5180 = vdwg.mxu0
    %v5182 = vsel %vm597, %v5021, 0
    %v5185 = vsel %vm597, %v5024, 0
    %v5188 = vsel %vm597, %v5029, 0
    %v5191 = vsel %vm597, %v5032, 0
    %v5194 = vsel %vm597, %v5037, 0
    %v5197 = vsel %vm597, %v5040, 0
    %v5200 = vsel %vm597, %v5090, 0
    %v5203 = vsel %vm597, %v5093, 0
    %v5206 = vsel %vm597, %v5098, 0
    %v5209 = vsel %vm597, %v5101, 0
    %v5212 = vsel %vm597, %v5106, 0
    %v5215 = vsel %vm597, %v5109, 0
    %5217 = vmatprep.subr.mxu0 0.0
    %5218 = vmatpush1.xpose.msra.mxu0 0.0
    %5219 = vmatprep.subr.mxu0 0.0
    %5220 = vmatpush1.xpose.msra.mxu0 0.0
    %5221 = vmatprep.subr.mxu0 0.0
    %5222 = vmatpush1.xpose.msra.mxu0 0.0
    %5223 = vmatprep.subr.mxu0 0.0
    %5224 = vmatpush1.xpose.msra.mxu0 0.0
    %5225 = vmatprep.subr.mxu0 0.0
    %5226 = vmatpush1.xpose.msra.mxu0 0.0
    %5227 = vmatprep.subr.mxu0 0.0
    %5228 = vmatpush1.xpose.msra.mxu0 0.0
    %5229 = vmatprep.subr.mxu0 0.0
    %5230 = vmatpush1.xpose.msra.mxu0 0.0
    %5231 = vmatprep.subr.mxu0 0.0
    %5232 = vmatpush1.xpose.msra.mxu0 0.0
    %5233 = vmatprep.subr.mxu0 0.0
    %5234 = vmatpush1.xpose.msra.mxu0 0.0
    %5235 = vmatprep.subr.mxu0 0.0
    %5236 = vmatpush1.xpose.msra.mxu0 0.0
    %5237 = vmatprep.subr.mxu0 0.0
    %5238 = vmatpush1.xpose.msra.mxu0 %v5215
    %5239 = vmatprep.subr.mxu0 0.0
    %5240 = vmatpush1.xpose.msra.mxu0 %v5212
    %5241 = vmatprep.subr.mxu0 0.0
    %5242 = vmatpush1.xpose.msra.mxu0 %v5209
    %5243 = vmatprep.subr.mxu0 0.0
    %5244 = vmatpush1.xpose.msra.mxu0 %v5206
    %5245 = vmatprep.subr.mxu0 0.0
    %5246 = vmatpush1.xpose.msra.mxu0 %v5203
    %5247 = vmatprep.subr.mxu0 0.0
    %5248 = vmatpush1.xpose.msra.mxu0 %v5200
    %5249 = vmatprep.subr.mxu0 0.0
    %5250 = vmatpush2.xpose.msra.mxu0 0.0
    %5251 = vmatprep.subr.mxu0 0.0
    %5252 = vmatpush2.xpose.msra.mxu0 0.0
    %5253 = vmatprep.subr.mxu0 0.0
    %5254 = vmatpush2.xpose.msra.mxu0 0.0
    %5255 = vmatprep.subr.mxu0 0.0
    %5256 = vmatpush2.xpose.msra.mxu0 0.0
    %5257 = vmatprep.subr.mxu0 0.0
    %5258 = vmatpush2.xpose.msra.mxu0 0.0
    %5259 = vmatprep.subr.mxu0 0.0
    %5260 = vmatpush2.xpose.msra.mxu0 0.0
    %5261 = vmatprep.subr.mxu0 0.0
    %5262 = vmatpush2.xpose.msra.mxu0 0.0
    %5263 = vmatprep.subr.mxu0 0.0
    %5264 = vmatpush2.xpose.msra.mxu0 0.0
    %5265 = vmatprep.subr.mxu0 0.0
    %5266 = vmatpush2.xpose.msra.mxu0 0.0
    %5267 = vmatprep.subr.mxu0 0.0
    %5268 = vmatpush2.xpose.msra.mxu0 0.0
    %5269 = vmatprep.subr.mxu0 0.0
    %5270 = vmatpush2.xpose.msra.mxu0 0.0
    %5271 = vmatprep.subr.mxu0 0.0
    %5272 = vmatpush2.xpose.msra.mxu0 0.0
    %5273 = vmatprep.subr.mxu0 0.0
    %5274 = vmatpush2.xpose.msra.mxu0 0.0
    %5275 = vmatprep.subr.mxu0 0.0
    %5276 = vmatpush2.xpose.msra.mxu0 0.0
    %5277 = vmatprep.subr.mxu0 0.0
    %5278 = vmatpush2.xpose.msra.mxu0 0.0
    %5279 = vmatprep.subr.mxu0 0.0
    %5280 = vmatpush2.xpose.msra.mxu0 0.0
    %5281 = vmatprep.mubr.f32.mxu0 0.0
    %5282 = vmatmul.mubr.f32.gmra.mxu0 %v5182
    %v5283 = vpop.f32.mrf.mxu0
    %v5284 = vadd.f32 %v247, %v5283
    %v5285 = vpop.f32.mrf.mxu0
    %5286 = vmatprep.mubr.f32.mxu0 0.0
    %5287 = vmatmul.mubr.f32.gmra.mxu0 %v5185
    %v5288 = vpop.f32.mrf.mxu0
    %v5289 = vadd.f32 %v248, %v5288
    %v5290 = vpop.f32.mrf.mxu0
    %5291 = vmatprep.mubr.f32.mxu0 0.0
    %5292 = vmatmul.mubr.f32.gmra.mxu0 %v5188
    %v5293 = vpop.f32.mrf.mxu0
    %v5294 = vadd.f32 %v249, %v5293
    %v5295 = vpop.f32.mrf.mxu0
    %5296 = vmatprep.mubr.f32.mxu0 0.0
    %5297 = vmatmul.mubr.f32.gmra.mxu0 %v5191
    %v5298 = vpop.f32.mrf.mxu0
    %v5299 = vadd.f32 %v250, %v5298
    %v5300 = vpop.f32.mrf.mxu0
    %5301 = vmatprep.mubr.f32.mxu0 0.0
    %5302 = vmatmul.mubr.f32.gmra.mxu0 %v5194
    %v5303 = vpop.f32.mrf.mxu0
    %v5304 = vadd.f32 %v251, %v5303
    %v5305 = vpop.f32.mrf.mxu0
    %5306 = vmatprep.mubr.f32.mxu0 0.0
    %5307 = vmatmul.mubr.f32.gmra.mxu0 %v5197
    %v5308 = vpop.f32.mrf.mxu0
    %v5309 = vadd.f32 %v252, %v5308
    %v5310 = vpop.f32.mrf.mxu0
    %5311 = vdwg.mxu0
    %v5312 = vsel %vm63, %v5284, -inf
    %5313 = vmax.xlane.f32.xlu0 %v5312
    %v5314 = vpop.xlane.xlu0 %5313
    %v5315 = vsel %vm63, %v5289, -inf
    %5316 = vmax.xlane.f32.xlu0 %v5315
    %v5317 = vpop.xlane.xlu0 %5316
    %v5318 = vsel %vm63, %v5294, -inf
    %5319 = vmax.xlane.f32.xlu0 %v5318
    %v5320 = vpop.xlane.xlu0 %5319
    %v5321 = vsel %vm63, %v5299, -inf
    %5322 = vmax.xlane.f32.xlu0 %v5321
    %v5323 = vpop.xlane.xlu0 %5322
    %v5324 = vsel %vm63, %v5304, -inf
    %5325 = vmax.xlane.f32.xlu0 %v5324
    %v5326 = vpop.xlane.xlu0 %5325
    %v5327 = vsel %vm63, %v5309, -inf
    %5328 = vmax.xlane.f32.xlu0 %v5327
    %v5329 = vpop.xlane.xlu0 %5328
    %v5330 = vsub.f32 %v5284, %v5314
    %v5331 = vsub.f32 %v5289, %v5317
    %v5332 = vsub.f32 %v5294, %v5320
    %v5333 = vsub.f32 %v5299, %v5323
    %v5334 = vsub.f32 %v5304, %v5326
    %v5335 = vsub.f32 %v5309, %v5329
    %v5336 = vmul.f32 %v5330, 1.442695
    %v5337 = vpow.pop %v5336
    %v5338 = vmul.f32 %v5331, 1.442695
    %v5339 = vpow.pop %v5338
    %v5340 = vmul.f32 %v5332, 1.442695
    %v5341 = vpow.pop %v5340
    %v5342 = vmul.f32 %v5333, 1.442695
    %v5343 = vpow.pop %v5342
    %v5344 = vmul.f32 %v5334, 1.442695
    %v5345 = vpow.pop %v5344
    %v5346 = vmul.f32 %v5335, 1.442695
    %v5347 = vpow.pop %v5346
    %v5348 = vsel %vm63, %v5337, 0.0
    %5349 = vadd.xlane.f32.xlu0 %v5348
    %v5350 = vpop.xlane.xlu0 %5349
    %v5351 = vsel %vm63, %v5339, 0.0
    %5352 = vadd.xlane.f32.xlu0 %v5351
    %v5353 = vpop.xlane.xlu0 %5352
    %v5354 = vsel %vm63, %v5341, 0.0
    %5355 = vadd.xlane.f32.xlu0 %v5354
    %v5356 = vpop.xlane.xlu0 %5355
    %v5357 = vsel %vm63, %v5343, 0.0
    %5358 = vadd.xlane.f32.xlu0 %v5357
    %v5359 = vpop.xlane.xlu0 %5358
    %v5360 = vsel %vm63, %v5345, 0.0
    %5361 = vadd.xlane.f32.xlu0 %v5360
    %v5362 = vpop.xlane.xlu0 %5361
    %v5363 = vsel %vm63, %v5347, 0.0
    %5364 = vadd.xlane.f32.xlu0 %v5363
    %v5365 = vpop.xlane.xlu0 %5364
    %v5366 = vrcp.pop %v5350
    %v5367 = vrcp.pop %v5353
    %v5368 = vrcp.pop %v5356
    %v5369 = vrcp.pop %v5359
    %v5370 = vrcp.pop %v5362
    %v5371 = vrcp.pop %v5365
    %v5372 = vmul.f32 %v5337, %v5366
    %v5373 = vmul.f32 %v5339, %v5367
    %v5374 = vmul.f32 %v5341, %v5368
    %v5375 = vmul.f32 %v5343, %v5369
    %v5376 = vmul.f32 %v5345, %v5370
    %v5377 = vmul.f32 %v5347, %v5371
    %v5378 = vpack.c.bf16 %v5373, %v5372
    %v5379 = vpack.c.bf16 %v5375, %v5374
    %v5380 = vpack.c.bf16 %v5377, %v5376
    %v5381 = vpack.c.bf16 %v5162, %v5159
    %v5382 = vpack.c.bf16 %v5170, %v5167
    %v5383 = vpack.c.bf16 %v5178, %v5175
    %v5385 = vsel %vm63, %v5378, 0
    %v5388 = vsel %vm63, %v5379, 0
    %v5391 = vsel %vm63, %v5380, 0
    %5393 = vmatprep.subr.bf16.mxu0 0
    %5394 = vmatpush1.bf16.msra.mxu0 0
    %5395 = vmatprep.subr.bf16.mxu0 0
    %5396 = vmatpush1.bf16.msra.mxu0 0
    %5397 = vmatprep.subr.bf16.mxu0 0
    %5398 = vmatpush1.bf16.msra.mxu0 0
    %5399 = vmatprep.subr.bf16.mxu0 0
    %5400 = vmatpush1.bf16.msra.mxu0 0
    %5401 = vmatprep.subr.bf16.mxu0 0
    %5402 = vmatpush1.bf16.msra.mxu0 0
    %5403 = vmatprep.subr.bf16.mxu0 0
    %5404 = vmatpush1.bf16.msra.mxu0 %v5383
    %5405 = vmatprep.subr.bf16.mxu0 0
    %5406 = vmatpush1.bf16.msra.mxu0 %v5382
    %5407 = vmatprep.subr.bf16.mxu0 0
    %5408 = vmatpush1.bf16.msra.mxu0 %v5381
    %5409 = vmatprep.subr.bf16.mxu0 0
    %5410 = vmatpush2.bf16.msra.mxu0 0
    %5411 = vmatprep.subr.bf16.mxu0 0
    %5412 = vmatpush2.bf16.msra.mxu0 0
    %5413 = vmatprep.subr.bf16.mxu0 0
    %5414 = vmatpush2.bf16.msra.mxu0 0
    %5415 = vmatprep.subr.bf16.mxu0 0
    %5416 = vmatpush2.bf16.msra.mxu0 0
    %5417 = vmatprep.subr.bf16.mxu0 0
    %5418 = vmatpush2.bf16.msra.mxu0 0
    %5419 = vmatprep.subr.bf16.mxu0 0
    %5420 = vmatpush2.bf16.msra.mxu0 0
    %5421 = vmatprep.subr.bf16.mxu0 0
    %5422 = vmatpush2.bf16.msra.mxu0 0
    %5423 = vmatprep.subr.bf16.mxu0 0
    %5424 = vmatpush2.bf16.msra.mxu0 0
    %5425 = vmatprep.mubr.bf16.mxu0 0
    %5426 = vmatmul.mubr.bf16.gmra.mxu0 %v5385
    %v5427 = vpop.f32.mrf.mxu0
    %v5428 = vadd.f32 0.0, %v5427
    %v5429 = vpop.f32.mrf.mxu0
    %v5430 = vpop.f32.mrf.mxu0
    %v5431 = vadd.f32 0.0, %v5430
    %v5432 = vpop.f32.mrf.mxu0
    %5433 = vmatprep.mubr.bf16.mxu0 0
    %5434 = vmatmul.mubr.bf16.gmra.mxu0 %v5388
    %v5435 = vpop.f32.mrf.mxu0
    %v5436 = vadd.f32 0.0, %v5435
    %v5437 = vpop.f32.mrf.mxu0
    %v5438 = vpop.f32.mrf.mxu0
    %v5439 = vadd.f32 0.0, %v5438
    %v5440 = vpop.f32.mrf.mxu0
    %5441 = vmatprep.mubr.bf16.mxu0 0
    %5442 = vmatmul.mubr.bf16.gmra.mxu0 %v5391
    %v5443 = vpop.f32.mrf.mxu0
    %v5444 = vadd.f32 0.0, %v5443
    %v5445 = vpop.f32.mrf.mxu0
    %v5446 = vpop.f32.mrf.mxu0
    %v5447 = vadd.f32 0.0, %v5446
    %v5448 = vpop.f32.mrf.mxu0
    %5449 = vdwg.mxu0
    %v5450 = vpack.c.bf16 %v5431, %v5428
    %v5451 = vpack.c.bf16 %v5439, %v5436
    %v5452 = vpack.c.bf16 %v5447, %v5444
    %v5457 = vunpack.c.l.b16 %v4965
    %v5458 = vunpack.c.l.b16 %v4966
    %v5459 = vunpack.c.l.b16 %v4967
    %v5460 = vunpack.c.l.b16 %v4968
    %v5461 = vpack.c.b16 %v5458, %v5457
    %v5462 = vpack.c.b16 %v5460, %v5459
    %v5464 = vsel %vm597, %v5450, 0
    %v5467 = vsel %vm597, %v5451, 0
    %v5470 = vsel %vm597, %v5452, 0
    %v5473 = vsel %vm597, %v5461, 0
    %v5476 = vsel %vm597, %v5462, 0
    %5478 = vmatprep.subr.bf16.mxu0 0
    %5479 = vmatpush1.bf16.xpose.msra.mxu0 0
    %5480 = vmatprep.subr.bf16.mxu0 0
    %5481 = vmatpush1.bf16.xpose.msra.mxu0 0
    %5482 = vmatprep.subr.bf16.mxu0 0
    %5483 = vmatpush1.bf16.xpose.msra.mxu0 0
    %5484 = vmatprep.subr.bf16.mxu0 0
    %5485 = vmatpush1.bf16.xpose.msra.mxu0 0
    %5486 = vmatprep.subr.bf16.mxu0 0
    %5487 = vmatpush1.bf16.xpose.msra.mxu0 0
    %5488 = vmatprep.subr.bf16.mxu0 0
    %5489 = vmatpush1.bf16.xpose.msra.mxu0 0
    %5490 = vmatprep.subr.bf16.mxu0 0
    %5491 = vmatpush1.bf16.xpose.msra.mxu0 %v5476
    %5492 = vmatprep.subr.bf16.mxu0 0
    %5493 = vmatpush1.bf16.xpose.msra.mxu0 %v5473
    %5494 = vmatprep.subr.bf16.mxu0 0
    %5495 = vmatpush2.bf16.xpose.msra.mxu0 0
    %5496 = vmatprep.subr.bf16.mxu0 0
    %5497 = vmatpush2.bf16.xpose.msra.mxu0 0
    %5498 = vmatprep.subr.bf16.mxu0 0
    %5499 = vmatpush2.bf16.xpose.msra.mxu0 0
    %5500 = vmatprep.subr.bf16.mxu0 0
    %5501 = vmatpush2.bf16.xpose.msra.mxu0 0
    %5502 = vmatprep.subr.bf16.mxu0 0
    %5503 = vmatpush2.bf16.xpose.msra.mxu0 0
    %5504 = vmatprep.subr.bf16.mxu0 0
    %5505 = vmatpush2.bf16.xpose.msra.mxu0 0
    %5506 = vmatprep.subr.bf16.mxu0 0
    %5507 = vmatpush2.bf16.xpose.msra.mxu0 0
    %5508 = vmatprep.subr.bf16.mxu0 0
    %5509 = vmatpush2.bf16.xpose.msra.mxu0 0
    %5510 = vmatprep.mubr.bf16.mxu0 0
    %5511 = vmatmul.mubr.bf16.gmra.mxu0 %v5464
    %v5512 = vpop.f32.mrf.mxu0
    %v5513 = vadd.f32 0.0, %v5512
    %v5514 = vpop.f32.mrf.mxu0
    %v5515 = vpop.f32.mrf.mxu0
    %v5516 = vadd.f32 0.0, %v5515
    %v5517 = vpop.f32.mrf.mxu0
    %5518 = vmatprep.mubr.bf16.mxu0 0
    %5519 = vmatmul.mubr.bf16.gmra.mxu0 %v5467
    %v5520 = vpop.f32.mrf.mxu0
    %v5521 = vadd.f32 0.0, %v5520
    %v5522 = vpop.f32.mrf.mxu0
    %v5523 = vpop.f32.mrf.mxu0
    %v5524 = vadd.f32 0.0, %v5523
    %v5525 = vpop.f32.mrf.mxu0
    %5526 = vmatprep.mubr.bf16.mxu0 0
    %5527 = vmatmul.mubr.bf16.gmra.mxu0 %v5470
    %v5528 = vpop.f32.mrf.mxu0
    %v5529 = vadd.f32 0.0, %v5528
    %v5530 = vpop.f32.mrf.mxu0
    %v5531 = vpop.f32.mrf.mxu0
    %v5532 = vadd.f32 0.0, %v5531
    %v5533 = vpop.f32.mrf.mxu0
    %5534 = vdwg.mxu0
    %v5535 = vadd.f32 %v4942, %v5513
    %v5536 = vadd.f32 %v4943, %v5516
    %v5537 = vadd.f32 %v4944, %v5521
    %v5538 = vadd.f32 %v4945, %v5524
    %v5539 = vadd.f32 %v4946, %v5529
    %v5540 = vadd.f32 %v4947, %v5532
    %v5541 = vld [vmem:[%s4 + $0x1e] sm:$0x1]
    %v5542 = vlaneseq
    %v5543 = vshrl.u32 %v5542, 7
    %v5544 = vsub.s32 0, %v5543
    %v5545 = vrot.slane %v5541, %v5544
    %v5546 = vadd.f32 %v5535, %v5545
    %v5547 = vadd.f32 %v5536, %v5545
    %v5548 = vadd.f32 %v5537, %v5545
    %v5549 = vadd.f32 %v5538, %v5545
    %v5550 = vadd.f32 %v5539, %v5545
    %v5551 = vadd.f32 %v5540, %v5545
    %v5552 = vadd.f32 %v3063, %v5546
    %v5553 = vadd.f32 %v3064, %v5547
    %v5554 = vadd.f32 %v3065, %v5548
    %v5555 = vadd.f32 %v3066, %v5549
    %v5556 = vadd.f32 %v3067, %v5550
    %v5557 = vadd.f32 %v3068, %v5551
    %v5558 = vld [vmem:[%s4 + $0x1a] sm:$0x1]
    %v5559 = vld [vmem:[%s4 + $0x1c] sm:$0x1]
    %v5560 = vsel %vm122, %v5552, 0.0
    %5561 = vadd.xlane.f32.xlu0 %v5560
    %v5562 = vpop.xlane.xlu0 %5561
    %v5563 = vsel %vm122, %v5553, 0.0
    %5564 = vadd.xlane.f32.xlu0 %v5563
    %v5565 = vpop.xlane.xlu0 %5564
    %v5566 = vsel %vm122, %v5554, 0.0
    %5567 = vadd.xlane.f32.xlu0 %v5566
    %v5568 = vpop.xlane.xlu0 %5567
    %v5569 = vsel %vm122, %v5555, 0.0
    %5570 = vadd.xlane.f32.xlu0 %v5569
    %v5571 = vpop.xlane.xlu0 %5570
    %v5572 = vsel %vm122, %v5556, 0.0
    %5573 = vadd.xlane.f32.xlu0 %v5572
    %v5574 = vpop.xlane.xlu0 %5573
    %v5575 = vsel %vm122, %v5557, 0.0
    %5576 = vadd.xlane.f32.xlu0 %v5575
    %v5577 = vpop.xlane.xlu0 %5576
    %v5578 = vmul.f32 %v5562, %v166
    %v5579 = vmul.f32 %v5565, %v166
    %v5580 = vmul.f32 %v5568, %v166
    %v5581 = vmul.f32 %v5571, %v166
    %v5582 = vmul.f32 %v5574, %v166
    %v5583 = vmul.f32 %v5577, %v166
    %v5584 = vsub.f32 %v5552, %v5578
    %v5585 = vsub.f32 %v5553, %v5579
    %v5586 = vsub.f32 %v5554, %v5580
    %v5587 = vsub.f32 %v5555, %v5581
    %v5588 = vsub.f32 %v5556, %v5582
    %v5589 = vsub.f32 %v5557, %v5583
    %v5590 = vmul.f32 %v5584, %v5584
    %v5591 = vmul.f32 %v5585, %v5585
    %v5592 = vmul.f32 %v5586, %v5586
    %v5593 = vmul.f32 %v5587, %v5587
    %v5594 = vmul.f32 %v5588, %v5588
    %v5595 = vmul.f32 %v5589, %v5589
    %v5596 = vsel %vm122, %v5590, 0.0
    %5597 = vadd.xlane.f32.xlu0 %v5596
    %v5598 = vpop.xlane.xlu0 %5597
    %v5599 = vsel %vm122, %v5591, 0.0
    %5600 = vadd.xlane.f32.xlu0 %v5599
    %v5601 = vpop.xlane.xlu0 %5600
    %v5602 = vsel %vm122, %v5592, 0.0
    %5603 = vadd.xlane.f32.xlu0 %v5602
    %v5604 = vpop.xlane.xlu0 %5603
    %v5605 = vsel %vm122, %v5593, 0.0
    %5606 = vadd.xlane.f32.xlu0 %v5605
    %v5607 = vpop.xlane.xlu0 %5606
    %v5608 = vsel %vm122, %v5594, 0.0
    %5609 = vadd.xlane.f32.xlu0 %v5608
    %v5610 = vpop.xlane.xlu0 %5609
    %v5611 = vsel %vm122, %v5595, 0.0
    %5612 = vadd.xlane.f32.xlu0 %v5611
    %v5613 = vpop.xlane.xlu0 %5612
    %v5614 = vmul.f32 %v5598, %v166
    %v5615 = vmul.f32 %v5601, %v166
    %v5616 = vmul.f32 %v5604, %v166
    %v5617 = vmul.f32 %v5607, %v166
    %v5618 = vmul.f32 %v5610, %v166
    %v5619 = vmul.f32 %v5613, %v166
    %v5620 = vadd.f32 %v5614, 1e-05
    %v5621 = vadd.f32 %v5615, 1e-05
    %v5622 = vadd.f32 %v5616, 1e-05
    %v5623 = vadd.f32 %v5617, 1e-05
    %v5624 = vadd.f32 %v5618, 1e-05
    %v5625 = vadd.f32 %v5619, 1e-05
    %v5626 = vrsqrt.pop %v5620
    %v5627 = vrsqrt.pop %v5621
    %v5628 = vrsqrt.pop %v5622
    %v5629 = vrsqrt.pop %v5623
    %v5630 = vrsqrt.pop %v5624
    %v5631 = vrsqrt.pop %v5625
    %v5632 = vmul.f32 %v5584, %v5626
    %v5633 = vmul.f32 %v5585, %v5627
    %v5634 = vmul.f32 %v5586, %v5628
    %v5635 = vmul.f32 %v5587, %v5629
    %v5636 = vmul.f32 %v5588, %v5630
    %v5637 = vmul.f32 %v5589, %v5631
    %v5638 = vlaneseq
    %v5639 = vshrl.u32 %v5638, 7
    %v5640 = vsub.s32 0, %v5639
    %v5641 = vrot.slane %v5558, %v5640
    %v5642 = vmul.f32 %v5632, %v5641
    %v5643 = vmul.f32 %v5633, %v5641
    %v5644 = vmul.f32 %v5634, %v5641
    %v5645 = vmul.f32 %v5635, %v5641
    %v5646 = vmul.f32 %v5636, %v5641
    %v5647 = vmul.f32 %v5637, %v5641
    %v5648 = vlaneseq
    %v5649 = vshrl.u32 %v5648, 7
    %v5650 = vsub.s32 0, %v5649
    %v5651 = vrot.slane %v5559, %v5650
    %v5652 = vadd.f32 %v5642, %v5651
    %v5653 = vadd.f32 %v5643, %v5651
    %v5654 = vadd.f32 %v5644, %v5651
    %v5655 = vadd.f32 %v5645, %v5651
    %v5656 = vadd.f32 %v5646, %v5651
    %v5657 = vadd.f32 %v5647, %v5651
    %s5658 = scalar_lea.vmem %s2, 40
    %v5659 = vld [vmem:[%s5658] sm:$0xf]
    %v5660 = vld [vmem:[%s5658 + $0x4] sm:$0xf]
    %v5661 = vld [vmem:[%s5658 + $0x8] sm:$0xf]
    %v5662 = vld [vmem:[%s5658 + $0xc] sm:$0xf]
    %v5663 = vld [vmem:[%s5658 + $0x10] sm:$0x1]
    %s5664 = scalar_lea.vmem %s2, 60
    %v5665 = vld [vmem:[%s5664] sm:$0xf]
    %v5666 = vld [vmem:[%s5664 + $0x4] sm:$0xf]
    %v5667 = vld [vmem:[%s5664 + $0x8] sm:$0xf]
    %v5668 = vld [vmem:[%s5664 + $0xc] sm:$0xf]
    %v5669 = vpack.c.bf16 %v5653, %v5652
    %v5670 = vpack.c.bf16 %v5655, %v5654
    %v5671 = vpack.c.bf16 %v5657, %v5656
    %v5672 = vunpack.c.l.bf16 %v5663
    %v5673 = vlaneseq
    %v5674 = vshrl.u32 %v5673, 7
    %v5675 = vsub.s32 0, %v5674
    %v5676 = vrot.slane %v5672, %v5675
    %v5681 = vunpack.c.l.b16 %v5659
    %v5682 = vunpack.c.l.b16 %v5660
    %v5683 = vunpack.c.l.b16 %v5661
    %v5684 = vunpack.c.l.b16 %v5662
    %v5685 = vpack.c.b16 %v5682, %v5681
    %v5686 = vpack.c.b16 %v5684, %v5683
    %v5690 = vsel %vm122, %v5669, 0
    %v5693 = vsel %vm122, %v5670, 0
    %v5696 = vsel %vm122, %v5671, 0
    %5698 = vmatprep.subr.bf16.mxu0 0
    %5699 = vmatpush1.bf16.msra.mxu0 0
    %5700 = vmatprep.subr.bf16.mxu0 0
    %5701 = vmatpush1.bf16.msra.mxu0 0
    %5702 = vmatprep.subr.bf16.mxu0 0
    %5703 = vmatpush1.bf16.msra.mxu0 0
    %5704 = vmatprep.subr.bf16.mxu0 0
    %5705 = vmatpush1.bf16.msra.mxu0 0
    %5706 = vmatprep.subr.bf16.mxu0 0
    %5707 = vmatpush1.bf16.msra.mxu0 0
    %5708 = vmatprep.subr.bf16.mxu0 0
    %5709 = vmatpush1.bf16.msra.mxu0 0
    %5710 = vmatprep.subr.bf16.mxu0 0
    %5711 = vmatpush1.bf16.msra.mxu0 %v5686
    %5712 = vmatprep.subr.bf16.mxu0 0
    %5713 = vmatpush1.bf16.msra.mxu0 %v5685
    %5714 = vmatprep.subr.bf16.mxu0 0
    %5715 = vmatpush2.bf16.msra.mxu0 0
    %5716 = vmatprep.subr.bf16.mxu0 0
    %5717 = vmatpush2.bf16.msra.mxu0 0
    %5718 = vmatprep.subr.bf16.mxu0 0
    %5719 = vmatpush2.bf16.msra.mxu0 0
    %5720 = vmatprep.subr.bf16.mxu0 0
    %5721 = vmatpush2.bf16.msra.mxu0 0
    %5722 = vmatprep.subr.bf16.mxu0 0
    %5723 = vmatpush2.bf16.msra.mxu0 0
    %5724 = vmatprep.subr.bf16.mxu0 0
    %5725 = vmatpush2.bf16.msra.mxu0 0
    %5726 = vmatprep.subr.bf16.mxu0 0
    %5727 = vmatpush2.bf16.msra.mxu0 0
    %5728 = vmatprep.subr.bf16.mxu0 0
    %5729 = vmatpush2.bf16.msra.mxu0 0
    %5730 = vmatprep.mubr.bf16.mxu0 0
    %5731 = vmatmul.mubr.bf16.gmra.mxu0 %v5690
    %v5732 = vpop.f32.mrf.mxu0
    %v5733 = vadd.f32 %v5676, %v5732
    %v5734 = vpop.f32.mrf.mxu0
    %v5735 = vpop.f32.mrf.mxu0
    %v5736 = vadd.f32 %v5676, %v5735
    %v5737 = vpop.f32.mrf.mxu0
    %5738 = vmatprep.mubr.bf16.mxu0 0
    %5739 = vmatmul.mubr.bf16.gmra.mxu0 %v5693
    %v5740 = vpop.f32.mrf.mxu0
    %v5741 = vadd.f32 %v5676, %v5740
    %v5742 = vpop.f32.mrf.mxu0
    %v5743 = vpop.f32.mrf.mxu0
    %v5744 = vadd.f32 %v5676, %v5743
    %v5745 = vpop.f32.mrf.mxu0
    %5746 = vmatprep.mubr.bf16.mxu0 0
    %5747 = vmatmul.mubr.bf16.gmra.mxu0 %v5696
    %v5748 = vpop.f32.mrf.mxu0
    %v5749 = vadd.f32 %v5676, %v5748
    %v5750 = vpop.f32.mrf.mxu0
    %v5751 = vpop.f32.mrf.mxu0
    %v5752 = vadd.f32 %v5676, %v5751
    %v5753 = vpop.f32.mrf.mxu0
    %5754 = vdwg.mxu0
    %v5755 = vmul.f32 %v5733, 1.702
    %v5756 = vmul.f32 %v5736, 1.702
    %v5757 = vmul.f32 %v5741, 1.702
    %v5758 = vmul.f32 %v5744, 1.702
    %v5759 = vmul.f32 %v5749, 1.702
    %v5760 = vmul.f32 %v5752, 1.702
    %v5761 = vxor.u32 %v5755, 2147483648
    %v5762 = vxor.u32 %v5756, 2147483648
    %v5763 = vxor.u32 %v5757, 2147483648
    %v5764 = vxor.u32 %v5758, 2147483648
    %v5765 = vxor.u32 %v5759, 2147483648
    %v5766 = vxor.u32 %v5760, 2147483648
    %v5767 = vmul.f32 %v5761, 1.442695
    %v5768 = vpow.pop %v5767
    %v5769 = vmul.f32 %v5762, 1.442695
    %v5770 = vpow.pop %v5769
    %v5771 = vmul.f32 %v5763, 1.442695
    %v5772 = vpow.pop %v5771
    %v5773 = vmul.f32 %v5764, 1.442695
    %v5774 = vpow.pop %v5773
    %v5775 = vmul.f32 %v5765, 1.442695
    %v5776 = vpow.pop %v5775
    %v5777 = vmul.f32 %v5766, 1.442695
    %v5778 = vpow.pop %v5777
    %v5779 = vadd.f32 %v5768, 1.0
    %v5780 = vadd.f32 %v5770, 1.0
    %v5781 = vadd.f32 %v5772, 1.0
    %v5782 = vadd.f32 %v5774, 1.0
    %v5783 = vadd.f32 %v5776, 1.0
    %v5784 = vadd.f32 %v5778, 1.0
    %v5785 = vrcp.pop %v5779
    %v5786 = vmul.f32 1.0, %v5785
    %v5787 = vrcp.pop %v5780
    %v5788 = vmul.f32 1.0, %v5787
    %v5789 = vrcp.pop %v5781
    %v5790 = vmul.f32 1.0, %v5789
    %v5791 = vrcp.pop %v5782
    %v5792 = vmul.f32 1.0, %v5791
    %v5793 = vrcp.pop %v5783
    %v5794 = vmul.f32 1.0, %v5793
    %v5795 = vrcp.pop %v5784
    %v5796 = vmul.f32 1.0, %v5795
    %v5797 = vmul.f32 %v5733, %v5786
    %v5798 = vmul.f32 %v5736, %v5788
    %v5799 = vmul.f32 %v5741, %v5790
    %v5800 = vmul.f32 %v5744, %v5792
    %v5801 = vmul.f32 %v5749, %v5794
    %v5802 = vmul.f32 %v5752, %v5796
    %v5803 = vpack.c.bf16 %v5798, %v5797
    %v5804 = vpack.c.bf16 %v5800, %v5799
    %v5805 = vpack.c.bf16 %v5802, %v5801
    %v5806 = vld [vmem:[%s4 + $0x20] sm:$0x1]
    %v5807 = vlaneseq
    %v5808 = vshrl.u32 %v5807, 7
    %v5809 = vsub.s32 0, %v5808
    %v5810 = vrot.slane %v5806, %v5809
    %v5815 = vunpack.c.l.b16 %v5665
    %v5816 = vunpack.c.l.b16 %v5666
    %v5817 = vunpack.c.l.b16 %v5667
    %v5818 = vunpack.c.l.b16 %v5668
    %v5819 = vpack.c.b16 %v5816, %v5815
    %v5820 = vpack.c.b16 %v5818, %v5817
    %5823 = vmatprep.subr.bf16.mxu0 0
    %5824 = vmatpush1.bf16.xpose.msra.mxu0 0
    %5825 = vmatprep.subr.bf16.mxu0 0
    %5826 = vmatpush1.bf16.xpose.msra.mxu0 0
    %5827 = vmatprep.subr.bf16.mxu0 0
    %5828 = vmatpush1.bf16.xpose.msra.mxu0 0
    %5829 = vmatprep.subr.bf16.mxu0 0
    %5830 = vmatpush1.bf16.xpose.msra.mxu0 0
    %5831 = vmatprep.subr.bf16.mxu0 0
    %5832 = vmatpush1.bf16.xpose.msra.mxu0 0
    %5833 = vmatprep.subr.bf16.mxu0 0
    %5834 = vmatpush1.bf16.xpose.msra.mxu0 0
    %5835 = vmatprep.subr.bf16.mxu0 0
    %5836 = vmatpush1.bf16.xpose.msra.mxu0 %v5820
    %5837 = vmatprep.subr.bf16.mxu0 0
    %5838 = vmatpush1.bf16.xpose.msra.mxu0 %v5819
    %5839 = vmatprep.subr.bf16.mxu0 0
    %5840 = vmatpush2.bf16.xpose.msra.mxu0 0
    %5841 = vmatprep.subr.bf16.mxu0 0
    %5842 = vmatpush2.bf16.xpose.msra.mxu0 0
    %5843 = vmatprep.subr.bf16.mxu0 0
    %5844 = vmatpush2.bf16.xpose.msra.mxu0 0
    %5845 = vmatprep.subr.bf16.mxu0 0
    %5846 = vmatpush2.bf16.xpose.msra.mxu0 0
    %5847 = vmatprep.subr.bf16.mxu0 0
    %5848 = vmatpush2.bf16.xpose.msra.mxu0 0
    %5849 = vmatprep.subr.bf16.mxu0 0
    %5850 = vmatpush2.bf16.xpose.msra.mxu0 0
    %5851 = vmatprep.subr.bf16.mxu0 0
    %5852 = vmatpush2.bf16.xpose.msra.mxu0 0
    %5853 = vmatprep.subr.bf16.mxu0 0
    %5854 = vmatpush2.bf16.xpose.msra.mxu0 0
    %5855 = vmatprep.mubr.bf16.mxu0 0
    %5856 = vmatmul.mubr.bf16.gmra.mxu0 %v5803
    %v5857 = vpop.f32.mrf.mxu0
    %v5858 = vadd.f32 %v5810, %v5857
    %v5859 = vpop.f32.mrf.mxu0
    %v5860 = vpop.f32.mrf.mxu0
    %v5861 = vadd.f32 %v5810, %v5860
    %v5862 = vpop.f32.mrf.mxu0
    %5863 = vmatprep.mubr.bf16.mxu0 0
    %5864 = vmatmul.mubr.bf16.gmra.mxu0 %v5804
    %v5865 = vpop.f32.mrf.mxu0
    %v5866 = vadd.f32 %v5810, %v5865
    %v5867 = vpop.f32.mrf.mxu0
    %v5868 = vpop.f32.mrf.mxu0
    %v5869 = vadd.f32 %v5810, %v5868
    %v5870 = vpop.f32.mrf.mxu0
    %5871 = vmatprep.mubr.bf16.mxu0 0
    %5872 = vmatmul.mubr.bf16.gmra.mxu0 %v5805
    %v5873 = vpop.f32.mrf.mxu0
    %v5874 = vadd.f32 %v5810, %v5873
    %v5875 = vpop.f32.mrf.mxu0
    %v5876 = vpop.f32.mrf.mxu0
    %v5877 = vadd.f32 %v5810, %v5876
    %v5878 = vpop.f32.mrf.mxu0
    %5879 = vdwg.mxu0
    %v5880 = vadd.f32 %v5552, %v5858
    %v5881 = vadd.f32 %v5553, %v5861
    %v5882 = vadd.f32 %v5554, %v5866
    %v5883 = vadd.f32 %v5555, %v5869
    %v5884 = vadd.f32 %v5556, %v5874
    %v5885 = vadd.f32 %v5557, %v5877
    %v5886 = vld [vmem:[%s4 + $0x13] sm:$0x1]
    %v5887 = vld [vmem:[%s4 + $0x14] sm:$0x1]
    %v5888 = vsel %vm122, %v5880, 0.0
    %5889 = vadd.xlane.f32.xlu0 %v5888
    %v5890 = vpop.xlane.xlu0 %5889
    %v5891 = vsel %vm122, %v5881, 0.0
    %5892 = vadd.xlane.f32.xlu0 %v5891
    %v5893 = vpop.xlane.xlu0 %5892
    %v5894 = vsel %vm122, %v5882, 0.0
    %5895 = vadd.xlane.f32.xlu0 %v5894
    %v5896 = vpop.xlane.xlu0 %5895
    %v5897 = vsel %vm122, %v5883, 0.0
    %5898 = vadd.xlane.f32.xlu0 %v5897
    %v5899 = vpop.xlane.xlu0 %5898
    %v5900 = vsel %vm122, %v5884, 0.0
    %5901 = vadd.xlane.f32.xlu0 %v5900
    %v5902 = vpop.xlane.xlu0 %5901
    %v5903 = vsel %vm122, %v5885, 0.0
    %5904 = vadd.xlane.f32.xlu0 %v5903
    %v5905 = vpop.xlane.xlu0 %5904
    %v5906 = vmul.f32 %v5890, %v166
    %v5907 = vmul.f32 %v5893, %v166
    %v5908 = vmul.f32 %v5896, %v166
    %v5909 = vmul.f32 %v5899, %v166
    %v5910 = vmul.f32 %v5902, %v166
    %v5911 = vmul.f32 %v5905, %v166
    %v5912 = vsub.f32 %v5880, %v5906
    %v5913 = vsub.f32 %v5881, %v5907
    %v5914 = vsub.f32 %v5882, %v5908
    %v5915 = vsub.f32 %v5883, %v5909
    %v5916 = vsub.f32 %v5884, %v5910
    %v5917 = vsub.f32 %v5885, %v5911
    %v5918 = vmul.f32 %v5912, %v5912
    %v5919 = vmul.f32 %v5913, %v5913
    %v5920 = vmul.f32 %v5914, %v5914
    %v5921 = vmul.f32 %v5915, %v5915
    %v5922 = vmul.f32 %v5916, %v5916
    %v5923 = vmul.f32 %v5917, %v5917
    %v5924 = vsel %vm122, %v5918, 0.0
    %5925 = vadd.xlane.f32.xlu0 %v5924
    %v5926 = vpop.xlane.xlu0 %5925
    %v5927 = vsel %vm122, %v5919, 0.0
    %5928 = vadd.xlane.f32.xlu0 %v5927
    %v5929 = vpop.xlane.xlu0 %5928
    %v5930 = vsel %vm122, %v5920, 0.0
    %5931 = vadd.xlane.f32.xlu0 %v5930
    %v5932 = vpop.xlane.xlu0 %5931
    %v5933 = vsel %vm122, %v5921, 0.0
    %5934 = vadd.xlane.f32.xlu0 %v5933
    %v5935 = vpop.xlane.xlu0 %5934
    %v5936 = vsel %vm122, %v5922, 0.0
    %5937 = vadd.xlane.f32.xlu0 %v5936
    %v5938 = vpop.xlane.xlu0 %5937
    %v5939 = vsel %vm122, %v5923, 0.0
    %5940 = vadd.xlane.f32.xlu0 %v5939
    %v5941 = vpop.xlane.xlu0 %5940
    %v5942 = vmul.f32 %v5926, %v166
    %v5943 = vmul.f32 %v5929, %v166
    %v5944 = vmul.f32 %v5932, %v166
    %v5945 = vmul.f32 %v5935, %v166
    %v5946 = vmul.f32 %v5938, %v166
    %v5947 = vmul.f32 %v5941, %v166
    %v5948 = vadd.f32 %v5942, 1e-05
    %v5949 = vadd.f32 %v5943, 1e-05
    %v5950 = vadd.f32 %v5944, 1e-05
    %v5951 = vadd.f32 %v5945, 1e-05
    %v5952 = vadd.f32 %v5946, 1e-05
    %v5953 = vadd.f32 %v5947, 1e-05
    %v5954 = vrsqrt.pop %v5948
    %v5955 = vrsqrt.pop %v5949
    %v5956 = vrsqrt.pop %v5950
    %v5957 = vrsqrt.pop %v5951
    %v5958 = vrsqrt.pop %v5952
    %v5959 = vrsqrt.pop %v5953
    %v5960 = vmul.f32 %v5912, %v5954
    %v5961 = vmul.f32 %v5913, %v5955
    %v5962 = vmul.f32 %v5914, %v5956
    %v5963 = vmul.f32 %v5915, %v5957
    %v5964 = vmul.f32 %v5916, %v5958
    %v5965 = vmul.f32 %v5917, %v5959
    %v5966 = vlaneseq
    %v5967 = vshrl.u32 %v5966, 7
    %v5968 = vsub.s32 0, %v5967
    %v5969 = vrot.slane %v5886, %v5968
    %v5970 = vmul.f32 %v5960, %v5969
    %v5971 = vmul.f32 %v5961, %v5969
    %v5972 = vmul.f32 %v5962, %v5969
    %v5973 = vmul.f32 %v5963, %v5969
    %v5974 = vmul.f32 %v5964, %v5969
    %v5975 = vmul.f32 %v5965, %v5969
    %v5976 = vlaneseq
    %v5977 = vshrl.u32 %v5976, 7
    %v5978 = vsub.s32 0, %v5977
    %v5979 = vrot.slane %v5887, %v5978
    %v5980 = vadd.f32 %v5970, %v5979
    %v5981 = vadd.f32 %v5971, %v5979
    %v5982 = vadd.f32 %v5972, %v5979
    %v5983 = vadd.f32 %v5973, %v5979
    %v5984 = vadd.f32 %v5974, %v5979
    %v5985 = vadd.f32 %v5975, %v5979
    %v5986 = vld [vmem:[%s3 + $0x18] sm:$0xf]
    %v5987 = vld [vmem:[%s3 + $0x1c] sm:$0xf]
    %v5988 = vld [vmem:[%s3 + $0x20] sm:$0xf]
    %v5989 = vld [vmem:[%s3 + $0x24] sm:$0xf]
    %v5990 = vpack.c.bf16 %v5981, %v5980
    %v5991 = vpack.c.bf16 %v5983, %v5982
    %v5992 = vpack.c.bf16 %v5985, %v5984
    %v5997 = vunpack.c.l.b16 %v5986
    %v5998 = vunpack.c.l.b16 %v5987
    %v5999 = vunpack.c.l.b16 %v5988
    %v6000 = vunpack.c.l.b16 %v5989
    %v6001 = vpack.c.b16 %v5998, %v5997
    %v6002 = vpack.c.b16 %v6000, %v5999
    %v6006 = vsel %vm122, %v5990, 0
    %v6009 = vsel %vm122, %v5991, 0
    %v6012 = vsel %vm122, %v5992, 0
    %6014 = vmatprep.subr.bf16.mxu0 0
    %6015 = vmatpush1.bf16.msra.mxu0 0
    %6016 = vmatprep.subr.bf16.mxu0 0
    %6017 = vmatpush1.bf16.msra.mxu0 0
    %6018 = vmatprep.subr.bf16.mxu0 0
    %6019 = vmatpush1.bf16.msra.mxu0 0
    %6020 = vmatprep.subr.bf16.mxu0 0
    %6021 = vmatpush1.bf16.msra.mxu0 0
    %6022 = vmatprep.subr.bf16.mxu0 0
    %6023 = vmatpush1.bf16.msra.mxu0 0
    %6024 = vmatprep.subr.bf16.mxu0 0
    %6025 = vmatpush1.bf16.msra.mxu0 0
    %6026 = vmatprep.subr.bf16.mxu0 0
    %6027 = vmatpush1.bf16.msra.mxu0 %v6002
    %6028 = vmatprep.subr.bf16.mxu0 0
    %6029 = vmatpush1.bf16.msra.mxu0 %v6001
    %6030 = vmatprep.subr.bf16.mxu0 0
    %6031 = vmatpush2.bf16.msra.mxu0 0
    %6032 = vmatprep.subr.bf16.mxu0 0
    %6033 = vmatpush2.bf16.msra.mxu0 0
    %6034 = vmatprep.subr.bf16.mxu0 0
    %6035 = vmatpush2.bf16.msra.mxu0 0
    %6036 = vmatprep.subr.bf16.mxu0 0
    %6037 = vmatpush2.bf16.msra.mxu0 0
    %6038 = vmatprep.subr.bf16.mxu0 0
    %6039 = vmatpush2.bf16.msra.mxu0 0
    %6040 = vmatprep.subr.bf16.mxu0 0
    %6041 = vmatpush2.bf16.msra.mxu0 0
    %6042 = vmatprep.subr.bf16.mxu0 0
    %6043 = vmatpush2.bf16.msra.mxu0 0
    %6044 = vmatprep.subr.bf16.mxu0 0
    %6045 = vmatpush2.bf16.msra.mxu0 0
    %6046 = vmatprep.mubr.bf16.mxu0 0
    %6047 = vmatmul.mubr.bf16.gmra.mxu0 %v6006
    %v6048 = vpop.f32.mrf.mxu0
    %v6049 = vpop.f32.mrf.mxu0
    %v6050 = vpop.f32.mrf.mxu0
    %v6051 = vpop.f32.mrf.mxu0
    %6052 = vmatprep.mubr.bf16.mxu0 0
    %6053 = vmatmul.mubr.bf16.gmra.mxu0 %v6009
    %v6054 = vpop.f32.mrf.mxu0
    %v6055 = vadd.f32 0.0, %v6054
    %v6056 = vpop.f32.mrf.mxu0
    %v6057 = vpop.f32.mrf.mxu0
    %v6058 = vpop.f32.mrf.mxu0
    %6059 = vmatprep.mubr.bf16.mxu0 0
    %6060 = vmatmul.mubr.bf16.gmra.mxu0 %v6012
    %v6061 = vpop.f32.mrf.mxu0
    %v6062 = vpop.f32.mrf.mxu0
    %v6063 = vpop.f32.mrf.mxu0
    %v6064 = vadd.f32 0.0, %v6063
    %v6065 = vpop.f32.mrf.mxu0
    %6066 = vdwg.mxu0
    %vm6067 = vcmask 122880
    %6068 = vst.msk [vmem:[#allocation3] sm:$0x1] %vm6067, %v6055
    %6069 = vst.msk [vmem:[#allocation3 + $0x1] sm:$0x1] %vm6067, %v6064
    // Predicated region
    $region26: #{tpu_custom_call.1} parent=1 // pred_check
      _
    $region27: #{tpu_custom_call.1} parent=1 // pred_check_branch
      %6071 = sbr.rel (0) target = $region29
    $region28: #{tpu_custom_call.1} parent=1 // pred_region
      %s6073 = ssub.s32 32, 32
      %6074 = vsyncadd [#allocation4], %s6073
      %s6076 = sshll.u32 [#allocation3], 4
      %s6077 = int_to_ptr.vmem [resolvable:$true] %s6076
      %6079 = dma.vmem_to_hbm [thread:$0]  %s6077, 32, %s6, [#allocation4]
    $region29: #{tpu_custom_call.1} parent=1 // pred_fallthru
      _
    // Predicated region
    $region30: #{tpu_custom_call.1} parent=1 // pred_check
      _
    $region31: #{tpu_custom_call.1} parent=1 // pred_check_branch
      %6081 = sbr.rel (0) target = $region33
    $region32: #{tpu_custom_call.1} parent=1 // pred_region
      %6082 = dma.done [#allocation4], 32
    $region33: #{tpu_custom_call.1} parent=1 // pred_fallthru
      _
    %6083 = vsyncpa [#allocation4], 1

</llo_original>
